<compile_context>
chip_gen: v6e
topology: v6e:2x2x1
jax: 0.10.0
libtpu: 0.0.40
codegen_flags: <defaults>
</compile_context>

<pallas_src>
import jax
import jax.numpy as jnp
from jax import lax
from jax.experimental import pallas as pl
from jax.experimental.pallas import tpu as pltpu
import numpy as np

SLOT = 32  # rows reserved per sample in the row-stacked activation buffers


# ----------------------------------------------------------------------------
# Fused Pallas kernel: TB samples per grid step.
#
# Row layout (per sample s, buffer row r = 32*s + ...):
#   xin : input row y at 8 + 32*s + y            (rows 0..7 / slot rows 28..31
#                                                  are the zero conv1 padding)
#   c1  : conv1 output row y at 32*s + y
#   p1  : pool1 output row h at 32*s + 2*h
#   c2  : conv2 output row y at 32*s + 2*y
#   p2  : pool2 output row h at 32*s + 4*h
#   fc1 : per-sample fc1 vector at row 32*s  (gathered by a selection matmul)
# Lane layout of conv outputs: parity*128 + (x//2)*C + channel, so the 2x2
# pool's column pair is exactly (lane, lane+128).
# ----------------------------------------------------------------------------
def _lenet_kernel(x_ref, sel_ref, a1_ref, b1_ref, a2_ref, b2_ref,
                  wf1_ref, bf1_ref, wf2_ref, bf2_ref, wo_ref, bo_ref,
                  out_ref,
                  xin_ref, c1_ref, p1_ref, c2_ref, p2_ref):
    f32 = jnp.float32
    tb = x_ref.shape[0]
    n = tb * SLOT

    # Zero the activation buffers.  Only the padding rows / dead lanes truly
    # need it (the interiors are fully rewritten below), but a full zero is a
    # few hundred full-width stores per TB samples and keeps the kernel free
    # of any cross-grid-step / cross-core state (grid axis is "parallel").
    xin_ref[...] = jnp.zeros_like(xin_ref)
    c1_ref[...] = jnp.zeros_like(c1_ref)
    p1_ref[...] = jnp.zeros_like(p1_ref)
    c2_ref[...] = jnp.zeros_like(c2_ref)
    p2_ref[...] = jnp.zeros_like(p2_ref)

    # ---- stage the TB input images into 32-row slots (aligned row starts) ---
    for s in range(tb):
        xin_ref[8 + SLOT * s: 8 + SLOT * s + 28, :] = x_ref[s]

    # ---- conv1 (1->6, 5x5, pad 2) + ReLU: 5 banded dots, M = n ---------------
    acc = jnp.dot(xin_ref[6:6 + n, :], a1_ref[0], preferred_element_type=f32)
    for i in range(1, 5):
        acc = acc + jnp.dot(xin_ref[6 + i:6 + i + n, :], a1_ref[i],
                            preferred_element_type=f32)
    c1_ref[0:n, :] = jnp.maximum(acc + b1_ref[...], 0.0)          # (n, 256)

    # ---- pool1: 2x2 max = row pair (r, r+1) x lane pair (l, l+128) ----------
    p1_ref[0:n, :] = jnp.maximum(
        jnp.maximum(c1_ref[0:n, 0:128], c1_ref[1:1 + n, 0:128]),
        jnp.maximum(c1_ref[0:n, 128:256], c1_ref[1:1 + n, 128:256]))

    # ---- conv2 (6->16, 5x5, valid) + ReLU: 5 banded dots (row taps = 2*i) ----
    acc = jnp.dot(p1_ref[0:n, :], a2_ref[0], preferred_element_type=f32)
    for i in range(1, 5):
        acc = acc + jnp.dot(p1_ref[2 * i:2 * i + n, :], a2_ref[i],
                            preferred_element_type=f32)
    c2_ref[0:n, :] = jnp.maximum(acc + b2_ref[...], 0.0)          # (n, 256)

    # ---- pool2: 2x2 max = row pair (r, r+2) x lane pair (l, l+128) ----------
    p2_ref[0:n, :] = jnp.maximum(
        jnp.maximum(c2_ref[0:n, 0:128], c2_ref[2:2 + n, 0:128]),
        jnp.maximum(c2_ref[0:n, 128:256], c2_ref[2:2 + n, 128:256]))

    # ---- fc1: 5 wide banded dots (row taps = 4*i), valid rows at 32*s -------
    acc = jnp.dot(p2_ref[0:n, :], wf1_ref[0], preferred_element_type=f32)
    for i in range(1, 5):
        acc = acc + jnp.dot(p2_ref[4 * i:4 * i + n, :], wf1_ref[i],
                            preferred_element_type=f32)           # (n, 120)

    # ---- gather per-sample rows with a selection matmul; batched FC head ----
    feats = jnp.dot(sel_ref[...], acc,
                    preferred_element_type=f32) + bf1_ref[...]    # (tb, 120)
    h = jnp.dot(feats, wf2_ref[...],
                preferred_element_type=f32) + bf2_ref[...]        # (tb, 84)
    out_ref[...] = (jnp.dot(h, wo_ref[...], preferred_element_type=f32)
                    + bo_ref[...])                                # (tb, 128)


# ----------------------------------------------------------------------------
# Wrapper-side weight preparation (pure, tiny weight reshuffles).
# ----------------------------------------------------------------------------
def _conv1_banded(w):
    """(6,1,5,5) -> (5, 28, 256).

    A1[ky, Xin, parity*128 + (x//2)*6 + o] = w[o,0,ky, Xin - x + 2]
    (horizontal padding folded in; dead lanes 84..127 / 212..255 are zero)."""
    K = 5
    Xin = np.arange(28)[:, None, None]
    xo = np.arange(28)[None, :, None]
    kx = np.arange(K)[None, None, :]
    place = (Xin == xo + kx - 2).astype(np.float32)        # (28, 28, 5)
    a = jnp.einsum('Xxk,oik->iXxo', jnp.asarray(place), w[:, 0])  # (5,28,28,6)
    a = a.reshape(K, 28, 14, 2, 6).transpose(0, 1, 3, 2, 4)       # (5,28,2,14,6)
    a = a.reshape(K, 28, 2, 84)
    out = jnp.zeros((K, 28, 2, 128), jnp.float32).at[..., :84].set(a)
    return out.reshape(K, 28, 256)


def _conv2_banded(w):
    """(16,6,5,5) -> (5, 128, 256).

    A2[ky, X*6+c, parity*128 + (x//2)*16 + o] = w[o,c,ky, X - x]
    (input rows >= 84 and dead output lanes are zero)."""
    K = 5
    Xin = np.arange(14)[:, None, None]
    xo = np.arange(10)[None, :, None]
    kx = np.arange(K)[None, None, :]
    place = (Xin == xo + kx).astype(np.float32)            # (14, 10, 5)
    a = jnp.einsum('Xxk,ocik->iXcxo', jnp.asarray(place), w)      # (5,14,6,10,16)
    a = a.reshape(K, 84, 10, 16)
    a = jnp.zeros((K, 128, 10, 16), jnp.float32).at[:, :84].set(a)
    a = a.reshape(K, 128, 5, 2, 16).transpose(0, 1, 3, 2, 4)      # (5,128,2,5,16)
    a = a.reshape(K, 128, 2, 80)
    out = jnp.zeros((K, 128, 2, 128), jnp.float32).at[..., :80].set(a)
    return out.reshape(K, 128, 256)


def lenet5_forward(x_nchw, params, tb=8):
    f32 = jnp.float32
    B = x_nchw.shape[0]
    n_steps = -(-B // tb)
    bpad = n_steps * tb
    n = tb * SLOT

    x = x_nchw[:, 0, :, :].astype(f32)                     # (B, 28, 28)
    if bpad != B:
        x = jnp.concatenate([x, jnp.zeros((bpad - B, 28, 28), f32)], axis=0)

    # conv weights -> banded matmul weights, biases tiled to the lane layout
    a1 = _conv1_banded(params["conv1_w"])                  # (5, 28, 256)
    b84 = jnp.tile(params["conv1_b"], 14)
    b1 = jnp.tile(jnp.zeros((128,), f32).at[:84].set(b84), 2).reshape(1, 256)
    a2 = _conv2_banded(params["conv2_w"])                  # (5, 128, 256)
    b80 = jnp.tile(params["conv2_b"], 5)
    b2 = jnp.tile(jnp.zeros((128,), f32).at[:80].set(b80), 2).reshape(1, 256)

    # fc1: PyTorch NCHW flatten order folded in; Wf1[h, X*16+o, j] = W[j, o*25+h*5+X]
    wf = params["fc1_w"].reshape(120, 16, 5, 5)            # (j, o, y, x)
    wf = jnp.transpose(wf, (2, 3, 1, 0)).reshape(5, 80, 120)
    wf1 = jnp.zeros((5, 128, 120), f32).at[:, :80, :].set(wf)
    bf1 = params["fc1_b"].reshape(1, 120)
    wf2 = params["fc2_w"].T                                # (120, 84)
    bf2 = params["fc2_b"].reshape(1, 84)
    # output head padded to 128 lanes (lane-dense output store)
    wo = jnp.zeros((84, 128), f32).at[:, :10].set(params["out_w"].T)
    bo = jnp.zeros((1, 128), f32).at[:, :10].set(params["out_b"][None, :])

    # selection matrix gathering row 32*s of each sample's fc1 result
    sel_np = np.zeros((tb, n), np.float32)
    sel_np[np.arange(tb), np.arange(tb) * SLOT] = 1.0
    sel = jnp.asarray(sel_np)

    flops_per_step = (2 * n * 5 * (28 * 256 + 128 * 256 + 128 * 120)
                      + 2 * (tb * n * 120 + tb * 120 * 84 + tb * 84 * 128))
    weight_elems = (5 * 28 * 256 + 5 * 128 * 256 + 5 * 128 * 120
                    + 120 * 84 + 84 * 128 + tb * n + 256 + 256 + 120 + 84 + 128)
    cost = pl.CostEstimate(
        flops=n_steps * flops_per_step,
        transcendentals=0,
        bytes_accessed=4 * (bpad * 28 * 28 + bpad * 128 + weight_elems))

    out = pl.pallas_call(
        _lenet_kernel,
        out_shape=jax.ShapeDtypeStruct((bpad, 128), f32),
        grid=(n_steps,),
        in_specs=[
            pl.BlockSpec((tb, 28, 28), lambda b: (b, 0, 0)),     # x (TB samples)
            pl.BlockSpec((tb, n), lambda b: (0, 0)),             # selection mat
            pl.BlockSpec((5, 28, 256), lambda b: (0, 0, 0)),     # conv1 banded W
            pl.BlockSpec((1, 256), lambda b: (0, 0)),            # conv1 bias
            pl.BlockSpec((5, 128, 256), lambda b: (0, 0, 0)),    # conv2 banded W
            pl.BlockSpec((1, 256), lambda b: (0, 0)),            # conv2 bias
            pl.BlockSpec((5, 128, 120), lambda b: (0, 0, 0)),    # fc1 banded W
            pl.BlockSpec((1, 120), lambda b: (0, 0)),            # fc1 bias
            pl.BlockSpec((120, 84), lambda b: (0, 0)),           # fc2 W
            pl.BlockSpec((1, 84), lambda b: (0, 0)),             # fc2 bias
            pl.BlockSpec((84, 128), lambda b: (0, 0)),           # out W (padded)
            pl.BlockSpec((1, 128), lambda b: (0, 0)),            # out bias (padded)
        ],
        out_specs=pl.BlockSpec((tb, 128), lambda b: (b, 0)),
        scratch_shapes=[
            pltpu.VMEM((n + 16, 28), f32),    # padded, row-stacked input
            pltpu.VMEM((n + 8, 256), f32),    # conv1 output
            pltpu.VMEM((n + 8, 128), f32),    # pool1 output
            pltpu.VMEM((n + 8, 256), f32),    # conv2 output
            pltpu.VMEM((n + 16, 128), f32),   # pool2 output
        ],
        compiler_params=pltpu.CompilerParams(
            dimension_semantics=("parallel",)),
        cost_estimate=cost,
    )(x, sel, a1, b1, a2, b2, wf1, bf1, wf2, bf2, wo, bo)
    return out[:B, :10]


# ----------------------------------------------------------------------------
# Pure-JAX reference (correctness checking only)
# ----------------------------------------------------------------------------
def lenet5_reference(x, p):
    dn = ("NCHW", "OIHW", "NCHW")
    y = lax.conv_general_dilated(x, p["conv1_w"], (1, 1), [(2, 2), (2, 2)],
                                 dimension_numbers=dn)
    y = jnp.maximum(y + p["conv1_b"][None, :, None, None], 0.0)
    B = y.shape[0]
    y = y.reshape(B, 6, 14, 2, 14, 2).max(axis=(3, 5))
    y = lax.conv_general_dilated(y, p["conv2_w"], (1, 1), [(0, 0), (0, 0)],
                                 dimension_numbers=dn)
    y = jnp.maximum(y + p["conv2_b"][None, :, None, None], 0.0)
    y = y.reshape(B, 16, 5, 2, 5, 2).max(axis=(3, 5))
    y = y.reshape(B, 400)
    y = y @ p["fc1_w"].T + p["fc1_b"]
    y = y @ p["fc2_w"].T + p["fc2_b"]
    y = y @ p["out_w"].T + p["out_b"]
    return y


# ----------------------------------------------------------------------------
# Deterministic parameter init (synthetic weights, PyTorch shapes)
# ----------------------------------------------------------------------------
def init_params(key):
    ks = jax.random.split(key, 10)
    s = 0.05
    return {
        "conv1_w": s * jax.random.normal(ks[0], (6, 1, 5, 5), jnp.float32),
        "conv1_b": s * jax.random.normal(ks[1], (6,), jnp.float32),
        "conv2_w": s * jax.random.normal(ks[2], (16, 6, 5, 5), jnp.float32),
        "conv2_b": s * jax.random.normal(ks[3], (16,), jnp.float32),
        "fc1_w": s * jax.random.normal(ks[4], (120, 400), jnp.float32),
        "fc1_b": s * jax.random.normal(ks[5], (120,), jnp.float32),
        "fc2_w": s * jax.random.normal(ks[6], (84, 120), jnp.float32),
        "fc2_b": s * jax.random.normal(ks[7], (84,), jnp.float32),
        "out_w": s * jax.random.normal(ks[8], (10, 84), jnp.float32),
        "out_b": s * jax.random.normal(ks[9], (10,), jnp.float32),
    }


if __name__ == "__main__":
    key = jax.random.PRNGKey(0)
    k_x, k_p = jax.random.split(key)
    # LeNet5 forward implies 1x28x28 inputs (flatten gives 400 features).
    x = jax.random.normal(k_x, (2, 1, 28, 28), jnp.float32)
    params = init_params(k_p)

    out = jax.block_until_ready(jax.jit(lenet5_forward)(x, params))
    ref = jax.block_until_ready(lenet5_reference(x, params))
    np.testing.assert_allclose(np.asarray(out), np.asarray(ref),
                               rtol=1e-4, atol=1e-4)
    assert out.shape == (2, 10) and out.dtype == jnp.float32
    print("KERNEL_OK")
</pallas_src>

<mosaic_0001>
module attributes {stable_mosaic.version = 11 : i64} {
  func.func @_lenet_kernel(%arg0: i32, %arg1: memref<8x28x28xf32, #tpu.memory_space<vmem>>, %arg2: memref<8x256xf32, #tpu.memory_space<vmem>>, %arg3: memref<5x28x256xf32, #tpu.memory_space<vmem>>, %arg4: memref<1x256xf32, #tpu.memory_space<vmem>>, %arg5: memref<5x128x256xf32, #tpu.memory_space<vmem>>, %arg6: memref<1x256xf32, #tpu.memory_space<vmem>>, %arg7: memref<5x128x120xf32, #tpu.memory_space<vmem>>, %arg8: memref<1x120xf32, #tpu.memory_space<vmem>>, %arg9: memref<120x84xf32, #tpu.memory_space<vmem>>, %arg10: memref<1x84xf32, #tpu.memory_space<vmem>>, %arg11: memref<84x128xf32, #tpu.memory_space<vmem>>, %arg12: memref<1x128xf32, #tpu.memory_space<vmem>>, %arg13: memref<8x128xf32, #tpu.memory_space<vmem>>, %arg14: memref<272x28xf32, #tpu.memory_space<vmem>>, %arg15: memref<264x256xf32, #tpu.memory_space<vmem>>, %arg16: memref<264x128xf32, #tpu.memory_space<vmem>>, %arg17: memref<264x256xf32, #tpu.memory_space<vmem>>, %arg18: memref<272x128xf32, #tpu.memory_space<vmem>>) attributes {dimension_semantics = [#tpu.dimension_semantics<parallel>], iteration_bounds = array<i64: 1>, scalar_prefetch = 0 : i64, scratch_operands = 5 : i64, tpu.core_type = #tpu.core_type<tc>, window_params = [{transform_indices = @transform_0, window_bounds = array<i64: 8, 28, 28>}, {pipeline_mode = #tpu.pipeline_mode<synchronous>, transform_indices = @transform_1, window_bounds = array<i64: 8, 256>}, {pipeline_mode = #tpu.pipeline_mode<synchronous>, transform_indices = @transform_2, window_bounds = array<i64: 5, 28, 256>}, {pipeline_mode = #tpu.pipeline_mode<synchronous>, transform_indices = @transform_3, window_bounds = array<i64: 1, 256>}, {pipeline_mode = #tpu.pipeline_mode<synchronous>, transform_indices = @transform_4, window_bounds = array<i64: 5, 128, 256>}, {pipeline_mode = #tpu.pipeline_mode<synchronous>, transform_indices = @transform_5, window_bounds = array<i64: 1, 256>}, {pipeline_mode = #tpu.pipeline_mode<synchronous>, transform_indices = @transform_6, window_bounds = array<i64: 5, 128, 120>}, {pipeline_mode = #tpu.pipeline_mode<synchronous>, transform_indices = @transform_7, window_bounds = array<i64: 1, 120>}, {pipeline_mode = #tpu.pipeline_mode<synchronous>, transform_indices = @transform_8, window_bounds = array<i64: 120, 84>}, {pipeline_mode = #tpu.pipeline_mode<synchronous>, transform_indices = @transform_9, window_bounds = array<i64: 1, 84>}, {pipeline_mode = #tpu.pipeline_mode<synchronous>, transform_indices = @transform_10, window_bounds = array<i64: 84, 128>}, {pipeline_mode = #tpu.pipeline_mode<synchronous>, transform_indices = @transform_11, window_bounds = array<i64: 1, 128>}, {transform_indices = @transform_12, window_bounds = array<i64: 8, 128>}]} {
    %cst = arith.constant 0.000000e+00 : f32
    %0 = vector.broadcast %cst : f32 to vector<272x28xf32>
    %c0 = arith.constant 0 : index
    %c0_0 = arith.constant 0 : index
    %1 = vector.load %arg14[%c0, %c0_0] : memref<272x28xf32, #tpu.memory_space<vmem>>, vector<272x28xf32>
    tpu.vector_store %arg14[%c0, %c0_0], %0 {strides = array<i32>} : memref<272x28xf32, #tpu.memory_space<vmem>>, vector<272x28xf32>,
    %cst_1 = arith.constant 0.000000e+00 : f32
    %2 = vector.broadcast %cst_1 : f32 to vector<264x256xf32>
    %c0_2 = arith.constant 0 : index
    %c0_3 = arith.constant 0 : index
    %3 = vector.load %arg15[%c0_2, %c0_3] : memref<264x256xf32, #tpu.memory_space<vmem>>, vector<264x256xf32>
    tpu.vector_store %arg15[%c0_2, %c0_3], %2 {strides = array<i32>} : memref<264x256xf32, #tpu.memory_space<vmem>>, vector<264x256xf32>,
    %cst_4 = arith.constant 0.000000e+00 : f32
    %4 = vector.broadcast %cst_4 : f32 to vector<264x128xf32>
    %c0_5 = arith.constant 0 : index
    %c0_6 = arith.constant 0 : index
    %5 = vector.load %arg16[%c0_5, %c0_6] : memref<264x128xf32, #tpu.memory_space<vmem>>, vector<264x128xf32>
    tpu.vector_store %arg16[%c0_5, %c0_6], %4 {strides = array<i32>} : memref<264x128xf32, #tpu.memory_space<vmem>>, vector<264x128xf32>,
    %cst_7 = arith.constant 0.000000e+00 : f32
    %6 = vector.broadcast %cst_7 : f32 to vector<264x256xf32>
    %c0_8 = arith.constant 0 : index
    %c0_9 = arith.constant 0 : index
    %7 = vector.load %arg17[%c0_8, %c0_9] : memref<264x256xf32, #tpu.memory_space<vmem>>, vector<264x256xf32>
    tpu.vector_store %arg17[%c0_8, %c0_9], %6 {strides = array<i32>} : memref<264x256xf32, #tpu.memory_space<vmem>>, vector<264x256xf32>,
    %cst_10 = arith.constant 0.000000e+00 : f32
    %8 = vector.broadcast %cst_10 : f32 to vector<272x128xf32>
    %c0_11 = arith.constant 0 : index
    %c0_12 = arith.constant 0 : index
    %9 = vector.load %arg18[%c0_11, %c0_12] : memref<272x128xf32, #tpu.memory_space<vmem>>, vector<272x128xf32>
    tpu.vector_store %arg18[%c0_11, %c0_12], %8 {strides = array<i32>} : memref<272x128xf32, #tpu.memory_space<vmem>>, vector<272x128xf32>,
    %c0_13 = arith.constant 0 : index
    %c0_14 = arith.constant 0 : index
    %c0_15 = arith.constant 0 : index
    %10 = vector.load %arg1[%c0_13, %c0_14, %c0_15] : memref<8x28x28xf32, #tpu.memory_space<vmem>>, vector<1x28x28xf32>
    %11 = vector.shape_cast %10 : vector<1x28x28xf32> to vector<28x28xf32>
    %c8 = arith.constant 8 : index
    %c0_16 = arith.constant 0 : index
    %12 = vector.load %arg14[%c8, %c0_16] : memref<272x28xf32, #tpu.memory_space<vmem>>, vector<28x28xf32>
    tpu.vector_store %arg14[%c8, %c0_16], %11 {strides = array<i32>} : memref<272x28xf32, #tpu.memory_space<vmem>>, vector<28x28xf32>,
    %c1 = arith.constant 1 : index
    %c0_17 = arith.constant 0 : index
    %c0_18 = arith.constant 0 : index
    %13 = vector.load %arg1[%c1, %c0_17, %c0_18] : memref<8x28x28xf32, #tpu.memory_space<vmem>>, vector<1x28x28xf32>
    %14 = vector.shape_cast %13 : vector<1x28x28xf32> to vector<28x28xf32>
    %c40 = arith.constant 40 : index
    %c0_19 = arith.constant 0 : index
    %15 = vector.load %arg14[%c40, %c0_19] : memref<272x28xf32, #tpu.memory_space<vmem>>, vector<28x28xf32>
    tpu.vector_store %arg14[%c40, %c0_19], %14 {strides = array<i32>} : memref<272x28xf32, #tpu.memory_space<vmem>>, vector<28x28xf32>,
    %c2 = arith.constant 2 : index
    %c0_20 = arith.constant 0 : index
    %c0_21 = arith.constant 0 : index
    %16 = vector.load %arg1[%c2, %c0_20, %c0_21] : memref<8x28x28xf32, #tpu.memory_space<vmem>>, vector<1x28x28xf32>
    %17 = vector.shape_cast %16 : vector<1x28x28xf32> to vector<28x28xf32>
    %c72 = arith.constant 72 : index
    %c0_22 = arith.constant 0 : index
    %18 = vector.load %arg14[%c72, %c0_22] : memref<272x28xf32, #tpu.memory_space<vmem>>, vector<28x28xf32>
    tpu.vector_store %arg14[%c72, %c0_22], %17 {strides = array<i32>} : memref<272x28xf32, #tpu.memory_space<vmem>>, vector<28x28xf32>,
    %c3 = arith.constant 3 : index
    %c0_23 = arith.constant 0 : index
    %c0_24 = arith.constant 0 : index
    %19 = vector.load %arg1[%c3, %c0_23, %c0_24] : memref<8x28x28xf32, #tpu.memory_space<vmem>>, vector<1x28x28xf32>
    %20 = vector.shape_cast %19 : vector<1x28x28xf32> to vector<28x28xf32>
    %c104 = arith.constant 104 : index
    %c0_25 = arith.constant 0 : index
    %21 = vector.load %arg14[%c104, %c0_25] : memref<272x28xf32, #tpu.memory_space<vmem>>, vector<28x28xf32>
    tpu.vector_store %arg14[%c104, %c0_25], %20 {strides = array<i32>} : memref<272x28xf32, #tpu.memory_space<vmem>>, vector<28x28xf32>,
    %c4 = arith.constant 4 : index
    %c0_26 = arith.constant 0 : index
    %c0_27 = arith.constant 0 : index
    %22 = vector.load %arg1[%c4, %c0_26, %c0_27] : memref<8x28x28xf32, #tpu.memory_space<vmem>>, vector<1x28x28xf32>
    %23 = vector.shape_cast %22 : vector<1x28x28xf32> to vector<28x28xf32>
    %c136 = arith.constant 136 : index
    %c0_28 = arith.constant 0 : index
    %24 = vector.load %arg14[%c136, %c0_28] : memref<272x28xf32, #tpu.memory_space<vmem>>, vector<28x28xf32>
    tpu.vector_store %arg14[%c136, %c0_28], %23 {strides = array<i32>} : memref<272x28xf32, #tpu.memory_space<vmem>>, vector<28x28xf32>,
    %c5 = arith.constant 5 : index
    %c0_29 = arith.constant 0 : index
    %c0_30 = arith.constant 0 : index
    %25 = vector.load %arg1[%c5, %c0_29, %c0_30] : memref<8x28x28xf32, #tpu.memory_space<vmem>>, vector<1x28x28xf32>
    %26 = vector.shape_cast %25 : vector<1x28x28xf32> to vector<28x28xf32>
    %c168 = arith.constant 168 : index
    %c0_31 = arith.constant 0 : index
    %27 = vector.load %arg14[%c168, %c0_31] : memref<272x28xf32, #tpu.memory_space<vmem>>, vector<28x28xf32>
    tpu.vector_store %arg14[%c168, %c0_31], %26 {strides = array<i32>} : memref<272x28xf32, #tpu.memory_space<vmem>>, vector<28x28xf32>,
    %c6 = arith.constant 6 : index
    %c0_32 = arith.constant 0 : index
    %c0_33 = arith.constant 0 : index
    %28 = vector.load %arg1[%c6, %c0_32, %c0_33] : memref<8x28x28xf32, #tpu.memory_space<vmem>>, vector<1x28x28xf32>
    %29 = vector.shape_cast %28 : vector<1x28x28xf32> to vector<28x28xf32>
    %c200 = arith.constant 200 : index
    %c0_34 = arith.constant 0 : index
    %30 = vector.load %arg14[%c200, %c0_34] : memref<272x28xf32, #tpu.memory_space<vmem>>, vector<28x28xf32>
    tpu.vector_store %arg14[%c200, %c0_34], %29 {strides = array<i32>} : memref<272x28xf32, #tpu.memory_space<vmem>>, vector<28x28xf32>,
    %c7 = arith.constant 7 : index
    %c0_35 = arith.constant 0 : index
    %c0_36 = arith.constant 0 : index
    %31 = vector.load %arg1[%c7, %c0_35, %c0_36] : memref<8x28x28xf32, #tpu.memory_space<vmem>>, vector<1x28x28xf32>
    %32 = vector.shape_cast %31 : vector<1x28x28xf32> to vector<28x28xf32>
    %c232 = arith.constant 232 : index
    %c0_37 = arith.constant 0 : index
    %33 = vector.load %arg14[%c232, %c0_37] : memref<272x28xf32, #tpu.memory_space<vmem>>, vector<28x28xf32>
    tpu.vector_store %arg14[%c232, %c0_37], %32 {strides = array<i32>} : memref<272x28xf32, #tpu.memory_space<vmem>>, vector<28x28xf32>,
    %c6_38 = arith.constant 6 : index
    %c0_39 = arith.constant 0 : index
    %34 = vector.load %arg14[%c6_38, %c0_39] : memref<272x28xf32, #tpu.memory_space<vmem>>, vector<256x28xf32>
    %c0_40 = arith.constant 0 : index
    %c0_41 = arith.constant 0 : index
    %c0_42 = arith.constant 0 : index
    %35 = vector.load %arg3[%c0_40, %c0_41, %c0_42] : memref<5x28x256xf32, #tpu.memory_space<vmem>>, vector<1x28x256xf32>
    %36 = vector.shape_cast %35 : vector<1x28x256xf32> to vector<28x256xf32>
    %cst_43 = arith.constant dense<0.000000e+00> : vector<256x256xf32>
    %37 = tpu.matmul %34, %36, %cst_43 {dimension_numbers = #tpu.dot_dimension_numbers<[1], [0], [0], [1], [0, 0, 1, 1], [], []>} : vector<256x28xf32>, vector<28x256xf32>, vector<256x256xf32> -> vector<256x256xf32>
    %c7_44 = arith.constant 7 : index
    %c0_45 = arith.constant 0 : index
    %38 = vector.load %arg14[%c7_44, %c0_45] : memref<272x28xf32, #tpu.memory_space<vmem>>, vector<256x28xf32>
    %c1_46 = arith.constant 1 : index
    %c0_47 = arith.constant 0 : index
    %c0_48 = arith.constant 0 : index
    %39 = vector.load %arg3[%c1_46, %c0_47, %c0_48] : memref<5x28x256xf32, #tpu.memory_space<vmem>>, vector<1x28x256xf32>
    %40 = vector.shape_cast %39 : vector<1x28x256xf32> to vector<28x256xf32>
    %cst_49 = arith.constant dense<0.000000e+00> : vector<256x256xf32>
    %41 = tpu.matmul %38, %40, %cst_49 {dimension_numbers = #tpu.dot_dimension_numbers<[1], [0], [0], [1], [0, 0, 1, 1], [], []>} : vector<256x28xf32>, vector<28x256xf32>, vector<256x256xf32> -> vector<256x256xf32>
    %42 = arith.addf %37, %41 : vector<256x256xf32>
    %c8_50 = arith.constant 8 : index
    %c0_51 = arith.constant 0 : index
    %43 = vector.load %arg14[%c8_50, %c0_51] : memref<272x28xf32, #tpu.memory_space<vmem>>, vector<256x28xf32>
    %c2_52 = arith.constant 2 : index
    %c0_53 = arith.constant 0 : index
    %c0_54 = arith.constant 0 : index
    %44 = vector.load %arg3[%c2_52, %c0_53, %c0_54] : memref<5x28x256xf32, #tpu.memory_space<vmem>>, vector<1x28x256xf32>
    %45 = vector.shape_cast %44 : vector<1x28x256xf32> to vector<28x256xf32>
    %cst_55 = arith.constant dense<0.000000e+00> : vector<256x256xf32>
    %46 = tpu.matmul %43, %45, %cst_55 {dimension_numbers = #tpu.dot_dimension_numbers<[1], [0], [0], [1], [0, 0, 1, 1], [], []>} : vector<256x28xf32>, vector<28x256xf32>, vector<256x256xf32> -> vector<256x256xf32>
    %47 = arith.addf %42, %46 : vector<256x256xf32>
    %c9 = arith.constant 9 : index
    %c0_56 = arith.constant 0 : index
    %48 = vector.load %arg14[%c9, %c0_56] : memref<272x28xf32, #tpu.memory_space<vmem>>, vector<256x28xf32>
    %c3_57 = arith.constant 3 : index
    %c0_58 = arith.constant 0 : index
    %c0_59 = arith.constant 0 : index
    %49 = vector.load %arg3[%c3_57, %c0_58, %c0_59] : memref<5x28x256xf32, #tpu.memory_space<vmem>>, vector<1x28x256xf32>
    %50 = vector.shape_cast %49 : vector<1x28x256xf32> to vector<28x256xf32>
    %cst_60 = arith.constant dense<0.000000e+00> : vector<256x256xf32>
    %51 = tpu.matmul %48, %50, %cst_60 {dimension_numbers = #tpu.dot_dimension_numbers<[1], [0], [0], [1], [0, 0, 1, 1], [], []>} : vector<256x28xf32>, vector<28x256xf32>, vector<256x256xf32> -> vector<256x256xf32>
    %52 = arith.addf %47, %51 : vector<256x256xf32>
    %c10 = arith.constant 10 : index
    %c0_61 = arith.constant 0 : index
    %53 = vector.load %arg14[%c10, %c0_61] : memref<272x28xf32, #tpu.memory_space<vmem>>, vector<256x28xf32>
    %c4_62 = arith.constant 4 : index
    %c0_63 = arith.constant 0 : index
    %c0_64 = arith.constant 0 : index
    %54 = vector.load %arg3[%c4_62, %c0_63, %c0_64] : memref<5x28x256xf32, #tpu.memory_space<vmem>>, vector<1x28x256xf32>
    %55 = vector.shape_cast %54 : vector<1x28x256xf32> to vector<28x256xf32>
    %cst_65 = arith.constant dense<0.000000e+00> : vector<256x256xf32>
    %56 = tpu.matmul %53, %55, %cst_65 {dimension_numbers = #tpu.dot_dimension_numbers<[1], [0], [0], [1], [0, 0, 1, 1], [], []>} : vector<256x28xf32>, vector<28x256xf32>, vector<256x256xf32> -> vector<256x256xf32>
    %57 = arith.addf %52, %56 : vector<256x256xf32>
    %c0_66 = arith.constant 0 : index
    %c0_67 = arith.constant 0 : index
    %58 = vector.load %arg4[%c0_66, %c0_67] : memref<1x256xf32, #tpu.memory_space<vmem>>, vector<1x256xf32>
    %59 = vector.broadcast %58 : vector<1x256xf32> to vector<256x256xf32>
    %60 = arith.addf %57, %59 : vector<256x256xf32>
    %cst_68 = arith.constant 0.000000e+00 : f32
    %61 = vector.broadcast %cst_68 : f32 to vector<256x256xf32>
    %62 = arith.maximumf %60, %61 : vector<256x256xf32>
    %c0_69 = arith.constant 0 : index
    %c0_70 = arith.constant 0 : index
    %63 = vector.load %arg15[%c0_69, %c0_70] : memref<264x256xf32, #tpu.memory_space<vmem>>, vector<256x256xf32>
    tpu.vector_store %arg15[%c0_69, %c0_70], %62 {strides = array<i32>} : memref<264x256xf32, #tpu.memory_space<vmem>>, vector<256x256xf32>,
    %c0_71 = arith.constant 0 : index
    %c0_72 = arith.constant 0 : index
    %64 = vector.load %arg15[%c0_71, %c0_72] : memref<264x256xf32, #tpu.memory_space<vmem>>, vector<256x128xf32>
    %c1_73 = arith.constant 1 : index
    %c0_74 = arith.constant 0 : index
    %65 = vector.load %arg15[%c1_73, %c0_74] : memref<264x256xf32, #tpu.memory_space<vmem>>, vector<256x128xf32>
    %66 = arith.maximumf %64, %65 : vector<256x128xf32>
    %c0_75 = arith.constant 0 : index
    %c128 = arith.constant 128 : index
    %67 = vector.load %arg15[%c0_75, %c128] : memref<264x256xf32, #tpu.memory_space<vmem>>, vector<256x128xf32>
    %c1_76 = arith.constant 1 : index
    %c128_77 = arith.constant 128 : index
    %68 = vector.load %arg15[%c1_76, %c128_77] : memref<264x256xf32, #tpu.memory_space<vmem>>, vector<256x128xf32>
    %69 = arith.maximumf %67, %68 : vector<256x128xf32>
    %70 = arith.maximumf %66, %69 : vector<256x128xf32>
    %c0_78 = arith.constant 0 : index
    %c0_79 = arith.constant 0 : index
    %71 = vector.load %arg16[%c0_78, %c0_79] : memref<264x128xf32, #tpu.memory_space<vmem>>, vector<256x128xf32>
    tpu.vector_store %arg16[%c0_78, %c0_79], %70 {strides = array<i32>} : memref<264x128xf32, #tpu.memory_space<vmem>>, vector<256x128xf32>,
    %c0_80 = arith.constant 0 : index
    %c0_81 = arith.constant 0 : index
    %72 = vector.load %arg16[%c0_80, %c0_81] : memref<264x128xf32, #tpu.memory_space<vmem>>, vector<256x128xf32>
    %c0_82 = arith.constant 0 : index
    %c0_83 = arith.constant 0 : index
    %c0_84 = arith.constant 0 : index
    %73 = vector.load %arg5[%c0_82, %c0_83, %c0_84] : memref<5x128x256xf32, #tpu.memory_space<vmem>>, vector<1x128x256xf32>
    %74 = vector.shape_cast %73 : vector<1x128x256xf32> to vector<128x256xf32>
    %cst_85 = arith.constant dense<0.000000e+00> : vector<256x256xf32>
    %75 = tpu.matmul %72, %74, %cst_85 {dimension_numbers = #tpu.dot_dimension_numbers<[1], [0], [0], [1], [0, 0, 1, 1], [], []>} : vector<256x128xf32>, vector<128x256xf32>, vector<256x256xf32> -> vector<256x256xf32>
    %c2_86 = arith.constant 2 : index
    %c0_87 = arith.constant 0 : index
    %76 = vector.load %arg16[%c2_86, %c0_87] : memref<264x128xf32, #tpu.memory_space<vmem>>, vector<256x128xf32>
    %c1_88 = arith.constant 1 : index
    %c0_89 = arith.constant 0 : index
    %c0_90 = arith.constant 0 : index
    %77 = vector.load %arg5[%c1_88, %c0_89, %c0_90] : memref<5x128x256xf32, #tpu.memory_space<vmem>>, vector<1x128x256xf32>
    %78 = vector.shape_cast %77 : vector<1x128x256xf32> to vector<128x256xf32>
    %cst_91 = arith.constant dense<0.000000e+00> : vector<256x256xf32>
    %79 = tpu.matmul %76, %78, %cst_91 {dimension_numbers = #tpu.dot_dimension_numbers<[1], [0], [0], [1], [0, 0, 1, 1], [], []>} : vector<256x128xf32>, vector<128x256xf32>, vector<256x256xf32> -> vector<256x256xf32>
    %80 = arith.addf %75, %79 : vector<256x256xf32>
    %c4_92 = arith.constant 4 : index
    %c0_93 = arith.constant 0 : index
    %81 = vector.load %arg16[%c4_92, %c0_93] : memref<264x128xf32, #tpu.memory_space<vmem>>, vector<256x128xf32>
    %c2_94 = arith.constant 2 : index
    %c0_95 = arith.constant 0 : index
    %c0_96 = arith.constant 0 : index
    %82 = vector.load %arg5[%c2_94, %c0_95, %c0_96] : memref<5x128x256xf32, #tpu.memory_space<vmem>>, vector<1x128x256xf32>
    %83 = vector.shape_cast %82 : vector<1x128x256xf32> to vector<128x256xf32>
    %cst_97 = arith.constant dense<0.000000e+00> : vector<256x256xf32>
    %84 = tpu.matmul %81, %83, %cst_97 {dimension_numbers = #tpu.dot_dimension_numbers<[1], [0], [0], [1], [0, 0, 1, 1], [], []>} : vector<256x128xf32>, vector<128x256xf32>, vector<256x256xf32> -> vector<256x256xf32>
    %85 = arith.addf %80, %84 : vector<256x256xf32>
    %c6_98 = arith.constant 6 : index
    %c0_99 = arith.constant 0 : index
    %86 = vector.load %arg16[%c6_98, %c0_99] : memref<264x128xf32, #tpu.memory_space<vmem>>, vector<256x128xf32>
    %c3_100 = arith.constant 3 : index
    %c0_101 = arith.constant 0 : index
    %c0_102 = arith.constant 0 : index
    %87 = vector.load %arg5[%c3_100, %c0_101, %c0_102] : memref<5x128x256xf32, #tpu.memory_space<vmem>>, vector<1x128x256xf32>
    %88 = vector.shape_cast %87 : vector<1x128x256xf32> to vector<128x256xf32>
    %cst_103 = arith.constant dense<0.000000e+00> : vector<256x256xf32>
    %89 = tpu.matmul %86, %88, %cst_103 {dimension_numbers = #tpu.dot_dimension_numbers<[1], [0], [0], [1], [0, 0, 1, 1], [], []>} : vector<256x128xf32>, vector<128x256xf32>, vector<256x256xf32> -> vector<256x256xf32>
    %90 = arith.addf %85, %89 : vector<256x256xf32>
    %c8_104 = arith.constant 8 : index
    %c0_105 = arith.constant 0 : index
    %91 = vector.load %arg16[%c8_104, %c0_105] : memref<264x128xf32, #tpu.memory_space<vmem>>, vector<256x128xf32>
    %c4_106 = arith.constant 4 : index
    %c0_107 = arith.constant 0 : index
    %c0_108 = arith.constant 0 : index
    %92 = vector.load %arg5[%c4_106, %c0_107, %c0_108] : memref<5x128x256xf32, #tpu.memory_space<vmem>>, vector<1x128x256xf32>
    %93 = vector.shape_cast %92 : vector<1x128x256xf32> to vector<128x256xf32>
    %cst_109 = arith.constant dense<0.000000e+00> : vector<256x256xf32>
    %94 = tpu.matmul %91, %93, %cst_109 {dimension_numbers = #tpu.dot_dimension_numbers<[1], [0], [0], [1], [0, 0, 1, 1], [], []>} : vector<256x128xf32>, vector<128x256xf32>, vector<256x256xf32> -> vector<256x256xf32>
    %95 = arith.addf %90, %94 : vector<256x256xf32>
    %c0_110 = arith.constant 0 : index
    %c0_111 = arith.constant 0 : index
    %96 = vector.load %arg6[%c0_110, %c0_111] : memref<1x256xf32, #tpu.memory_space<vmem>>, vector<1x256xf32>
    %97 = vector.broadcast %96 : vector<1x256xf32> to vector<256x256xf32>
    %98 = arith.addf %95, %97 : vector<256x256xf32>
    %cst_112 = arith.constant 0.000000e+00 : f32
    %99 = vector.broadcast %cst_112 : f32 to vector<256x256xf32>
    %100 = arith.maximumf %98, %99 : vector<256x256xf32>
    %c0_113 = arith.constant 0 : index
    %c0_114 = arith.constant 0 : index
    %101 = vector.load %arg17[%c0_113, %c0_114] : memref<264x256xf32, #tpu.memory_space<vmem>>, vector<256x256xf32>
    tpu.vector_store %arg17[%c0_113, %c0_114], %100 {strides = array<i32>} : memref<264x256xf32, #tpu.memory_space<vmem>>, vector<256x256xf32>,
    %c0_115 = arith.constant 0 : index
    %c0_116 = arith.constant 0 : index
    %102 = vector.load %arg17[%c0_115, %c0_116] : memref<264x256xf32, #tpu.memory_space<vmem>>, vector<256x128xf32>
    %c2_117 = arith.constant 2 : index
    %c0_118 = arith.constant 0 : index
    %103 = vector.load %arg17[%c2_117, %c0_118] : memref<264x256xf32, #tpu.memory_space<vmem>>, vector<256x128xf32>
    %104 = arith.maximumf %102, %103 : vector<256x128xf32>
    %c0_119 = arith.constant 0 : index
    %c128_120 = arith.constant 128 : index
    %105 = vector.load %arg17[%c0_119, %c128_120] : memref<264x256xf32, #tpu.memory_space<vmem>>, vector<256x128xf32>
    %c2_121 = arith.constant 2 : index
    %c128_122 = arith.constant 128 : index
    %106 = vector.load %arg17[%c2_121, %c128_122] : memref<264x256xf32, #tpu.memory_space<vmem>>, vector<256x128xf32>
    %107 = arith.maximumf %105, %106 : vector<256x128xf32>
    %108 = arith.maximumf %104, %107 : vector<256x128xf32>
    %c0_123 = arith.constant 0 : index
    %c0_124 = arith.constant 0 : index
    %109 = vector.load %arg18[%c0_123, %c0_124] : memref<272x128xf32, #tpu.memory_space<vmem>>, vector<256x128xf32>
    tpu.vector_store %arg18[%c0_123, %c0_124], %108 {strides = array<i32>} : memref<272x128xf32, #tpu.memory_space<vmem>>, vector<256x128xf32>,
    %c0_125 = arith.constant 0 : index
    %c0_126 = arith.constant 0 : index
    %110 = vector.load %arg18[%c0_125, %c0_126] : memref<272x128xf32, #tpu.memory_space<vmem>>, vector<256x128xf32>
    %c0_127 = arith.constant 0 : index
    %c0_128 = arith.constant 0 : index
    %c0_129 = arith.constant 0 : index
    %111 = vector.load %arg7[%c0_127, %c0_128, %c0_129] : memref<5x128x120xf32, #tpu.memory_space<vmem>>, vector<1x128x120xf32>
    %112 = vector.shape_cast %111 : vector<1x128x120xf32> to vector<128x120xf32>
    %cst_130 = arith.constant dense<0.000000e+00> : vector<256x120xf32>
    %113 = tpu.matmul %110, %112, %cst_130 {dimension_numbers = #tpu.dot_dimension_numbers<[1], [0], [0], [1], [0, 0, 1, 1], [], []>} : vector<256x128xf32>, vector<128x120xf32>, vector<256x120xf32> -> vector<256x120xf32>
    %c4_131 = arith.constant 4 : index
    %c0_132 = arith.constant 0 : index
    %114 = vector.load %arg18[%c4_131, %c0_132] : memref<272x128xf32, #tpu.memory_space<vmem>>, vector<256x128xf32>
    %c1_133 = arith.constant 1 : index
    %c0_134 = arith.constant 0 : index
    %c0_135 = arith.constant 0 : index
    %115 = vector.load %arg7[%c1_133, %c0_134, %c0_135] : memref<5x128x120xf32, #tpu.memory_space<vmem>>, vector<1x128x120xf32>
    %116 = vector.shape_cast %115 : vector<1x128x120xf32> to vector<128x120xf32>
    %cst_136 = arith.constant dense<0.000000e+00> : vector<256x120xf32>
    %117 = tpu.matmul %114, %116, %cst_136 {dimension_numbers = #tpu.dot_dimension_numbers<[1], [0], [0], [1], [0, 0, 1, 1], [], []>} : vector<256x128xf32>, vector<128x120xf32>, vector<256x120xf32> -> vector<256x120xf32>
    %118 = arith.addf %113, %117 : vector<256x120xf32>
    %c8_137 = arith.constant 8 : index
    %c0_138 = arith.constant 0 : index
    %119 = vector.load %arg18[%c8_137, %c0_138] : memref<272x128xf32, #tpu.memory_space<vmem>>, vector<256x128xf32>
    %c2_139 = arith.constant 2 : index
    %c0_140 = arith.constant 0 : index
    %c0_141 = arith.constant 0 : index
    %120 = vector.load %arg7[%c2_139, %c0_140, %c0_141] : memref<5x128x120xf32, #tpu.memory_space<vmem>>, vector<1x128x120xf32>
    %121 = vector.shape_cast %120 : vector<1x128x120xf32> to vector<128x120xf32>
    %cst_142 = arith.constant dense<0.000000e+00> : vector<256x120xf32>
    %122 = tpu.matmul %119, %121, %cst_142 {dimension_numbers = #tpu.dot_dimension_numbers<[1], [0], [0], [1], [0, 0, 1, 1], [], []>} : vector<256x128xf32>, vector<128x120xf32>, vector<256x120xf32> -> vector<256x120xf32>
    %123 = arith.addf %118, %122 : vector<256x120xf32>
    %c12 = arith.constant 12 : index
    %c0_143 = arith.constant 0 : index
    %124 = vector.load %arg18[%c12, %c0_143] : memref<272x128xf32, #tpu.memory_space<vmem>>, vector<256x128xf32>
    %c3_144 = arith.constant 3 : index
    %c0_145 = arith.constant 0 : index
    %c0_146 = arith.constant 0 : index
    %125 = vector.load %arg7[%c3_144, %c0_145, %c0_146] : memref<5x128x120xf32, #tpu.memory_space<vmem>>, vector<1x128x120xf32>
    %126 = vector.shape_cast %125 : vector<1x128x120xf32> to vector<128x120xf32>
    %cst_147 = arith.constant dense<0.000000e+00> : vector<256x120xf32>
    %127 = tpu.matmul %124, %126, %cst_147 {dimension_numbers = #tpu.dot_dimension_numbers<[1], [0], [0], [1], [0, 0, 1, 1], [], []>} : vector<256x128xf32>, vector<128x120xf32>, vector<256x120xf32> -> vector<256x120xf32>
    %128 = arith.addf %123, %127 : vector<256x120xf32>
    %c16 = arith.constant 16 : index
    %c0_148 = arith.constant 0 : index
    %129 = vector.load %arg18[%c16, %c0_148] : memref<272x128xf32, #tpu.memory_space<vmem>>, vector<256x128xf32>
    %c4_149 = arith.constant 4 : index
    %c0_150 = arith.constant 0 : index
    %c0_151 = arith.constant 0 : index
    %130 = vector.load %arg7[%c4_149, %c0_150, %c0_151] : memref<5x128x120xf32, #tpu.memory_space<vmem>>, vector<1x128x120xf32>
    %131 = vector.shape_cast %130 : vector<1x128x120xf32> to vector<128x120xf32>
    %cst_152 = arith.constant dense<0.000000e+00> : vector<256x120xf32>
    %132 = tpu.matmul %129, %131, %cst_152 {dimension_numbers = #tpu.dot_dimension_numbers<[1], [0], [0], [1], [0, 0, 1, 1], [], []>} : vector<256x128xf32>, vector<128x120xf32>, vector<256x120xf32> -> vector<256x120xf32>
    %133 = arith.addf %128, %132 : vector<256x120xf32>
    %c0_153 = arith.constant 0 : index
    %c0_154 = arith.constant 0 : index
    %134 = vector.load %arg2[%c0_153, %c0_154] : memref<8x256xf32, #tpu.memory_space<vmem>>, vector<8x256xf32>
    %cst_155 = arith.constant dense<0.000000e+00> : vector<8x120xf32>
    %135 = tpu.matmul %134, %133, %cst_155 {dimension_numbers = #tpu.dot_dimension_numbers<[1], [0], [0], [1], [0, 0, 1, 1], [], []>} : vector<8x256xf32>, vector<256x120xf32>, vector<8x120xf32> -> vector<8x120xf32>
    %c0_156 = arith.constant 0 : index
    %c0_157 = arith.constant 0 : index
    %136 = vector.load %arg8[%c0_156, %c0_157] : memref<1x120xf32, #tpu.memory_space<vmem>>, vector<1x120xf32>
    %137 = vector.broadcast %136 : vector<1x120xf32> to vector<8x120xf32>
    %138 = arith.addf %135, %137 : vector<8x120xf32>
    %c0_158 = arith.constant 0 : index
    %c0_159 = arith.constant 0 : index
    %139 = vector.load %arg9[%c0_158, %c0_159] : memref<120x84xf32, #tpu.memory_space<vmem>>, vector<120x84xf32>
    %cst_160 = arith.constant dense<0.000000e+00> : vector<8x84xf32>
    %140 = tpu.matmul %138, %139, %cst_160 {dimension_numbers = #tpu.dot_dimension_numbers<[1], [0], [0], [1], [0, 0, 1, 1], [], []>} : vector<8x120xf32>, vector<120x84xf32>, vector<8x84xf32> -> vector<8x84xf32>
    %c0_161 = arith.constant 0 : index
    %c0_162 = arith.constant 0 : index
    %141 = vector.load %arg10[%c0_161, %c0_162] : memref<1x84xf32, #tpu.memory_space<vmem>>, vector<1x84xf32>
    %142 = vector.broadcast %141 : vector<1x84xf32> to vector<8x84xf32>
    %143 = arith.addf %140, %142 : vector<8x84xf32>
    %c0_163 = arith.constant 0 : index
    %c0_164 = arith.constant 0 : index
    %144 = vector.load %arg11[%c0_163, %c0_164] : memref<84x128xf32, #tpu.memory_space<vmem>>, vector<84x128xf32>
    %cst_165 = arith.constant dense<0.000000e+00> : vector<8x128xf32>
    %145 = tpu.matmul %143, %144, %cst_165 {dimension_numbers = #tpu.dot_dimension_numbers<[1], [0], [0], [1], [0, 0, 1, 1], [], []>} : vector<8x84xf32>, vector<84x128xf32>, vector<8x128xf32> -> vector<8x128xf32>
    %c0_166 = arith.constant 0 : index
    %c0_167 = arith.constant 0 : index
    %146 = vector.load %arg12[%c0_166, %c0_167] : memref<1x128xf32, #tpu.memory_space<vmem>>, vector<1x128xf32>
    %147 = vector.broadcast %146 : vector<1x128xf32> to vector<8x128xf32>
    %148 = arith.addf %145, %147 : vector<8x128xf32>
    %c0_168 = arith.constant 0 : index
    %c0_169 = arith.constant 0 : index
    %149 = vector.load %arg13[%c0_168, %c0_169] : memref<8x128xf32, #tpu.memory_space<vmem>>, vector<8x128xf32>
    tpu.vector_store %arg13[%c0_168, %c0_169], %148 {strides = array<i32>} : memref<8x128xf32, #tpu.memory_space<vmem>>, vector<8x128xf32>,
    return
  }
  func.func @transform_0(%arg0: i32) -> (i32, i32, i32) {
    %c0_i32 = arith.constant 0 : i32
    %c0_i32_0 = arith.constant 0 : i32
    %c0_i32_1 = arith.constant 0 : i32
    return %arg0, %c0_i32, %c0_i32_0 : i32, i32, i32
  }
  func.func @transform_1(%arg0: i32) -> (i32, i32) {
    %c0_i32 = arith.constant 0 : i32
    %c0_i32_0 = arith.constant 0 : i32
    %c0_i32_1 = arith.constant 0 : i32
    return %c0_i32, %c0_i32_0 : i32, i32
  }
  func.func @transform_2(%arg0: i32) -> (i32, i32, i32) {
    %c0_i32 = arith.constant 0 : i32
    %c0_i32_0 = arith.constant 0 : i32
    %c0_i32_1 = arith.constant 0 : i32
    %c0_i32_2 = arith.constant 0 : i32
    return %c0_i32, %c0_i32_0, %c0_i32_1 : i32, i32, i32
  }
  func.func @transform_3(%arg0: i32) -> (i32, i32) {
    %c0_i32 = arith.constant 0 : i32
    %c0_i32_0 = arith.constant 0 : i32
    %c0_i32_1 = arith.constant 0 : i32
    return %c0_i32, %c0_i32_0 : i32, i32
  }
  func.func @transform_4(%arg0: i32) -> (i32, i32, i32) {
    %c0_i32 = arith.constant 0 : i32
    %c0_i32_0 = arith.constant 0 : i32
    %c0_i32_1 = arith.constant 0 : i32
    %c0_i32_2 = arith.constant 0 : i32
    return %c0_i32, %c0_i32_0, %c0_i32_1 : i32, i32, i32
  }
  func.func @transform_5(%arg0: i32) -> (i32, i32) {
    %c0_i32 = arith.constant 0 : i32
    %c0_i32_0 = arith.constant 0 : i32
    %c0_i32_1 = arith.constant 0 : i32
    return %c0_i32, %c0_i32_0 : i32, i32
  }
  func.func @transform_6(%arg0: i32) -> (i32, i32, i32) {
    %c0_i32 = arith.constant 0 : i32
    %c0_i32_0 = arith.constant 0 : i32
    %c0_i32_1 = arith.constant 0 : i32
    %c0_i32_2 = arith.constant 0 : i32
    return %c0_i32, %c0_i32_0, %c0_i32_1 : i32, i32, i32
  }
  func.func @transform_7(%arg0: i32) -> (i32, i32) {
    %c0_i32 = arith.constant 0 : i32
    %c0_i32_0 = arith.constant 0 : i32
    %c0_i32_1 = arith.constant 0 : i32
    return %c0_i32, %c0_i32_0 : i32, i32
  }
  func.func @transform_8(%arg0: i32) -> (i32, i32) {
    %c0_i32 = arith.constant 0 : i32
    %c0_i32_0 = arith.constant 0 : i32
    %c0_i32_1 = arith.constant 0 : i32
    return %c0_i32, %c0_i32_0 : i32, i32
  }
  func.func @transform_9(%arg0: i32) -> (i32, i32) {
    %c0_i32 = arith.constant 0 : i32
    %c0_i32_0 = arith.constant 0 : i32
    %c0_i32_1 = arith.constant 0 : i32
    return %c0_i32, %c0_i32_0 : i32, i32
  }
  func.func @transform_10(%arg0: i32) -> (i32, i32) {
    %c0_i32 = arith.constant 0 : i32
    %c0_i32_0 = arith.constant 0 : i32
    %c0_i32_1 = arith.constant 0 : i32
    return %c0_i32, %c0_i32_0 : i32, i32
  }
  func.func @transform_11(%arg0: i32) -> (i32, i32) {
    %c0_i32 = arith.constant 0 : i32
    %c0_i32_0 = arith.constant 0 : i32
    %c0_i32_1 = arith.constant 0 : i32
    return %c0_i32, %c0_i32_0 : i32, i32
  }
  func.func @transform_12(%arg0: i32) -> (i32, i32) {
    %c0_i32 = arith.constant 0 : i32
    %c0_i32_0 = arith.constant 0 : i32
    return %arg0, %c0_i32 : i32, i32
  }
}

</mosaic_0001>

<llo_original>
// kernel: tile.23
$region0: #{tile.23}
  #allocation0 [shape = 's32[1]{0}', space=sflag, size = 0x4, scoped, tag = 'scoped memory for tile.23']
  %s0 = inlined_call_operand.vmem [shape: f32[6], index: 0, kind: input, shape index: {}]
  %s1 = inlined_call_operand.vmem [shape: f32[14,6], index: 1, kind: output, shape index: {}]
  // Predicated region
  $region2: #{tile.23} parent=0 // pred_check
    _
  $region3: #{tile.23} parent=0 // pred_check_branch
    %3 = sbr.rel (0) target = $region5
  $region4: #{tile.23} parent=0 // pred_region
    _
  $region5: #{tile.23} parent=0 // pred_fallthru
    _
  %v4 = vld [vmem:[%s0] ss:$0 sm:$0xff]
  %5 = vst [vmem:[%s1] sm:$0xff] %v4
  %s6 = scalar_lea.vmem %s1, 8
  %7 = vst [vmem:[%s6] sm:$0xff] %v4

// kernel: tile.28
$region0: #{tile.28}
  #allocation0 [shape = 's32[1]{0}', space=sflag, size = 0x4, scoped, tag = 'scoped memory for tile.28']
  %s0 = inlined_call_operand.vmem [shape: f32[128], index: 0, kind: input, shape index: {}]
  %s1 = inlined_call_operand.vmem [shape: f32[2,128], index: 1, kind: output, shape index: {}]
  // Predicated region
  $region2: #{tile.28} parent=0 // pred_check
    _
  $region3: #{tile.28} parent=0 // pred_check_branch
    %3 = sbr.rel (0) target = $region5
  $region4: #{tile.28} parent=0 // pred_region
    _
  $region5: #{tile.28} parent=0 // pred_fallthru
    _
  %v4 = vld [vmem:[%s0] ss:$0 sm:$0xff]
  %5 = vst [vmem:[%s1] sm:$0x3] %v4

// kernel: tile.33
$region0: #{tile.33}
  #allocation0 [shape = 's32[1]{0}', space=sflag, size = 0x4, scoped, tag = 'scoped memory for tile.33']
  %s0 = inlined_call_operand.vmem [shape: f32[16], index: 0, kind: input, shape index: {}]
  %s1 = inlined_call_operand.vmem [shape: f32[5,16], index: 1, kind: output, shape index: {}]
  // Predicated region
  $region2: #{tile.33} parent=0 // pred_check
    _
  $region3: #{tile.33} parent=0 // pred_check_branch
    %3 = sbr.rel (0) target = $region5
  $region4: #{tile.33} parent=0 // pred_region
    _
  $region5: #{tile.33} parent=0 // pred_fallthru
    _
  %v4 = vld [vmem:[%s0] ss:$0 sm:$0xff]
  %5 = vst [vmem:[%s1] sm:$0xff] %v4

// kernel: lenet5_forward.1
$region0: #{lenet5_forward.1}
  #allocation0 [shape = 'u32[]', space=smem, size = 0x4, offset = 0x4, fixed_abs, tag = 'smem constant byte address 0x4 - core index']
  #allocation1 [shape = 'u32[144,128]{1,0:T(1,128)}', space=vmem, size = 0x12000, scoped, tag = 'internal scratch']
  #allocation2 [shape = 'f32[272,28]{1,0:T(8,128)}', space=vmem, size = 0x22000, scoped, tag = 'scratch operand']
  #allocation3 [shape = 'f32[264,256]{1,0:T(8,128)}', space=vmem, size = 0x42000, scoped, tag = 'scratch operand']
  #allocation4 [shape = 'f32[264,128]{1,0:T(8,128)}', space=vmem, size = 0x21000, scoped, tag = 'scratch operand']
  #allocation5 [shape = 'f32[264,256]{1,0:T(8,128)}', space=vmem, size = 0x42000, scoped, tag = 'scratch operand']
  #allocation6 [shape = 'f32[272,128]{1,0:T(8,128)}', space=vmem, size = 0x22000, scoped, tag = 'scratch operand']
  %s0 = inlined_call_operand.vmem [shape: f32[8,28,28], index: 0, kind: input, shape index: {}]
  %s1 = inlined_call_operand.vmem [shape: f32[8,256], index: 1, kind: input, shape index: {}]
  %s2 = inlined_call_operand.vmem [shape: f32[5,28,256], index: 2, kind: input, shape index: {}]
  %s3 = inlined_call_operand.vmem [shape: f32[1,256], index: 3, kind: input, shape index: {}]
  %s4 = inlined_call_operand.vmem [shape: f32[5,128,256], index: 4, kind: input, shape index: {}]
  %s5 = inlined_call_operand.vmem [shape: f32[1,256], index: 5, kind: input, shape index: {}]
  %s6 = inlined_call_operand.vmem [shape: f32[5,128,120], index: 6, kind: input, shape index: {}]
  %s7 = inlined_call_operand.vmem [shape: f32[1,120], index: 7, kind: input, shape index: {}]
  %s8 = inlined_call_operand.vmem [shape: f32[120,84], index: 8, kind: input, shape index: {}]
  %s9 = inlined_call_operand.vmem [shape: f32[1,84], index: 9, kind: input, shape index: {}]
  %s10 = inlined_call_operand.vmem [shape: f32[84,128], index: 10, kind: input, shape index: {}]
  %s11 = inlined_call_operand.vmem [shape: f32[1,128], index: 11, kind: input, shape index: {}]
  %s12 = inlined_call_operand.vmem [shape: f32[8,128], index: 12, kind: output, shape index: {}]
  %s13 = sld [smem:[#allocation0]]
  $region58: #{lenet5_forward.1} parent=0
    _
  %s15 = ssub.s32 1, %s13
  %s16 = scalar_select 0, %s15, %s13
  // Predicated region
  $region2: #{lenet5_forward.1} parent=0 // pred_check
    _
  $region3: #{lenet5_forward.1} parent=0 // pred_check_branch
    %18 = sbr.rel (0) target = $region5
  $region4: #{lenet5_forward.1} parent=0 // pred_region
    _
  $region5: #{lenet5_forward.1} parent=0 // pred_fallthru
    _
  // Predicated region
  $region6: #{lenet5_forward.1} parent=0 // pred_check
    _
  $region7: #{lenet5_forward.1} parent=0 // pred_check_branch
    %20 = sbr.rel (0) target = $region9
  $region8: #{lenet5_forward.1} parent=0 // pred_region
    _
  $region9: #{lenet5_forward.1} parent=0 // pred_fallthru
    _
  // Predicated region
  $region10: #{lenet5_forward.1} parent=0 // pred_check
    _
  $region11: #{lenet5_forward.1} parent=0 // pred_check_branch
    %22 = sbr.rel (0) target = $region13
  $region12: #{lenet5_forward.1} parent=0 // pred_region
    _
  $region13: #{lenet5_forward.1} parent=0 // pred_fallthru
    _
  // Predicated region
  $region14: #{lenet5_forward.1} parent=0 // pred_check
    _
  $region15: #{lenet5_forward.1} parent=0 // pred_check_branch
    %24 = sbr.rel (0) target = $region17
  $region16: #{lenet5_forward.1} parent=0 // pred_region
    _
  $region17: #{lenet5_forward.1} parent=0 // pred_fallthru
    _
  // Predicated region
  $region18: #{lenet5_forward.1} parent=0 // pred_check
    _
  $region19: #{lenet5_forward.1} parent=0 // pred_check_branch
    %26 = sbr.rel (0) target = $region21
  $region20: #{lenet5_forward.1} parent=0 // pred_region
    _
  $region21: #{lenet5_forward.1} parent=0 // pred_fallthru
    _
  // Predicated region
  $region22: #{lenet5_forward.1} parent=0 // pred_check
    _
  $region23: #{lenet5_forward.1} parent=0 // pred_check_branch
    %28 = sbr.rel (0) target = $region25
  $region24: #{lenet5_forward.1} parent=0 // pred_region
    _
  $region25: #{lenet5_forward.1} parent=0 // pred_fallthru
    _
  // Predicated region
  $region26: #{lenet5_forward.1} parent=0 // pred_check
    _
  $region27: #{lenet5_forward.1} parent=0 // pred_check_branch
    %30 = sbr.rel (0) target = $region29
  $region28: #{lenet5_forward.1} parent=0 // pred_region
    _
  $region29: #{lenet5_forward.1} parent=0 // pred_fallthru
    _
  // Predicated region
  $region30: #{lenet5_forward.1} parent=0 // pred_check
    _
  $region31: #{lenet5_forward.1} parent=0 // pred_check_branch
    %32 = sbr.rel (0) target = $region33
  $region32: #{lenet5_forward.1} parent=0 // pred_region
    _
  $region33: #{lenet5_forward.1} parent=0 // pred_fallthru
    _
  // Predicated region
  $region34: #{lenet5_forward.1} parent=0 // pred_check
    _
  $region35: #{lenet5_forward.1} parent=0 // pred_check_branch
    %34 = sbr.rel (0) target = $region37
  $region36: #{lenet5_forward.1} parent=0 // pred_region
    _
  $region37: #{lenet5_forward.1} parent=0 // pred_fallthru
    _
  // Predicated region
  $region38: #{lenet5_forward.1} parent=0 // pred_check
    _
  $region39: #{lenet5_forward.1} parent=0 // pred_check_branch
    %36 = sbr.rel (0) target = $region41
  $region40: #{lenet5_forward.1} parent=0 // pred_region
    _
  $region41: #{lenet5_forward.1} parent=0 // pred_fallthru
    _
  // Predicated region
  $region42: #{lenet5_forward.1} parent=0 // pred_check
    _
  $region43: #{lenet5_forward.1} parent=0 // pred_check_branch
    %38 = sbr.rel (0) target = $region45
  $region44: #{lenet5_forward.1} parent=0 // pred_region
    _
  $region45: #{lenet5_forward.1} parent=0 // pred_fallthru
    _
  // Predicated region
  $region46: #{lenet5_forward.1} parent=0 // pred_check
    _
  $region47: #{lenet5_forward.1} parent=0 // pred_check_branch
    %40 = sbr.rel (0) target = $region49
  $region48: #{lenet5_forward.1} parent=0 // pred_region
    _
  $region49: #{lenet5_forward.1} parent=0 // pred_fallthru
    _
  %vm41 = vcmask 228352
  %42 = vst.msk [vmem:[#allocation2] sm:$0xff] %vm41, 0.0
  %43 = vst.msk [vmem:[#allocation2 + $0x8] sm:$0xff] %vm41, 0.0
  %44 = vst.msk [vmem:[#allocation2 + $0x10] sm:$0xff] %vm41, 0.0
  %45 = vst.msk [vmem:[#allocation2 + $0x18] sm:$0xff] %vm41, 0.0
  %46 = vst.msk [vmem:[#allocation2 + $0x20] sm:$0xff] %vm41, 0.0
  %47 = vst.msk [vmem:[#allocation2 + $0x28] sm:$0xff] %vm41, 0.0
  %48 = vst.msk [vmem:[#allocation2 + $0x30] sm:$0xff] %vm41, 0.0
  %49 = vst.msk [vmem:[#allocation2 + $0x38] sm:$0xff] %vm41, 0.0
  %50 = vst.msk [vmem:[#allocation2 + $0x40] sm:$0xff] %vm41, 0.0
  %51 = vst.msk [vmem:[#allocation2 + $0x48] sm:$0xff] %vm41, 0.0
  %52 = vst.msk [vmem:[#allocation2 + $0x50] sm:$0xff] %vm41, 0.0
  %53 = vst.msk [vmem:[#allocation2 + $0x58] sm:$0xff] %vm41, 0.0
  %54 = vst.msk [vmem:[#allocation2 + $0x60] sm:$0xff] %vm41, 0.0
  %55 = vst.msk [vmem:[#allocation2 + $0x68] sm:$0xff] %vm41, 0.0
  %56 = vst.msk [vmem:[#allocation2 + $0x70] sm:$0xff] %vm41, 0.0
  %57 = vst.msk [vmem:[#allocation2 + $0x78] sm:$0xff] %vm41, 0.0
  %58 = vst.msk [vmem:[#allocation2 + $0x80] sm:$0xff] %vm41, 0.0
  %59 = vst.msk [vmem:[#allocation2 + $0x88] sm:$0xff] %vm41, 0.0
  %60 = vst.msk [vmem:[#allocation2 + $0x90] sm:$0xff] %vm41, 0.0
  %61 = vst.msk [vmem:[#allocation2 + $0x98] sm:$0xff] %vm41, 0.0
  %62 = vst.msk [vmem:[#allocation2 + $0xa0] sm:$0xff] %vm41, 0.0
  %63 = vst.msk [vmem:[#allocation2 + $0xa8] sm:$0xff] %vm41, 0.0
  %64 = vst.msk [vmem:[#allocation2 + $0xb0] sm:$0xff] %vm41, 0.0
  %65 = vst.msk [vmem:[#allocation2 + $0xb8] sm:$0xff] %vm41, 0.0
  %66 = vst.msk [vmem:[#allocation2 + $0xc0] sm:$0xff] %vm41, 0.0
  %67 = vst.msk [vmem:[#allocation2 + $0xc8] sm:$0xff] %vm41, 0.0
  %68 = vst.msk [vmem:[#allocation2 + $0xd0] sm:$0xff] %vm41, 0.0
  %69 = vst.msk [vmem:[#allocation2 + $0xd8] sm:$0xff] %vm41, 0.0
  %70 = vst.msk [vmem:[#allocation2 + $0xe0] sm:$0xff] %vm41, 0.0
  %71 = vst.msk [vmem:[#allocation2 + $0xe8] sm:$0xff] %vm41, 0.0
  %72 = vst.msk [vmem:[#allocation2 + $0xf0] sm:$0xff] %vm41, 0.0
  %73 = vst.msk [vmem:[#allocation2 + $0xf8] sm:$0xff] %vm41, 0.0
  %74 = vst.msk [vmem:[#allocation2 + $0x100] sm:$0xff] %vm41, 0.0
  %75 = vst.msk [vmem:[#allocation2 + $0x108] sm:$0xff] %vm41, 0.0
  %76 = vst [vmem:[#allocation3] sm:$0xff] 0.0
  %77 = vst [vmem:[#allocation3 + $0x8] sm:$0xff] 0.0
  %78 = vst [vmem:[#allocation3 + $0x10] sm:$0xff] 0.0
  %79 = vst [vmem:[#allocation3 + $0x18] sm:$0xff] 0.0
  %80 = vst [vmem:[#allocation3 + $0x20] sm:$0xff] 0.0
  %81 = vst [vmem:[#allocation3 + $0x28] sm:$0xff] 0.0
  %82 = vst [vmem:[#allocation3 + $0x30] sm:$0xff] 0.0
  %83 = vst [vmem:[#allocation3 + $0x38] sm:$0xff] 0.0
  %84 = vst [vmem:[#allocation3 + $0x40] sm:$0xff] 0.0
  %85 = vst [vmem:[#allocation3 + $0x48] sm:$0xff] 0.0
  %86 = vst [vmem:[#allocation3 + $0x50] sm:$0xff] 0.0
  %87 = vst [vmem:[#allocation3 + $0x58] sm:$0xff] 0.0
  %88 = vst [vmem:[#allocation3 + $0x60] sm:$0xff] 0.0
  %89 = vst [vmem:[#allocation3 + $0x68] sm:$0xff] 0.0
  %90 = vst [vmem:[#allocation3 + $0x70] sm:$0xff] 0.0
  %91 = vst [vmem:[#allocation3 + $0x78] sm:$0xff] 0.0
  %92 = vst [vmem:[#allocation3 + $0x80] sm:$0xff] 0.0
  %93 = vst [vmem:[#allocation3 + $0x88] sm:$0xff] 0.0
  %94 = vst [vmem:[#allocation3 + $0x90] sm:$0xff] 0.0
  %95 = vst [vmem:[#allocation3 + $0x98] sm:$0xff] 0.0
  %96 = vst [vmem:[#allocation3 + $0xa0] sm:$0xff] 0.0
  %97 = vst [vmem:[#allocation3 + $0xa8] sm:$0xff] 0.0
  %98 = vst [vmem:[#allocation3 + $0xb0] sm:$0xff] 0.0
  %99 = vst [vmem:[#allocation3 + $0xb8] sm:$0xff] 0.0
  %100 = vst [vmem:[#allocation3 + $0xc0] sm:$0xff] 0.0
  %101 = vst [vmem:[#allocation3 + $0xc8] sm:$0xff] 0.0
  %102 = vst [vmem:[#allocation3 + $0xd0] sm:$0xff] 0.0
  %103 = vst [vmem:[#allocation3 + $0xd8] sm:$0xff] 0.0
  %104 = vst [vmem:[#allocation3 + $0xe0] sm:$0xff] 0.0
  %105 = vst [vmem:[#allocation3 + $0xe8] sm:$0xff] 0.0
  %106 = vst [vmem:[#allocation3 + $0xf0] sm:$0xff] 0.0
  %107 = vst [vmem:[#allocation3 + $0xf8] sm:$0xff] 0.0
  %108 = vst [vmem:[#allocation3 + $0x100] sm:$0xff] 0.0
  %109 = vst [vmem:[#allocation3 + $0x108] sm:$0xff] 0.0
  %110 = vst [vmem:[#allocation3 + $0x110] sm:$0xff] 0.0
  %111 = vst [vmem:[#allocation3 + $0x118] sm:$0xff] 0.0
  %112 = vst [vmem:[#allocation3 + $0x120] sm:$0xff] 0.0
  %113 = vst [vmem:[#allocation3 + $0x128] sm:$0xff] 0.0
  %114 = vst [vmem:[#allocation3 + $0x130] sm:$0xff] 0.0
  %115 = vst [vmem:[#allocation3 + $0x138] sm:$0xff] 0.0
  %116 = vst [vmem:[#allocation3 + $0x140] sm:$0xff] 0.0
  %117 = vst [vmem:[#allocation3 + $0x148] sm:$0xff] 0.0
  %118 = vst [vmem:[#allocation3 + $0x150] sm:$0xff] 0.0
  %119 = vst [vmem:[#allocation3 + $0x158] sm:$0xff] 0.0
  %120 = vst [vmem:[#allocation3 + $0x160] sm:$0xff] 0.0
  %121 = vst [vmem:[#allocation3 + $0x168] sm:$0xff] 0.0
  %122 = vst [vmem:[#allocation3 + $0x170] sm:$0xff] 0.0
  %123 = vst [vmem:[#allocation3 + $0x178] sm:$0xff] 0.0
  %124 = vst [vmem:[#allocation3 + $0x180] sm:$0xff] 0.0
  %125 = vst [vmem:[#allocation3 + $0x188] sm:$0xff] 0.0
  %126 = vst [vmem:[#allocation3 + $0x190] sm:$0xff] 0.0
  %127 = vst [vmem:[#allocation3 + $0x198] sm:$0xff] 0.0
  %128 = vst [vmem:[#allocation3 + $0x1a0] sm:$0xff] 0.0
  %129 = vst [vmem:[#allocation3 + $0x1a8] sm:$0xff] 0.0
  %130 = vst [vmem:[#allocation3 + $0x1b0] sm:$0xff] 0.0
  %131 = vst [vmem:[#allocation3 + $0x1b8] sm:$0xff] 0.0
  %132 = vst [vmem:[#allocation3 + $0x1c0] sm:$0xff] 0.0
  %133 = vst [vmem:[#allocation3 + $0x1c8] sm:$0xff] 0.0
  %134 = vst [vmem:[#allocation3 + $0x1d0] sm:$0xff] 0.0
  %135 = vst [vmem:[#allocation3 + $0x1d8] sm:$0xff] 0.0
  %136 = vst [vmem:[#allocation3 + $0x1e0] sm:$0xff] 0.0
  %137 = vst [vmem:[#allocation3 + $0x1e8] sm:$0xff] 0.0
  %138 = vst [vmem:[#allocation3 + $0x1f0] sm:$0xff] 0.0
  %139 = vst [vmem:[#allocation3 + $0x1f8] sm:$0xff] 0.0
  %140 = vst [vmem:[#allocation3 + $0x200] sm:$0xff] 0.0
  %141 = vst [vmem:[#allocation3 + $0x208] sm:$0xff] 0.0
  %142 = vst [vmem:[#allocation4] sm:$0xff] 0.0
  %143 = vst [vmem:[#allocation4 + $0x8] sm:$0xff] 0.0
  %144 = vst [vmem:[#allocation4 + $0x10] sm:$0xff] 0.0
  %145 = vst [vmem:[#allocation4 + $0x18] sm:$0xff] 0.0
  %146 = vst [vmem:[#allocation4 + $0x20] sm:$0xff] 0.0
  %147 = vst [vmem:[#allocation4 + $0x28] sm:$0xff] 0.0
  %148 = vst [vmem:[#allocation4 + $0x30] sm:$0xff] 0.0
  %149 = vst [vmem:[#allocation4 + $0x38] sm:$0xff] 0.0
  %150 = vst [vmem:[#allocation4 + $0x40] sm:$0xff] 0.0
  %151 = vst [vmem:[#allocation4 + $0x48] sm:$0xff] 0.0
  %152 = vst [vmem:[#allocation4 + $0x50] sm:$0xff] 0.0
  %153 = vst [vmem:[#allocation4 + $0x58] sm:$0xff] 0.0
  %154 = vst [vmem:[#allocation4 + $0x60] sm:$0xff] 0.0
  %155 = vst [vmem:[#allocation4 + $0x68] sm:$0xff] 0.0
  %156 = vst [vmem:[#allocation4 + $0x70] sm:$0xff] 0.0
  %157 = vst [vmem:[#allocation4 + $0x78] sm:$0xff] 0.0
  %158 = vst [vmem:[#allocation4 + $0x80] sm:$0xff] 0.0
  %159 = vst [vmem:[#allocation4 + $0x88] sm:$0xff] 0.0
  %160 = vst [vmem:[#allocation4 + $0x90] sm:$0xff] 0.0
  %161 = vst [vmem:[#allocation4 + $0x98] sm:$0xff] 0.0
  %162 = vst [vmem:[#allocation4 + $0xa0] sm:$0xff] 0.0
  %163 = vst [vmem:[#allocation4 + $0xa8] sm:$0xff] 0.0
  %164 = vst [vmem:[#allocation4 + $0xb0] sm:$0xff] 0.0
  %165 = vst [vmem:[#allocation4 + $0xb8] sm:$0xff] 0.0
  %166 = vst [vmem:[#allocation4 + $0xc0] sm:$0xff] 0.0
  %167 = vst [vmem:[#allocation4 + $0xc8] sm:$0xff] 0.0
  %168 = vst [vmem:[#allocation4 + $0xd0] sm:$0xff] 0.0
  %169 = vst [vmem:[#allocation4 + $0xd8] sm:$0xff] 0.0
  %170 = vst [vmem:[#allocation4 + $0xe0] sm:$0xff] 0.0
  %171 = vst [vmem:[#allocation4 + $0xe8] sm:$0xff] 0.0
  %172 = vst [vmem:[#allocation4 + $0xf0] sm:$0xff] 0.0
  %173 = vst [vmem:[#allocation4 + $0xf8] sm:$0xff] 0.0
  %174 = vst [vmem:[#allocation4 + $0x100] sm:$0xff] 0.0
  %175 = vst [vmem:[#allocation5] sm:$0xff] 0.0
  %176 = vst [vmem:[#allocation5 + $0x8] sm:$0xff] 0.0
  %177 = vst [vmem:[#allocation5 + $0x10] sm:$0xff] 0.0
  %178 = vst [vmem:[#allocation5 + $0x18] sm:$0xff] 0.0
  %179 = vst [vmem:[#allocation5 + $0x20] sm:$0xff] 0.0
  %180 = vst [vmem:[#allocation5 + $0x28] sm:$0xff] 0.0
  %181 = vst [vmem:[#allocation5 + $0x30] sm:$0xff] 0.0
  %182 = vst [vmem:[#allocation5 + $0x38] sm:$0xff] 0.0
  %183 = vst [vmem:[#allocation5 + $0x40] sm:$0xff] 0.0
  %184 = vst [vmem:[#allocation5 + $0x48] sm:$0xff] 0.0
  %185 = vst [vmem:[#allocation5 + $0x50] sm:$0xff] 0.0
  %186 = vst [vmem:[#allocation5 + $0x58] sm:$0xff] 0.0
  %187 = vst [vmem:[#allocation5 + $0x60] sm:$0xff] 0.0
  %188 = vst [vmem:[#allocation5 + $0x68] sm:$0xff] 0.0
  %189 = vst [vmem:[#allocation5 + $0x70] sm:$0xff] 0.0
  %190 = vst [vmem:[#allocation5 + $0x78] sm:$0xff] 0.0
  %191 = vst [vmem:[#allocation5 + $0x80] sm:$0xff] 0.0
  %192 = vst [vmem:[#allocation5 + $0x88] sm:$0xff] 0.0
  %193 = vst [vmem:[#allocation5 + $0x90] sm:$0xff] 0.0
  %194 = vst [vmem:[#allocation5 + $0x98] sm:$0xff] 0.0
  %195 = vst [vmem:[#allocation5 + $0xa0] sm:$0xff] 0.0
  %196 = vst [vmem:[#allocation5 + $0xa8] sm:$0xff] 0.0
  %197 = vst [vmem:[#allocation5 + $0xb0] sm:$0xff] 0.0
  %198 = vst [vmem:[#allocation5 + $0xb8] sm:$0xff] 0.0
  %199 = vst [vmem:[#allocation5 + $0xc0] sm:$0xff] 0.0
  %200 = vst [vmem:[#allocation5 + $0xc8] sm:$0xff] 0.0
  %201 = vst [vmem:[#allocation5 + $0xd0] sm:$0xff] 0.0
  %202 = vst [vmem:[#allocation5 + $0xd8] sm:$0xff] 0.0
  %203 = vst [vmem:[#allocation5 + $0xe0] sm:$0xff] 0.0
  %204 = vst [vmem:[#allocation5 + $0xe8] sm:$0xff] 0.0
  %205 = vst [vmem:[#allocation5 + $0xf0] sm:$0xff] 0.0
  %206 = vst [vmem:[#allocation5 + $0xf8] sm:$0xff] 0.0
  %207 = vst [vmem:[#allocation5 + $0x100] sm:$0xff] 0.0
  %208 = vst [vmem:[#allocation5 + $0x108] sm:$0xff] 0.0
  %209 = vst [vmem:[#allocation5 + $0x110] sm:$0xff] 0.0
  %210 = vst [vmem:[#allocation5 + $0x118] sm:$0xff] 0.0
  %211 = vst [vmem:[#allocation5 + $0x120] sm:$0xff] 0.0
  %212 = vst [vmem:[#allocation5 + $0x128] sm:$0xff] 0.0
  %213 = vst [vmem:[#allocation5 + $0x130] sm:$0xff] 0.0
  %214 = vst [vmem:[#allocation5 + $0x138] sm:$0xff] 0.0
  %215 = vst [vmem:[#allocation5 + $0x140] sm:$0xff] 0.0
  %216 = vst [vmem:[#allocation5 + $0x148] sm:$0xff] 0.0
  %217 = vst [vmem:[#allocation5 + $0x150] sm:$0xff] 0.0
  %218 = vst [vmem:[#allocation5 + $0x158] sm:$0xff] 0.0
  %219 = vst [vmem:[#allocation5 + $0x160] sm:$0xff] 0.0
  %220 = vst [vmem:[#allocation5 + $0x168] sm:$0xff] 0.0
  %221 = vst [vmem:[#allocation5 + $0x170] sm:$0xff] 0.0
  %222 = vst [vmem:[#allocation5 + $0x178] sm:$0xff] 0.0
  %223 = vst [vmem:[#allocation5 + $0x180] sm:$0xff] 0.0
  %224 = vst [vmem:[#allocation5 + $0x188] sm:$0xff] 0.0
  %225 = vst [vmem:[#allocation5 + $0x190] sm:$0xff] 0.0
  %226 = vst [vmem:[#allocation5 + $0x198] sm:$0xff] 0.0
  %227 = vst [vmem:[#allocation5 + $0x1a0] sm:$0xff] 0.0
  %228 = vst [vmem:[#allocation5 + $0x1a8] sm:$0xff] 0.0
  %229 = vst [vmem:[#allocation5 + $0x1b0] sm:$0xff] 0.0
  %230 = vst [vmem:[#allocation5 + $0x1b8] sm:$0xff] 0.0
  %231 = vst [vmem:[#allocation5 + $0x1c0] sm:$0xff] 0.0
  %232 = vst [vmem:[#allocation5 + $0x1c8] sm:$0xff] 0.0
  %233 = vst [vmem:[#allocation5 + $0x1d0] sm:$0xff] 0.0
  %234 = vst [vmem:[#allocation5 + $0x1d8] sm:$0xff] 0.0
  %235 = vst [vmem:[#allocation5 + $0x1e0] sm:$0xff] 0.0
  %236 = vst [vmem:[#allocation5 + $0x1e8] sm:$0xff] 0.0
  %237 = vst [vmem:[#allocation5 + $0x1f0] sm:$0xff] 0.0
  %238 = vst [vmem:[#allocation5 + $0x1f8] sm:$0xff] 0.0
  %239 = vst [vmem:[#allocation5 + $0x200] sm:$0xff] 0.0
  %240 = vst [vmem:[#allocation5 + $0x208] sm:$0xff] 0.0
  %241 = vst [vmem:[#allocation6] sm:$0xff] 0.0
  %242 = vst [vmem:[#allocation6 + $0x8] sm:$0xff] 0.0
  %243 = vst [vmem:[#allocation6 + $0x10] sm:$0xff] 0.0
  %244 = vst [vmem:[#allocation6 + $0x18] sm:$0xff] 0.0
  %245 = vst [vmem:[#allocation6 + $0x20] sm:$0xff] 0.0
  %246 = vst [vmem:[#allocation6 + $0x28] sm:$0xff] 0.0
  %247 = vst [vmem:[#allocation6 + $0x30] sm:$0xff] 0.0
  %248 = vst [vmem:[#allocation6 + $0x38] sm:$0xff] 0.0
  %249 = vst [vmem:[#allocation6 + $0x40] sm:$0xff] 0.0
  %250 = vst [vmem:[#allocation6 + $0x48] sm:$0xff] 0.0
  %251 = vst [vmem:[#allocation6 + $0x50] sm:$0xff] 0.0
  %252 = vst [vmem:[#allocation6 + $0x58] sm:$0xff] 0.0
  %253 = vst [vmem:[#allocation6 + $0x60] sm:$0xff] 0.0
  %254 = vst [vmem:[#allocation6 + $0x68] sm:$0xff] 0.0
  %255 = vst [vmem:[#allocation6 + $0x70] sm:$0xff] 0.0
  %256 = vst [vmem:[#allocation6 + $0x78] sm:$0xff] 0.0
  %257 = vst [vmem:[#allocation6 + $0x80] sm:$0xff] 0.0
  %258 = vst [vmem:[#allocation6 + $0x88] sm:$0xff] 0.0
  %259 = vst [vmem:[#allocation6 + $0x90] sm:$0xff] 0.0
  %260 = vst [vmem:[#allocation6 + $0x98] sm:$0xff] 0.0
  %261 = vst [vmem:[#allocation6 + $0xa0] sm:$0xff] 0.0
  %262 = vst [vmem:[#allocation6 + $0xa8] sm:$0xff] 0.0
  %263 = vst [vmem:[#allocation6 + $0xb0] sm:$0xff] 0.0
  %264 = vst [vmem:[#allocation6 + $0xb8] sm:$0xff] 0.0
  %265 = vst [vmem:[#allocation6 + $0xc0] sm:$0xff] 0.0
  %266 = vst [vmem:[#allocation6 + $0xc8] sm:$0xff] 0.0
  %267 = vst [vmem:[#allocation6 + $0xd0] sm:$0xff] 0.0
  %268 = vst [vmem:[#allocation6 + $0xd8] sm:$0xff] 0.0
  %269 = vst [vmem:[#allocation6 + $0xe0] sm:$0xff] 0.0
  %270 = vst [vmem:[#allocation6 + $0xe8] sm:$0xff] 0.0
  %271 = vst [vmem:[#allocation6 + $0xf0] sm:$0xff] 0.0
  %272 = vst [vmem:[#allocation6 + $0xf8] sm:$0xff] 0.0
  %273 = vst [vmem:[#allocation6 + $0x100] sm:$0xff] 0.0
  %274 = vst [vmem:[#allocation6 + $0x108] sm:$0xff] 0.0
  %v275 = vld [vmem:[%s0] sm:$0xff]
  %v276 = vld [vmem:[%s0 + $0x8] sm:$0xff]
  %v277 = vld [vmem:[%s0 + $0x10] sm:$0xff]
  %v278 = vld [vmem:[%s0 + $0x18] sm:$0xf]
  %279 = vst.msk [vmem:[#allocation2 + $0x8] sm:$0xff] %vm41, %v275
  %280 = vst.msk [vmem:[#allocation2 + $0x10] sm:$0xff] %vm41, %v276
  %281 = vst.msk [vmem:[#allocation2 + $0x18] sm:$0xff] %vm41, %v277
  %vm282 = vcmask 224256
  %283 = vst.msk [vmem:[#allocation2 + $0x20] sm:$0xf] %vm282, %v278
  %s284 = scalar_lea.vmem %s0, 32
  %v285 = vld [vmem:[%s284] sm:$0xff]
  %v286 = vld [vmem:[%s284 + $0x8] sm:$0xff]
  %v287 = vld [vmem:[%s284 + $0x10] sm:$0xff]
  %v288 = vld [vmem:[%s284 + $0x18] sm:$0xf]
  %289 = vst.msk [vmem:[#allocation2 + $0x28] sm:$0xff] %vm41, %v285
  %290 = vst.msk [vmem:[#allocation2 + $0x30] sm:$0xff] %vm41, %v286
  %291 = vst.msk [vmem:[#allocation2 + $0x38] sm:$0xff] %vm41, %v287
  %292 = vst.msk [vmem:[#allocation2 + $0x40] sm:$0xf] %vm282, %v288
  %s293 = scalar_lea.vmem %s0, 64
  %v294 = vld [vmem:[%s293] sm:$0xff]
  %v295 = vld [vmem:[%s293 + $0x8] sm:$0xff]
  %v296 = vld [vmem:[%s293 + $0x10] sm:$0xff]
  %v297 = vld [vmem:[%s293 + $0x18] sm:$0xf]
  %298 = vst.msk [vmem:[#allocation2 + $0x48] sm:$0xff] %vm41, %v294
  %299 = vst.msk [vmem:[#allocation2 + $0x50] sm:$0xff] %vm41, %v295
  %300 = vst.msk [vmem:[#allocation2 + $0x58] sm:$0xff] %vm41, %v296
  %301 = vst.msk [vmem:[#allocation2 + $0x60] sm:$0xf] %vm282, %v297
  %s302 = scalar_lea.vmem %s0, 96
  %v303 = vld [vmem:[%s302] sm:$0xff]
  %v304 = vld [vmem:[%s302 + $0x8] sm:$0xff]
  %v305 = vld [vmem:[%s302 + $0x10] sm:$0xff]
  %v306 = vld [vmem:[%s302 + $0x18] sm:$0xf]
  %307 = vst.msk [vmem:[#allocation2 + $0x68] sm:$0xff] %vm41, %v303
  %308 = vst.msk [vmem:[#allocation2 + $0x70] sm:$0xff] %vm41, %v304
  %309 = vst.msk [vmem:[#allocation2 + $0x78] sm:$0xff] %vm41, %v305
  %310 = vst.msk [vmem:[#allocation2 + $0x80] sm:$0xf] %vm282, %v306
  %s311 = scalar_lea.vmem %s0, 128
  %v312 = vld [vmem:[%s311] sm:$0xff]
  %v313 = vld [vmem:[%s311 + $0x8] sm:$0xff]
  %v314 = vld [vmem:[%s311 + $0x10] sm:$0xff]
  %v315 = vld [vmem:[%s311 + $0x18] sm:$0xf]
  %316 = vst.msk [vmem:[#allocation2 + $0x88] sm:$0xff] %vm41, %v312
  %317 = vst.msk [vmem:[#allocation2 + $0x90] sm:$0xff] %vm41, %v313
  %318 = vst.msk [vmem:[#allocation2 + $0x98] sm:$0xff] %vm41, %v314
  %319 = vst.msk [vmem:[#allocation2 + $0xa0] sm:$0xf] %vm282, %v315
  %s320 = scalar_lea.vmem %s0, 160
  %v321 = vld [vmem:[%s320] sm:$0xff]
  %v322 = vld [vmem:[%s320 + $0x8] sm:$0xff]
  %v323 = vld [vmem:[%s320 + $0x10] sm:$0xff]
  %v324 = vld [vmem:[%s320 + $0x18] sm:$0xf]
  %325 = vst.msk [vmem:[#allocation2 + $0xa8] sm:$0xff] %vm41, %v321
  %326 = vst.msk [vmem:[#allocation2 + $0xb0] sm:$0xff] %vm41, %v322
  %327 = vst.msk [vmem:[#allocation2 + $0xb8] sm:$0xff] %vm41, %v323
  %328 = vst.msk [vmem:[#allocation2 + $0xc0] sm:$0xf] %vm282, %v324
  %s329 = scalar_lea.vmem %s0, 192
  %v330 = vld [vmem:[%s329] sm:$0xff]
  %v331 = vld [vmem:[%s329 + $0x8] sm:$0xff]
  %v332 = vld [vmem:[%s329 + $0x10] sm:$0xff]
  %v333 = vld [vmem:[%s329 + $0x18] sm:$0xf]
  %334 = vst.msk [vmem:[#allocation2 + $0xc8] sm:$0xff] %vm41, %v330
  %335 = vst.msk [vmem:[#allocation2 + $0xd0] sm:$0xff] %vm41, %v331
  %336 = vst.msk [vmem:[#allocation2 + $0xd8] sm:$0xff] %vm41, %v332
  %337 = vst.msk [vmem:[#allocation2 + $0xe0] sm:$0xf] %vm282, %v333
  %s338 = scalar_lea.vmem %s0, 224
  %v339 = vld [vmem:[%s338] sm:$0xff]
  %v340 = vld [vmem:[%s338 + $0x8] sm:$0xff]
  %v341 = vld [vmem:[%s338 + $0x10] sm:$0xff]
  %v342 = vld [vmem:[%s338 + $0x18] sm:$0xf]
  %343 = vst.msk [vmem:[#allocation2 + $0xe8] sm:$0xff] %vm41, %v339
  %344 = vst.msk [vmem:[#allocation2 + $0xf0] sm:$0xff] %vm41, %v340
  %345 = vst.msk [vmem:[#allocation2 + $0xf8] sm:$0xff] %vm41, %v341
  %346 = vst.msk [vmem:[#allocation2 + $0x100] sm:$0xf] %vm282, %v342
  %v347 = vld [vmem:[#allocation2 + $0x6] sm:$0xff]
  %v348 = vld [vmem:[#allocation2 + $0xe] sm:$0xff]
  %v349 = vld [vmem:[#allocation2 + $0x16] sm:$0xff]
  %v350 = vld [vmem:[#allocation2 + $0x1e] sm:$0xff]
  %v351 = vld [vmem:[#allocation2 + $0x26] sm:$0xff]
  %v352 = vld [vmem:[#allocation2 + $0x2e] sm:$0xff]
  %v353 = vld [vmem:[#allocation2 + $0x36] sm:$0xff]
  %v354 = vld [vmem:[#allocation2 + $0x3e] sm:$0xff]
  %v355 = vld [vmem:[#allocation2 + $0x46] sm:$0xff]
  %v356 = vld [vmem:[#allocation2 + $0x4e] sm:$0xff]
  %v357 = vld [vmem:[#allocation2 + $0x56] sm:$0xff]
  %v358 = vld [vmem:[#allocation2 + $0x5e] sm:$0xff]
  %v359 = vld [vmem:[#allocation2 + $0x66] sm:$0xff]
  %v360 = vld [vmem:[#allocation2 + $0x6e] sm:$0xff]
  %v361 = vld [vmem:[#allocation2 + $0x76] sm:$0xff]
  %v362 = vld [vmem:[#allocation2 + $0x7e] sm:$0xff]
  %v363 = vld [vmem:[#allocation2 + $0x86] sm:$0xff]
  %v364 = vld [vmem:[#allocation2 + $0x8e] sm:$0xff]
  %v365 = vld [vmem:[#allocation2 + $0x96] sm:$0xff]
  %v366 = vld [vmem:[#allocation2 + $0x9e] sm:$0xff]
  %v367 = vld [vmem:[#allocation2 + $0xa6] sm:$0xff]
  %v368 = vld [vmem:[#allocation2 + $0xae] sm:$0xff]
  %v369 = vld [vmem:[#allocation2 + $0xb6] sm:$0xff]
  %v370 = vld [vmem:[#allocation2 + $0xbe] sm:$0xff]
  %v371 = vld [vmem:[#allocation2 + $0xc6] sm:$0xff]
  %v372 = vld [vmem:[#allocation2 + $0xce] sm:$0xff]
  %v373 = vld [vmem:[#allocation2 + $0xd6] sm:$0xff]
  %v374 = vld [vmem:[#allocation2 + $0xde] sm:$0xff]
  %v375 = vld [vmem:[#allocation2 + $0xe6] sm:$0xff]
  %v376 = vld [vmem:[#allocation2 + $0xee] sm:$0xff]
  %v377 = vld [vmem:[#allocation2 + $0xf6] sm:$0xff]
  %v378 = vld [vmem:[#allocation2 + $0xfe] sm:$0xff]
  %v379 = vld [vmem:[%s2] sm:$0xff]
  %v380 = vld [vmem:[%s2 + $0x8] sm:$0xff]
  %v381 = vld [vmem:[%s2 + $0x10] sm:$0xff]
  %v382 = vld [vmem:[%s2 + $0x18] sm:$0xff]
  %v383 = vld [vmem:[%s2 + $0x20] sm:$0xff]
  %v384 = vld [vmem:[%s2 + $0x28] sm:$0xff]
  %v385 = vld [vmem:[%s2 + $0x30] sm:$0xf]
  %v386 = vld [vmem:[%s2 + $0x38] sm:$0xf]
  %v387 = vld [vmem:[#allocation2 + $0x7] sm:$0xff]
  %v388 = vld [vmem:[#allocation2 + $0xf] sm:$0xff]
  %v389 = vld [vmem:[#allocation2 + $0x17] sm:$0xff]
  %v390 = vld [vmem:[#allocation2 + $0x1f] sm:$0xff]
  %v391 = vld [vmem:[#allocation2 + $0x27] sm:$0xff]
  %v392 = vld [vmem:[#allocation2 + $0x2f] sm:$0xff]
  %v393 = vld [vmem:[#allocation2 + $0x37] sm:$0xff]
  %v394 = vld [vmem:[#allocation2 + $0x3f] sm:$0xff]
  %v395 = vld [vmem:[#allocation2 + $0x47] sm:$0xff]
  %v396 = vld [vmem:[#allocation2 + $0x4f] sm:$0xff]
  %v397 = vld [vmem:[#allocation2 + $0x57] sm:$0xff]
  %v398 = vld [vmem:[#allocation2 + $0x5f] sm:$0xff]
  %v399 = vld [vmem:[#allocation2 + $0x67] sm:$0xff]
  %v400 = vld [vmem:[#allocation2 + $0x6f] sm:$0xff]
  %v401 = vld [vmem:[#allocation2 + $0x77] sm:$0xff]
  %v402 = vld [vmem:[#allocation2 + $0x7f] sm:$0xff]
  %v403 = vld [vmem:[#allocation2 + $0x87] sm:$0xff]
  %v404 = vld [vmem:[#allocation2 + $0x8f] sm:$0xff]
  %v405 = vld [vmem:[#allocation2 + $0x97] sm:$0xff]
  %v406 = vld [vmem:[#allocation2 + $0x9f] sm:$0xff]
  %v407 = vld [vmem:[#allocation2 + $0xa7] sm:$0xff]
  %v408 = vld [vmem:[#allocation2 + $0xaf] sm:$0xff]
  %v409 = vld [vmem:[#allocation2 + $0xb7] sm:$0xff]
  %v410 = vld [vmem:[#allocation2 + $0xbf] sm:$0xff]
  %v411 = vld [vmem:[#allocation2 + $0xc7] sm:$0xff]
  %v412 = vld [vmem:[#allocation2 + $0xcf] sm:$0xff]
  %v413 = vld [vmem:[#allocation2 + $0xd7] sm:$0xff]
  %v414 = vld [vmem:[#allocation2 + $0xdf] sm:$0xff]
  %v415 = vld [vmem:[#allocation2 + $0xe7] sm:$0xff]
  %v416 = vld [vmem:[#allocation2 + $0xef] sm:$0xff]
  %v417 = vld [vmem:[#allocation2 + $0xf7] sm:$0xff]
  %v418 = vld [vmem:[#allocation2 + $0xff] sm:$0xff]
  %s419 = scalar_lea.vmem %s2, 64
  %v420 = vld [vmem:[%s419] sm:$0xff]
  %v421 = vld [vmem:[%s419 + $0x8] sm:$0xff]
  %v422 = vld [vmem:[%s419 + $0x10] sm:$0xff]
  %v423 = vld [vmem:[%s419 + $0x18] sm:$0xff]
  %v424 = vld [vmem:[%s419 + $0x20] sm:$0xff]
  %v425 = vld [vmem:[%s419 + $0x28] sm:$0xff]
  %v426 = vld [vmem:[%s419 + $0x30] sm:$0xf]
  %v427 = vld [vmem:[%s419 + $0x38] sm:$0xf]
  %v429 = vsel %vm41, %v387, 0
  %v432 = vsel %vm41, %v388, 0
  %v435 = vsel %vm41, %v389, 0
  %v438 = vsel %vm41, %v390, 0
  %v441 = vsel %vm41, %v391, 0
  %v444 = vsel %vm41, %v392, 0
  %v447 = vsel %vm41, %v393, 0
  %v450 = vsel %vm41, %v394, 0
  %v453 = vsel %vm41, %v395, 0
  %v456 = vsel %vm41, %v396, 0
  %v459 = vsel %vm41, %v397, 0
  %v462 = vsel %vm41, %v398, 0
  %v465 = vsel %vm41, %v399, 0
  %v468 = vsel %vm41, %v400, 0
  %v471 = vsel %vm41, %v401, 0
  %v474 = vsel %vm41, %v402, 0
  %v477 = vsel %vm41, %v403, 0
  %v480 = vsel %vm41, %v404, 0
  %v483 = vsel %vm41, %v405, 0
  %v486 = vsel %vm41, %v406, 0
  %v489 = vsel %vm41, %v407, 0
  %v492 = vsel %vm41, %v408, 0
  %v495 = vsel %vm41, %v409, 0
  %v498 = vsel %vm41, %v410, 0
  %v501 = vsel %vm41, %v411, 0
  %v504 = vsel %vm41, %v412, 0
  %v507 = vsel %vm41, %v413, 0
  %v510 = vsel %vm41, %v414, 0
  %v513 = vsel %vm41, %v415, 0
  %v516 = vsel %vm41, %v416, 0
  %v519 = vsel %vm41, %v417, 0
  %v522 = vsel %vm41, %v418, 0
  %vm524 = vcmask 1043456
  %v526 = vsel %vm524, %v426, 0
  %v529 = vsel %vm524, %v427, 0
  %531 = vmatprep.subr.mxu0 0.0
  %532 = vmatpush1.msra.mxu0 0.0
  %533 = vmatprep.subr.mxu0 0.0
  %534 = vmatpush1.msra.mxu0 0.0
  %535 = vmatprep.subr.mxu0 0.0
  %536 = vmatpush1.msra.mxu0 0.0
  %537 = vmatprep.subr.mxu0 0.0
  %538 = vmatpush1.msra.mxu0 0.0
  %539 = vmatprep.subr.mxu0 0.0
  %540 = vmatpush1.msra.mxu0 0.0
  %541 = vmatprep.subr.mxu0 0.0
  %542 = vmatpush1.msra.mxu0 0.0
  %543 = vmatprep.subr.mxu0 0.0
  %544 = vmatpush1.msra.mxu0 0.0
  %545 = vmatprep.subr.mxu0 0.0
  %546 = vmatpush1.msra.mxu0 0.0
  %547 = vmatprep.subr.mxu0 0.0
  %548 = vmatpush1.msra.mxu0 0.0
  %549 = vmatprep.subr.mxu0 0.0
  %550 = vmatpush1.msra.mxu0 0.0
  %551 = vmatprep.subr.mxu0 0.0
  %552 = vmatpush1.msra.mxu0 0.0
  %553 = vmatprep.subr.mxu0 0.0
  %554 = vmatpush1.msra.mxu0 0.0
  %555 = vmatprep.subr.mxu0 %v529
  %556 = vmatpush1.msra.mxu0 %v526
  %557 = vmatprep.subr.mxu0 %v425
  %558 = vmatpush1.msra.mxu0 %v424
  %559 = vmatprep.subr.mxu0 %v423
  %560 = vmatpush1.msra.mxu0 %v422
  %561 = vmatprep.subr.mxu0 %v421
  %562 = vmatpush1.msra.mxu0 %v420
  %563 = vmatprep.subr.mxu0 0.0
  %564 = vmatpush2.msra.mxu0 0.0
  %565 = vmatprep.subr.mxu0 0.0
  %566 = vmatpush2.msra.mxu0 0.0
  %567 = vmatprep.subr.mxu0 0.0
  %568 = vmatpush2.msra.mxu0 0.0
  %569 = vmatprep.subr.mxu0 0.0
  %570 = vmatpush2.msra.mxu0 0.0
  %571 = vmatprep.subr.mxu0 0.0
  %572 = vmatpush2.msra.mxu0 0.0
  %573 = vmatprep.subr.mxu0 0.0
  %574 = vmatpush2.msra.mxu0 0.0
  %575 = vmatprep.subr.mxu0 0.0
  %576 = vmatpush2.msra.mxu0 0.0
  %577 = vmatprep.subr.mxu0 0.0
  %578 = vmatpush2.msra.mxu0 0.0
  %579 = vmatprep.subr.mxu0 0.0
  %580 = vmatpush2.msra.mxu0 0.0
  %581 = vmatprep.subr.mxu0 0.0
  %582 = vmatpush2.msra.mxu0 0.0
  %583 = vmatprep.subr.mxu0 0.0
  %584 = vmatpush2.msra.mxu0 0.0
  %585 = vmatprep.subr.mxu0 0.0
  %586 = vmatpush2.msra.mxu0 0.0
  %587 = vmatprep.subr.mxu0 0.0
  %588 = vmatpush2.msra.mxu0 0.0
  %589 = vmatprep.subr.mxu0 0.0
  %590 = vmatpush2.msra.mxu0 0.0
  %591 = vmatprep.subr.mxu0 0.0
  %592 = vmatpush2.msra.mxu0 0.0
  %593 = vmatprep.subr.mxu0 0.0
  %594 = vmatpush2.msra.mxu0 0.0
  %595 = vmatprep.mubr.f32.mxu0 0.0
  %596 = vmatmul.mubr.f32.gmra.mxu0 %v429
  %v597 = vpop.f32.mrf.mxu0
  %v598 = vadd.f32 0.0, %v597
  %v599 = vpop.f32.mrf.mxu0
  %v600 = vadd.f32 0.0, %v599
  %601 = vmatprep.mubr.f32.mxu0 0.0
  %602 = vmatmul.mubr.f32.gmra.mxu0 %v432
  %v603 = vpop.f32.mrf.mxu0
  %v604 = vadd.f32 0.0, %v603
  %v605 = vpop.f32.mrf.mxu0
  %v606 = vadd.f32 0.0, %v605
  %607 = vmatprep.mubr.f32.mxu0 0.0
  %608 = vmatmul.mubr.f32.gmra.mxu0 %v435
  %v609 = vpop.f32.mrf.mxu0
  %v610 = vadd.f32 0.0, %v609
  %v611 = vpop.f32.mrf.mxu0
  %v612 = vadd.f32 0.0, %v611
  %613 = vmatprep.mubr.f32.mxu0 0.0
  %614 = vmatmul.mubr.f32.gmra.mxu0 %v438
  %v615 = vpop.f32.mrf.mxu0
  %v616 = vadd.f32 0.0, %v615
  %v617 = vpop.f32.mrf.mxu0
  %v618 = vadd.f32 0.0, %v617
  %619 = vmatprep.mubr.f32.mxu0 0.0
  %620 = vmatmul.mubr.f32.gmra.mxu0 %v441
  %v621 = vpop.f32.mrf.mxu0
  %v622 = vadd.f32 0.0, %v621
  %v623 = vpop.f32.mrf.mxu0
  %v624 = vadd.f32 0.0, %v623
  %625 = vmatprep.mubr.f32.mxu0 0.0
  %626 = vmatmul.mubr.f32.gmra.mxu0 %v444
  %v627 = vpop.f32.mrf.mxu0
  %v628 = vadd.f32 0.0, %v627
  %v629 = vpop.f32.mrf.mxu0
  %v630 = vadd.f32 0.0, %v629
  %631 = vmatprep.mubr.f32.mxu0 0.0
  %632 = vmatmul.mubr.f32.gmra.mxu0 %v447
  %v633 = vpop.f32.mrf.mxu0
  %v634 = vadd.f32 0.0, %v633
  %v635 = vpop.f32.mrf.mxu0
  %v636 = vadd.f32 0.0, %v635
  %637 = vmatprep.mubr.f32.mxu0 0.0
  %638 = vmatmul.mubr.f32.gmra.mxu0 %v450
  %v639 = vpop.f32.mrf.mxu0
  %v640 = vadd.f32 0.0, %v639
  %v641 = vpop.f32.mrf.mxu0
  %v642 = vadd.f32 0.0, %v641
  %643 = vmatprep.mubr.f32.mxu0 0.0
  %644 = vmatmul.mubr.f32.gmra.mxu0 %v453
  %v645 = vpop.f32.mrf.mxu0
  %v646 = vadd.f32 0.0, %v645
  %v647 = vpop.f32.mrf.mxu0
  %v648 = vadd.f32 0.0, %v647
  %649 = vmatprep.mubr.f32.mxu0 0.0
  %650 = vmatmul.mubr.f32.gmra.mxu0 %v456
  %v651 = vpop.f32.mrf.mxu0
  %v652 = vadd.f32 0.0, %v651
  %v653 = vpop.f32.mrf.mxu0
  %v654 = vadd.f32 0.0, %v653
  %655 = vmatprep.mubr.f32.mxu0 0.0
  %656 = vmatmul.mubr.f32.gmra.mxu0 %v459
  %v657 = vpop.f32.mrf.mxu0
  %v658 = vadd.f32 0.0, %v657
  %v659 = vpop.f32.mrf.mxu0
  %v660 = vadd.f32 0.0, %v659
  %661 = vmatprep.mubr.f32.mxu0 0.0
  %662 = vmatmul.mubr.f32.gmra.mxu0 %v462
  %v663 = vpop.f32.mrf.mxu0
  %v664 = vadd.f32 0.0, %v663
  %v665 = vpop.f32.mrf.mxu0
  %v666 = vadd.f32 0.0, %v665
  %667 = vmatprep.mubr.f32.mxu0 0.0
  %668 = vmatmul.mubr.f32.gmra.mxu0 %v465
  %v669 = vpop.f32.mrf.mxu0
  %v670 = vadd.f32 0.0, %v669
  %v671 = vpop.f32.mrf.mxu0
  %v672 = vadd.f32 0.0, %v671
  %673 = vmatprep.mubr.f32.mxu0 0.0
  %674 = vmatmul.mubr.f32.gmra.mxu0 %v468
  %v675 = vpop.f32.mrf.mxu0
  %v676 = vadd.f32 0.0, %v675
  %v677 = vpop.f32.mrf.mxu0
  %v678 = vadd.f32 0.0, %v677
  %679 = vmatprep.mubr.f32.mxu0 0.0
  %680 = vmatmul.mubr.f32.gmra.mxu0 %v471
  %v681 = vpop.f32.mrf.mxu0
  %v682 = vadd.f32 0.0, %v681
  %v683 = vpop.f32.mrf.mxu0
  %v684 = vadd.f32 0.0, %v683
  %685 = vmatprep.mubr.f32.mxu0 0.0
  %686 = vmatmul.mubr.f32.gmra.mxu0 %v474
  %v687 = vpop.f32.mrf.mxu0
  %v688 = vadd.f32 0.0, %v687
  %v689 = vpop.f32.mrf.mxu0
  %v690 = vadd.f32 0.0, %v689
  %691 = vmatprep.mubr.f32.mxu0 0.0
  %692 = vmatmul.mubr.f32.gmra.mxu0 %v477
  %v693 = vpop.f32.mrf.mxu0
  %v694 = vadd.f32 0.0, %v693
  %v695 = vpop.f32.mrf.mxu0
  %v696 = vadd.f32 0.0, %v695
  %697 = vmatprep.mubr.f32.mxu0 0.0
  %698 = vmatmul.mubr.f32.gmra.mxu0 %v480
  %v699 = vpop.f32.mrf.mxu0
  %v700 = vadd.f32 0.0, %v699
  %v701 = vpop.f32.mrf.mxu0
  %v702 = vadd.f32 0.0, %v701
  %703 = vmatprep.mubr.f32.mxu0 0.0
  %704 = vmatmul.mubr.f32.gmra.mxu0 %v483
  %v705 = vpop.f32.mrf.mxu0
  %v706 = vadd.f32 0.0, %v705
  %v707 = vpop.f32.mrf.mxu0
  %v708 = vadd.f32 0.0, %v707
  %709 = vmatprep.mubr.f32.mxu0 0.0
  %710 = vmatmul.mubr.f32.gmra.mxu0 %v486
  %v711 = vpop.f32.mrf.mxu0
  %v712 = vadd.f32 0.0, %v711
  %v713 = vpop.f32.mrf.mxu0
  %v714 = vadd.f32 0.0, %v713
  %715 = vmatprep.mubr.f32.mxu0 0.0
  %716 = vmatmul.mubr.f32.gmra.mxu0 %v489
  %v717 = vpop.f32.mrf.mxu0
  %v718 = vadd.f32 0.0, %v717
  %v719 = vpop.f32.mrf.mxu0
  %v720 = vadd.f32 0.0, %v719
  %721 = vmatprep.mubr.f32.mxu0 0.0
  %722 = vmatmul.mubr.f32.gmra.mxu0 %v492
  %v723 = vpop.f32.mrf.mxu0
  %v724 = vadd.f32 0.0, %v723
  %v725 = vpop.f32.mrf.mxu0
  %v726 = vadd.f32 0.0, %v725
  %727 = vmatprep.mubr.f32.mxu0 0.0
  %728 = vmatmul.mubr.f32.gmra.mxu0 %v495
  %v729 = vpop.f32.mrf.mxu0
  %v730 = vadd.f32 0.0, %v729
  %v731 = vpop.f32.mrf.mxu0
  %v732 = vadd.f32 0.0, %v731
  %733 = vmatprep.mubr.f32.mxu0 0.0
  %734 = vmatmul.mubr.f32.gmra.mxu0 %v498
  %v735 = vpop.f32.mrf.mxu0
  %v736 = vadd.f32 0.0, %v735
  %v737 = vpop.f32.mrf.mxu0
  %v738 = vadd.f32 0.0, %v737
  %739 = vmatprep.mubr.f32.mxu0 0.0
  %740 = vmatmul.mubr.f32.gmra.mxu0 %v501
  %v741 = vpop.f32.mrf.mxu0
  %v742 = vadd.f32 0.0, %v741
  %v743 = vpop.f32.mrf.mxu0
  %v744 = vadd.f32 0.0, %v743
  %745 = vmatprep.mubr.f32.mxu0 0.0
  %746 = vmatmul.mubr.f32.gmra.mxu0 %v504
  %v747 = vpop.f32.mrf.mxu0
  %v748 = vadd.f32 0.0, %v747
  %v749 = vpop.f32.mrf.mxu0
  %v750 = vadd.f32 0.0, %v749
  %751 = vmatprep.mubr.f32.mxu0 0.0
  %752 = vmatmul.mubr.f32.gmra.mxu0 %v507
  %v753 = vpop.f32.mrf.mxu0
  %v754 = vadd.f32 0.0, %v753
  %v755 = vpop.f32.mrf.mxu0
  %v756 = vadd.f32 0.0, %v755
  %757 = vmatprep.mubr.f32.mxu0 0.0
  %758 = vmatmul.mubr.f32.gmra.mxu0 %v510
  %v759 = vpop.f32.mrf.mxu0
  %v760 = vadd.f32 0.0, %v759
  %v761 = vpop.f32.mrf.mxu0
  %v762 = vadd.f32 0.0, %v761
  %763 = vmatprep.mubr.f32.mxu0 0.0
  %764 = vmatmul.mubr.f32.gmra.mxu0 %v513
  %v765 = vpop.f32.mrf.mxu0
  %v766 = vadd.f32 0.0, %v765
  %v767 = vpop.f32.mrf.mxu0
  %v768 = vadd.f32 0.0, %v767
  %769 = vmatprep.mubr.f32.mxu0 0.0
  %770 = vmatmul.mubr.f32.gmra.mxu0 %v516
  %v771 = vpop.f32.mrf.mxu0
  %v772 = vadd.f32 0.0, %v771
  %v773 = vpop.f32.mrf.mxu0
  %v774 = vadd.f32 0.0, %v773
  %775 = vmatprep.mubr.f32.mxu0 0.0
  %776 = vmatmul.mubr.f32.gmra.mxu0 %v519
  %v777 = vpop.f32.mrf.mxu0
  %v778 = vadd.f32 0.0, %v777
  %v779 = vpop.f32.mrf.mxu0
  %v780 = vadd.f32 0.0, %v779
  %781 = vmatprep.mubr.f32.mxu0 0.0
  %782 = vmatmul.mubr.f32.gmra.mxu0 %v522
  %v783 = vpop.f32.mrf.mxu0
  %v784 = vadd.f32 0.0, %v783
  %v785 = vpop.f32.mrf.mxu0
  %v786 = vadd.f32 0.0, %v785
  %787 = vdwg.mxu0
  %v789 = vsel %vm41, %v347, 0
  %v792 = vsel %vm41, %v348, 0
  %v795 = vsel %vm41, %v349, 0
  %v798 = vsel %vm41, %v350, 0
  %v801 = vsel %vm41, %v351, 0
  %v804 = vsel %vm41, %v352, 0
  %v807 = vsel %vm41, %v353, 0
  %v810 = vsel %vm41, %v354, 0
  %v813 = vsel %vm41, %v355, 0
  %v816 = vsel %vm41, %v356, 0
  %v819 = vsel %vm41, %v357, 0
  %v822 = vsel %vm41, %v358, 0
  %v825 = vsel %vm41, %v359, 0
  %v828 = vsel %vm41, %v360, 0
  %v831 = vsel %vm41, %v361, 0
  %v834 = vsel %vm41, %v362, 0
  %v837 = vsel %vm41, %v363, 0
  %v840 = vsel %vm41, %v364, 0
  %v843 = vsel %vm41, %v365, 0
  %v846 = vsel %vm41, %v366, 0
  %v849 = vsel %vm41, %v367, 0
  %v852 = vsel %vm41, %v368, 0
  %v855 = vsel %vm41, %v369, 0
  %v858 = vsel %vm41, %v370, 0
  %v861 = vsel %vm41, %v371, 0
  %v864 = vsel %vm41, %v372, 0
  %v867 = vsel %vm41, %v373, 0
  %v870 = vsel %vm41, %v374, 0
  %v873 = vsel %vm41, %v375, 0
  %v876 = vsel %vm41, %v376, 0
  %v879 = vsel %vm41, %v377, 0
  %v882 = vsel %vm41, %v378, 0
  %v885 = vsel %vm524, %v385, 0
  %v888 = vsel %vm524, %v386, 0
  %890 = vmatprep.subr.mxu0 0.0
  %891 = vmatpush1.msra.mxu0 0.0
  %892 = vmatprep.subr.mxu0 0.0
  %893 = vmatpush1.msra.mxu0 0.0
  %894 = vmatprep.subr.mxu0 0.0
  %895 = vmatpush1.msra.mxu0 0.0
  %896 = vmatprep.subr.mxu0 0.0
  %897 = vmatpush1.msra.mxu0 0.0
  %898 = vmatprep.subr.mxu0 0.0
  %899 = vmatpush1.msra.mxu0 0.0
  %900 = vmatprep.subr.mxu0 0.0
  %901 = vmatpush1.msra.mxu0 0.0
  %902 = vmatprep.subr.mxu0 0.0
  %903 = vmatpush1.msra.mxu0 0.0
  %904 = vmatprep.subr.mxu0 0.0
  %905 = vmatpush1.msra.mxu0 0.0
  %906 = vmatprep.subr.mxu0 0.0
  %907 = vmatpush1.msra.mxu0 0.0
  %908 = vmatprep.subr.mxu0 0.0
  %909 = vmatpush1.msra.mxu0 0.0
  %910 = vmatprep.subr.mxu0 0.0
  %911 = vmatpush1.msra.mxu0 0.0
  %912 = vmatprep.subr.mxu0 0.0
  %913 = vmatpush1.msra.mxu0 0.0
  %914 = vmatprep.subr.mxu0 %v888
  %915 = vmatpush1.msra.mxu0 %v885
  %916 = vmatprep.subr.mxu0 %v384
  %917 = vmatpush1.msra.mxu0 %v383
  %918 = vmatprep.subr.mxu0 %v382
  %919 = vmatpush1.msra.mxu0 %v381
  %920 = vmatprep.subr.mxu0 %v380
  %921 = vmatpush1.msra.mxu0 %v379
  %922 = vmatprep.subr.mxu0 0.0
  %923 = vmatpush2.msra.mxu0 0.0
  %924 = vmatprep.subr.mxu0 0.0
  %925 = vmatpush2.msra.mxu0 0.0
  %926 = vmatprep.subr.mxu0 0.0
  %927 = vmatpush2.msra.mxu0 0.0
  %928 = vmatprep.subr.mxu0 0.0
  %929 = vmatpush2.msra.mxu0 0.0
  %930 = vmatprep.subr.mxu0 0.0
  %931 = vmatpush2.msra.mxu0 0.0
  %932 = vmatprep.subr.mxu0 0.0
  %933 = vmatpush2.msra.mxu0 0.0
  %934 = vmatprep.subr.mxu0 0.0
  %935 = vmatpush2.msra.mxu0 0.0
  %936 = vmatprep.subr.mxu0 0.0
  %937 = vmatpush2.msra.mxu0 0.0
  %938 = vmatprep.subr.mxu0 0.0
  %939 = vmatpush2.msra.mxu0 0.0
  %940 = vmatprep.subr.mxu0 0.0
  %941 = vmatpush2.msra.mxu0 0.0
  %942 = vmatprep.subr.mxu0 0.0
  %943 = vmatpush2.msra.mxu0 0.0
  %944 = vmatprep.subr.mxu0 0.0
  %945 = vmatpush2.msra.mxu0 0.0
  %946 = vmatprep.subr.mxu0 0.0
  %947 = vmatpush2.msra.mxu0 0.0
  %948 = vmatprep.subr.mxu0 0.0
  %949 = vmatpush2.msra.mxu0 0.0
  %950 = vmatprep.subr.mxu0 0.0
  %951 = vmatpush2.msra.mxu0 0.0
  %952 = vmatprep.subr.mxu0 0.0
  %953 = vmatpush2.msra.mxu0 0.0
  %954 = vmatprep.mubr.f32.mxu0 0.0
  %955 = vmatmul.mubr.f32.gmra.mxu0 %v789
  %v956 = vpop.f32.mrf.mxu0
  %v957 = vadd.f32 %v598, %v956
  %v958 = vpop.f32.mrf.mxu0
  %v959 = vadd.f32 %v600, %v958
  %960 = vmatprep.mubr.f32.mxu0 0.0
  %961 = vmatmul.mubr.f32.gmra.mxu0 %v792
  %v962 = vpop.f32.mrf.mxu0
  %v963 = vadd.f32 %v604, %v962
  %v964 = vpop.f32.mrf.mxu0
  %v965 = vadd.f32 %v606, %v964
  %966 = vmatprep.mubr.f32.mxu0 0.0
  %967 = vmatmul.mubr.f32.gmra.mxu0 %v795
  %v968 = vpop.f32.mrf.mxu0
  %v969 = vadd.f32 %v610, %v968
  %v970 = vpop.f32.mrf.mxu0
  %v971 = vadd.f32 %v612, %v970
  %972 = vmatprep.mubr.f32.mxu0 0.0
  %973 = vmatmul.mubr.f32.gmra.mxu0 %v798
  %v974 = vpop.f32.mrf.mxu0
  %v975 = vadd.f32 %v616, %v974
  %v976 = vpop.f32.mrf.mxu0
  %v977 = vadd.f32 %v618, %v976
  %978 = vmatprep.mubr.f32.mxu0 0.0
  %979 = vmatmul.mubr.f32.gmra.mxu0 %v801
  %v980 = vpop.f32.mrf.mxu0
  %v981 = vadd.f32 %v622, %v980
  %v982 = vpop.f32.mrf.mxu0
  %v983 = vadd.f32 %v624, %v982
  %984 = vmatprep.mubr.f32.mxu0 0.0
  %985 = vmatmul.mubr.f32.gmra.mxu0 %v804
  %v986 = vpop.f32.mrf.mxu0
  %v987 = vadd.f32 %v628, %v986
  %v988 = vpop.f32.mrf.mxu0
  %v989 = vadd.f32 %v630, %v988
  %990 = vmatprep.mubr.f32.mxu0 0.0
  %991 = vmatmul.mubr.f32.gmra.mxu0 %v807
  %v992 = vpop.f32.mrf.mxu0
  %v993 = vadd.f32 %v634, %v992
  %v994 = vpop.f32.mrf.mxu0
  %v995 = vadd.f32 %v636, %v994
  %996 = vmatprep.mubr.f32.mxu0 0.0
  %997 = vmatmul.mubr.f32.gmra.mxu0 %v810
  %v998 = vpop.f32.mrf.mxu0
  %v999 = vadd.f32 %v640, %v998
  %v1000 = vpop.f32.mrf.mxu0
  %v1001 = vadd.f32 %v642, %v1000
  %1002 = vmatprep.mubr.f32.mxu0 0.0
  %1003 = vmatmul.mubr.f32.gmra.mxu0 %v813
  %v1004 = vpop.f32.mrf.mxu0
  %v1005 = vadd.f32 %v646, %v1004
  %v1006 = vpop.f32.mrf.mxu0
  %v1007 = vadd.f32 %v648, %v1006
  %1008 = vmatprep.mubr.f32.mxu0 0.0
  %1009 = vmatmul.mubr.f32.gmra.mxu0 %v816
  %v1010 = vpop.f32.mrf.mxu0
  %v1011 = vadd.f32 %v652, %v1010
  %v1012 = vpop.f32.mrf.mxu0
  %v1013 = vadd.f32 %v654, %v1012
  %1014 = vmatprep.mubr.f32.mxu0 0.0
  %1015 = vmatmul.mubr.f32.gmra.mxu0 %v819
  %v1016 = vpop.f32.mrf.mxu0
  %v1017 = vadd.f32 %v658, %v1016
  %v1018 = vpop.f32.mrf.mxu0
  %v1019 = vadd.f32 %v660, %v1018
  %1020 = vmatprep.mubr.f32.mxu0 0.0
  %1021 = vmatmul.mubr.f32.gmra.mxu0 %v822
  %v1022 = vpop.f32.mrf.mxu0
  %v1023 = vadd.f32 %v664, %v1022
  %v1024 = vpop.f32.mrf.mxu0
  %v1025 = vadd.f32 %v666, %v1024
  %1026 = vmatprep.mubr.f32.mxu0 0.0
  %1027 = vmatmul.mubr.f32.gmra.mxu0 %v825
  %v1028 = vpop.f32.mrf.mxu0
  %v1029 = vadd.f32 %v670, %v1028
  %v1030 = vpop.f32.mrf.mxu0
  %v1031 = vadd.f32 %v672, %v1030
  %1032 = vmatprep.mubr.f32.mxu0 0.0
  %1033 = vmatmul.mubr.f32.gmra.mxu0 %v828
  %v1034 = vpop.f32.mrf.mxu0
  %v1035 = vadd.f32 %v676, %v1034
  %v1036 = vpop.f32.mrf.mxu0
  %v1037 = vadd.f32 %v678, %v1036
  %1038 = vmatprep.mubr.f32.mxu0 0.0
  %1039 = vmatmul.mubr.f32.gmra.mxu0 %v831
  %v1040 = vpop.f32.mrf.mxu0
  %v1041 = vadd.f32 %v682, %v1040
  %v1042 = vpop.f32.mrf.mxu0
  %v1043 = vadd.f32 %v684, %v1042
  %1044 = vmatprep.mubr.f32.mxu0 0.0
  %1045 = vmatmul.mubr.f32.gmra.mxu0 %v834
  %v1046 = vpop.f32.mrf.mxu0
  %v1047 = vadd.f32 %v688, %v1046
  %v1048 = vpop.f32.mrf.mxu0
  %v1049 = vadd.f32 %v690, %v1048
  %1050 = vmatprep.mubr.f32.mxu0 0.0
  %1051 = vmatmul.mubr.f32.gmra.mxu0 %v837
  %v1052 = vpop.f32.mrf.mxu0
  %v1053 = vadd.f32 %v694, %v1052
  %v1054 = vpop.f32.mrf.mxu0
  %v1055 = vadd.f32 %v696, %v1054
  %1056 = vmatprep.mubr.f32.mxu0 0.0
  %1057 = vmatmul.mubr.f32.gmra.mxu0 %v840
  %v1058 = vpop.f32.mrf.mxu0
  %v1059 = vadd.f32 %v700, %v1058
  %v1060 = vpop.f32.mrf.mxu0
  %v1061 = vadd.f32 %v702, %v1060
  %1062 = vmatprep.mubr.f32.mxu0 0.0
  %1063 = vmatmul.mubr.f32.gmra.mxu0 %v843
  %v1064 = vpop.f32.mrf.mxu0
  %v1065 = vadd.f32 %v706, %v1064
  %v1066 = vpop.f32.mrf.mxu0
  %v1067 = vadd.f32 %v708, %v1066
  %1068 = vmatprep.mubr.f32.mxu0 0.0
  %1069 = vmatmul.mubr.f32.gmra.mxu0 %v846
  %v1070 = vpop.f32.mrf.mxu0
  %v1071 = vadd.f32 %v712, %v1070
  %v1072 = vpop.f32.mrf.mxu0
  %v1073 = vadd.f32 %v714, %v1072
  %1074 = vmatprep.mubr.f32.mxu0 0.0
  %1075 = vmatmul.mubr.f32.gmra.mxu0 %v849
  %v1076 = vpop.f32.mrf.mxu0
  %v1077 = vadd.f32 %v718, %v1076
  %v1078 = vpop.f32.mrf.mxu0
  %v1079 = vadd.f32 %v720, %v1078
  %1080 = vmatprep.mubr.f32.mxu0 0.0
  %1081 = vmatmul.mubr.f32.gmra.mxu0 %v852
  %v1082 = vpop.f32.mrf.mxu0
  %v1083 = vadd.f32 %v724, %v1082
  %v1084 = vpop.f32.mrf.mxu0
  %v1085 = vadd.f32 %v726, %v1084
  %1086 = vmatprep.mubr.f32.mxu0 0.0
  %1087 = vmatmul.mubr.f32.gmra.mxu0 %v855
  %v1088 = vpop.f32.mrf.mxu0
  %v1089 = vadd.f32 %v730, %v1088
  %v1090 = vpop.f32.mrf.mxu0
  %v1091 = vadd.f32 %v732, %v1090
  %1092 = vmatprep.mubr.f32.mxu0 0.0
  %1093 = vmatmul.mubr.f32.gmra.mxu0 %v858
  %v1094 = vpop.f32.mrf.mxu0
  %v1095 = vadd.f32 %v736, %v1094
  %v1096 = vpop.f32.mrf.mxu0
  %v1097 = vadd.f32 %v738, %v1096
  %1098 = vmatprep.mubr.f32.mxu0 0.0
  %1099 = vmatmul.mubr.f32.gmra.mxu0 %v861
  %v1100 = vpop.f32.mrf.mxu0
  %v1101 = vadd.f32 %v742, %v1100
  %v1102 = vpop.f32.mrf.mxu0
  %v1103 = vadd.f32 %v744, %v1102
  %1104 = vmatprep.mubr.f32.mxu0 0.0
  %1105 = vmatmul.mubr.f32.gmra.mxu0 %v864
  %v1106 = vpop.f32.mrf.mxu0
  %v1107 = vadd.f32 %v748, %v1106
  %v1108 = vpop.f32.mrf.mxu0
  %v1109 = vadd.f32 %v750, %v1108
  %1110 = vmatprep.mubr.f32.mxu0 0.0
  %1111 = vmatmul.mubr.f32.gmra.mxu0 %v867
  %v1112 = vpop.f32.mrf.mxu0
  %v1113 = vadd.f32 %v754, %v1112
  %v1114 = vpop.f32.mrf.mxu0
  %v1115 = vadd.f32 %v756, %v1114
  %1116 = vmatprep.mubr.f32.mxu0 0.0
  %1117 = vmatmul.mubr.f32.gmra.mxu0 %v870
  %v1118 = vpop.f32.mrf.mxu0
  %v1119 = vadd.f32 %v760, %v1118
  %v1120 = vpop.f32.mrf.mxu0
  %v1121 = vadd.f32 %v762, %v1120
  %1122 = vmatprep.mubr.f32.mxu0 0.0
  %1123 = vmatmul.mubr.f32.gmra.mxu0 %v873
  %v1124 = vpop.f32.mrf.mxu0
  %v1125 = vadd.f32 %v766, %v1124
  %v1126 = vpop.f32.mrf.mxu0
  %v1127 = vadd.f32 %v768, %v1126
  %1128 = vmatprep.mubr.f32.mxu0 0.0
  %1129 = vmatmul.mubr.f32.gmra.mxu0 %v876
  %v1130 = vpop.f32.mrf.mxu0
  %v1131 = vadd.f32 %v772, %v1130
  %v1132 = vpop.f32.mrf.mxu0
  %v1133 = vadd.f32 %v774, %v1132
  %1134 = vmatprep.mubr.f32.mxu0 0.0
  %1135 = vmatmul.mubr.f32.gmra.mxu0 %v879
  %v1136 = vpop.f32.mrf.mxu0
  %v1137 = vadd.f32 %v778, %v1136
  %v1138 = vpop.f32.mrf.mxu0
  %v1139 = vadd.f32 %v780, %v1138
  %1140 = vmatprep.mubr.f32.mxu0 0.0
  %1141 = vmatmul.mubr.f32.gmra.mxu0 %v882
  %v1142 = vpop.f32.mrf.mxu0
  %v1143 = vadd.f32 %v784, %v1142
  %v1144 = vpop.f32.mrf.mxu0
  %v1145 = vadd.f32 %v786, %v1144
  %1146 = vdwg.mxu0
  %v1147 = vld [vmem:[#allocation2 + $0x8] sm:$0xff]
  %v1148 = vld [vmem:[#allocation2 + $0x10] sm:$0xff]
  %v1149 = vld [vmem:[#allocation2 + $0x18] sm:$0xff]
  %v1150 = vld [vmem:[#allocation2 + $0x20] sm:$0xff]
  %v1151 = vld [vmem:[#allocation2 + $0x28] sm:$0xff]
  %v1152 = vld [vmem:[#allocation2 + $0x30] sm:$0xff]
  %v1153 = vld [vmem:[#allocation2 + $0x38] sm:$0xff]
  %v1154 = vld [vmem:[#allocation2 + $0x40] sm:$0xff]
  %v1155 = vld [vmem:[#allocation2 + $0x48] sm:$0xff]
  %v1156 = vld [vmem:[#allocation2 + $0x50] sm:$0xff]
  %v1157 = vld [vmem:[#allocation2 + $0x58] sm:$0xff]
  %v1158 = vld [vmem:[#allocation2 + $0x60] sm:$0xff]
  %v1159 = vld [vmem:[#allocation2 + $0x68] sm:$0xff]
  %v1160 = vld [vmem:[#allocation2 + $0x70] sm:$0xff]
  %v1161 = vld [vmem:[#allocation2 + $0x78] sm:$0xff]
  %v1162 = vld [vmem:[#allocation2 + $0x80] sm:$0xff]
  %v1163 = vld [vmem:[#allocation2 + $0x88] sm:$0xff]
  %v1164 = vld [vmem:[#allocation2 + $0x90] sm:$0xff]
  %v1165 = vld [vmem:[#allocation2 + $0x98] sm:$0xff]
  %v1166 = vld [vmem:[#allocation2 + $0xa0] sm:$0xff]
  %v1167 = vld [vmem:[#allocation2 + $0xa8] sm:$0xff]
  %v1168 = vld [vmem:[#allocation2 + $0xb0] sm:$0xff]
  %v1169 = vld [vmem:[#allocation2 + $0xb8] sm:$0xff]
  %v1170 = vld [vmem:[#allocation2 + $0xc0] sm:$0xff]
  %v1171 = vld [vmem:[#allocation2 + $0xc8] sm:$0xff]
  %v1172 = vld [vmem:[#allocation2 + $0xd0] sm:$0xff]
  %v1173 = vld [vmem:[#allocation2 + $0xd8] sm:$0xff]
  %v1174 = vld [vmem:[#allocation2 + $0xe0] sm:$0xff]
  %v1175 = vld [vmem:[#allocation2 + $0xe8] sm:$0xff]
  %v1176 = vld [vmem:[#allocation2 + $0xf0] sm:$0xff]
  %v1177 = vld [vmem:[#allocation2 + $0xf8] sm:$0xff]
  %v1178 = vld [vmem:[#allocation2 + $0x100] sm:$0xff]
  %s1179 = scalar_lea.vmem %s2, 128
  %v1180 = vld [vmem:[%s1179] sm:$0xff]
  %v1181 = vld [vmem:[%s1179 + $0x8] sm:$0xff]
  %v1182 = vld [vmem:[%s1179 + $0x10] sm:$0xff]
  %v1183 = vld [vmem:[%s1179 + $0x18] sm:$0xff]
  %v1184 = vld [vmem:[%s1179 + $0x20] sm:$0xff]
  %v1185 = vld [vmem:[%s1179 + $0x28] sm:$0xff]
  %v1186 = vld [vmem:[%s1179 + $0x30] sm:$0xf]
  %v1187 = vld [vmem:[%s1179 + $0x38] sm:$0xf]
  %v1189 = vsel %vm41, %v1147, 0
  %v1192 = vsel %vm41, %v1148, 0
  %v1195 = vsel %vm41, %v1149, 0
  %v1198 = vsel %vm41, %v1150, 0
  %v1201 = vsel %vm41, %v1151, 0
  %v1204 = vsel %vm41, %v1152, 0
  %v1207 = vsel %vm41, %v1153, 0
  %v1210 = vsel %vm41, %v1154, 0
  %v1213 = vsel %vm41, %v1155, 0
  %v1216 = vsel %vm41, %v1156, 0
  %v1219 = vsel %vm41, %v1157, 0
  %v1222 = vsel %vm41, %v1158, 0
  %v1225 = vsel %vm41, %v1159, 0
  %v1228 = vsel %vm41, %v1160, 0
  %v1231 = vsel %vm41, %v1161, 0
  %v1234 = vsel %vm41, %v1162, 0
  %v1237 = vsel %vm41, %v1163, 0
  %v1240 = vsel %vm41, %v1164, 0
  %v1243 = vsel %vm41, %v1165, 0
  %v1246 = vsel %vm41, %v1166, 0
  %v1249 = vsel %vm41, %v1167, 0
  %v1252 = vsel %vm41, %v1168, 0
  %v1255 = vsel %vm41, %v1169, 0
  %v1258 = vsel %vm41, %v1170, 0
  %v1261 = vsel %vm41, %v1171, 0
  %v1264 = vsel %vm41, %v1172, 0
  %v1267 = vsel %vm41, %v1173, 0
  %v1270 = vsel %vm41, %v1174, 0
  %v1273 = vsel %vm41, %v1175, 0
  %v1276 = vsel %vm41, %v1176, 0
  %v1279 = vsel %vm41, %v1177, 0
  %v1282 = vsel %vm41, %v1178, 0
  %v1285 = vsel %vm524, %v1186, 0
  %v1288 = vsel %vm524, %v1187, 0
  %1290 = vmatprep.subr.mxu0 0.0
  %1291 = vmatpush1.msra.mxu0 0.0
  %1292 = vmatprep.subr.mxu0 0.0
  %1293 = vmatpush1.msra.mxu0 0.0
  %1294 = vmatprep.subr.mxu0 0.0
  %1295 = vmatpush1.msra.mxu0 0.0
  %1296 = vmatprep.subr.mxu0 0.0
  %1297 = vmatpush1.msra.mxu0 0.0
  %1298 = vmatprep.subr.mxu0 0.0
  %1299 = vmatpush1.msra.mxu0 0.0
  %1300 = vmatprep.subr.mxu0 0.0
  %1301 = vmatpush1.msra.mxu0 0.0
  %1302 = vmatprep.subr.mxu0 0.0
  %1303 = vmatpush1.msra.mxu0 0.0
  %1304 = vmatprep.subr.mxu0 0.0
  %1305 = vmatpush1.msra.mxu0 0.0
  %1306 = vmatprep.subr.mxu0 0.0
  %1307 = vmatpush1.msra.mxu0 0.0
  %1308 = vmatprep.subr.mxu0 0.0
  %1309 = vmatpush1.msra.mxu0 0.0
  %1310 = vmatprep.subr.mxu0 0.0
  %1311 = vmatpush1.msra.mxu0 0.0
  %1312 = vmatprep.subr.mxu0 0.0
  %1313 = vmatpush1.msra.mxu0 0.0
  %1314 = vmatprep.subr.mxu0 %v1288
  %1315 = vmatpush1.msra.mxu0 %v1285
  %1316 = vmatprep.subr.mxu0 %v1185
  %1317 = vmatpush1.msra.mxu0 %v1184
  %1318 = vmatprep.subr.mxu0 %v1183
  %1319 = vmatpush1.msra.mxu0 %v1182
  %1320 = vmatprep.subr.mxu0 %v1181
  %1321 = vmatpush1.msra.mxu0 %v1180
  %1322 = vmatprep.subr.mxu0 0.0
  %1323 = vmatpush2.msra.mxu0 0.0
  %1324 = vmatprep.subr.mxu0 0.0
  %1325 = vmatpush2.msra.mxu0 0.0
  %1326 = vmatprep.subr.mxu0 0.0
  %1327 = vmatpush2.msra.mxu0 0.0
  %1328 = vmatprep.subr.mxu0 0.0
  %1329 = vmatpush2.msra.mxu0 0.0
  %1330 = vmatprep.subr.mxu0 0.0
  %1331 = vmatpush2.msra.mxu0 0.0
  %1332 = vmatprep.subr.mxu0 0.0
  %1333 = vmatpush2.msra.mxu0 0.0
  %1334 = vmatprep.subr.mxu0 0.0
  %1335 = vmatpush2.msra.mxu0 0.0
  %1336 = vmatprep.subr.mxu0 0.0
  %1337 = vmatpush2.msra.mxu0 0.0
  %1338 = vmatprep.subr.mxu0 0.0
  %1339 = vmatpush2.msra.mxu0 0.0
  %1340 = vmatprep.subr.mxu0 0.0
  %1341 = vmatpush2.msra.mxu0 0.0
  %1342 = vmatprep.subr.mxu0 0.0
  %1343 = vmatpush2.msra.mxu0 0.0
  %1344 = vmatprep.subr.mxu0 0.0
  %1345 = vmatpush2.msra.mxu0 0.0
  %1346 = vmatprep.subr.mxu0 0.0
  %1347 = vmatpush2.msra.mxu0 0.0
  %1348 = vmatprep.subr.mxu0 0.0
  %1349 = vmatpush2.msra.mxu0 0.0
  %1350 = vmatprep.subr.mxu0 0.0
  %1351 = vmatpush2.msra.mxu0 0.0
  %1352 = vmatprep.subr.mxu0 0.0
  %1353 = vmatpush2.msra.mxu0 0.0
  %1354 = vmatprep.mubr.f32.mxu0 0.0
  %1355 = vmatmul.mubr.f32.gmra.mxu0 %v1189
  %v1356 = vpop.f32.mrf.mxu0
  %v1357 = vadd.f32 0.0, %v1356
  %v1358 = vpop.f32.mrf.mxu0
  %v1359 = vadd.f32 0.0, %v1358
  %1360 = vmatprep.mubr.f32.mxu0 0.0
  %1361 = vmatmul.mubr.f32.gmra.mxu0 %v1192
  %v1362 = vpop.f32.mrf.mxu0
  %v1363 = vadd.f32 0.0, %v1362
  %v1364 = vpop.f32.mrf.mxu0
  %v1365 = vadd.f32 0.0, %v1364
  %1366 = vmatprep.mubr.f32.mxu0 0.0
  %1367 = vmatmul.mubr.f32.gmra.mxu0 %v1195
  %v1368 = vpop.f32.mrf.mxu0
  %v1369 = vadd.f32 0.0, %v1368
  %v1370 = vpop.f32.mrf.mxu0
  %v1371 = vadd.f32 0.0, %v1370
  %1372 = vmatprep.mubr.f32.mxu0 0.0
  %1373 = vmatmul.mubr.f32.gmra.mxu0 %v1198
  %v1374 = vpop.f32.mrf.mxu0
  %v1375 = vadd.f32 0.0, %v1374
  %v1376 = vpop.f32.mrf.mxu0
  %v1377 = vadd.f32 0.0, %v1376
  %1378 = vmatprep.mubr.f32.mxu0 0.0
  %1379 = vmatmul.mubr.f32.gmra.mxu0 %v1201
  %v1380 = vpop.f32.mrf.mxu0
  %v1381 = vadd.f32 0.0, %v1380
  %v1382 = vpop.f32.mrf.mxu0
  %v1383 = vadd.f32 0.0, %v1382
  %1384 = vmatprep.mubr.f32.mxu0 0.0
  %1385 = vmatmul.mubr.f32.gmra.mxu0 %v1204
  %v1386 = vpop.f32.mrf.mxu0
  %v1387 = vadd.f32 0.0, %v1386
  %v1388 = vpop.f32.mrf.mxu0
  %v1389 = vadd.f32 0.0, %v1388
  %1390 = vmatprep.mubr.f32.mxu0 0.0
  %1391 = vmatmul.mubr.f32.gmra.mxu0 %v1207
  %v1392 = vpop.f32.mrf.mxu0
  %v1393 = vadd.f32 0.0, %v1392
  %v1394 = vpop.f32.mrf.mxu0
  %v1395 = vadd.f32 0.0, %v1394
  %1396 = vmatprep.mubr.f32.mxu0 0.0
  %1397 = vmatmul.mubr.f32.gmra.mxu0 %v1210
  %v1398 = vpop.f32.mrf.mxu0
  %v1399 = vadd.f32 0.0, %v1398
  %v1400 = vpop.f32.mrf.mxu0
  %v1401 = vadd.f32 0.0, %v1400
  %1402 = vmatprep.mubr.f32.mxu0 0.0
  %1403 = vmatmul.mubr.f32.gmra.mxu0 %v1213
  %v1404 = vpop.f32.mrf.mxu0
  %v1405 = vadd.f32 0.0, %v1404
  %v1406 = vpop.f32.mrf.mxu0
  %v1407 = vadd.f32 0.0, %v1406
  %1408 = vmatprep.mubr.f32.mxu0 0.0
  %1409 = vmatmul.mubr.f32.gmra.mxu0 %v1216
  %v1410 = vpop.f32.mrf.mxu0
  %v1411 = vadd.f32 0.0, %v1410
  %v1412 = vpop.f32.mrf.mxu0
  %v1413 = vadd.f32 0.0, %v1412
  %1414 = vmatprep.mubr.f32.mxu0 0.0
  %1415 = vmatmul.mubr.f32.gmra.mxu0 %v1219
  %v1416 = vpop.f32.mrf.mxu0
  %v1417 = vadd.f32 0.0, %v1416
  %v1418 = vpop.f32.mrf.mxu0
  %v1419 = vadd.f32 0.0, %v1418
  %1420 = vmatprep.mubr.f32.mxu0 0.0
  %1421 = vmatmul.mubr.f32.gmra.mxu0 %v1222
  %v1422 = vpop.f32.mrf.mxu0
  %v1423 = vadd.f32 0.0, %v1422
  %v1424 = vpop.f32.mrf.mxu0
  %v1425 = vadd.f32 0.0, %v1424
  %1426 = vmatprep.mubr.f32.mxu0 0.0
  %1427 = vmatmul.mubr.f32.gmra.mxu0 %v1225
  %v1428 = vpop.f32.mrf.mxu0
  %v1429 = vadd.f32 0.0, %v1428
  %v1430 = vpop.f32.mrf.mxu0
  %v1431 = vadd.f32 0.0, %v1430
  %1432 = vmatprep.mubr.f32.mxu0 0.0
  %1433 = vmatmul.mubr.f32.gmra.mxu0 %v1228
  %v1434 = vpop.f32.mrf.mxu0
  %v1435 = vadd.f32 0.0, %v1434
  %v1436 = vpop.f32.mrf.mxu0
  %v1437 = vadd.f32 0.0, %v1436
  %1438 = vmatprep.mubr.f32.mxu0 0.0
  %1439 = vmatmul.mubr.f32.gmra.mxu0 %v1231
  %v1440 = vpop.f32.mrf.mxu0
  %v1441 = vadd.f32 0.0, %v1440
  %v1442 = vpop.f32.mrf.mxu0
  %v1443 = vadd.f32 0.0, %v1442
  %1444 = vmatprep.mubr.f32.mxu0 0.0
  %1445 = vmatmul.mubr.f32.gmra.mxu0 %v1234
  %v1446 = vpop.f32.mrf.mxu0
  %v1447 = vadd.f32 0.0, %v1446
  %v1448 = vpop.f32.mrf.mxu0
  %v1449 = vadd.f32 0.0, %v1448
  %1450 = vmatprep.mubr.f32.mxu0 0.0
  %1451 = vmatmul.mubr.f32.gmra.mxu0 %v1237
  %v1452 = vpop.f32.mrf.mxu0
  %v1453 = vadd.f32 0.0, %v1452
  %v1454 = vpop.f32.mrf.mxu0
  %v1455 = vadd.f32 0.0, %v1454
  %1456 = vmatprep.mubr.f32.mxu0 0.0
  %1457 = vmatmul.mubr.f32.gmra.mxu0 %v1240
  %v1458 = vpop.f32.mrf.mxu0
  %v1459 = vadd.f32 0.0, %v1458
  %v1460 = vpop.f32.mrf.mxu0
  %v1461 = vadd.f32 0.0, %v1460
  %1462 = vmatprep.mubr.f32.mxu0 0.0
  %1463 = vmatmul.mubr.f32.gmra.mxu0 %v1243
  %v1464 = vpop.f32.mrf.mxu0
  %v1465 = vadd.f32 0.0, %v1464
  %v1466 = vpop.f32.mrf.mxu0
  %v1467 = vadd.f32 0.0, %v1466
  %1468 = vmatprep.mubr.f32.mxu0 0.0
  %1469 = vmatmul.mubr.f32.gmra.mxu0 %v1246
  %v1470 = vpop.f32.mrf.mxu0
  %v1471 = vadd.f32 0.0, %v1470
  %v1472 = vpop.f32.mrf.mxu0
  %v1473 = vadd.f32 0.0, %v1472
  %1474 = vmatprep.mubr.f32.mxu0 0.0
  %1475 = vmatmul.mubr.f32.gmra.mxu0 %v1249
  %v1476 = vpop.f32.mrf.mxu0
  %v1477 = vadd.f32 0.0, %v1476
  %v1478 = vpop.f32.mrf.mxu0
  %v1479 = vadd.f32 0.0, %v1478
  %1480 = vmatprep.mubr.f32.mxu0 0.0
  %1481 = vmatmul.mubr.f32.gmra.mxu0 %v1252
  %v1482 = vpop.f32.mrf.mxu0
  %v1483 = vadd.f32 0.0, %v1482
  %v1484 = vpop.f32.mrf.mxu0
  %v1485 = vadd.f32 0.0, %v1484
  %1486 = vmatprep.mubr.f32.mxu0 0.0
  %1487 = vmatmul.mubr.f32.gmra.mxu0 %v1255
  %v1488 = vpop.f32.mrf.mxu0
  %v1489 = vadd.f32 0.0, %v1488
  %v1490 = vpop.f32.mrf.mxu0
  %v1491 = vadd.f32 0.0, %v1490
  %1492 = vmatprep.mubr.f32.mxu0 0.0
  %1493 = vmatmul.mubr.f32.gmra.mxu0 %v1258
  %v1494 = vpop.f32.mrf.mxu0
  %v1495 = vadd.f32 0.0, %v1494
  %v1496 = vpop.f32.mrf.mxu0
  %v1497 = vadd.f32 0.0, %v1496
  %1498 = vmatprep.mubr.f32.mxu0 0.0
  %1499 = vmatmul.mubr.f32.gmra.mxu0 %v1261
  %v1500 = vpop.f32.mrf.mxu0
  %v1501 = vadd.f32 0.0, %v1500
  %v1502 = vpop.f32.mrf.mxu0
  %v1503 = vadd.f32 0.0, %v1502
  %1504 = vmatprep.mubr.f32.mxu0 0.0
  %1505 = vmatmul.mubr.f32.gmra.mxu0 %v1264
  %v1506 = vpop.f32.mrf.mxu0
  %v1507 = vadd.f32 0.0, %v1506
  %v1508 = vpop.f32.mrf.mxu0
  %v1509 = vadd.f32 0.0, %v1508
  %1510 = vmatprep.mubr.f32.mxu0 0.0
  %1511 = vmatmul.mubr.f32.gmra.mxu0 %v1267
  %v1512 = vpop.f32.mrf.mxu0
  %v1513 = vadd.f32 0.0, %v1512
  %v1514 = vpop.f32.mrf.mxu0
  %v1515 = vadd.f32 0.0, %v1514
  %1516 = vmatprep.mubr.f32.mxu0 0.0
  %1517 = vmatmul.mubr.f32.gmra.mxu0 %v1270
  %v1518 = vpop.f32.mrf.mxu0
  %v1519 = vadd.f32 0.0, %v1518
  %v1520 = vpop.f32.mrf.mxu0
  %v1521 = vadd.f32 0.0, %v1520
  %1522 = vmatprep.mubr.f32.mxu0 0.0
  %1523 = vmatmul.mubr.f32.gmra.mxu0 %v1273
  %v1524 = vpop.f32.mrf.mxu0
  %v1525 = vadd.f32 0.0, %v1524
  %v1526 = vpop.f32.mrf.mxu0
  %v1527 = vadd.f32 0.0, %v1526
  %1528 = vmatprep.mubr.f32.mxu0 0.0
  %1529 = vmatmul.mubr.f32.gmra.mxu0 %v1276
  %v1530 = vpop.f32.mrf.mxu0
  %v1531 = vadd.f32 0.0, %v1530
  %v1532 = vpop.f32.mrf.mxu0
  %v1533 = vadd.f32 0.0, %v1532
  %1534 = vmatprep.mubr.f32.mxu0 0.0
  %1535 = vmatmul.mubr.f32.gmra.mxu0 %v1279
  %v1536 = vpop.f32.mrf.mxu0
  %v1537 = vadd.f32 0.0, %v1536
  %v1538 = vpop.f32.mrf.mxu0
  %v1539 = vadd.f32 0.0, %v1538
  %1540 = vmatprep.mubr.f32.mxu0 0.0
  %1541 = vmatmul.mubr.f32.gmra.mxu0 %v1282
  %v1542 = vpop.f32.mrf.mxu0
  %v1543 = vadd.f32 0.0, %v1542
  %v1544 = vpop.f32.mrf.mxu0
  %v1545 = vadd.f32 0.0, %v1544
  %1546 = vdwg.mxu0
  %v1547 = vadd.f32 %v957, %v1357
  %v1548 = vadd.f32 %v959, %v1359
  %v1549 = vadd.f32 %v963, %v1363
  %v1550 = vadd.f32 %v965, %v1365
  %v1551 = vadd.f32 %v969, %v1369
  %v1552 = vadd.f32 %v971, %v1371
  %v1553 = vadd.f32 %v975, %v1375
  %v1554 = vadd.f32 %v977, %v1377
  %v1555 = vadd.f32 %v981, %v1381
  %v1556 = vadd.f32 %v983, %v1383
  %v1557 = vadd.f32 %v987, %v1387
  %v1558 = vadd.f32 %v989, %v1389
  %v1559 = vadd.f32 %v993, %v1393
  %v1560 = vadd.f32 %v995, %v1395
  %v1561 = vadd.f32 %v999, %v1399
  %v1562 = vadd.f32 %v1001, %v1401
  %v1563 = vadd.f32 %v1005, %v1405
  %v1564 = vadd.f32 %v1007, %v1407
  %v1565 = vadd.f32 %v1011, %v1411
  %v1566 = vadd.f32 %v1013, %v1413
  %v1567 = vadd.f32 %v1017, %v1417
  %v1568 = vadd.f32 %v1019, %v1419
  %v1569 = vadd.f32 %v1023, %v1423
  %v1570 = vadd.f32 %v1025, %v1425
  %v1571 = vadd.f32 %v1029, %v1429
  %v1572 = vadd.f32 %v1031, %v1431
  %v1573 = vadd.f32 %v1035, %v1435
  %v1574 = vadd.f32 %v1037, %v1437
  %v1575 = vadd.f32 %v1041, %v1441
  %v1576 = vadd.f32 %v1043, %v1443
  %v1577 = vadd.f32 %v1047, %v1447
  %v1578 = vadd.f32 %v1049, %v1449
  %v1579 = vadd.f32 %v1053, %v1453
  %v1580 = vadd.f32 %v1055, %v1455
  %v1581 = vadd.f32 %v1059, %v1459
  %v1582 = vadd.f32 %v1061, %v1461
  %v1583 = vadd.f32 %v1065, %v1465
  %v1584 = vadd.f32 %v1067, %v1467
  %v1585 = vadd.f32 %v1071, %v1471
  %v1586 = vadd.f32 %v1073, %v1473
  %v1587 = vadd.f32 %v1077, %v1477
  %v1588 = vadd.f32 %v1079, %v1479
  %v1589 = vadd.f32 %v1083, %v1483
  %v1590 = vadd.f32 %v1085, %v1485
  %v1591 = vadd.f32 %v1089, %v1489
  %v1592 = vadd.f32 %v1091, %v1491
  %v1593 = vadd.f32 %v1095, %v1495
  %v1594 = vadd.f32 %v1097, %v1497
  %v1595 = vadd.f32 %v1101, %v1501
  %v1596 = vadd.f32 %v1103, %v1503
  %v1597 = vadd.f32 %v1107, %v1507
  %v1598 = vadd.f32 %v1109, %v1509
  %v1599 = vadd.f32 %v1113, %v1513
  %v1600 = vadd.f32 %v1115, %v1515
  %v1601 = vadd.f32 %v1119, %v1519
  %v1602 = vadd.f32 %v1121, %v1521
  %v1603 = vadd.f32 %v1125, %v1525
  %v1604 = vadd.f32 %v1127, %v1527
  %v1605 = vadd.f32 %v1131, %v1531
  %v1606 = vadd.f32 %v1133, %v1533
  %v1607 = vadd.f32 %v1137, %v1537
  %v1608 = vadd.f32 %v1139, %v1539
  %v1609 = vadd.f32 %v1143, %v1543
  %v1610 = vadd.f32 %v1145, %v1545
  %v1611 = vld [vmem:[#allocation2 + $0x9] sm:$0xff]
  %v1612 = vld [vmem:[#allocation2 + $0x11] sm:$0xff]
  %v1613 = vld [vmem:[#allocation2 + $0x19] sm:$0xff]
  %v1614 = vld [vmem:[#allocation2 + $0x21] sm:$0xff]
  %v1615 = vld [vmem:[#allocation2 + $0x29] sm:$0xff]
  %v1616 = vld [vmem:[#allocation2 + $0x31] sm:$0xff]
  %v1617 = vld [vmem:[#allocation2 + $0x39] sm:$0xff]
  %v1618 = vld [vmem:[#allocation2 + $0x41] sm:$0xff]
  %v1619 = vld [vmem:[#allocation2 + $0x49] sm:$0xff]
  %v1620 = vld [vmem:[#allocation2 + $0x51] sm:$0xff]
  %v1621 = vld [vmem:[#allocation2 + $0x59] sm:$0xff]
  %v1622 = vld [vmem:[#allocation2 + $0x61] sm:$0xff]
  %v1623 = vld [vmem:[#allocation2 + $0x69] sm:$0xff]
  %v1624 = vld [vmem:[#allocation2 + $0x71] sm:$0xff]
  %v1625 = vld [vmem:[#allocation2 + $0x79] sm:$0xff]
  %v1626 = vld [vmem:[#allocation2 + $0x81] sm:$0xff]
  %v1627 = vld [vmem:[#allocation2 + $0x89] sm:$0xff]
  %v1628 = vld [vmem:[#allocation2 + $0x91] sm:$0xff]
  %v1629 = vld [vmem:[#allocation2 + $0x99] sm:$0xff]
  %v1630 = vld [vmem:[#allocation2 + $0xa1] sm:$0xff]
  %v1631 = vld [vmem:[#allocation2 + $0xa9] sm:$0xff]
  %v1632 = vld [vmem:[#allocation2 + $0xb1] sm:$0xff]
  %v1633 = vld [vmem:[#allocation2 + $0xb9] sm:$0xff]
  %v1634 = vld [vmem:[#allocation2 + $0xc1] sm:$0xff]
  %v1635 = vld [vmem:[#allocation2 + $0xc9] sm:$0xff]
  %v1636 = vld [vmem:[#allocation2 + $0xd1] sm:$0xff]
  %v1637 = vld [vmem:[#allocation2 + $0xd9] sm:$0xff]
  %v1638 = vld [vmem:[#allocation2 + $0xe1] sm:$0xff]
  %v1639 = vld [vmem:[#allocation2 + $0xe9] sm:$0xff]
  %v1640 = vld [vmem:[#allocation2 + $0xf1] sm:$0xff]
  %v1641 = vld [vmem:[#allocation2 + $0xf9] sm:$0xff]
  %v1642 = vld [vmem:[#allocation2 + $0x101] sm:$0xff]
  %s1643 = scalar_lea.vmem %s2, 192
  %v1644 = vld [vmem:[%s1643] sm:$0xff]
  %v1645 = vld [vmem:[%s1643 + $0x8] sm:$0xff]
  %v1646 = vld [vmem:[%s1643 + $0x10] sm:$0xff]
  %v1647 = vld [vmem:[%s1643 + $0x18] sm:$0xff]
  %v1648 = vld [vmem:[%s1643 + $0x20] sm:$0xff]
  %v1649 = vld [vmem:[%s1643 + $0x28] sm:$0xff]
  %v1650 = vld [vmem:[%s1643 + $0x30] sm:$0xf]
  %v1651 = vld [vmem:[%s1643 + $0x38] sm:$0xf]
  %v1653 = vsel %vm41, %v1611, 0
  %v1656 = vsel %vm41, %v1612, 0
  %v1659 = vsel %vm41, %v1613, 0
  %v1662 = vsel %vm41, %v1614, 0
  %v1665 = vsel %vm41, %v1615, 0
  %v1668 = vsel %vm41, %v1616, 0
  %v1671 = vsel %vm41, %v1617, 0
  %v1674 = vsel %vm41, %v1618, 0
  %v1677 = vsel %vm41, %v1619, 0
  %v1680 = vsel %vm41, %v1620, 0
  %v1683 = vsel %vm41, %v1621, 0
  %v1686 = vsel %vm41, %v1622, 0
  %v1689 = vsel %vm41, %v1623, 0
  %v1692 = vsel %vm41, %v1624, 0
  %v1695 = vsel %vm41, %v1625, 0
  %v1698 = vsel %vm41, %v1626, 0
  %v1701 = vsel %vm41, %v1627, 0
  %v1704 = vsel %vm41, %v1628, 0
  %v1707 = vsel %vm41, %v1629, 0
  %v1710 = vsel %vm41, %v1630, 0
  %v1713 = vsel %vm41, %v1631, 0
  %v1716 = vsel %vm41, %v1632, 0
  %v1719 = vsel %vm41, %v1633, 0
  %v1722 = vsel %vm41, %v1634, 0
  %v1725 = vsel %vm41, %v1635, 0
  %v1728 = vsel %vm41, %v1636, 0
  %v1731 = vsel %vm41, %v1637, 0
  %v1734 = vsel %vm41, %v1638, 0
  %v1737 = vsel %vm41, %v1639, 0
  %v1740 = vsel %vm41, %v1640, 0
  %v1743 = vsel %vm41, %v1641, 0
  %v1746 = vsel %vm41, %v1642, 0
  %v1749 = vsel %vm524, %v1650, 0
  %v1752 = vsel %vm524, %v1651, 0
  %1754 = vmatprep.subr.mxu0 0.0
  %1755 = vmatpush1.msra.mxu0 0.0
  %1756 = vmatprep.subr.mxu0 0.0
  %1757 = vmatpush1.msra.mxu0 0.0
  %1758 = vmatprep.subr.mxu0 0.0
  %1759 = vmatpush1.msra.mxu0 0.0
  %1760 = vmatprep.subr.mxu0 0.0
  %1761 = vmatpush1.msra.mxu0 0.0
  %1762 = vmatprep.subr.mxu0 0.0
  %1763 = vmatpush1.msra.mxu0 0.0
  %1764 = vmatprep.subr.mxu0 0.0
  %1765 = vmatpush1.msra.mxu0 0.0
  %1766 = vmatprep.subr.mxu0 0.0
  %1767 = vmatpush1.msra.mxu0 0.0
  %1768 = vmatprep.subr.mxu0 0.0
  %1769 = vmatpush1.msra.mxu0 0.0
  %1770 = vmatprep.subr.mxu0 0.0
  %1771 = vmatpush1.msra.mxu0 0.0
  %1772 = vmatprep.subr.mxu0 0.0
  %1773 = vmatpush1.msra.mxu0 0.0
  %1774 = vmatprep.subr.mxu0 0.0
  %1775 = vmatpush1.msra.mxu0 0.0
  %1776 = vmatprep.subr.mxu0 0.0
  %1777 = vmatpush1.msra.mxu0 0.0
  %1778 = vmatprep.subr.mxu0 %v1752
  %1779 = vmatpush1.msra.mxu0 %v1749
  %1780 = vmatprep.subr.mxu0 %v1649
  %1781 = vmatpush1.msra.mxu0 %v1648
  %1782 = vmatprep.subr.mxu0 %v1647
  %1783 = vmatpush1.msra.mxu0 %v1646
  %1784 = vmatprep.subr.mxu0 %v1645
  %1785 = vmatpush1.msra.mxu0 %v1644
  %1786 = vmatprep.subr.mxu0 0.0
  %1787 = vmatpush2.msra.mxu0 0.0
  %1788 = vmatprep.subr.mxu0 0.0
  %1789 = vmatpush2.msra.mxu0 0.0
  %1790 = vmatprep.subr.mxu0 0.0
  %1791 = vmatpush2.msra.mxu0 0.0
  %1792 = vmatprep.subr.mxu0 0.0
  %1793 = vmatpush2.msra.mxu0 0.0
  %1794 = vmatprep.subr.mxu0 0.0
  %1795 = vmatpush2.msra.mxu0 0.0
  %1796 = vmatprep.subr.mxu0 0.0
  %1797 = vmatpush2.msra.mxu0 0.0
  %1798 = vmatprep.subr.mxu0 0.0
  %1799 = vmatpush2.msra.mxu0 0.0
  %1800 = vmatprep.subr.mxu0 0.0
  %1801 = vmatpush2.msra.mxu0 0.0
  %1802 = vmatprep.subr.mxu0 0.0
  %1803 = vmatpush2.msra.mxu0 0.0
  %1804 = vmatprep.subr.mxu0 0.0
  %1805 = vmatpush2.msra.mxu0 0.0
  %1806 = vmatprep.subr.mxu0 0.0
  %1807 = vmatpush2.msra.mxu0 0.0
  %1808 = vmatprep.subr.mxu0 0.0
  %1809 = vmatpush2.msra.mxu0 0.0
  %1810 = vmatprep.subr.mxu0 0.0
  %1811 = vmatpush2.msra.mxu0 0.0
  %1812 = vmatprep.subr.mxu0 0.0
  %1813 = vmatpush2.msra.mxu0 0.0
  %1814 = vmatprep.subr.mxu0 0.0
  %1815 = vmatpush2.msra.mxu0 0.0
  %1816 = vmatprep.subr.mxu0 0.0
  %1817 = vmatpush2.msra.mxu0 0.0
  %1818 = vmatprep.mubr.f32.mxu0 0.0
  %1819 = vmatmul.mubr.f32.gmra.mxu0 %v1653
  %v1820 = vpop.f32.mrf.mxu0
  %v1821 = vadd.f32 0.0, %v1820
  %v1822 = vpop.f32.mrf.mxu0
  %v1823 = vadd.f32 0.0, %v1822
  %1824 = vmatprep.mubr.f32.mxu0 0.0
  %1825 = vmatmul.mubr.f32.gmra.mxu0 %v1656
  %v1826 = vpop.f32.mrf.mxu0
  %v1827 = vadd.f32 0.0, %v1826
  %v1828 = vpop.f32.mrf.mxu0
  %v1829 = vadd.f32 0.0, %v1828
  %1830 = vmatprep.mubr.f32.mxu0 0.0
  %1831 = vmatmul.mubr.f32.gmra.mxu0 %v1659
  %v1832 = vpop.f32.mrf.mxu0
  %v1833 = vadd.f32 0.0, %v1832
  %v1834 = vpop.f32.mrf.mxu0
  %v1835 = vadd.f32 0.0, %v1834
  %1836 = vmatprep.mubr.f32.mxu0 0.0
  %1837 = vmatmul.mubr.f32.gmra.mxu0 %v1662
  %v1838 = vpop.f32.mrf.mxu0
  %v1839 = vadd.f32 0.0, %v1838
  %v1840 = vpop.f32.mrf.mxu0
  %v1841 = vadd.f32 0.0, %v1840
  %1842 = vmatprep.mubr.f32.mxu0 0.0
  %1843 = vmatmul.mubr.f32.gmra.mxu0 %v1665
  %v1844 = vpop.f32.mrf.mxu0
  %v1845 = vadd.f32 0.0, %v1844
  %v1846 = vpop.f32.mrf.mxu0
  %v1847 = vadd.f32 0.0, %v1846
  %1848 = vmatprep.mubr.f32.mxu0 0.0
  %1849 = vmatmul.mubr.f32.gmra.mxu0 %v1668
  %v1850 = vpop.f32.mrf.mxu0
  %v1851 = vadd.f32 0.0, %v1850
  %v1852 = vpop.f32.mrf.mxu0
  %v1853 = vadd.f32 0.0, %v1852
  %1854 = vmatprep.mubr.f32.mxu0 0.0
  %1855 = vmatmul.mubr.f32.gmra.mxu0 %v1671
  %v1856 = vpop.f32.mrf.mxu0
  %v1857 = vadd.f32 0.0, %v1856
  %v1858 = vpop.f32.mrf.mxu0
  %v1859 = vadd.f32 0.0, %v1858
  %1860 = vmatprep.mubr.f32.mxu0 0.0
  %1861 = vmatmul.mubr.f32.gmra.mxu0 %v1674
  %v1862 = vpop.f32.mrf.mxu0
  %v1863 = vadd.f32 0.0, %v1862
  %v1864 = vpop.f32.mrf.mxu0
  %v1865 = vadd.f32 0.0, %v1864
  %1866 = vmatprep.mubr.f32.mxu0 0.0
  %1867 = vmatmul.mubr.f32.gmra.mxu0 %v1677
  %v1868 = vpop.f32.mrf.mxu0
  %v1869 = vadd.f32 0.0, %v1868
  %v1870 = vpop.f32.mrf.mxu0
  %v1871 = vadd.f32 0.0, %v1870
  %1872 = vmatprep.mubr.f32.mxu0 0.0
  %1873 = vmatmul.mubr.f32.gmra.mxu0 %v1680
  %v1874 = vpop.f32.mrf.mxu0
  %v1875 = vadd.f32 0.0, %v1874
  %v1876 = vpop.f32.mrf.mxu0
  %v1877 = vadd.f32 0.0, %v1876
  %1878 = vmatprep.mubr.f32.mxu0 0.0
  %1879 = vmatmul.mubr.f32.gmra.mxu0 %v1683
  %v1880 = vpop.f32.mrf.mxu0
  %v1881 = vadd.f32 0.0, %v1880
  %v1882 = vpop.f32.mrf.mxu0
  %v1883 = vadd.f32 0.0, %v1882
  %1884 = vmatprep.mubr.f32.mxu0 0.0
  %1885 = vmatmul.mubr.f32.gmra.mxu0 %v1686
  %v1886 = vpop.f32.mrf.mxu0
  %v1887 = vadd.f32 0.0, %v1886
  %v1888 = vpop.f32.mrf.mxu0
  %v1889 = vadd.f32 0.0, %v1888
  %1890 = vmatprep.mubr.f32.mxu0 0.0
  %1891 = vmatmul.mubr.f32.gmra.mxu0 %v1689
  %v1892 = vpop.f32.mrf.mxu0
  %v1893 = vadd.f32 0.0, %v1892
  %v1894 = vpop.f32.mrf.mxu0
  %v1895 = vadd.f32 0.0, %v1894
  %1896 = vmatprep.mubr.f32.mxu0 0.0
  %1897 = vmatmul.mubr.f32.gmra.mxu0 %v1692
  %v1898 = vpop.f32.mrf.mxu0
  %v1899 = vadd.f32 0.0, %v1898
  %v1900 = vpop.f32.mrf.mxu0
  %v1901 = vadd.f32 0.0, %v1900
  %1902 = vmatprep.mubr.f32.mxu0 0.0
  %1903 = vmatmul.mubr.f32.gmra.mxu0 %v1695
  %v1904 = vpop.f32.mrf.mxu0
  %v1905 = vadd.f32 0.0, %v1904
  %v1906 = vpop.f32.mrf.mxu0
  %v1907 = vadd.f32 0.0, %v1906
  %1908 = vmatprep.mubr.f32.mxu0 0.0
  %1909 = vmatmul.mubr.f32.gmra.mxu0 %v1698
  %v1910 = vpop.f32.mrf.mxu0
  %v1911 = vadd.f32 0.0, %v1910
  %v1912 = vpop.f32.mrf.mxu0
  %v1913 = vadd.f32 0.0, %v1912
  %1914 = vmatprep.mubr.f32.mxu0 0.0
  %1915 = vmatmul.mubr.f32.gmra.mxu0 %v1701
  %v1916 = vpop.f32.mrf.mxu0
  %v1917 = vadd.f32 0.0, %v1916
  %v1918 = vpop.f32.mrf.mxu0
  %v1919 = vadd.f32 0.0, %v1918
  %1920 = vmatprep.mubr.f32.mxu0 0.0
  %1921 = vmatmul.mubr.f32.gmra.mxu0 %v1704
  %v1922 = vpop.f32.mrf.mxu0
  %v1923 = vadd.f32 0.0, %v1922
  %v1924 = vpop.f32.mrf.mxu0
  %v1925 = vadd.f32 0.0, %v1924
  %1926 = vmatprep.mubr.f32.mxu0 0.0
  %1927 = vmatmul.mubr.f32.gmra.mxu0 %v1707
  %v1928 = vpop.f32.mrf.mxu0
  %v1929 = vadd.f32 0.0, %v1928
  %v1930 = vpop.f32.mrf.mxu0
  %v1931 = vadd.f32 0.0, %v1930
  %1932 = vmatprep.mubr.f32.mxu0 0.0
  %1933 = vmatmul.mubr.f32.gmra.mxu0 %v1710
  %v1934 = vpop.f32.mrf.mxu0
  %v1935 = vadd.f32 0.0, %v1934
  %v1936 = vpop.f32.mrf.mxu0
  %v1937 = vadd.f32 0.0, %v1936
  %1938 = vmatprep.mubr.f32.mxu0 0.0
  %1939 = vmatmul.mubr.f32.gmra.mxu0 %v1713
  %v1940 = vpop.f32.mrf.mxu0
  %v1941 = vadd.f32 0.0, %v1940
  %v1942 = vpop.f32.mrf.mxu0
  %v1943 = vadd.f32 0.0, %v1942
  %1944 = vmatprep.mubr.f32.mxu0 0.0
  %1945 = vmatmul.mubr.f32.gmra.mxu0 %v1716
  %v1946 = vpop.f32.mrf.mxu0
  %v1947 = vadd.f32 0.0, %v1946
  %v1948 = vpop.f32.mrf.mxu0
  %v1949 = vadd.f32 0.0, %v1948
  %1950 = vmatprep.mubr.f32.mxu0 0.0
  %1951 = vmatmul.mubr.f32.gmra.mxu0 %v1719
  %v1952 = vpop.f32.mrf.mxu0
  %v1953 = vadd.f32 0.0, %v1952
  %v1954 = vpop.f32.mrf.mxu0
  %v1955 = vadd.f32 0.0, %v1954
  %1956 = vmatprep.mubr.f32.mxu0 0.0
  %1957 = vmatmul.mubr.f32.gmra.mxu0 %v1722
  %v1958 = vpop.f32.mrf.mxu0
  %v1959 = vadd.f32 0.0, %v1958
  %v1960 = vpop.f32.mrf.mxu0
  %v1961 = vadd.f32 0.0, %v1960
  %1962 = vmatprep.mubr.f32.mxu0 0.0
  %1963 = vmatmul.mubr.f32.gmra.mxu0 %v1725
  %v1964 = vpop.f32.mrf.mxu0
  %v1965 = vadd.f32 0.0, %v1964
  %v1966 = vpop.f32.mrf.mxu0
  %v1967 = vadd.f32 0.0, %v1966
  %1968 = vmatprep.mubr.f32.mxu0 0.0
  %1969 = vmatmul.mubr.f32.gmra.mxu0 %v1728
  %v1970 = vpop.f32.mrf.mxu0
  %v1971 = vadd.f32 0.0, %v1970
  %v1972 = vpop.f32.mrf.mxu0
  %v1973 = vadd.f32 0.0, %v1972
  %1974 = vmatprep.mubr.f32.mxu0 0.0
  %1975 = vmatmul.mubr.f32.gmra.mxu0 %v1731
  %v1976 = vpop.f32.mrf.mxu0
  %v1977 = vadd.f32 0.0, %v1976
  %v1978 = vpop.f32.mrf.mxu0
  %v1979 = vadd.f32 0.0, %v1978
  %1980 = vmatprep.mubr.f32.mxu0 0.0
  %1981 = vmatmul.mubr.f32.gmra.mxu0 %v1734
  %v1982 = vpop.f32.mrf.mxu0
  %v1983 = vadd.f32 0.0, %v1982
  %v1984 = vpop.f32.mrf.mxu0
  %v1985 = vadd.f32 0.0, %v1984
  %1986 = vmatprep.mubr.f32.mxu0 0.0
  %1987 = vmatmul.mubr.f32.gmra.mxu0 %v1737
  %v1988 = vpop.f32.mrf.mxu0
  %v1989 = vadd.f32 0.0, %v1988
  %v1990 = vpop.f32.mrf.mxu0
  %v1991 = vadd.f32 0.0, %v1990
  %1992 = vmatprep.mubr.f32.mxu0 0.0
  %1993 = vmatmul.mubr.f32.gmra.mxu0 %v1740
  %v1994 = vpop.f32.mrf.mxu0
  %v1995 = vadd.f32 0.0, %v1994
  %v1996 = vpop.f32.mrf.mxu0
  %v1997 = vadd.f32 0.0, %v1996
  %1998 = vmatprep.mubr.f32.mxu0 0.0
  %1999 = vmatmul.mubr.f32.gmra.mxu0 %v1743
  %v2000 = vpop.f32.mrf.mxu0
  %v2001 = vadd.f32 0.0, %v2000
  %v2002 = vpop.f32.mrf.mxu0
  %v2003 = vadd.f32 0.0, %v2002
  %2004 = vmatprep.mubr.f32.mxu0 0.0
  %2005 = vmatmul.mubr.f32.gmra.mxu0 %v1746
  %v2006 = vpop.f32.mrf.mxu0
  %v2007 = vadd.f32 0.0, %v2006
  %v2008 = vpop.f32.mrf.mxu0
  %v2009 = vadd.f32 0.0, %v2008
  %2010 = vdwg.mxu0
  %v2011 = vadd.f32 %v1547, %v1821
  %v2012 = vadd.f32 %v1548, %v1823
  %v2013 = vadd.f32 %v1549, %v1827
  %v2014 = vadd.f32 %v1550, %v1829
  %v2015 = vadd.f32 %v1551, %v1833
  %v2016 = vadd.f32 %v1552, %v1835
  %v2017 = vadd.f32 %v1553, %v1839
  %v2018 = vadd.f32 %v1554, %v1841
  %v2019 = vadd.f32 %v1555, %v1845
  %v2020 = vadd.f32 %v1556, %v1847
  %v2021 = vadd.f32 %v1557, %v1851
  %v2022 = vadd.f32 %v1558, %v1853
  %v2023 = vadd.f32 %v1559, %v1857
  %v2024 = vadd.f32 %v1560, %v1859
  %v2025 = vadd.f32 %v1561, %v1863
  %v2026 = vadd.f32 %v1562, %v1865
  %v2027 = vadd.f32 %v1563, %v1869
  %v2028 = vadd.f32 %v1564, %v1871
  %v2029 = vadd.f32 %v1565, %v1875
  %v2030 = vadd.f32 %v1566, %v1877
  %v2031 = vadd.f32 %v1567, %v1881
  %v2032 = vadd.f32 %v1568, %v1883
  %v2033 = vadd.f32 %v1569, %v1887
  %v2034 = vadd.f32 %v1570, %v1889
  %v2035 = vadd.f32 %v1571, %v1893
  %v2036 = vadd.f32 %v1572, %v1895
  %v2037 = vadd.f32 %v1573, %v1899
  %v2038 = vadd.f32 %v1574, %v1901
  %v2039 = vadd.f32 %v1575, %v1905
  %v2040 = vadd.f32 %v1576, %v1907
  %v2041 = vadd.f32 %v1577, %v1911
  %v2042 = vadd.f32 %v1578, %v1913
  %v2043 = vadd.f32 %v1579, %v1917
  %v2044 = vadd.f32 %v1580, %v1919
  %v2045 = vadd.f32 %v1581, %v1923
  %v2046 = vadd.f32 %v1582, %v1925
  %v2047 = vadd.f32 %v1583, %v1929
  %v2048 = vadd.f32 %v1584, %v1931
  %v2049 = vadd.f32 %v1585, %v1935
  %v2050 = vadd.f32 %v1586, %v1937
  %v2051 = vadd.f32 %v1587, %v1941
  %v2052 = vadd.f32 %v1588, %v1943
  %v2053 = vadd.f32 %v1589, %v1947
  %v2054 = vadd.f32 %v1590, %v1949
  %v2055 = vadd.f32 %v1591, %v1953
  %v2056 = vadd.f32 %v1592, %v1955
  %v2057 = vadd.f32 %v1593, %v1959
  %v2058 = vadd.f32 %v1594, %v1961
  %v2059 = vadd.f32 %v1595, %v1965
  %v2060 = vadd.f32 %v1596, %v1967
  %v2061 = vadd.f32 %v1597, %v1971
  %v2062 = vadd.f32 %v1598, %v1973
  %v2063 = vadd.f32 %v1599, %v1977
  %v2064 = vadd.f32 %v1600, %v1979
  %v2065 = vadd.f32 %v1601, %v1983
  %v2066 = vadd.f32 %v1602, %v1985
  %v2067 = vadd.f32 %v1603, %v1989
  %v2068 = vadd.f32 %v1604, %v1991
  %v2069 = vadd.f32 %v1605, %v1995
  %v2070 = vadd.f32 %v1606, %v1997
  %v2071 = vadd.f32 %v1607, %v2001
  %v2072 = vadd.f32 %v1608, %v2003
  %v2073 = vadd.f32 %v1609, %v2007
  %v2074 = vadd.f32 %v1610, %v2009
  %v2075 = vld [vmem:[#allocation2 + $0xa] sm:$0xff]
  %v2076 = vld [vmem:[#allocation2 + $0x12] sm:$0xff]
  %v2077 = vld [vmem:[#allocation2 + $0x1a] sm:$0xff]
  %v2078 = vld [vmem:[#allocation2 + $0x22] sm:$0xff]
  %v2079 = vld [vmem:[#allocation2 + $0x2a] sm:$0xff]
  %v2080 = vld [vmem:[#allocation2 + $0x32] sm:$0xff]
  %v2081 = vld [vmem:[#allocation2 + $0x3a] sm:$0xff]
  %v2082 = vld [vmem:[#allocation2 + $0x42] sm:$0xff]
  %v2083 = vld [vmem:[#allocation2 + $0x4a] sm:$0xff]
  %v2084 = vld [vmem:[#allocation2 + $0x52] sm:$0xff]
  %v2085 = vld [vmem:[#allocation2 + $0x5a] sm:$0xff]
  %v2086 = vld [vmem:[#allocation2 + $0x62] sm:$0xff]
  %v2087 = vld [vmem:[#allocation2 + $0x6a] sm:$0xff]
  %v2088 = vld [vmem:[#allocation2 + $0x72] sm:$0xff]
  %v2089 = vld [vmem:[#allocation2 + $0x7a] sm:$0xff]
  %v2090 = vld [vmem:[#allocation2 + $0x82] sm:$0xff]
  %v2091 = vld [vmem:[#allocation2 + $0x8a] sm:$0xff]
  %v2092 = vld [vmem:[#allocation2 + $0x92] sm:$0xff]
  %v2093 = vld [vmem:[#allocation2 + $0x9a] sm:$0xff]
  %v2094 = vld [vmem:[#allocation2 + $0xa2] sm:$0xff]
  %v2095 = vld [vmem:[#allocation2 + $0xaa] sm:$0xff]
  %v2096 = vld [vmem:[#allocation2 + $0xb2] sm:$0xff]
  %v2097 = vld [vmem:[#allocation2 + $0xba] sm:$0xff]
  %v2098 = vld [vmem:[#allocation2 + $0xc2] sm:$0xff]
  %v2099 = vld [vmem:[#allocation2 + $0xca] sm:$0xff]
  %v2100 = vld [vmem:[#allocation2 + $0xd2] sm:$0xff]
  %v2101 = vld [vmem:[#allocation2 + $0xda] sm:$0xff]
  %v2102 = vld [vmem:[#allocation2 + $0xe2] sm:$0xff]
  %v2103 = vld [vmem:[#allocation2 + $0xea] sm:$0xff]
  %v2104 = vld [vmem:[#allocation2 + $0xf2] sm:$0xff]
  %v2105 = vld [vmem:[#allocation2 + $0xfa] sm:$0xff]
  %v2106 = vld [vmem:[#allocation2 + $0x102] sm:$0xff]
  %s2107 = scalar_lea.vmem %s2, 256
  %v2108 = vld [vmem:[%s2107] sm:$0xff]
  %v2109 = vld [vmem:[%s2107 + $0x8] sm:$0xff]
  %v2110 = vld [vmem:[%s2107 + $0x10] sm:$0xff]
  %v2111 = vld [vmem:[%s2107 + $0x18] sm:$0xff]
  %v2112 = vld [vmem:[%s2107 + $0x20] sm:$0xff]
  %v2113 = vld [vmem:[%s2107 + $0x28] sm:$0xff]
  %v2114 = vld [vmem:[%s2107 + $0x30] sm:$0xf]
  %v2115 = vld [vmem:[%s2107 + $0x38] sm:$0xf]
  %v2117 = vsel %vm41, %v2075, 0
  %v2120 = vsel %vm41, %v2076, 0
  %v2123 = vsel %vm41, %v2077, 0
  %v2126 = vsel %vm41, %v2078, 0
  %v2129 = vsel %vm41, %v2079, 0
  %v2132 = vsel %vm41, %v2080, 0
  %v2135 = vsel %vm41, %v2081, 0
  %v2138 = vsel %vm41, %v2082, 0
  %v2141 = vsel %vm41, %v2083, 0
  %v2144 = vsel %vm41, %v2084, 0
  %v2147 = vsel %vm41, %v2085, 0
  %v2150 = vsel %vm41, %v2086, 0
  %v2153 = vsel %vm41, %v2087, 0
  %v2156 = vsel %vm41, %v2088, 0
  %v2159 = vsel %vm41, %v2089, 0
  %v2162 = vsel %vm41, %v2090, 0
  %v2165 = vsel %vm41, %v2091, 0
  %v2168 = vsel %vm41, %v2092, 0
  %v2171 = vsel %vm41, %v2093, 0
  %v2174 = vsel %vm41, %v2094, 0
  %v2177 = vsel %vm41, %v2095, 0
  %v2180 = vsel %vm41, %v2096, 0
  %v2183 = vsel %vm41, %v2097, 0
  %v2186 = vsel %vm41, %v2098, 0
  %v2189 = vsel %vm41, %v2099, 0
  %v2192 = vsel %vm41, %v2100, 0
  %v2195 = vsel %vm41, %v2101, 0
  %v2198 = vsel %vm41, %v2102, 0
  %v2201 = vsel %vm41, %v2103, 0
  %v2204 = vsel %vm41, %v2104, 0
  %v2207 = vsel %vm41, %v2105, 0
  %v2210 = vsel %vm41, %v2106, 0
  %v2213 = vsel %vm524, %v2114, 0
  %v2216 = vsel %vm524, %v2115, 0
  %2218 = vmatprep.subr.mxu0 0.0
  %2219 = vmatpush1.msra.mxu0 0.0
  %2220 = vmatprep.subr.mxu0 0.0
  %2221 = vmatpush1.msra.mxu0 0.0
  %2222 = vmatprep.subr.mxu0 0.0
  %2223 = vmatpush1.msra.mxu0 0.0
  %2224 = vmatprep.subr.mxu0 0.0
  %2225 = vmatpush1.msra.mxu0 0.0
  %2226 = vmatprep.subr.mxu0 0.0
  %2227 = vmatpush1.msra.mxu0 0.0
  %2228 = vmatprep.subr.mxu0 0.0
  %2229 = vmatpush1.msra.mxu0 0.0
  %2230 = vmatprep.subr.mxu0 0.0
  %2231 = vmatpush1.msra.mxu0 0.0
  %2232 = vmatprep.subr.mxu0 0.0
  %2233 = vmatpush1.msra.mxu0 0.0
  %2234 = vmatprep.subr.mxu0 0.0
  %2235 = vmatpush1.msra.mxu0 0.0
  %2236 = vmatprep.subr.mxu0 0.0
  %2237 = vmatpush1.msra.mxu0 0.0
  %2238 = vmatprep.subr.mxu0 0.0
  %2239 = vmatpush1.msra.mxu0 0.0
  %2240 = vmatprep.subr.mxu0 0.0
  %2241 = vmatpush1.msra.mxu0 0.0
  %2242 = vmatprep.subr.mxu0 %v2216
  %2243 = vmatpush1.msra.mxu0 %v2213
  %2244 = vmatprep.subr.mxu0 %v2113
  %2245 = vmatpush1.msra.mxu0 %v2112
  %2246 = vmatprep.subr.mxu0 %v2111
  %2247 = vmatpush1.msra.mxu0 %v2110
  %2248 = vmatprep.subr.mxu0 %v2109
  %2249 = vmatpush1.msra.mxu0 %v2108
  %2250 = vmatprep.subr.mxu0 0.0
  %2251 = vmatpush2.msra.mxu0 0.0
  %2252 = vmatprep.subr.mxu0 0.0
  %2253 = vmatpush2.msra.mxu0 0.0
  %2254 = vmatprep.subr.mxu0 0.0
  %2255 = vmatpush2.msra.mxu0 0.0
  %2256 = vmatprep.subr.mxu0 0.0
  %2257 = vmatpush2.msra.mxu0 0.0
  %2258 = vmatprep.subr.mxu0 0.0
  %2259 = vmatpush2.msra.mxu0 0.0
  %2260 = vmatprep.subr.mxu0 0.0
  %2261 = vmatpush2.msra.mxu0 0.0
  %2262 = vmatprep.subr.mxu0 0.0
  %2263 = vmatpush2.msra.mxu0 0.0
  %2264 = vmatprep.subr.mxu0 0.0
  %2265 = vmatpush2.msra.mxu0 0.0
  %2266 = vmatprep.subr.mxu0 0.0
  %2267 = vmatpush2.msra.mxu0 0.0
  %2268 = vmatprep.subr.mxu0 0.0
  %2269 = vmatpush2.msra.mxu0 0.0
  %2270 = vmatprep.subr.mxu0 0.0
  %2271 = vmatpush2.msra.mxu0 0.0
  %2272 = vmatprep.subr.mxu0 0.0
  %2273 = vmatpush2.msra.mxu0 0.0
  %2274 = vmatprep.subr.mxu0 0.0
  %2275 = vmatpush2.msra.mxu0 0.0
  %2276 = vmatprep.subr.mxu0 0.0
  %2277 = vmatpush2.msra.mxu0 0.0
  %2278 = vmatprep.subr.mxu0 0.0
  %2279 = vmatpush2.msra.mxu0 0.0
  %2280 = vmatprep.subr.mxu0 0.0
  %2281 = vmatpush2.msra.mxu0 0.0
  %2282 = vmatprep.mubr.f32.mxu0 0.0
  %2283 = vmatmul.mubr.f32.gmra.mxu0 %v2117
  %v2284 = vpop.f32.mrf.mxu0
  %v2285 = vadd.f32 0.0, %v2284
  %v2286 = vpop.f32.mrf.mxu0
  %v2287 = vadd.f32 0.0, %v2286
  %2288 = vmatprep.mubr.f32.mxu0 0.0
  %2289 = vmatmul.mubr.f32.gmra.mxu0 %v2120
  %v2290 = vpop.f32.mrf.mxu0
  %v2291 = vadd.f32 0.0, %v2290
  %v2292 = vpop.f32.mrf.mxu0
  %v2293 = vadd.f32 0.0, %v2292
  %2294 = vmatprep.mubr.f32.mxu0 0.0
  %2295 = vmatmul.mubr.f32.gmra.mxu0 %v2123
  %v2296 = vpop.f32.mrf.mxu0
  %v2297 = vadd.f32 0.0, %v2296
  %v2298 = vpop.f32.mrf.mxu0
  %v2299 = vadd.f32 0.0, %v2298
  %2300 = vmatprep.mubr.f32.mxu0 0.0
  %2301 = vmatmul.mubr.f32.gmra.mxu0 %v2126
  %v2302 = vpop.f32.mrf.mxu0
  %v2303 = vadd.f32 0.0, %v2302
  %v2304 = vpop.f32.mrf.mxu0
  %v2305 = vadd.f32 0.0, %v2304
  %2306 = vmatprep.mubr.f32.mxu0 0.0
  %2307 = vmatmul.mubr.f32.gmra.mxu0 %v2129
  %v2308 = vpop.f32.mrf.mxu0
  %v2309 = vadd.f32 0.0, %v2308
  %v2310 = vpop.f32.mrf.mxu0
  %v2311 = vadd.f32 0.0, %v2310
  %2312 = vmatprep.mubr.f32.mxu0 0.0
  %2313 = vmatmul.mubr.f32.gmra.mxu0 %v2132
  %v2314 = vpop.f32.mrf.mxu0
  %v2315 = vadd.f32 0.0, %v2314
  %v2316 = vpop.f32.mrf.mxu0
  %v2317 = vadd.f32 0.0, %v2316
  %2318 = vmatprep.mubr.f32.mxu0 0.0
  %2319 = vmatmul.mubr.f32.gmra.mxu0 %v2135
  %v2320 = vpop.f32.mrf.mxu0
  %v2321 = vadd.f32 0.0, %v2320
  %v2322 = vpop.f32.mrf.mxu0
  %v2323 = vadd.f32 0.0, %v2322
  %2324 = vmatprep.mubr.f32.mxu0 0.0
  %2325 = vmatmul.mubr.f32.gmra.mxu0 %v2138
  %v2326 = vpop.f32.mrf.mxu0
  %v2327 = vadd.f32 0.0, %v2326
  %v2328 = vpop.f32.mrf.mxu0
  %v2329 = vadd.f32 0.0, %v2328
  %2330 = vmatprep.mubr.f32.mxu0 0.0
  %2331 = vmatmul.mubr.f32.gmra.mxu0 %v2141
  %v2332 = vpop.f32.mrf.mxu0
  %v2333 = vadd.f32 0.0, %v2332
  %v2334 = vpop.f32.mrf.mxu0
  %v2335 = vadd.f32 0.0, %v2334
  %2336 = vmatprep.mubr.f32.mxu0 0.0
  %2337 = vmatmul.mubr.f32.gmra.mxu0 %v2144
  %v2338 = vpop.f32.mrf.mxu0
  %v2339 = vadd.f32 0.0, %v2338
  %v2340 = vpop.f32.mrf.mxu0
  %v2341 = vadd.f32 0.0, %v2340
  %2342 = vmatprep.mubr.f32.mxu0 0.0
  %2343 = vmatmul.mubr.f32.gmra.mxu0 %v2147
  %v2344 = vpop.f32.mrf.mxu0
  %v2345 = vadd.f32 0.0, %v2344
  %v2346 = vpop.f32.mrf.mxu0
  %v2347 = vadd.f32 0.0, %v2346
  %2348 = vmatprep.mubr.f32.mxu0 0.0
  %2349 = vmatmul.mubr.f32.gmra.mxu0 %v2150
  %v2350 = vpop.f32.mrf.mxu0
  %v2351 = vadd.f32 0.0, %v2350
  %v2352 = vpop.f32.mrf.mxu0
  %v2353 = vadd.f32 0.0, %v2352
  %2354 = vmatprep.mubr.f32.mxu0 0.0
  %2355 = vmatmul.mubr.f32.gmra.mxu0 %v2153
  %v2356 = vpop.f32.mrf.mxu0
  %v2357 = vadd.f32 0.0, %v2356
  %v2358 = vpop.f32.mrf.mxu0
  %v2359 = vadd.f32 0.0, %v2358
  %2360 = vmatprep.mubr.f32.mxu0 0.0
  %2361 = vmatmul.mubr.f32.gmra.mxu0 %v2156
  %v2362 = vpop.f32.mrf.mxu0
  %v2363 = vadd.f32 0.0, %v2362
  %v2364 = vpop.f32.mrf.mxu0
  %v2365 = vadd.f32 0.0, %v2364
  %2366 = vmatprep.mubr.f32.mxu0 0.0
  %2367 = vmatmul.mubr.f32.gmra.mxu0 %v2159
  %v2368 = vpop.f32.mrf.mxu0
  %v2369 = vadd.f32 0.0, %v2368
  %v2370 = vpop.f32.mrf.mxu0
  %v2371 = vadd.f32 0.0, %v2370
  %2372 = vmatprep.mubr.f32.mxu0 0.0
  %2373 = vmatmul.mubr.f32.gmra.mxu0 %v2162
  %v2374 = vpop.f32.mrf.mxu0
  %v2375 = vadd.f32 0.0, %v2374
  %v2376 = vpop.f32.mrf.mxu0
  %v2377 = vadd.f32 0.0, %v2376
  %2378 = vmatprep.mubr.f32.mxu0 0.0
  %2379 = vmatmul.mubr.f32.gmra.mxu0 %v2165
  %v2380 = vpop.f32.mrf.mxu0
  %v2381 = vadd.f32 0.0, %v2380
  %v2382 = vpop.f32.mrf.mxu0
  %v2383 = vadd.f32 0.0, %v2382
  %2384 = vmatprep.mubr.f32.mxu0 0.0
  %2385 = vmatmul.mubr.f32.gmra.mxu0 %v2168
  %v2386 = vpop.f32.mrf.mxu0
  %v2387 = vadd.f32 0.0, %v2386
  %v2388 = vpop.f32.mrf.mxu0
  %v2389 = vadd.f32 0.0, %v2388
  %2390 = vmatprep.mubr.f32.mxu0 0.0
  %2391 = vmatmul.mubr.f32.gmra.mxu0 %v2171
  %v2392 = vpop.f32.mrf.mxu0
  %v2393 = vadd.f32 0.0, %v2392
  %v2394 = vpop.f32.mrf.mxu0
  %v2395 = vadd.f32 0.0, %v2394
  %2396 = vmatprep.mubr.f32.mxu0 0.0
  %2397 = vmatmul.mubr.f32.gmra.mxu0 %v2174
  %v2398 = vpop.f32.mrf.mxu0
  %v2399 = vadd.f32 0.0, %v2398
  %v2400 = vpop.f32.mrf.mxu0
  %v2401 = vadd.f32 0.0, %v2400
  %2402 = vmatprep.mubr.f32.mxu0 0.0
  %2403 = vmatmul.mubr.f32.gmra.mxu0 %v2177
  %v2404 = vpop.f32.mrf.mxu0
  %v2405 = vadd.f32 0.0, %v2404
  %v2406 = vpop.f32.mrf.mxu0
  %v2407 = vadd.f32 0.0, %v2406
  %2408 = vmatprep.mubr.f32.mxu0 0.0
  %2409 = vmatmul.mubr.f32.gmra.mxu0 %v2180
  %v2410 = vpop.f32.mrf.mxu0
  %v2411 = vadd.f32 0.0, %v2410
  %v2412 = vpop.f32.mrf.mxu0
  %v2413 = vadd.f32 0.0, %v2412
  %2414 = vmatprep.mubr.f32.mxu0 0.0
  %2415 = vmatmul.mubr.f32.gmra.mxu0 %v2183
  %v2416 = vpop.f32.mrf.mxu0
  %v2417 = vadd.f32 0.0, %v2416
  %v2418 = vpop.f32.mrf.mxu0
  %v2419 = vadd.f32 0.0, %v2418
  %2420 = vmatprep.mubr.f32.mxu0 0.0
  %2421 = vmatmul.mubr.f32.gmra.mxu0 %v2186
  %v2422 = vpop.f32.mrf.mxu0
  %v2423 = vadd.f32 0.0, %v2422
  %v2424 = vpop.f32.mrf.mxu0
  %v2425 = vadd.f32 0.0, %v2424
  %2426 = vmatprep.mubr.f32.mxu0 0.0
  %2427 = vmatmul.mubr.f32.gmra.mxu0 %v2189
  %v2428 = vpop.f32.mrf.mxu0
  %v2429 = vadd.f32 0.0, %v2428
  %v2430 = vpop.f32.mrf.mxu0
  %v2431 = vadd.f32 0.0, %v2430
  %2432 = vmatprep.mubr.f32.mxu0 0.0
  %2433 = vmatmul.mubr.f32.gmra.mxu0 %v2192
  %v2434 = vpop.f32.mrf.mxu0
  %v2435 = vadd.f32 0.0, %v2434
  %v2436 = vpop.f32.mrf.mxu0
  %v2437 = vadd.f32 0.0, %v2436
  %2438 = vmatprep.mubr.f32.mxu0 0.0
  %2439 = vmatmul.mubr.f32.gmra.mxu0 %v2195
  %v2440 = vpop.f32.mrf.mxu0
  %v2441 = vadd.f32 0.0, %v2440
  %v2442 = vpop.f32.mrf.mxu0
  %v2443 = vadd.f32 0.0, %v2442
  %2444 = vmatprep.mubr.f32.mxu0 0.0
  %2445 = vmatmul.mubr.f32.gmra.mxu0 %v2198
  %v2446 = vpop.f32.mrf.mxu0
  %v2447 = vadd.f32 0.0, %v2446
  %v2448 = vpop.f32.mrf.mxu0
  %v2449 = vadd.f32 0.0, %v2448
  %2450 = vmatprep.mubr.f32.mxu0 0.0
  %2451 = vmatmul.mubr.f32.gmra.mxu0 %v2201
  %v2452 = vpop.f32.mrf.mxu0
  %v2453 = vadd.f32 0.0, %v2452
  %v2454 = vpop.f32.mrf.mxu0
  %v2455 = vadd.f32 0.0, %v2454
  %2456 = vmatprep.mubr.f32.mxu0 0.0
  %2457 = vmatmul.mubr.f32.gmra.mxu0 %v2204
  %v2458 = vpop.f32.mrf.mxu0
  %v2459 = vadd.f32 0.0, %v2458
  %v2460 = vpop.f32.mrf.mxu0
  %v2461 = vadd.f32 0.0, %v2460
  %2462 = vmatprep.mubr.f32.mxu0 0.0
  %2463 = vmatmul.mubr.f32.gmra.mxu0 %v2207
  %v2464 = vpop.f32.mrf.mxu0
  %v2465 = vadd.f32 0.0, %v2464
  %v2466 = vpop.f32.mrf.mxu0
  %v2467 = vadd.f32 0.0, %v2466
  %2468 = vmatprep.mubr.f32.mxu0 0.0
  %2469 = vmatmul.mubr.f32.gmra.mxu0 %v2210
  %v2470 = vpop.f32.mrf.mxu0
  %v2471 = vadd.f32 0.0, %v2470
  %v2472 = vpop.f32.mrf.mxu0
  %v2473 = vadd.f32 0.0, %v2472
  %2474 = vdwg.mxu0
  %v2475 = vadd.f32 %v2011, %v2285
  %v2476 = vadd.f32 %v2012, %v2287
  %v2477 = vadd.f32 %v2013, %v2291
  %v2478 = vadd.f32 %v2014, %v2293
  %v2479 = vadd.f32 %v2015, %v2297
  %v2480 = vadd.f32 %v2016, %v2299
  %v2481 = vadd.f32 %v2017, %v2303
  %v2482 = vadd.f32 %v2018, %v2305
  %v2483 = vadd.f32 %v2019, %v2309
  %v2484 = vadd.f32 %v2020, %v2311
  %v2485 = vadd.f32 %v2021, %v2315
  %v2486 = vadd.f32 %v2022, %v2317
  %v2487 = vadd.f32 %v2023, %v2321
  %v2488 = vadd.f32 %v2024, %v2323
  %v2489 = vadd.f32 %v2025, %v2327
  %v2490 = vadd.f32 %v2026, %v2329
  %v2491 = vadd.f32 %v2027, %v2333
  %v2492 = vadd.f32 %v2028, %v2335
  %v2493 = vadd.f32 %v2029, %v2339
  %v2494 = vadd.f32 %v2030, %v2341
  %v2495 = vadd.f32 %v2031, %v2345
  %v2496 = vadd.f32 %v2032, %v2347
  %v2497 = vadd.f32 %v2033, %v2351
  %v2498 = vadd.f32 %v2034, %v2353
  %v2499 = vadd.f32 %v2035, %v2357
  %v2500 = vadd.f32 %v2036, %v2359
  %v2501 = vadd.f32 %v2037, %v2363
  %v2502 = vadd.f32 %v2038, %v2365
  %v2503 = vadd.f32 %v2039, %v2369
  %v2504 = vadd.f32 %v2040, %v2371
  %v2505 = vadd.f32 %v2041, %v2375
  %v2506 = vadd.f32 %v2042, %v2377
  %v2507 = vadd.f32 %v2043, %v2381
  %v2508 = vadd.f32 %v2044, %v2383
  %v2509 = vadd.f32 %v2045, %v2387
  %v2510 = vadd.f32 %v2046, %v2389
  %v2511 = vadd.f32 %v2047, %v2393
  %v2512 = vadd.f32 %v2048, %v2395
  %v2513 = vadd.f32 %v2049, %v2399
  %v2514 = vadd.f32 %v2050, %v2401
  %v2515 = vadd.f32 %v2051, %v2405
  %v2516 = vadd.f32 %v2052, %v2407
  %v2517 = vadd.f32 %v2053, %v2411
  %v2518 = vadd.f32 %v2054, %v2413
  %v2519 = vadd.f32 %v2055, %v2417
  %v2520 = vadd.f32 %v2056, %v2419
  %v2521 = vadd.f32 %v2057, %v2423
  %v2522 = vadd.f32 %v2058, %v2425
  %v2523 = vadd.f32 %v2059, %v2429
  %v2524 = vadd.f32 %v2060, %v2431
  %v2525 = vadd.f32 %v2061, %v2435
  %v2526 = vadd.f32 %v2062, %v2437
  %v2527 = vadd.f32 %v2063, %v2441
  %v2528 = vadd.f32 %v2064, %v2443
  %v2529 = vadd.f32 %v2065, %v2447
  %v2530 = vadd.f32 %v2066, %v2449
  %v2531 = vadd.f32 %v2067, %v2453
  %v2532 = vadd.f32 %v2068, %v2455
  %v2533 = vadd.f32 %v2069, %v2459
  %v2534 = vadd.f32 %v2070, %v2461
  %v2535 = vadd.f32 %v2071, %v2465
  %v2536 = vadd.f32 %v2072, %v2467
  %v2537 = vadd.f32 %v2073, %v2471
  %v2538 = vadd.f32 %v2074, %v2473
  %v2539 = vld [vmem:[%s3] sm:$0x3]
  %v2541 = vlaneseq
  %v2542 = vshrl.u32 %v2541, 7
  %v2543 = vsub.s32 0, %v2542
  %v2544 = vrot.slane %v2539, %v2543
  %v2545 = vlaneseq
  %v2546 = vshrl.u32 %v2545, 7
  %v2547 = vsub.s32 1, %v2546
  %v2548 = vrot.slane %v2539, %v2547
  %v2551 = vadd.f32 %v2475, %v2544
  %v2552 = vadd.f32 %v2476, %v2548
  %v2553 = vadd.f32 %v2477, %v2544
  %v2554 = vadd.f32 %v2478, %v2548
  %v2555 = vadd.f32 %v2479, %v2544
  %v2556 = vadd.f32 %v2480, %v2548
  %v2557 = vadd.f32 %v2481, %v2544
  %v2558 = vadd.f32 %v2482, %v2548
  %v2559 = vadd.f32 %v2483, %v2544
  %v2560 = vadd.f32 %v2484, %v2548
  %v2561 = vadd.f32 %v2485, %v2544
  %v2562 = vadd.f32 %v2486, %v2548
  %v2563 = vadd.f32 %v2487, %v2544
  %v2564 = vadd.f32 %v2488, %v2548
  %v2565 = vadd.f32 %v2489, %v2544
  %v2566 = vadd.f32 %v2490, %v2548
  %v2567 = vadd.f32 %v2491, %v2544
  %v2568 = vadd.f32 %v2492, %v2548
  %v2569 = vadd.f32 %v2493, %v2544
  %v2570 = vadd.f32 %v2494, %v2548
  %v2571 = vadd.f32 %v2495, %v2544
  %v2572 = vadd.f32 %v2496, %v2548
  %v2573 = vadd.f32 %v2497, %v2544
  %v2574 = vadd.f32 %v2498, %v2548
  %v2575 = vadd.f32 %v2499, %v2544
  %v2576 = vadd.f32 %v2500, %v2548
  %v2577 = vadd.f32 %v2501, %v2544
  %v2578 = vadd.f32 %v2502, %v2548
  %v2579 = vadd.f32 %v2503, %v2544
  %v2580 = vadd.f32 %v2504, %v2548
  %v2581 = vadd.f32 %v2505, %v2544
  %v2582 = vadd.f32 %v2506, %v2548
  %v2583 = vadd.f32 %v2507, %v2544
  %v2584 = vadd.f32 %v2508, %v2548
  %v2585 = vadd.f32 %v2509, %v2544
  %v2586 = vadd.f32 %v2510, %v2548
  %v2587 = vadd.f32 %v2511, %v2544
  %v2588 = vadd.f32 %v2512, %v2548
  %v2589 = vadd.f32 %v2513, %v2544
  %v2590 = vadd.f32 %v2514, %v2548
  %v2591 = vadd.f32 %v2515, %v2544
  %v2592 = vadd.f32 %v2516, %v2548
  %v2593 = vadd.f32 %v2517, %v2544
  %v2594 = vadd.f32 %v2518, %v2548
  %v2595 = vadd.f32 %v2519, %v2544
  %v2596 = vadd.f32 %v2520, %v2548
  %v2597 = vadd.f32 %v2521, %v2544
  %v2598 = vadd.f32 %v2522, %v2548
  %v2599 = vadd.f32 %v2523, %v2544
  %v2600 = vadd.f32 %v2524, %v2548
  %v2601 = vadd.f32 %v2525, %v2544
  %v2602 = vadd.f32 %v2526, %v2548
  %v2603 = vadd.f32 %v2527, %v2544
  %v2604 = vadd.f32 %v2528, %v2548
  %v2605 = vadd.f32 %v2529, %v2544
  %v2606 = vadd.f32 %v2530, %v2548
  %v2607 = vadd.f32 %v2531, %v2544
  %v2608 = vadd.f32 %v2532, %v2548
  %v2609 = vadd.f32 %v2533, %v2544
  %v2610 = vadd.f32 %v2534, %v2548
  %v2611 = vadd.f32 %v2535, %v2544
  %v2612 = vadd.f32 %v2536, %v2548
  %v2613 = vadd.f32 %v2537, %v2544
  %v2614 = vadd.f32 %v2538, %v2548
  %v2615 = vmax.f32 %v2551, 0.0
  %v2616 = vmax.f32 %v2552, 0.0
  %v2617 = vmax.f32 %v2553, 0.0
  %v2618 = vmax.f32 %v2554, 0.0
  %v2619 = vmax.f32 %v2555, 0.0
  %v2620 = vmax.f32 %v2556, 0.0
  %v2621 = vmax.f32 %v2557, 0.0
  %v2622 = vmax.f32 %v2558, 0.0
  %v2623 = vmax.f32 %v2559, 0.0
  %v2624 = vmax.f32 %v2560, 0.0
  %v2625 = vmax.f32 %v2561, 0.0
  %v2626 = vmax.f32 %v2562, 0.0
  %v2627 = vmax.f32 %v2563, 0.0
  %v2628 = vmax.f32 %v2564, 0.0
  %v2629 = vmax.f32 %v2565, 0.0
  %v2630 = vmax.f32 %v2566, 0.0
  %v2631 = vmax.f32 %v2567, 0.0
  %v2632 = vmax.f32 %v2568, 0.0
  %v2633 = vmax.f32 %v2569, 0.0
  %v2634 = vmax.f32 %v2570, 0.0
  %v2635 = vmax.f32 %v2571, 0.0
  %v2636 = vmax.f32 %v2572, 0.0
  %v2637 = vmax.f32 %v2573, 0.0
  %v2638 = vmax.f32 %v2574, 0.0
  %v2639 = vmax.f32 %v2575, 0.0
  %v2640 = vmax.f32 %v2576, 0.0
  %v2641 = vmax.f32 %v2577, 0.0
  %v2642 = vmax.f32 %v2578, 0.0
  %v2643 = vmax.f32 %v2579, 0.0
  %v2644 = vmax.f32 %v2580, 0.0
  %v2645 = vmax.f32 %v2581, 0.0
  %v2646 = vmax.f32 %v2582, 0.0
  %v2647 = vmax.f32 %v2583, 0.0
  %v2648 = vmax.f32 %v2584, 0.0
  %v2649 = vmax.f32 %v2585, 0.0
  %v2650 = vmax.f32 %v2586, 0.0
  %v2651 = vmax.f32 %v2587, 0.0
  %v2652 = vmax.f32 %v2588, 0.0
  %v2653 = vmax.f32 %v2589, 0.0
  %v2654 = vmax.f32 %v2590, 0.0
  %v2655 = vmax.f32 %v2591, 0.0
  %v2656 = vmax.f32 %v2592, 0.0
  %v2657 = vmax.f32 %v2593, 0.0
  %v2658 = vmax.f32 %v2594, 0.0
  %v2659 = vmax.f32 %v2595, 0.0
  %v2660 = vmax.f32 %v2596, 0.0
  %v2661 = vmax.f32 %v2597, 0.0
  %v2662 = vmax.f32 %v2598, 0.0
  %v2663 = vmax.f32 %v2599, 0.0
  %v2664 = vmax.f32 %v2600, 0.0
  %v2665 = vmax.f32 %v2601, 0.0
  %v2666 = vmax.f32 %v2602, 0.0
  %v2667 = vmax.f32 %v2603, 0.0
  %v2668 = vmax.f32 %v2604, 0.0
  %v2669 = vmax.f32 %v2605, 0.0
  %v2670 = vmax.f32 %v2606, 0.0
  %v2671 = vmax.f32 %v2607, 0.0
  %v2672 = vmax.f32 %v2608, 0.0
  %v2673 = vmax.f32 %v2609, 0.0
  %v2674 = vmax.f32 %v2610, 0.0
  %v2675 = vmax.f32 %v2611, 0.0
  %v2676 = vmax.f32 %v2612, 0.0
  %v2677 = vmax.f32 %v2613, 0.0
  %v2678 = vmax.f32 %v2614, 0.0
  %2679 = vst [vmem:[#allocation3] sm:$0xff] %v2615
  %2680 = vst [vmem:[#allocation3 + $0x8] sm:$0xff] %v2616
  %2681 = vst [vmem:[#allocation3 + $0x10] sm:$0xff] %v2617
  %2682 = vst [vmem:[#allocation3 + $0x18] sm:$0xff] %v2618
  %2683 = vst [vmem:[#allocation3 + $0x20] sm:$0xff] %v2619
  %2684 = vst [vmem:[#allocation3 + $0x28] sm:$0xff] %v2620
  %2685 = vst [vmem:[#allocation3 + $0x30] sm:$0xff] %v2621
  %2686 = vst [vmem:[#allocation3 + $0x38] sm:$0xff] %v2622
  %2687 = vst [vmem:[#allocation3 + $0x40] sm:$0xff] %v2623
  %2688 = vst [vmem:[#allocation3 + $0x48] sm:$0xff] %v2624
  %2689 = vst [vmem:[#allocation3 + $0x50] sm:$0xff] %v2625
  %2690 = vst [vmem:[#allocation3 + $0x58] sm:$0xff] %v2626
  %2691 = vst [vmem:[#allocation3 + $0x60] sm:$0xff] %v2627
  %2692 = vst [vmem:[#allocation3 + $0x68] sm:$0xff] %v2628
  %2693 = vst [vmem:[#allocation3 + $0x70] sm:$0xff] %v2629
  %2694 = vst [vmem:[#allocation3 + $0x78] sm:$0xff] %v2630
  %2695 = vst [vmem:[#allocation3 + $0x80] sm:$0xff] %v2631
  %2696 = vst [vmem:[#allocation3 + $0x88] sm:$0xff] %v2632
  %2697 = vst [vmem:[#allocation3 + $0x90] sm:$0xff] %v2633
  %2698 = vst [vmem:[#allocation3 + $0x98] sm:$0xff] %v2634
  %2699 = vst [vmem:[#allocation3 + $0xa0] sm:$0xff] %v2635
  %2700 = vst [vmem:[#allocation3 + $0xa8] sm:$0xff] %v2636
  %2701 = vst [vmem:[#allocation3 + $0xb0] sm:$0xff] %v2637
  %2702 = vst [vmem:[#allocation3 + $0xb8] sm:$0xff] %v2638
  %2703 = vst [vmem:[#allocation3 + $0xc0] sm:$0xff] %v2639
  %2704 = vst [vmem:[#allocation3 + $0xc8] sm:$0xff] %v2640
  %2705 = vst [vmem:[#allocation3 + $0xd0] sm:$0xff] %v2641
  %2706 = vst [vmem:[#allocation3 + $0xd8] sm:$0xff] %v2642
  %2707 = vst [vmem:[#allocation3 + $0xe0] sm:$0xff] %v2643
  %2708 = vst [vmem:[#allocation3 + $0xe8] sm:$0xff] %v2644
  %2709 = vst [vmem:[#allocation3 + $0xf0] sm:$0xff] %v2645
  %2710 = vst [vmem:[#allocation3 + $0xf8] sm:$0xff] %v2646
  %2711 = vst [vmem:[#allocation3 + $0x100] sm:$0xff] %v2647
  %2712 = vst [vmem:[#allocation3 + $0x108] sm:$0xff] %v2648
  %2713 = vst [vmem:[#allocation3 + $0x110] sm:$0xff] %v2649
  %2714 = vst [vmem:[#allocation3 + $0x118] sm:$0xff] %v2650
  %2715 = vst [vmem:[#allocation3 + $0x120] sm:$0xff] %v2651
  %2716 = vst [vmem:[#allocation3 + $0x128] sm:$0xff] %v2652
  %2717 = vst [vmem:[#allocation3 + $0x130] sm:$0xff] %v2653
  %2718 = vst [vmem:[#allocation3 + $0x138] sm:$0xff] %v2654
  %2719 = vst [vmem:[#allocation3 + $0x140] sm:$0xff] %v2655
  %2720 = vst [vmem:[#allocation3 + $0x148] sm:$0xff] %v2656
  %2721 = vst [vmem:[#allocation3 + $0x150] sm:$0xff] %v2657
  %2722 = vst [vmem:[#allocation3 + $0x158] sm:$0xff] %v2658
  %2723 = vst [vmem:[#allocation3 + $0x160] sm:$0xff] %v2659
  %2724 = vst [vmem:[#allocation3 + $0x168] sm:$0xff] %v2660
  %2725 = vst [vmem:[#allocation3 + $0x170] sm:$0xff] %v2661
  %2726 = vst [vmem:[#allocation3 + $0x178] sm:$0xff] %v2662
  %2727 = vst [vmem:[#allocation3 + $0x180] sm:$0xff] %v2663
  %2728 = vst [vmem:[#allocation3 + $0x188] sm:$0xff] %v2664
  %2729 = vst [vmem:[#allocation3 + $0x190] sm:$0xff] %v2665
  %2730 = vst [vmem:[#allocation3 + $0x198] sm:$0xff] %v2666
  %2731 = vst [vmem:[#allocation3 + $0x1a0] sm:$0xff] %v2667
  %2732 = vst [vmem:[#allocation3 + $0x1a8] sm:$0xff] %v2668
  %2733 = vst [vmem:[#allocation3 + $0x1b0] sm:$0xff] %v2669
  %2734 = vst [vmem:[#allocation3 + $0x1b8] sm:$0xff] %v2670
  %2735 = vst [vmem:[#allocation3 + $0x1c0] sm:$0xff] %v2671
  %2736 = vst [vmem:[#allocation3 + $0x1c8] sm:$0xff] %v2672
  %2737 = vst [vmem:[#allocation3 + $0x1d0] sm:$0xff] %v2673
  %2738 = vst [vmem:[#allocation3 + $0x1d8] sm:$0xff] %v2674
  %2739 = vst [vmem:[#allocation3 + $0x1e0] sm:$0xff] %v2675
  %2740 = vst [vmem:[#allocation3 + $0x1e8] sm:$0xff] %v2676
  %2741 = vst [vmem:[#allocation3 + $0x1f0] sm:$0xff] %v2677
  %2742 = vst [vmem:[#allocation3 + $0x1f8] sm:$0xff] %v2678
  %v2743 = vld [vmem:[#allocation3] sm:$0xff]
  %v2744 = vld [vmem:[#allocation3 + $0x10] sm:$0xff]
  %v2745 = vld [vmem:[#allocation3 + $0x20] sm:$0xff]
  %v2746 = vld [vmem:[#allocation3 + $0x30] sm:$0xff]
  %v2747 = vld [vmem:[#allocation3 + $0x40] sm:$0xff]
  %v2748 = vld [vmem:[#allocation3 + $0x50] sm:$0xff]
  %v2749 = vld [vmem:[#allocation3 + $0x60] sm:$0xff]
  %v2750 = vld [vmem:[#allocation3 + $0x70] sm:$0xff]
  %v2751 = vld [vmem:[#allocation3 + $0x80] sm:$0xff]
  %v2752 = vld [vmem:[#allocation3 + $0x90] sm:$0xff]
  %v2753 = vld [vmem:[#allocation3 + $0xa0] sm:$0xff]
  %v2754 = vld [vmem:[#allocation3 + $0xb0] sm:$0xff]
  %v2755 = vld [vmem:[#allocation3 + $0xc0] sm:$0xff]
  %v2756 = vld [vmem:[#allocation3 + $0xd0] sm:$0xff]
  %v2757 = vld [vmem:[#allocation3 + $0xe0] sm:$0xff]
  %v2758 = vld [vmem:[#allocation3 + $0xf0] sm:$0xff]
  %v2759 = vld [vmem:[#allocation3 + $0x100] sm:$0xff]
  %v2760 = vld [vmem:[#allocation3 + $0x110] sm:$0xff]
  %v2761 = vld [vmem:[#allocation3 + $0x120] sm:$0xff]
  %v2762 = vld [vmem:[#allocation3 + $0x130] sm:$0xff]
  %v2763 = vld [vmem:[#allocation3 + $0x140] sm:$0xff]
  %v2764 = vld [vmem:[#allocation3 + $0x150] sm:$0xff]
  %v2765 = vld [vmem:[#allocation3 + $0x160] sm:$0xff]
  %v2766 = vld [vmem:[#allocation3 + $0x170] sm:$0xff]
  %v2767 = vld [vmem:[#allocation3 + $0x180] sm:$0xff]
  %v2768 = vld [vmem:[#allocation3 + $0x190] sm:$0xff]
  %v2769 = vld [vmem:[#allocation3 + $0x1a0] sm:$0xff]
  %v2770 = vld [vmem:[#allocation3 + $0x1b0] sm:$0xff]
  %v2771 = vld [vmem:[#allocation3 + $0x1c0] sm:$0xff]
  %v2772 = vld [vmem:[#allocation3 + $0x1d0] sm:$0xff]
  %v2773 = vld [vmem:[#allocation3 + $0x1e0] sm:$0xff]
  %v2774 = vld [vmem:[#allocation3 + $0x1f0] sm:$0xff]
  %v2775 = vld [vmem:[#allocation3] sm:$0xfe]
  %v2776 = vld [vmem:[#allocation3 + $0x200] sm:$0x1]
  %vm2810 = vcmask 1046528
  %v2811 = vrot.slane %v2775, 1
  %v2812 = vrot.slane %v2744, 1
  %v2813 = vsel %vm2810, %v2811, %v2812
  %v2814 = vrot.slane %v2745, 1
  %v2815 = vsel %vm2810, %v2812, %v2814
  %v2816 = vrot.slane %v2746, 1
  %v2817 = vsel %vm2810, %v2814, %v2816
  %v2818 = vrot.slane %v2747, 1
  %v2819 = vsel %vm2810, %v2816, %v2818
  %v2820 = vrot.slane %v2748, 1
  %v2821 = vsel %vm2810, %v2818, %v2820
  %v2822 = vrot.slane %v2749, 1
  %v2823 = vsel %vm2810, %v2820, %v2822
  %v2824 = vrot.slane %v2750, 1
  %v2825 = vsel %vm2810, %v2822, %v2824
  %v2826 = vrot.slane %v2751, 1
  %v2827 = vsel %vm2810, %v2824, %v2826
  %v2828 = vrot.slane %v2752, 1
  %v2829 = vsel %vm2810, %v2826, %v2828
  %v2830 = vrot.slane %v2753, 1
  %v2831 = vsel %vm2810, %v2828, %v2830
  %v2832 = vrot.slane %v2754, 1
  %v2833 = vsel %vm2810, %v2830, %v2832
  %v2834 = vrot.slane %v2755, 1
  %v2835 = vsel %vm2810, %v2832, %v2834
  %v2836 = vrot.slane %v2756, 1
  %v2837 = vsel %vm2810, %v2834, %v2836
  %v2838 = vrot.slane %v2757, 1
  %v2839 = vsel %vm2810, %v2836, %v2838
  %v2840 = vrot.slane %v2758, 1
  %v2841 = vsel %vm2810, %v2838, %v2840
  %v2842 = vrot.slane %v2759, 1
  %v2843 = vsel %vm2810, %v2840, %v2842
  %v2844 = vrot.slane %v2760, 1
  %v2845 = vsel %vm2810, %v2842, %v2844
  %v2846 = vrot.slane %v2761, 1
  %v2847 = vsel %vm2810, %v2844, %v2846
  %v2848 = vrot.slane %v2762, 1
  %v2849 = vsel %vm2810, %v2846, %v2848
  %v2850 = vrot.slane %v2763, 1
  %v2851 = vsel %vm2810, %v2848, %v2850
  %v2852 = vrot.slane %v2764, 1
  %v2853 = vsel %vm2810, %v2850, %v2852
  %v2854 = vrot.slane %v2765, 1
  %v2855 = vsel %vm2810, %v2852, %v2854
  %v2856 = vrot.slane %v2766, 1
  %v2857 = vsel %vm2810, %v2854, %v2856
  %v2858 = vrot.slane %v2767, 1
  %v2859 = vsel %vm2810, %v2856, %v2858
  %v2860 = vrot.slane %v2768, 1
  %v2861 = vsel %vm2810, %v2858, %v2860
  %v2862 = vrot.slane %v2769, 1
  %v2863 = vsel %vm2810, %v2860, %v2862
  %v2864 = vrot.slane %v2770, 1
  %v2865 = vsel %vm2810, %v2862, %v2864
  %v2866 = vrot.slane %v2771, 1
  %v2867 = vsel %vm2810, %v2864, %v2866
  %v2868 = vrot.slane %v2772, 1
  %v2869 = vsel %vm2810, %v2866, %v2868
  %v2870 = vrot.slane %v2773, 1
  %v2871 = vsel %vm2810, %v2868, %v2870
  %v2872 = vrot.slane %v2774, 1
  %v2873 = vsel %vm2810, %v2870, %v2872
  %v2874 = vrot.slane %v2776, 1
  %v2875 = vsel %vm2810, %v2872, %v2874
  %v2908 = vmax.f32 %v2743, %v2813
  %v2909 = vmax.f32 %v2744, %v2815
  %v2910 = vmax.f32 %v2745, %v2817
  %v2911 = vmax.f32 %v2746, %v2819
  %v2912 = vmax.f32 %v2747, %v2821
  %v2913 = vmax.f32 %v2748, %v2823
  %v2914 = vmax.f32 %v2749, %v2825
  %v2915 = vmax.f32 %v2750, %v2827
  %v2916 = vmax.f32 %v2751, %v2829
  %v2917 = vmax.f32 %v2752, %v2831
  %v2918 = vmax.f32 %v2753, %v2833
  %v2919 = vmax.f32 %v2754, %v2835
  %v2920 = vmax.f32 %v2755, %v2837
  %v2921 = vmax.f32 %v2756, %v2839
  %v2922 = vmax.f32 %v2757, %v2841
  %v2923 = vmax.f32 %v2758, %v2843
  %v2924 = vmax.f32 %v2759, %v2845
  %v2925 = vmax.f32 %v2760, %v2847
  %v2926 = vmax.f32 %v2761, %v2849
  %v2927 = vmax.f32 %v2762, %v2851
  %v2928 = vmax.f32 %v2763, %v2853
  %v2929 = vmax.f32 %v2764, %v2855
  %v2930 = vmax.f32 %v2765, %v2857
  %v2931 = vmax.f32 %v2766, %v2859
  %v2932 = vmax.f32 %v2767, %v2861
  %v2933 = vmax.f32 %v2768, %v2863
  %v2934 = vmax.f32 %v2769, %v2865
  %v2935 = vmax.f32 %v2770, %v2867
  %v2936 = vmax.f32 %v2771, %v2869
  %v2937 = vmax.f32 %v2772, %v2871
  %v2938 = vmax.f32 %v2773, %v2873
  %v2939 = vmax.f32 %v2774, %v2875
  %v2940 = vld [vmem:[#allocation3 + $0x8] sm:$0xff]
  %v2941 = vld [vmem:[#allocation3 + $0x18] sm:$0xff]
  %v2942 = vld [vmem:[#allocation3 + $0x28] sm:$0xff]
  %v2943 = vld [vmem:[#allocation3 + $0x38] sm:$0xff]
  %v2944 = vld [vmem:[#allocation3 + $0x48] sm:$0xff]
  %v2945 = vld [vmem:[#allocation3 + $0x58] sm:$0xff]
  %v2946 = vld [vmem:[#allocation3 + $0x68] sm:$0xff]
  %v2947 = vld [vmem:[#allocation3 + $0x78] sm:$0xff]
  %v2948 = vld [vmem:[#allocation3 + $0x88] sm:$0xff]
  %v2949 = vld [vmem:[#allocation3 + $0x98] sm:$0xff]
  %v2950 = vld [vmem:[#allocation3 + $0xa8] sm:$0xff]
  %v2951 = vld [vmem:[#allocation3 + $0xb8] sm:$0xff]
  %v2952 = vld [vmem:[#allocation3 + $0xc8] sm:$0xff]
  %v2953 = vld [vmem:[#allocation3 + $0xd8] sm:$0xff]
  %v2954 = vld [vmem:[#allocation3 + $0xe8] sm:$0xff]
  %v2955 = vld [vmem:[#allocation3 + $0xf8] sm:$0xff]
  %v2956 = vld [vmem:[#allocation3 + $0x108] sm:$0xff]
  %v2957 = vld [vmem:[#allocation3 + $0x118] sm:$0xff]
  %v2958 = vld [vmem:[#allocation3 + $0x128] sm:$0xff]
  %v2959 = vld [vmem:[#allocation3 + $0x138] sm:$0xff]
  %v2960 = vld [vmem:[#allocation3 + $0x148] sm:$0xff]
  %v2961 = vld [vmem:[#allocation3 + $0x158] sm:$0xff]
  %v2962 = vld [vmem:[#allocation3 + $0x168] sm:$0xff]
  %v2963 = vld [vmem:[#allocation3 + $0x178] sm:$0xff]
  %v2964 = vld [vmem:[#allocation3 + $0x188] sm:$0xff]
  %v2965 = vld [vmem:[#allocation3 + $0x198] sm:$0xff]
  %v2966 = vld [vmem:[#allocation3 + $0x1a8] sm:$0xff]
  %v2967 = vld [vmem:[#allocation3 + $0x1b8] sm:$0xff]
  %v2968 = vld [vmem:[#allocation3 + $0x1c8] sm:$0xff]
  %v2969 = vld [vmem:[#allocation3 + $0x1d8] sm:$0xff]
  %v2970 = vld [vmem:[#allocation3 + $0x1e8] sm:$0xff]
  %v2971 = vld [vmem:[#allocation3 + $0x1f8] sm:$0xff]
  %v2972 = vld [vmem:[#allocation3 + $0x8] sm:$0xfe]
  %v2973 = vld [vmem:[#allocation3 + $0x18] sm:$0xff]
  %v2974 = vld [vmem:[#allocation3 + $0x28] sm:$0xff]
  %v2975 = vld [vmem:[#allocation3 + $0x38] sm:$0xff]
  %v2976 = vld [vmem:[#allocation3 + $0x48] sm:$0xff]
  %v2977 = vld [vmem:[#allocation3 + $0x58] sm:$0xff]
  %v2978 = vld [vmem:[#allocation3 + $0x68] sm:$0xff]
  %v2979 = vld [vmem:[#allocation3 + $0x78] sm:$0xff]
  %v2980 = vld [vmem:[#allocation3 + $0x88] sm:$0xff]
  %v2981 = vld [vmem:[#allocation3 + $0x98] sm:$0xff]
  %v2982 = vld [vmem:[#allocation3 + $0xa8] sm:$0xff]
  %v2983 = vld [vmem:[#allocation3 + $0xb8] sm:$0xff]
  %v2984 = vld [vmem:[#allocation3 + $0xc8] sm:$0xff]
  %v2985 = vld [vmem:[#allocation3 + $0xd8] sm:$0xff]
  %v2986 = vld [vmem:[#allocation3 + $0xe8] sm:$0xff]
  %v2987 = vld [vmem:[#allocation3 + $0xf8] sm:$0xff]
  %v2988 = vld [vmem:[#allocation3 + $0x108] sm:$0xff]
  %v2989 = vld [vmem:[#allocation3 + $0x118] sm:$0xff]
  %v2990 = vld [vmem:[#allocation3 + $0x128] sm:$0xff]
  %v2991 = vld [vmem:[#allocation3 + $0x138] sm:$0xff]
  %v2992 = vld [vmem:[#allocation3 + $0x148] sm:$0xff]
  %v2993 = vld [vmem:[#allocation3 + $0x158] sm:$0xff]
  %v2994 = vld [vmem:[#allocation3 + $0x168] sm:$0xff]
  %v2995 = vld [vmem:[#allocation3 + $0x178] sm:$0xff]
  %v2996 = vld [vmem:[#allocation3 + $0x188] sm:$0xff]
  %v2997 = vld [vmem:[#allocation3 + $0x198] sm:$0xff]
  %v2998 = vld [vmem:[#allocation3 + $0x1a8] sm:$0xff]
  %v2999 = vld [vmem:[#allocation3 + $0x1b8] sm:$0xff]
  %v3000 = vld [vmem:[#allocation3 + $0x1c8] sm:$0xff]
  %v3001 = vld [vmem:[#allocation3 + $0x1d8] sm:$0xff]
  %v3002 = vld [vmem:[#allocation3 + $0x1e8] sm:$0xff]
  %v3003 = vld [vmem:[#allocation3 + $0x1f8] sm:$0xff]
  %v3004 = vld [vmem:[#allocation3 + $0x208] sm:$0x1]
  %v3038 = vrot.slane %v2972, 1
  %v3039 = vrot.slane %v2973, 1
  %v3040 = vsel %vm2810, %v3038, %v3039
  %v3041 = vrot.slane %v2974, 1
  %v3042 = vsel %vm2810, %v3039, %v3041
  %v3043 = vrot.slane %v2975, 1
  %v3044 = vsel %vm2810, %v3041, %v3043
  %v3045 = vrot.slane %v2976, 1
  %v3046 = vsel %vm2810, %v3043, %v3045
  %v3047 = vrot.slane %v2977, 1
  %v3048 = vsel %vm2810, %v3045, %v3047
  %v3049 = vrot.slane %v2978, 1
  %v3050 = vsel %vm2810, %v3047, %v3049
  %v3051 = vrot.slane %v2979, 1
  %v3052 = vsel %vm2810, %v3049, %v3051
  %v3053 = vrot.slane %v2980, 1
  %v3054 = vsel %vm2810, %v3051, %v3053
  %v3055 = vrot.slane %v2981, 1
  %v3056 = vsel %vm2810, %v3053, %v3055
  %v3057 = vrot.slane %v2982, 1
  %v3058 = vsel %vm2810, %v3055, %v3057
  %v3059 = vrot.slane %v2983, 1
  %v3060 = vsel %vm2810, %v3057, %v3059
  %v3061 = vrot.slane %v2984, 1
  %v3062 = vsel %vm2810, %v3059, %v3061
  %v3063 = vrot.slane %v2985, 1
  %v3064 = vsel %vm2810, %v3061, %v3063
  %v3065 = vrot.slane %v2986, 1
  %v3066 = vsel %vm2810, %v3063, %v3065
  %v3067 = vrot.slane %v2987, 1
  %v3068 = vsel %vm2810, %v3065, %v3067
  %v3069 = vrot.slane %v2988, 1
  %v3070 = vsel %vm2810, %v3067, %v3069
  %v3071 = vrot.slane %v2989, 1
  %v3072 = vsel %vm2810, %v3069, %v3071
  %v3073 = vrot.slane %v2990, 1
  %v3074 = vsel %vm2810, %v3071, %v3073
  %v3075 = vrot.slane %v2991, 1
  %v3076 = vsel %vm2810, %v3073, %v3075
  %v3077 = vrot.slane %v2992, 1
  %v3078 = vsel %vm2810, %v3075, %v3077
  %v3079 = vrot.slane %v2993, 1
  %v3080 = vsel %vm2810, %v3077, %v3079
  %v3081 = vrot.slane %v2994, 1
  %v3082 = vsel %vm2810, %v3079, %v3081
  %v3083 = vrot.slane %v2995, 1
  %v3084 = vsel %vm2810, %v3081, %v3083
  %v3085 = vrot.slane %v2996, 1
  %v3086 = vsel %vm2810, %v3083, %v3085
  %v3087 = vrot.slane %v2997, 1
  %v3088 = vsel %vm2810, %v3085, %v3087
  %v3089 = vrot.slane %v2998, 1
  %v3090 = vsel %vm2810, %v3087, %v3089
  %v3091 = vrot.slane %v2999, 1
  %v3092 = vsel %vm2810, %v3089, %v3091
  %v3093 = vrot.slane %v3000, 1
  %v3094 = vsel %vm2810, %v3091, %v3093
  %v3095 = vrot.slane %v3001, 1
  %v3096 = vsel %vm2810, %v3093, %v3095
  %v3097 = vrot.slane %v3002, 1
  %v3098 = vsel %vm2810, %v3095, %v3097
  %v3099 = vrot.slane %v3003, 1
  %v3100 = vsel %vm2810, %v3097, %v3099
  %v3101 = vrot.slane %v3004, 1
  %v3102 = vsel %vm2810, %v3099, %v3101
  %v3135 = vmax.f32 %v2940, %v3040
  %v3136 = vmax.f32 %v2941, %v3042
  %v3137 = vmax.f32 %v2942, %v3044
  %v3138 = vmax.f32 %v2943, %v3046
  %v3139 = vmax.f32 %v2944, %v3048
  %v3140 = vmax.f32 %v2945, %v3050
  %v3141 = vmax.f32 %v2946, %v3052
  %v3142 = vmax.f32 %v2947, %v3054
  %v3143 = vmax.f32 %v2948, %v3056
  %v3144 = vmax.f32 %v2949, %v3058
  %v3145 = vmax.f32 %v2950, %v3060
  %v3146 = vmax.f32 %v2951, %v3062
  %v3147 = vmax.f32 %v2952, %v3064
  %v3148 = vmax.f32 %v2953, %v3066
  %v3149 = vmax.f32 %v2954, %v3068
  %v3150 = vmax.f32 %v2955, %v3070
  %v3151 = vmax.f32 %v2956, %v3072
  %v3152 = vmax.f32 %v2957, %v3074
  %v3153 = vmax.f32 %v2958, %v3076
  %v3154 = vmax.f32 %v2959, %v3078
  %v3155 = vmax.f32 %v2960, %v3080
  %v3156 = vmax.f32 %v2961, %v3082
  %v3157 = vmax.f32 %v2962, %v3084
  %v3158 = vmax.f32 %v2963, %v3086
  %v3159 = vmax.f32 %v2964, %v3088
  %v3160 = vmax.f32 %v2965, %v3090
  %v3161 = vmax.f32 %v2966, %v3092
  %v3162 = vmax.f32 %v2967, %v3094
  %v3163 = vmax.f32 %v2968, %v3096
  %v3164 = vmax.f32 %v2969, %v3098
  %v3165 = vmax.f32 %v2970, %v3100
  %v3166 = vmax.f32 %v2971, %v3102
  %v3167 = vmax.f32 %v2908, %v3135
  %v3168 = vmax.f32 %v2909, %v3136
  %v3169 = vmax.f32 %v2910, %v3137
  %v3170 = vmax.f32 %v2911, %v3138
  %v3171 = vmax.f32 %v2912, %v3139
  %v3172 = vmax.f32 %v2913, %v3140
  %v3173 = vmax.f32 %v2914, %v3141
  %v3174 = vmax.f32 %v2915, %v3142
  %v3175 = vmax.f32 %v2916, %v3143
  %v3176 = vmax.f32 %v2917, %v3144
  %v3177 = vmax.f32 %v2918, %v3145
  %v3178 = vmax.f32 %v2919, %v3146
  %v3179 = vmax.f32 %v2920, %v3147
  %v3180 = vmax.f32 %v2921, %v3148
  %v3181 = vmax.f32 %v2922, %v3149
  %v3182 = vmax.f32 %v2923, %v3150
  %v3183 = vmax.f32 %v2924, %v3151
  %v3184 = vmax.f32 %v2925, %v3152
  %v3185 = vmax.f32 %v2926, %v3153
  %v3186 = vmax.f32 %v2927, %v3154
  %v3187 = vmax.f32 %v2928, %v3155
  %v3188 = vmax.f32 %v2929, %v3156
  %v3189 = vmax.f32 %v2930, %v3157
  %v3190 = vmax.f32 %v2931, %v3158
  %v3191 = vmax.f32 %v2932, %v3159
  %v3192 = vmax.f32 %v2933, %v3160
  %v3193 = vmax.f32 %v2934, %v3161
  %v3194 = vmax.f32 %v2935, %v3162
  %v3195 = vmax.f32 %v2936, %v3163
  %v3196 = vmax.f32 %v2937, %v3164
  %v3197 = vmax.f32 %v2938, %v3165
  %v3198 = vmax.f32 %v2939, %v3166
  %3199 = vst [vmem:[#allocation4] sm:$0xff] %v3167
  %3200 = vst [vmem:[#allocation4 + $0x8] sm:$0xff] %v3168
  %3201 = vst [vmem:[#allocation4 + $0x10] sm:$0xff] %v3169
  %3202 = vst [vmem:[#allocation4 + $0x18] sm:$0xff] %v3170
  %3203 = vst [vmem:[#allocation4 + $0x20] sm:$0xff] %v3171
  %3204 = vst [vmem:[#allocation4 + $0x28] sm:$0xff] %v3172
  %3205 = vst [vmem:[#allocation4 + $0x30] sm:$0xff] %v3173
  %3206 = vst [vmem:[#allocation4 + $0x38] sm:$0xff] %v3174
  %3207 = vst [vmem:[#allocation4 + $0x40] sm:$0xff] %v3175
  %3208 = vst [vmem:[#allocation4 + $0x48] sm:$0xff] %v3176
  %3209 = vst [vmem:[#allocation4 + $0x50] sm:$0xff] %v3177
  %3210 = vst [vmem:[#allocation4 + $0x58] sm:$0xff] %v3178
  %3211 = vst [vmem:[#allocation4 + $0x60] sm:$0xff] %v3179
  %3212 = vst [vmem:[#allocation4 + $0x68] sm:$0xff] %v3180
  %3213 = vst [vmem:[#allocation4 + $0x70] sm:$0xff] %v3181
  %3214 = vst [vmem:[#allocation4 + $0x78] sm:$0xff] %v3182
  %3215 = vst [vmem:[#allocation4 + $0x80] sm:$0xff] %v3183
  %3216 = vst [vmem:[#allocation4 + $0x88] sm:$0xff] %v3184
  %3217 = vst [vmem:[#allocation4 + $0x90] sm:$0xff] %v3185
  %3218 = vst [vmem:[#allocation4 + $0x98] sm:$0xff] %v3186
  %3219 = vst [vmem:[#allocation4 + $0xa0] sm:$0xff] %v3187
  %3220 = vst [vmem:[#allocation4 + $0xa8] sm:$0xff] %v3188
  %3221 = vst [vmem:[#allocation4 + $0xb0] sm:$0xff] %v3189
  %3222 = vst [vmem:[#allocation4 + $0xb8] sm:$0xff] %v3190
  %3223 = vst [vmem:[#allocation4 + $0xc0] sm:$0xff] %v3191
  %3224 = vst [vmem:[#allocation4 + $0xc8] sm:$0xff] %v3192
  %3225 = vst [vmem:[#allocation4 + $0xd0] sm:$0xff] %v3193
  %3226 = vst [vmem:[#allocation4 + $0xd8] sm:$0xff] %v3194
  %3227 = vst [vmem:[#allocation4 + $0xe0] sm:$0xff] %v3195
  %3228 = vst [vmem:[#allocation4 + $0xe8] sm:$0xff] %v3196
  %3229 = vst [vmem:[#allocation4 + $0xf0] sm:$0xff] %v3197
  %3230 = vst [vmem:[#allocation4 + $0xf8] sm:$0xff] %v3198
  %v3231 = vld [vmem:[#allocation4] sm:$0xff]
  %v3232 = vld [vmem:[#allocation4 + $0x8] sm:$0xff]
  %v3233 = vld [vmem:[#allocation4 + $0x10] sm:$0xff]
  %v3234 = vld [vmem:[#allocation4 + $0x18] sm:$0xff]
  %v3235 = vld [vmem:[#allocation4 + $0x20] sm:$0xff]
  %v3236 = vld [vmem:[#allocation4 + $0x28] sm:$0xff]
  %v3237 = vld [vmem:[#allocation4 + $0x30] sm:$0xff]
  %v3238 = vld [vmem:[#allocation4 + $0x38] sm:$0xff]
  %v3239 = vld [vmem:[#allocation4 + $0x40] sm:$0xff]
  %v3240 = vld [vmem:[#allocation4 + $0x48] sm:$0xff]
  %v3241 = vld [vmem:[#allocation4 + $0x50] sm:$0xff]
  %v3242 = vld [vmem:[#allocation4 + $0x58] sm:$0xff]
  %v3243 = vld [vmem:[#allocation4 + $0x60] sm:$0xff]
  %v3244 = vld [vmem:[#allocation4 + $0x68] sm:$0xff]
  %v3245 = vld [vmem:[#allocation4 + $0x70] sm:$0xff]
  %v3246 = vld [vmem:[#allocation4 + $0x78] sm:$0xff]
  %v3247 = vld [vmem:[#allocation4 + $0x80] sm:$0xff]
  %v3248 = vld [vmem:[#allocation4 + $0x88] sm:$0xff]
  %v3249 = vld [vmem:[#allocation4 + $0x90] sm:$0xff]
  %v3250 = vld [vmem:[#allocation4 + $0x98] sm:$0xff]
  %v3251 = vld [vmem:[#allocation4 + $0xa0] sm:$0xff]
  %v3252 = vld [vmem:[#allocation4 + $0xa8] sm:$0xff]
  %v3253 = vld [vmem:[#allocation4 + $0xb0] sm:$0xff]
  %v3254 = vld [vmem:[#allocation4 + $0xb8] sm:$0xff]
  %v3255 = vld [vmem:[#allocation4 + $0xc0] sm:$0xff]
  %v3256 = vld [vmem:[#allocation4 + $0xc8] sm:$0xff]
  %v3257 = vld [vmem:[#allocation4 + $0xd0] sm:$0xff]
  %v3258 = vld [vmem:[#allocation4 + $0xd8] sm:$0xff]
  %v3259 = vld [vmem:[#allocation4 + $0xe0] sm:$0xff]
  %v3260 = vld [vmem:[#allocation4 + $0xe8] sm:$0xff]
  %v3261 = vld [vmem:[#allocation4 + $0xf0] sm:$0xff]
  %v3262 = vld [vmem:[#allocation4 + $0xf8] sm:$0xff]
  %v3263 = vld [vmem:[%s4] sm:$0xff]
  %v3264 = vld [vmem:[%s4 + $0x8] sm:$0xff]
  %v3265 = vld [vmem:[%s4 + $0x10] sm:$0xff]
  %v3266 = vld [vmem:[%s4 + $0x18] sm:$0xff]
  %v3267 = vld [vmem:[%s4 + $0x20] sm:$0xff]
  %v3268 = vld [vmem:[%s4 + $0x28] sm:$0xff]
  %v3269 = vld [vmem:[%s4 + $0x30] sm:$0xff]
  %v3270 = vld [vmem:[%s4 + $0x38] sm:$0xff]
  %v3271 = vld [vmem:[%s4 + $0x40] sm:$0xff]
  %v3272 = vld [vmem:[%s4 + $0x48] sm:$0xff]
  %v3273 = vld [vmem:[%s4 + $0x50] sm:$0xff]
  %v3274 = vld [vmem:[%s4 + $0x58] sm:$0xff]
  %v3275 = vld [vmem:[%s4 + $0x60] sm:$0xff]
  %v3276 = vld [vmem:[%s4 + $0x68] sm:$0xff]
  %v3277 = vld [vmem:[%s4 + $0x70] sm:$0xff]
  %v3278 = vld [vmem:[%s4 + $0x78] sm:$0xff]
  %v3279 = vld [vmem:[%s4 + $0x80] sm:$0xff]
  %v3280 = vld [vmem:[%s4 + $0x88] sm:$0xff]
  %v3281 = vld [vmem:[%s4 + $0x90] sm:$0xff]
  %v3282 = vld [vmem:[%s4 + $0x98] sm:$0xff]
  %v3283 = vld [vmem:[%s4 + $0xa0] sm:$0xff]
  %v3284 = vld [vmem:[%s4 + $0xa8] sm:$0xff]
  %v3285 = vld [vmem:[%s4 + $0xb0] sm:$0xff]
  %v3286 = vld [vmem:[%s4 + $0xb8] sm:$0xff]
  %v3287 = vld [vmem:[%s4 + $0xc0] sm:$0xff]
  %v3288 = vld [vmem:[%s4 + $0xc8] sm:$0xff]
  %v3289 = vld [vmem:[%s4 + $0xd0] sm:$0xff]
  %v3290 = vld [vmem:[%s4 + $0xd8] sm:$0xff]
  %v3291 = vld [vmem:[%s4 + $0xe0] sm:$0xff]
  %v3292 = vld [vmem:[%s4 + $0xe8] sm:$0xff]
  %v3293 = vld [vmem:[%s4 + $0xf0] sm:$0xff]
  %v3294 = vld [vmem:[%s4 + $0xf8] sm:$0xff]
  %v3295 = vld [vmem:[#allocation4 + $0x2] sm:$0xff]
  %v3296 = vld [vmem:[#allocation4 + $0xa] sm:$0xff]
  %v3297 = vld [vmem:[#allocation4 + $0x12] sm:$0xff]
  %v3298 = vld [vmem:[#allocation4 + $0x1a] sm:$0xff]
  %v3299 = vld [vmem:[#allocation4 + $0x22] sm:$0xff]
  %v3300 = vld [vmem:[#allocation4 + $0x2a] sm:$0xff]
  %v3301 = vld [vmem:[#allocation4 + $0x32] sm:$0xff]
  %v3302 = vld [vmem:[#allocation4 + $0x3a] sm:$0xff]
  %v3303 = vld [vmem:[#allocation4 + $0x42] sm:$0xff]
  %v3304 = vld [vmem:[#allocation4 + $0x4a] sm:$0xff]
  %v3305 = vld [vmem:[#allocation4 + $0x52] sm:$0xff]
  %v3306 = vld [vmem:[#allocation4 + $0x5a] sm:$0xff]
  %v3307 = vld [vmem:[#allocation4 + $0x62] sm:$0xff]
  %v3308 = vld [vmem:[#allocation4 + $0x6a] sm:$0xff]
  %v3309 = vld [vmem:[#allocation4 + $0x72] sm:$0xff]
  %v3310 = vld [vmem:[#allocation4 + $0x7a] sm:$0xff]
  %v3311 = vld [vmem:[#allocation4 + $0x82] sm:$0xff]
  %v3312 = vld [vmem:[#allocation4 + $0x8a] sm:$0xff]
  %v3313 = vld [vmem:[#allocation4 + $0x92] sm:$0xff]
  %v3314 = vld [vmem:[#allocation4 + $0x9a] sm:$0xff]
  %v3315 = vld [vmem:[#allocation4 + $0xa2] sm:$0xff]
  %v3316 = vld [vmem:[#allocation4 + $0xaa] sm:$0xff]
  %v3317 = vld [vmem:[#allocation4 + $0xb2] sm:$0xff]
  %v3318 = vld [vmem:[#allocation4 + $0xba] sm:$0xff]
  %v3319 = vld [vmem:[#allocation4 + $0xc2] sm:$0xff]
  %v3320 = vld [vmem:[#allocation4 + $0xca] sm:$0xff]
  %v3321 = vld [vmem:[#allocation4 + $0xd2] sm:$0xff]
  %v3322 = vld [vmem:[#allocation4 + $0xda] sm:$0xff]
  %v3323 = vld [vmem:[#allocation4 + $0xe2] sm:$0xff]
  %v3324 = vld [vmem:[#allocation4 + $0xea] sm:$0xff]
  %v3325 = vld [vmem:[#allocation4 + $0xf2] sm:$0xff]
  %v3326 = vld [vmem:[#allocation4 + $0xfa] sm:$0xff]
  %s3327 = scalar_lea.vmem %s4, 256
  %v3328 = vld [vmem:[%s3327] sm:$0xff]
  %v3329 = vld [vmem:[%s3327 + $0x8] sm:$0xff]
  %v3330 = vld [vmem:[%s3327 + $0x10] sm:$0xff]
  %v3331 = vld [vmem:[%s3327 + $0x18] sm:$0xff]
  %v3332 = vld [vmem:[%s3327 + $0x20] sm:$0xff]
  %v3333 = vld [vmem:[%s3327 + $0x28] sm:$0xff]
  %v3334 = vld [vmem:[%s3327 + $0x30] sm:$0xff]
  %v3335 = vld [vmem:[%s3327 + $0x38] sm:$0xff]
  %v3336 = vld [vmem:[%s3327 + $0x40] sm:$0xff]
  %v3337 = vld [vmem:[%s3327 + $0x48] sm:$0xff]
  %v3338 = vld [vmem:[%s3327 + $0x50] sm:$0xff]
  %v3339 = vld [vmem:[%s3327 + $0x58] sm:$0xff]
  %v3340 = vld [vmem:[%s3327 + $0x60] sm:$0xff]
  %v3341 = vld [vmem:[%s3327 + $0x68] sm:$0xff]
  %v3342 = vld [vmem:[%s3327 + $0x70] sm:$0xff]
  %v3343 = vld [vmem:[%s3327 + $0x78] sm:$0xff]
  %v3344 = vld [vmem:[%s3327 + $0x80] sm:$0xff]
  %v3345 = vld [vmem:[%s3327 + $0x88] sm:$0xff]
  %v3346 = vld [vmem:[%s3327 + $0x90] sm:$0xff]
  %v3347 = vld [vmem:[%s3327 + $0x98] sm:$0xff]
  %v3348 = vld [vmem:[%s3327 + $0xa0] sm:$0xff]
  %v3349 = vld [vmem:[%s3327 + $0xa8] sm:$0xff]
  %v3350 = vld [vmem:[%s3327 + $0xb0] sm:$0xff]
  %v3351 = vld [vmem:[%s3327 + $0xb8] sm:$0xff]
  %v3352 = vld [vmem:[%s3327 + $0xc0] sm:$0xff]
  %v3353 = vld [vmem:[%s3327 + $0xc8] sm:$0xff]
  %v3354 = vld [vmem:[%s3327 + $0xd0] sm:$0xff]
  %v3355 = vld [vmem:[%s3327 + $0xd8] sm:$0xff]
  %v3356 = vld [vmem:[%s3327 + $0xe0] sm:$0xff]
  %v3357 = vld [vmem:[%s3327 + $0xe8] sm:$0xff]
  %v3358 = vld [vmem:[%s3327 + $0xf0] sm:$0xff]
  %v3359 = vld [vmem:[%s3327 + $0xf8] sm:$0xff]
  %3360 = vmatprep.subr.mxu0 %v3359
  %3361 = vmatpush1.msra.mxu0 %v3358
  %3362 = vmatprep.subr.mxu0 %v3357
  %3363 = vmatpush1.msra.mxu0 %v3356
  %3364 = vmatprep.subr.mxu0 %v3355
  %3365 = vmatpush1.msra.mxu0 %v3354
  %3366 = vmatprep.subr.mxu0 %v3353
  %3367 = vmatpush1.msra.mxu0 %v3352
  %3368 = vmatprep.subr.mxu0 %v3351
  %3369 = vmatpush1.msra.mxu0 %v3350
  %3370 = vmatprep.subr.mxu0 %v3349
  %3371 = vmatpush1.msra.mxu0 %v3348
  %3372 = vmatprep.subr.mxu0 %v3347
  %3373 = vmatpush1.msra.mxu0 %v3346
  %3374 = vmatprep.subr.mxu0 %v3345
  %3375 = vmatpush1.msra.mxu0 %v3344
  %3376 = vmatprep.subr.mxu0 %v3343
  %3377 = vmatpush1.msra.mxu0 %v3342
  %3378 = vmatprep.subr.mxu0 %v3341
  %3379 = vmatpush1.msra.mxu0 %v3340
  %3380 = vmatprep.subr.mxu0 %v3339
  %3381 = vmatpush1.msra.mxu0 %v3338
  %3382 = vmatprep.subr.mxu0 %v3337
  %3383 = vmatpush1.msra.mxu0 %v3336
  %3384 = vmatprep.subr.mxu0 %v3335
  %3385 = vmatpush1.msra.mxu0 %v3334
  %3386 = vmatprep.subr.mxu0 %v3333
  %3387 = vmatpush1.msra.mxu0 %v3332
  %3388 = vmatprep.subr.mxu0 %v3331
  %3389 = vmatpush1.msra.mxu0 %v3330
  %3390 = vmatprep.subr.mxu0 %v3329
  %3391 = vmatpush1.msra.mxu0 %v3328
  %3392 = vmatprep.subr.mxu0 0.0
  %3393 = vmatpush2.msra.mxu0 0.0
  %3394 = vmatprep.subr.mxu0 0.0
  %3395 = vmatpush2.msra.mxu0 0.0
  %3396 = vmatprep.subr.mxu0 0.0
  %3397 = vmatpush2.msra.mxu0 0.0
  %3398 = vmatprep.subr.mxu0 0.0
  %3399 = vmatpush2.msra.mxu0 0.0
  %3400 = vmatprep.subr.mxu0 0.0
  %3401 = vmatpush2.msra.mxu0 0.0
  %3402 = vmatprep.subr.mxu0 0.0
  %3403 = vmatpush2.msra.mxu0 0.0
  %3404 = vmatprep.subr.mxu0 0.0
  %3405 = vmatpush2.msra.mxu0 0.0
  %3406 = vmatprep.subr.mxu0 0.0
  %3407 = vmatpush2.msra.mxu0 0.0
  %3408 = vmatprep.subr.mxu0 0.0
  %3409 = vmatpush2.msra.mxu0 0.0
  %3410 = vmatprep.subr.mxu0 0.0
  %3411 = vmatpush2.msra.mxu0 0.0
  %3412 = vmatprep.subr.mxu0 0.0
  %3413 = vmatpush2.msra.mxu0 0.0
  %3414 = vmatprep.subr.mxu0 0.0
  %3415 = vmatpush2.msra.mxu0 0.0
  %3416 = vmatprep.subr.mxu0 0.0
  %3417 = vmatpush2.msra.mxu0 0.0
  %3418 = vmatprep.subr.mxu0 0.0
  %3419 = vmatpush2.msra.mxu0 0.0
  %3420 = vmatprep.subr.mxu0 0.0
  %3421 = vmatpush2.msra.mxu0 0.0
  %3422 = vmatprep.subr.mxu0 0.0
  %3423 = vmatpush2.msra.mxu0 0.0
  %3424 = vmatprep.mubr.f32.mxu0 0.0
  %3425 = vmatmul.mubr.f32.gmra.mxu0 %v3295
  %v3426 = vpop.f32.mrf.mxu0
  %v3427 = vadd.f32 0.0, %v3426
  %v3428 = vpop.f32.mrf.mxu0
  %v3429 = vadd.f32 0.0, %v3428
  %3430 = vmatprep.mubr.f32.mxu0 0.0
  %3431 = vmatmul.mubr.f32.gmra.mxu0 %v3296
  %v3432 = vpop.f32.mrf.mxu0
  %v3433 = vadd.f32 0.0, %v3432
  %v3434 = vpop.f32.mrf.mxu0
  %v3435 = vadd.f32 0.0, %v3434
  %3436 = vmatprep.mubr.f32.mxu0 0.0
  %3437 = vmatmul.mubr.f32.gmra.mxu0 %v3297
  %v3438 = vpop.f32.mrf.mxu0
  %v3439 = vadd.f32 0.0, %v3438
  %v3440 = vpop.f32.mrf.mxu0
  %v3441 = vadd.f32 0.0, %v3440
  %3442 = vmatprep.mubr.f32.mxu0 0.0
  %3443 = vmatmul.mubr.f32.gmra.mxu0 %v3298
  %v3444 = vpop.f32.mrf.mxu0
  %v3445 = vadd.f32 0.0, %v3444
  %v3446 = vpop.f32.mrf.mxu0
  %v3447 = vadd.f32 0.0, %v3446
  %3448 = vmatprep.mubr.f32.mxu0 0.0
  %3449 = vmatmul.mubr.f32.gmra.mxu0 %v3299
  %v3450 = vpop.f32.mrf.mxu0
  %v3451 = vadd.f32 0.0, %v3450
  %v3452 = vpop.f32.mrf.mxu0
  %v3453 = vadd.f32 0.0, %v3452
  %3454 = vmatprep.mubr.f32.mxu0 0.0
  %3455 = vmatmul.mubr.f32.gmra.mxu0 %v3300
  %v3456 = vpop.f32.mrf.mxu0
  %v3457 = vadd.f32 0.0, %v3456
  %v3458 = vpop.f32.mrf.mxu0
  %v3459 = vadd.f32 0.0, %v3458
  %3460 = vmatprep.mubr.f32.mxu0 0.0
  %3461 = vmatmul.mubr.f32.gmra.mxu0 %v3301
  %v3462 = vpop.f32.mrf.mxu0
  %v3463 = vadd.f32 0.0, %v3462
  %v3464 = vpop.f32.mrf.mxu0
  %v3465 = vadd.f32 0.0, %v3464
  %3466 = vmatprep.mubr.f32.mxu0 0.0
  %3467 = vmatmul.mubr.f32.gmra.mxu0 %v3302
  %v3468 = vpop.f32.mrf.mxu0
  %v3469 = vadd.f32 0.0, %v3468
  %v3470 = vpop.f32.mrf.mxu0
  %v3471 = vadd.f32 0.0, %v3470
  %3472 = vmatprep.mubr.f32.mxu0 0.0
  %3473 = vmatmul.mubr.f32.gmra.mxu0 %v3303
  %v3474 = vpop.f32.mrf.mxu0
  %v3475 = vadd.f32 0.0, %v3474
  %v3476 = vpop.f32.mrf.mxu0
  %v3477 = vadd.f32 0.0, %v3476
  %3478 = vmatprep.mubr.f32.mxu0 0.0
  %3479 = vmatmul.mubr.f32.gmra.mxu0 %v3304
  %v3480 = vpop.f32.mrf.mxu0
  %v3481 = vadd.f32 0.0, %v3480
  %v3482 = vpop.f32.mrf.mxu0
  %v3483 = vadd.f32 0.0, %v3482
  %3484 = vmatprep.mubr.f32.mxu0 0.0
  %3485 = vmatmul.mubr.f32.gmra.mxu0 %v3305
  %v3486 = vpop.f32.mrf.mxu0
  %v3487 = vadd.f32 0.0, %v3486
  %v3488 = vpop.f32.mrf.mxu0
  %v3489 = vadd.f32 0.0, %v3488
  %3490 = vmatprep.mubr.f32.mxu0 0.0
  %3491 = vmatmul.mubr.f32.gmra.mxu0 %v3306
  %v3492 = vpop.f32.mrf.mxu0
  %v3493 = vadd.f32 0.0, %v3492
  %v3494 = vpop.f32.mrf.mxu0
  %v3495 = vadd.f32 0.0, %v3494
  %3496 = vmatprep.mubr.f32.mxu0 0.0
  %3497 = vmatmul.mubr.f32.gmra.mxu0 %v3307
  %v3498 = vpop.f32.mrf.mxu0
  %v3499 = vadd.f32 0.0, %v3498
  %v3500 = vpop.f32.mrf.mxu0
  %v3501 = vadd.f32 0.0, %v3500
  %3502 = vmatprep.mubr.f32.mxu0 0.0
  %3503 = vmatmul.mubr.f32.gmra.mxu0 %v3308
  %v3504 = vpop.f32.mrf.mxu0
  %v3505 = vadd.f32 0.0, %v3504
  %v3506 = vpop.f32.mrf.mxu0
  %v3507 = vadd.f32 0.0, %v3506
  %3508 = vmatprep.mubr.f32.mxu0 0.0
  %3509 = vmatmul.mubr.f32.gmra.mxu0 %v3309
  %v3510 = vpop.f32.mrf.mxu0
  %v3511 = vadd.f32 0.0, %v3510
  %v3512 = vpop.f32.mrf.mxu0
  %v3513 = vadd.f32 0.0, %v3512
  %3514 = vmatprep.mubr.f32.mxu0 0.0
  %3515 = vmatmul.mubr.f32.gmra.mxu0 %v3310
  %v3516 = vpop.f32.mrf.mxu0
  %v3517 = vadd.f32 0.0, %v3516
  %v3518 = vpop.f32.mrf.mxu0
  %v3519 = vadd.f32 0.0, %v3518
  %3520 = vmatprep.mubr.f32.mxu0 0.0
  %3521 = vmatmul.mubr.f32.gmra.mxu0 %v3311
  %v3522 = vpop.f32.mrf.mxu0
  %v3523 = vadd.f32 0.0, %v3522
  %v3524 = vpop.f32.mrf.mxu0
  %v3525 = vadd.f32 0.0, %v3524
  %3526 = vmatprep.mubr.f32.mxu0 0.0
  %3527 = vmatmul.mubr.f32.gmra.mxu0 %v3312
  %v3528 = vpop.f32.mrf.mxu0
  %v3529 = vadd.f32 0.0, %v3528
  %v3530 = vpop.f32.mrf.mxu0
  %v3531 = vadd.f32 0.0, %v3530
  %3532 = vmatprep.mubr.f32.mxu0 0.0
  %3533 = vmatmul.mubr.f32.gmra.mxu0 %v3313
  %v3534 = vpop.f32.mrf.mxu0
  %v3535 = vadd.f32 0.0, %v3534
  %v3536 = vpop.f32.mrf.mxu0
  %v3537 = vadd.f32 0.0, %v3536
  %3538 = vmatprep.mubr.f32.mxu0 0.0
  %3539 = vmatmul.mubr.f32.gmra.mxu0 %v3314
  %v3540 = vpop.f32.mrf.mxu0
  %v3541 = vadd.f32 0.0, %v3540
  %v3542 = vpop.f32.mrf.mxu0
  %v3543 = vadd.f32 0.0, %v3542
  %3544 = vmatprep.mubr.f32.mxu0 0.0
  %3545 = vmatmul.mubr.f32.gmra.mxu0 %v3315
  %v3546 = vpop.f32.mrf.mxu0
  %v3547 = vadd.f32 0.0, %v3546
  %v3548 = vpop.f32.mrf.mxu0
  %v3549 = vadd.f32 0.0, %v3548
  %3550 = vmatprep.mubr.f32.mxu0 0.0
  %3551 = vmatmul.mubr.f32.gmra.mxu0 %v3316
  %v3552 = vpop.f32.mrf.mxu0
  %v3553 = vadd.f32 0.0, %v3552
  %v3554 = vpop.f32.mrf.mxu0
  %v3555 = vadd.f32 0.0, %v3554
  %3556 = vmatprep.mubr.f32.mxu0 0.0
  %3557 = vmatmul.mubr.f32.gmra.mxu0 %v3317
  %v3558 = vpop.f32.mrf.mxu0
  %v3559 = vadd.f32 0.0, %v3558
  %v3560 = vpop.f32.mrf.mxu0
  %v3561 = vadd.f32 0.0, %v3560
  %3562 = vmatprep.mubr.f32.mxu0 0.0
  %3563 = vmatmul.mubr.f32.gmra.mxu0 %v3318
  %v3564 = vpop.f32.mrf.mxu0
  %v3565 = vadd.f32 0.0, %v3564
  %v3566 = vpop.f32.mrf.mxu0
  %v3567 = vadd.f32 0.0, %v3566
  %3568 = vmatprep.mubr.f32.mxu0 0.0
  %3569 = vmatmul.mubr.f32.gmra.mxu0 %v3319
  %v3570 = vpop.f32.mrf.mxu0
  %v3571 = vadd.f32 0.0, %v3570
  %v3572 = vpop.f32.mrf.mxu0
  %v3573 = vadd.f32 0.0, %v3572
  %3574 = vmatprep.mubr.f32.mxu0 0.0
  %3575 = vmatmul.mubr.f32.gmra.mxu0 %v3320
  %v3576 = vpop.f32.mrf.mxu0
  %v3577 = vadd.f32 0.0, %v3576
  %v3578 = vpop.f32.mrf.mxu0
  %v3579 = vadd.f32 0.0, %v3578
  %3580 = vmatprep.mubr.f32.mxu0 0.0
  %3581 = vmatmul.mubr.f32.gmra.mxu0 %v3321
  %v3582 = vpop.f32.mrf.mxu0
  %v3583 = vadd.f32 0.0, %v3582
  %v3584 = vpop.f32.mrf.mxu0
  %v3585 = vadd.f32 0.0, %v3584
  %3586 = vmatprep.mubr.f32.mxu0 0.0
  %3587 = vmatmul.mubr.f32.gmra.mxu0 %v3322
  %v3588 = vpop.f32.mrf.mxu0
  %v3589 = vadd.f32 0.0, %v3588
  %v3590 = vpop.f32.mrf.mxu0
  %v3591 = vadd.f32 0.0, %v3590
  %3592 = vmatprep.mubr.f32.mxu0 0.0
  %3593 = vmatmul.mubr.f32.gmra.mxu0 %v3323
  %v3594 = vpop.f32.mrf.mxu0
  %v3595 = vadd.f32 0.0, %v3594
  %v3596 = vpop.f32.mrf.mxu0
  %v3597 = vadd.f32 0.0, %v3596
  %3598 = vmatprep.mubr.f32.mxu0 0.0
  %3599 = vmatmul.mubr.f32.gmra.mxu0 %v3324
  %v3600 = vpop.f32.mrf.mxu0
  %v3601 = vadd.f32 0.0, %v3600
  %v3602 = vpop.f32.mrf.mxu0
  %v3603 = vadd.f32 0.0, %v3602
  %3604 = vmatprep.mubr.f32.mxu0 0.0
  %3605 = vmatmul.mubr.f32.gmra.mxu0 %v3325
  %v3606 = vpop.f32.mrf.mxu0
  %v3607 = vadd.f32 0.0, %v3606
  %v3608 = vpop.f32.mrf.mxu0
  %v3609 = vadd.f32 0.0, %v3608
  %3610 = vmatprep.mubr.f32.mxu0 0.0
  %3611 = vmatmul.mubr.f32.gmra.mxu0 %v3326
  %v3612 = vpop.f32.mrf.mxu0
  %v3613 = vadd.f32 0.0, %v3612
  %v3614 = vpop.f32.mrf.mxu0
  %v3615 = vadd.f32 0.0, %v3614
  %3616 = vdwg.mxu0
  %3617 = vmatprep.subr.mxu0 %v3294
  %3618 = vmatpush1.msra.mxu0 %v3293
  %3619 = vmatprep.subr.mxu0 %v3292
  %3620 = vmatpush1.msra.mxu0 %v3291
  %3621 = vmatprep.subr.mxu0 %v3290
  %3622 = vmatpush1.msra.mxu0 %v3289
  %3623 = vmatprep.subr.mxu0 %v3288
  %3624 = vmatpush1.msra.mxu0 %v3287
  %3625 = vmatprep.subr.mxu0 %v3286
  %3626 = vmatpush1.msra.mxu0 %v3285
  %3627 = vmatprep.subr.mxu0 %v3284
  %3628 = vmatpush1.msra.mxu0 %v3283
  %3629 = vmatprep.subr.mxu0 %v3282
  %3630 = vmatpush1.msra.mxu0 %v3281
  %3631 = vmatprep.subr.mxu0 %v3280
  %3632 = vmatpush1.msra.mxu0 %v3279
  %3633 = vmatprep.subr.mxu0 %v3278
  %3634 = vmatpush1.msra.mxu0 %v3277
  %3635 = vmatprep.subr.mxu0 %v3276
  %3636 = vmatpush1.msra.mxu0 %v3275
  %3637 = vmatprep.subr.mxu0 %v3274
  %3638 = vmatpush1.msra.mxu0 %v3273
  %3639 = vmatprep.subr.mxu0 %v3272
  %3640 = vmatpush1.msra.mxu0 %v3271
  %3641 = vmatprep.subr.mxu0 %v3270
  %3642 = vmatpush1.msra.mxu0 %v3269
  %3643 = vmatprep.subr.mxu0 %v3268
  %3644 = vmatpush1.msra.mxu0 %v3267
  %3645 = vmatprep.subr.mxu0 %v3266
  %3646 = vmatpush1.msra.mxu0 %v3265
  %3647 = vmatprep.subr.mxu0 %v3264
  %3648 = vmatpush1.msra.mxu0 %v3263
  %3649 = vmatprep.subr.mxu0 0.0
  %3650 = vmatpush2.msra.mxu0 0.0
  %3651 = vmatprep.subr.mxu0 0.0
  %3652 = vmatpush2.msra.mxu0 0.0
  %3653 = vmatprep.subr.mxu0 0.0
  %3654 = vmatpush2.msra.mxu0 0.0
  %3655 = vmatprep.subr.mxu0 0.0
  %3656 = vmatpush2.msra.mxu0 0.0
  %3657 = vmatprep.subr.mxu0 0.0
  %3658 = vmatpush2.msra.mxu0 0.0
  %3659 = vmatprep.subr.mxu0 0.0
  %3660 = vmatpush2.msra.mxu0 0.0
  %3661 = vmatprep.subr.mxu0 0.0
  %3662 = vmatpush2.msra.mxu0 0.0
  %3663 = vmatprep.subr.mxu0 0.0
  %3664 = vmatpush2.msra.mxu0 0.0
  %3665 = vmatprep.subr.mxu0 0.0
  %3666 = vmatpush2.msra.mxu0 0.0
  %3667 = vmatprep.subr.mxu0 0.0
  %3668 = vmatpush2.msra.mxu0 0.0
  %3669 = vmatprep.subr.mxu0 0.0
  %3670 = vmatpush2.msra.mxu0 0.0
  %3671 = vmatprep.subr.mxu0 0.0
  %3672 = vmatpush2.msra.mxu0 0.0
  %3673 = vmatprep.subr.mxu0 0.0
  %3674 = vmatpush2.msra.mxu0 0.0
  %3675 = vmatprep.subr.mxu0 0.0
  %3676 = vmatpush2.msra.mxu0 0.0
  %3677 = vmatprep.subr.mxu0 0.0
  %3678 = vmatpush2.msra.mxu0 0.0
  %3679 = vmatprep.subr.mxu0 0.0
  %3680 = vmatpush2.msra.mxu0 0.0
  %3681 = vmatprep.mubr.f32.mxu0 0.0
  %3682 = vmatmul.mubr.f32.gmra.mxu0 %v3231
  %v3683 = vpop.f32.mrf.mxu0
  %v3684 = vadd.f32 %v3427, %v3683
  %v3685 = vpop.f32.mrf.mxu0
  %v3686 = vadd.f32 %v3429, %v3685
  %3687 = vmatprep.mubr.f32.mxu0 0.0
  %3688 = vmatmul.mubr.f32.gmra.mxu0 %v3232
  %v3689 = vpop.f32.mrf.mxu0
  %v3690 = vadd.f32 %v3433, %v3689
  %v3691 = vpop.f32.mrf.mxu0
  %v3692 = vadd.f32 %v3435, %v3691
  %3693 = vmatprep.mubr.f32.mxu0 0.0
  %3694 = vmatmul.mubr.f32.gmra.mxu0 %v3233
  %v3695 = vpop.f32.mrf.mxu0
  %v3696 = vadd.f32 %v3439, %v3695
  %v3697 = vpop.f32.mrf.mxu0
  %v3698 = vadd.f32 %v3441, %v3697
  %3699 = vmatprep.mubr.f32.mxu0 0.0
  %3700 = vmatmul.mubr.f32.gmra.mxu0 %v3234
  %v3701 = vpop.f32.mrf.mxu0
  %v3702 = vadd.f32 %v3445, %v3701
  %v3703 = vpop.f32.mrf.mxu0
  %v3704 = vadd.f32 %v3447, %v3703
  %3705 = vmatprep.mubr.f32.mxu0 0.0
  %3706 = vmatmul.mubr.f32.gmra.mxu0 %v3235
  %v3707 = vpop.f32.mrf.mxu0
  %v3708 = vadd.f32 %v3451, %v3707
  %v3709 = vpop.f32.mrf.mxu0
  %v3710 = vadd.f32 %v3453, %v3709
  %3711 = vmatprep.mubr.f32.mxu0 0.0
  %3712 = vmatmul.mubr.f32.gmra.mxu0 %v3236
  %v3713 = vpop.f32.mrf.mxu0
  %v3714 = vadd.f32 %v3457, %v3713
  %v3715 = vpop.f32.mrf.mxu0
  %v3716 = vadd.f32 %v3459, %v3715
  %3717 = vmatprep.mubr.f32.mxu0 0.0
  %3718 = vmatmul.mubr.f32.gmra.mxu0 %v3237
  %v3719 = vpop.f32.mrf.mxu0
  %v3720 = vadd.f32 %v3463, %v3719
  %v3721 = vpop.f32.mrf.mxu0
  %v3722 = vadd.f32 %v3465, %v3721
  %3723 = vmatprep.mubr.f32.mxu0 0.0
  %3724 = vmatmul.mubr.f32.gmra.mxu0 %v3238
  %v3725 = vpop.f32.mrf.mxu0
  %v3726 = vadd.f32 %v3469, %v3725
  %v3727 = vpop.f32.mrf.mxu0
  %v3728 = vadd.f32 %v3471, %v3727
  %3729 = vmatprep.mubr.f32.mxu0 0.0
  %3730 = vmatmul.mubr.f32.gmra.mxu0 %v3239
  %v3731 = vpop.f32.mrf.mxu0
  %v3732 = vadd.f32 %v3475, %v3731
  %v3733 = vpop.f32.mrf.mxu0
  %v3734 = vadd.f32 %v3477, %v3733
  %3735 = vmatprep.mubr.f32.mxu0 0.0
  %3736 = vmatmul.mubr.f32.gmra.mxu0 %v3240
  %v3737 = vpop.f32.mrf.mxu0
  %v3738 = vadd.f32 %v3481, %v3737
  %v3739 = vpop.f32.mrf.mxu0
  %v3740 = vadd.f32 %v3483, %v3739
  %3741 = vmatprep.mubr.f32.mxu0 0.0
  %3742 = vmatmul.mubr.f32.gmra.mxu0 %v3241
  %v3743 = vpop.f32.mrf.mxu0
  %v3744 = vadd.f32 %v3487, %v3743
  %v3745 = vpop.f32.mrf.mxu0
  %v3746 = vadd.f32 %v3489, %v3745
  %3747 = vmatprep.mubr.f32.mxu0 0.0
  %3748 = vmatmul.mubr.f32.gmra.mxu0 %v3242
  %v3749 = vpop.f32.mrf.mxu0
  %v3750 = vadd.f32 %v3493, %v3749
  %v3751 = vpop.f32.mrf.mxu0
  %v3752 = vadd.f32 %v3495, %v3751
  %3753 = vmatprep.mubr.f32.mxu0 0.0
  %3754 = vmatmul.mubr.f32.gmra.mxu0 %v3243
  %v3755 = vpop.f32.mrf.mxu0
  %v3756 = vadd.f32 %v3499, %v3755
  %v3757 = vpop.f32.mrf.mxu0
  %v3758 = vadd.f32 %v3501, %v3757
  %3759 = vmatprep.mubr.f32.mxu0 0.0
  %3760 = vmatmul.mubr.f32.gmra.mxu0 %v3244
  %v3761 = vpop.f32.mrf.mxu0
  %v3762 = vadd.f32 %v3505, %v3761
  %v3763 = vpop.f32.mrf.mxu0
  %v3764 = vadd.f32 %v3507, %v3763
  %3765 = vmatprep.mubr.f32.mxu0 0.0
  %3766 = vmatmul.mubr.f32.gmra.mxu0 %v3245
  %v3767 = vpop.f32.mrf.mxu0
  %v3768 = vadd.f32 %v3511, %v3767
  %v3769 = vpop.f32.mrf.mxu0
  %v3770 = vadd.f32 %v3513, %v3769
  %3771 = vmatprep.mubr.f32.mxu0 0.0
  %3772 = vmatmul.mubr.f32.gmra.mxu0 %v3246
  %v3773 = vpop.f32.mrf.mxu0
  %v3774 = vadd.f32 %v3517, %v3773
  %v3775 = vpop.f32.mrf.mxu0
  %v3776 = vadd.f32 %v3519, %v3775
  %3777 = vmatprep.mubr.f32.mxu0 0.0
  %3778 = vmatmul.mubr.f32.gmra.mxu0 %v3247
  %v3779 = vpop.f32.mrf.mxu0
  %v3780 = vadd.f32 %v3523, %v3779
  %v3781 = vpop.f32.mrf.mxu0
  %v3782 = vadd.f32 %v3525, %v3781
  %3783 = vmatprep.mubr.f32.mxu0 0.0
  %3784 = vmatmul.mubr.f32.gmra.mxu0 %v3248
  %v3785 = vpop.f32.mrf.mxu0
  %v3786 = vadd.f32 %v3529, %v3785
  %v3787 = vpop.f32.mrf.mxu0
  %v3788 = vadd.f32 %v3531, %v3787
  %3789 = vmatprep.mubr.f32.mxu0 0.0
  %3790 = vmatmul.mubr.f32.gmra.mxu0 %v3249
  %v3791 = vpop.f32.mrf.mxu0
  %v3792 = vadd.f32 %v3535, %v3791
  %v3793 = vpop.f32.mrf.mxu0
  %v3794 = vadd.f32 %v3537, %v3793
  %3795 = vmatprep.mubr.f32.mxu0 0.0
  %3796 = vmatmul.mubr.f32.gmra.mxu0 %v3250
  %v3797 = vpop.f32.mrf.mxu0
  %v3798 = vadd.f32 %v3541, %v3797
  %v3799 = vpop.f32.mrf.mxu0
  %v3800 = vadd.f32 %v3543, %v3799
  %3801 = vmatprep.mubr.f32.mxu0 0.0
  %3802 = vmatmul.mubr.f32.gmra.mxu0 %v3251
  %v3803 = vpop.f32.mrf.mxu0
  %v3804 = vadd.f32 %v3547, %v3803
  %v3805 = vpop.f32.mrf.mxu0
  %v3806 = vadd.f32 %v3549, %v3805
  %3807 = vmatprep.mubr.f32.mxu0 0.0
  %3808 = vmatmul.mubr.f32.gmra.mxu0 %v3252
  %v3809 = vpop.f32.mrf.mxu0
  %v3810 = vadd.f32 %v3553, %v3809
  %v3811 = vpop.f32.mrf.mxu0
  %v3812 = vadd.f32 %v3555, %v3811
  %3813 = vmatprep.mubr.f32.mxu0 0.0
  %3814 = vmatmul.mubr.f32.gmra.mxu0 %v3253
  %v3815 = vpop.f32.mrf.mxu0
  %v3816 = vadd.f32 %v3559, %v3815
  %v3817 = vpop.f32.mrf.mxu0
  %v3818 = vadd.f32 %v3561, %v3817
  %3819 = vmatprep.mubr.f32.mxu0 0.0
  %3820 = vmatmul.mubr.f32.gmra.mxu0 %v3254
  %v3821 = vpop.f32.mrf.mxu0
  %v3822 = vadd.f32 %v3565, %v3821
  %v3823 = vpop.f32.mrf.mxu0
  %v3824 = vadd.f32 %v3567, %v3823
  %3825 = vmatprep.mubr.f32.mxu0 0.0
  %3826 = vmatmul.mubr.f32.gmra.mxu0 %v3255
  %v3827 = vpop.f32.mrf.mxu0
  %v3828 = vadd.f32 %v3571, %v3827
  %v3829 = vpop.f32.mrf.mxu0
  %v3830 = vadd.f32 %v3573, %v3829
  %3831 = vmatprep.mubr.f32.mxu0 0.0
  %3832 = vmatmul.mubr.f32.gmra.mxu0 %v3256
  %v3833 = vpop.f32.mrf.mxu0
  %v3834 = vadd.f32 %v3577, %v3833
  %v3835 = vpop.f32.mrf.mxu0
  %v3836 = vadd.f32 %v3579, %v3835
  %3837 = vmatprep.mubr.f32.mxu0 0.0
  %3838 = vmatmul.mubr.f32.gmra.mxu0 %v3257
  %v3839 = vpop.f32.mrf.mxu0
  %v3840 = vadd.f32 %v3583, %v3839
  %v3841 = vpop.f32.mrf.mxu0
  %v3842 = vadd.f32 %v3585, %v3841
  %3843 = vmatprep.mubr.f32.mxu0 0.0
  %3844 = vmatmul.mubr.f32.gmra.mxu0 %v3258
  %v3845 = vpop.f32.mrf.mxu0
  %v3846 = vadd.f32 %v3589, %v3845
  %v3847 = vpop.f32.mrf.mxu0
  %v3848 = vadd.f32 %v3591, %v3847
  %3849 = vmatprep.mubr.f32.mxu0 0.0
  %3850 = vmatmul.mubr.f32.gmra.mxu0 %v3259
  %v3851 = vpop.f32.mrf.mxu0
  %v3852 = vadd.f32 %v3595, %v3851
  %v3853 = vpop.f32.mrf.mxu0
  %v3854 = vadd.f32 %v3597, %v3853
  %3855 = vmatprep.mubr.f32.mxu0 0.0
  %3856 = vmatmul.mubr.f32.gmra.mxu0 %v3260
  %v3857 = vpop.f32.mrf.mxu0
  %v3858 = vadd.f32 %v3601, %v3857
  %v3859 = vpop.f32.mrf.mxu0
  %v3860 = vadd.f32 %v3603, %v3859
  %3861 = vmatprep.mubr.f32.mxu0 0.0
  %3862 = vmatmul.mubr.f32.gmra.mxu0 %v3261
  %v3863 = vpop.f32.mrf.mxu0
  %v3864 = vadd.f32 %v3607, %v3863
  %v3865 = vpop.f32.mrf.mxu0
  %v3866 = vadd.f32 %v3609, %v3865
  %3867 = vmatprep.mubr.f32.mxu0 0.0
  %3868 = vmatmul.mubr.f32.gmra.mxu0 %v3262
  %v3869 = vpop.f32.mrf.mxu0
  %v3870 = vadd.f32 %v3613, %v3869
  %v3871 = vpop.f32.mrf.mxu0
  %v3872 = vadd.f32 %v3615, %v3871
  %3873 = vdwg.mxu0
  %v3874 = vld [vmem:[#allocation4 + $0x4] sm:$0xff]
  %v3875 = vld [vmem:[#allocation4 + $0xc] sm:$0xff]
  %v3876 = vld [vmem:[#allocation4 + $0x14] sm:$0xff]
  %v3877 = vld [vmem:[#allocation4 + $0x1c] sm:$0xff]
  %v3878 = vld [vmem:[#allocation4 + $0x24] sm:$0xff]
  %v3879 = vld [vmem:[#allocation4 + $0x2c] sm:$0xff]
  %v3880 = vld [vmem:[#allocation4 + $0x34] sm:$0xff]
  %v3881 = vld [vmem:[#allocation4 + $0x3c] sm:$0xff]
  %v3882 = vld [vmem:[#allocation4 + $0x44] sm:$0xff]
  %v3883 = vld [vmem:[#allocation4 + $0x4c] sm:$0xff]
  %v3884 = vld [vmem:[#allocation4 + $0x54] sm:$0xff]
  %v3885 = vld [vmem:[#allocation4 + $0x5c] sm:$0xff]
  %v3886 = vld [vmem:[#allocation4 + $0x64] sm:$0xff]
  %v3887 = vld [vmem:[#allocation4 + $0x6c] sm:$0xff]
  %v3888 = vld [vmem:[#allocation4 + $0x74] sm:$0xff]
  %v3889 = vld [vmem:[#allocation4 + $0x7c] sm:$0xff]
  %v3890 = vld [vmem:[#allocation4 + $0x84] sm:$0xff]
  %v3891 = vld [vmem:[#allocation4 + $0x8c] sm:$0xff]
  %v3892 = vld [vmem:[#allocation4 + $0x94] sm:$0xff]
  %v3893 = vld [vmem:[#allocation4 + $0x9c] sm:$0xff]
  %v3894 = vld [vmem:[#allocation4 + $0xa4] sm:$0xff]
  %v3895 = vld [vmem:[#allocation4 + $0xac] sm:$0xff]
  %v3896 = vld [vmem:[#allocation4 + $0xb4] sm:$0xff]
  %v3897 = vld [vmem:[#allocation4 + $0xbc] sm:$0xff]
  %v3898 = vld [vmem:[#allocation4 + $0xc4] sm:$0xff]
  %v3899 = vld [vmem:[#allocation4 + $0xcc] sm:$0xff]
  %v3900 = vld [vmem:[#allocation4 + $0xd4] sm:$0xff]
  %v3901 = vld [vmem:[#allocation4 + $0xdc] sm:$0xff]
  %v3902 = vld [vmem:[#allocation4 + $0xe4] sm:$0xff]
  %v3903 = vld [vmem:[#allocation4 + $0xec] sm:$0xff]
  %v3904 = vld [vmem:[#allocation4 + $0xf4] sm:$0xff]
  %v3905 = vld [vmem:[#allocation4 + $0xfc] sm:$0xff]
  %s3906 = scalar_lea.vmem %s4, 512
  %v3907 = vld [vmem:[%s3906] sm:$0xff]
  %v3908 = vld [vmem:[%s3906 + $0x8] sm:$0xff]
  %v3909 = vld [vmem:[%s3906 + $0x10] sm:$0xff]
  %v3910 = vld [vmem:[%s3906 + $0x18] sm:$0xff]
  %v3911 = vld [vmem:[%s3906 + $0x20] sm:$0xff]
  %v3912 = vld [vmem:[%s3906 + $0x28] sm:$0xff]
  %v3913 = vld [vmem:[%s3906 + $0x30] sm:$0xff]
  %v3914 = vld [vmem:[%s3906 + $0x38] sm:$0xff]
  %v3915 = vld [vmem:[%s3906 + $0x40] sm:$0xff]
  %v3916 = vld [vmem:[%s3906 + $0x48] sm:$0xff]
  %v3917 = vld [vmem:[%s3906 + $0x50] sm:$0xff]
  %v3918 = vld [vmem:[%s3906 + $0x58] sm:$0xff]
  %v3919 = vld [vmem:[%s3906 + $0x60] sm:$0xff]
  %v3920 = vld [vmem:[%s3906 + $0x68] sm:$0xff]
  %v3921 = vld [vmem:[%s3906 + $0x70] sm:$0xff]
  %v3922 = vld [vmem:[%s3906 + $0x78] sm:$0xff]
  %v3923 = vld [vmem:[%s3906 + $0x80] sm:$0xff]
  %v3924 = vld [vmem:[%s3906 + $0x88] sm:$0xff]
  %v3925 = vld [vmem:[%s3906 + $0x90] sm:$0xff]
  %v3926 = vld [vmem:[%s3906 + $0x98] sm:$0xff]
  %v3927 = vld [vmem:[%s3906 + $0xa0] sm:$0xff]
  %v3928 = vld [vmem:[%s3906 + $0xa8] sm:$0xff]
  %v3929 = vld [vmem:[%s3906 + $0xb0] sm:$0xff]
  %v3930 = vld [vmem:[%s3906 + $0xb8] sm:$0xff]
  %v3931 = vld [vmem:[%s3906 + $0xc0] sm:$0xff]
  %v3932 = vld [vmem:[%s3906 + $0xc8] sm:$0xff]
  %v3933 = vld [vmem:[%s3906 + $0xd0] sm:$0xff]
  %v3934 = vld [vmem:[%s3906 + $0xd8] sm:$0xff]
  %v3935 = vld [vmem:[%s3906 + $0xe0] sm:$0xff]
  %v3936 = vld [vmem:[%s3906 + $0xe8] sm:$0xff]
  %v3937 = vld [vmem:[%s3906 + $0xf0] sm:$0xff]
  %v3938 = vld [vmem:[%s3906 + $0xf8] sm:$0xff]
  %3939 = vmatprep.subr.mxu0 %v3938
  %3940 = vmatpush1.msra.mxu0 %v3937
  %3941 = vmatprep.subr.mxu0 %v3936
  %3942 = vmatpush1.msra.mxu0 %v3935
  %3943 = vmatprep.subr.mxu0 %v3934
  %3944 = vmatpush1.msra.mxu0 %v3933
  %3945 = vmatprep.subr.mxu0 %v3932
  %3946 = vmatpush1.msra.mxu0 %v3931
  %3947 = vmatprep.subr.mxu0 %v3930
  %3948 = vmatpush1.msra.mxu0 %v3929
  %3949 = vmatprep.subr.mxu0 %v3928
  %3950 = vmatpush1.msra.mxu0 %v3927
  %3951 = vmatprep.subr.mxu0 %v3926
  %3952 = vmatpush1.msra.mxu0 %v3925
  %3953 = vmatprep.subr.mxu0 %v3924
  %3954 = vmatpush1.msra.mxu0 %v3923
  %3955 = vmatprep.subr.mxu0 %v3922
  %3956 = vmatpush1.msra.mxu0 %v3921
  %3957 = vmatprep.subr.mxu0 %v3920
  %3958 = vmatpush1.msra.mxu0 %v3919
  %3959 = vmatprep.subr.mxu0 %v3918
  %3960 = vmatpush1.msra.mxu0 %v3917
  %3961 = vmatprep.subr.mxu0 %v3916
  %3962 = vmatpush1.msra.mxu0 %v3915
  %3963 = vmatprep.subr.mxu0 %v3914
  %3964 = vmatpush1.msra.mxu0 %v3913
  %3965 = vmatprep.subr.mxu0 %v3912
  %3966 = vmatpush1.msra.mxu0 %v3911
  %3967 = vmatprep.subr.mxu0 %v3910
  %3968 = vmatpush1.msra.mxu0 %v3909
  %3969 = vmatprep.subr.mxu0 %v3908
  %3970 = vmatpush1.msra.mxu0 %v3907
  %3971 = vmatprep.subr.mxu0 0.0
  %3972 = vmatpush2.msra.mxu0 0.0
  %3973 = vmatprep.subr.mxu0 0.0
  %3974 = vmatpush2.msra.mxu0 0.0
  %3975 = vmatprep.subr.mxu0 0.0
  %3976 = vmatpush2.msra.mxu0 0.0
  %3977 = vmatprep.subr.mxu0 0.0
  %3978 = vmatpush2.msra.mxu0 0.0
  %3979 = vmatprep.subr.mxu0 0.0
  %3980 = vmatpush2.msra.mxu0 0.0
  %3981 = vmatprep.subr.mxu0 0.0
  %3982 = vmatpush2.msra.mxu0 0.0
  %3983 = vmatprep.subr.mxu0 0.0
  %3984 = vmatpush2.msra.mxu0 0.0
  %3985 = vmatprep.subr.mxu0 0.0
  %3986 = vmatpush2.msra.mxu0 0.0
  %3987 = vmatprep.subr.mxu0 0.0
  %3988 = vmatpush2.msra.mxu0 0.0
  %3989 = vmatprep.subr.mxu0 0.0
  %3990 = vmatpush2.msra.mxu0 0.0
  %3991 = vmatprep.subr.mxu0 0.0
  %3992 = vmatpush2.msra.mxu0 0.0
  %3993 = vmatprep.subr.mxu0 0.0
  %3994 = vmatpush2.msra.mxu0 0.0
  %3995 = vmatprep.subr.mxu0 0.0
  %3996 = vmatpush2.msra.mxu0 0.0
  %3997 = vmatprep.subr.mxu0 0.0
  %3998 = vmatpush2.msra.mxu0 0.0
  %3999 = vmatprep.subr.mxu0 0.0
  %4000 = vmatpush2.msra.mxu0 0.0
  %4001 = vmatprep.subr.mxu0 0.0
  %4002 = vmatpush2.msra.mxu0 0.0
  %4003 = vmatprep.mubr.f32.mxu0 0.0
  %4004 = vmatmul.mubr.f32.gmra.mxu0 %v3874
  %v4005 = vpop.f32.mrf.mxu0
  %v4006 = vadd.f32 0.0, %v4005
  %v4007 = vpop.f32.mrf.mxu0
  %v4008 = vadd.f32 0.0, %v4007
  %4009 = vmatprep.mubr.f32.mxu0 0.0
  %4010 = vmatmul.mubr.f32.gmra.mxu0 %v3875
  %v4011 = vpop.f32.mrf.mxu0
  %v4012 = vadd.f32 0.0, %v4011
  %v4013 = vpop.f32.mrf.mxu0
  %v4014 = vadd.f32 0.0, %v4013
  %4015 = vmatprep.mubr.f32.mxu0 0.0
  %4016 = vmatmul.mubr.f32.gmra.mxu0 %v3876
  %v4017 = vpop.f32.mrf.mxu0
  %v4018 = vadd.f32 0.0, %v4017
  %v4019 = vpop.f32.mrf.mxu0
  %v4020 = vadd.f32 0.0, %v4019
  %4021 = vmatprep.mubr.f32.mxu0 0.0
  %4022 = vmatmul.mubr.f32.gmra.mxu0 %v3877
  %v4023 = vpop.f32.mrf.mxu0
  %v4024 = vadd.f32 0.0, %v4023
  %v4025 = vpop.f32.mrf.mxu0
  %v4026 = vadd.f32 0.0, %v4025
  %4027 = vmatprep.mubr.f32.mxu0 0.0
  %4028 = vmatmul.mubr.f32.gmra.mxu0 %v3878
  %v4029 = vpop.f32.mrf.mxu0
  %v4030 = vadd.f32 0.0, %v4029
  %v4031 = vpop.f32.mrf.mxu0
  %v4032 = vadd.f32 0.0, %v4031
  %4033 = vmatprep.mubr.f32.mxu0 0.0
  %4034 = vmatmul.mubr.f32.gmra.mxu0 %v3879
  %v4035 = vpop.f32.mrf.mxu0
  %v4036 = vadd.f32 0.0, %v4035
  %v4037 = vpop.f32.mrf.mxu0
  %v4038 = vadd.f32 0.0, %v4037
  %4039 = vmatprep.mubr.f32.mxu0 0.0
  %4040 = vmatmul.mubr.f32.gmra.mxu0 %v3880
  %v4041 = vpop.f32.mrf.mxu0
  %v4042 = vadd.f32 0.0, %v4041
  %v4043 = vpop.f32.mrf.mxu0
  %v4044 = vadd.f32 0.0, %v4043
  %4045 = vmatprep.mubr.f32.mxu0 0.0
  %4046 = vmatmul.mubr.f32.gmra.mxu0 %v3881
  %v4047 = vpop.f32.mrf.mxu0
  %v4048 = vadd.f32 0.0, %v4047
  %v4049 = vpop.f32.mrf.mxu0
  %v4050 = vadd.f32 0.0, %v4049
  %4051 = vmatprep.mubr.f32.mxu0 0.0
  %4052 = vmatmul.mubr.f32.gmra.mxu0 %v3882
  %v4053 = vpop.f32.mrf.mxu0
  %v4054 = vadd.f32 0.0, %v4053
  %v4055 = vpop.f32.mrf.mxu0
  %v4056 = vadd.f32 0.0, %v4055
  %4057 = vmatprep.mubr.f32.mxu0 0.0
  %4058 = vmatmul.mubr.f32.gmra.mxu0 %v3883
  %v4059 = vpop.f32.mrf.mxu0
  %v4060 = vadd.f32 0.0, %v4059
  %v4061 = vpop.f32.mrf.mxu0
  %v4062 = vadd.f32 0.0, %v4061
  %4063 = vmatprep.mubr.f32.mxu0 0.0
  %4064 = vmatmul.mubr.f32.gmra.mxu0 %v3884
  %v4065 = vpop.f32.mrf.mxu0
  %v4066 = vadd.f32 0.0, %v4065
  %v4067 = vpop.f32.mrf.mxu0
  %v4068 = vadd.f32 0.0, %v4067
  %4069 = vmatprep.mubr.f32.mxu0 0.0
  %4070 = vmatmul.mubr.f32.gmra.mxu0 %v3885
  %v4071 = vpop.f32.mrf.mxu0
  %v4072 = vadd.f32 0.0, %v4071
  %v4073 = vpop.f32.mrf.mxu0
  %v4074 = vadd.f32 0.0, %v4073
  %4075 = vmatprep.mubr.f32.mxu0 0.0
  %4076 = vmatmul.mubr.f32.gmra.mxu0 %v3886
  %v4077 = vpop.f32.mrf.mxu0
  %v4078 = vadd.f32 0.0, %v4077
  %v4079 = vpop.f32.mrf.mxu0
  %v4080 = vadd.f32 0.0, %v4079
  %4081 = vmatprep.mubr.f32.mxu0 0.0
  %4082 = vmatmul.mubr.f32.gmra.mxu0 %v3887
  %v4083 = vpop.f32.mrf.mxu0
  %v4084 = vadd.f32 0.0, %v4083
  %v4085 = vpop.f32.mrf.mxu0
  %v4086 = vadd.f32 0.0, %v4085
  %4087 = vmatprep.mubr.f32.mxu0 0.0
  %4088 = vmatmul.mubr.f32.gmra.mxu0 %v3888
  %v4089 = vpop.f32.mrf.mxu0
  %v4090 = vadd.f32 0.0, %v4089
  %v4091 = vpop.f32.mrf.mxu0
  %v4092 = vadd.f32 0.0, %v4091
  %4093 = vmatprep.mubr.f32.mxu0 0.0
  %4094 = vmatmul.mubr.f32.gmra.mxu0 %v3889
  %v4095 = vpop.f32.mrf.mxu0
  %v4096 = vadd.f32 0.0, %v4095
  %v4097 = vpop.f32.mrf.mxu0
  %v4098 = vadd.f32 0.0, %v4097
  %4099 = vmatprep.mubr.f32.mxu0 0.0
  %4100 = vmatmul.mubr.f32.gmra.mxu0 %v3890
  %v4101 = vpop.f32.mrf.mxu0
  %v4102 = vadd.f32 0.0, %v4101
  %v4103 = vpop.f32.mrf.mxu0
  %v4104 = vadd.f32 0.0, %v4103
  %4105 = vmatprep.mubr.f32.mxu0 0.0
  %4106 = vmatmul.mubr.f32.gmra.mxu0 %v3891
  %v4107 = vpop.f32.mrf.mxu0
  %v4108 = vadd.f32 0.0, %v4107
  %v4109 = vpop.f32.mrf.mxu0
  %v4110 = vadd.f32 0.0, %v4109
  %4111 = vmatprep.mubr.f32.mxu0 0.0
  %4112 = vmatmul.mubr.f32.gmra.mxu0 %v3892
  %v4113 = vpop.f32.mrf.mxu0
  %v4114 = vadd.f32 0.0, %v4113
  %v4115 = vpop.f32.mrf.mxu0
  %v4116 = vadd.f32 0.0, %v4115
  %4117 = vmatprep.mubr.f32.mxu0 0.0
  %4118 = vmatmul.mubr.f32.gmra.mxu0 %v3893
  %v4119 = vpop.f32.mrf.mxu0
  %v4120 = vadd.f32 0.0, %v4119
  %v4121 = vpop.f32.mrf.mxu0
  %v4122 = vadd.f32 0.0, %v4121
  %4123 = vmatprep.mubr.f32.mxu0 0.0
  %4124 = vmatmul.mubr.f32.gmra.mxu0 %v3894
  %v4125 = vpop.f32.mrf.mxu0
  %v4126 = vadd.f32 0.0, %v4125
  %v4127 = vpop.f32.mrf.mxu0
  %v4128 = vadd.f32 0.0, %v4127
  %4129 = vmatprep.mubr.f32.mxu0 0.0
  %4130 = vmatmul.mubr.f32.gmra.mxu0 %v3895
  %v4131 = vpop.f32.mrf.mxu0
  %v4132 = vadd.f32 0.0, %v4131
  %v4133 = vpop.f32.mrf.mxu0
  %v4134 = vadd.f32 0.0, %v4133
  %4135 = vmatprep.mubr.f32.mxu0 0.0
  %4136 = vmatmul.mubr.f32.gmra.mxu0 %v3896
  %v4137 = vpop.f32.mrf.mxu0
  %v4138 = vadd.f32 0.0, %v4137
  %v4139 = vpop.f32.mrf.mxu0
  %v4140 = vadd.f32 0.0, %v4139
  %4141 = vmatprep.mubr.f32.mxu0 0.0
  %4142 = vmatmul.mubr.f32.gmra.mxu0 %v3897
  %v4143 = vpop.f32.mrf.mxu0
  %v4144 = vadd.f32 0.0, %v4143
  %v4145 = vpop.f32.mrf.mxu0
  %v4146 = vadd.f32 0.0, %v4145
  %4147 = vmatprep.mubr.f32.mxu0 0.0
  %4148 = vmatmul.mubr.f32.gmra.mxu0 %v3898
  %v4149 = vpop.f32.mrf.mxu0
  %v4150 = vadd.f32 0.0, %v4149
  %v4151 = vpop.f32.mrf.mxu0
  %v4152 = vadd.f32 0.0, %v4151
  %4153 = vmatprep.mubr.f32.mxu0 0.0
  %4154 = vmatmul.mubr.f32.gmra.mxu0 %v3899
  %v4155 = vpop.f32.mrf.mxu0
  %v4156 = vadd.f32 0.0, %v4155
  %v4157 = vpop.f32.mrf.mxu0
  %v4158 = vadd.f32 0.0, %v4157
  %4159 = vmatprep.mubr.f32.mxu0 0.0
  %4160 = vmatmul.mubr.f32.gmra.mxu0 %v3900
  %v4161 = vpop.f32.mrf.mxu0
  %v4162 = vadd.f32 0.0, %v4161
  %v4163 = vpop.f32.mrf.mxu0
  %v4164 = vadd.f32 0.0, %v4163
  %4165 = vmatprep.mubr.f32.mxu0 0.0
  %4166 = vmatmul.mubr.f32.gmra.mxu0 %v3901
  %v4167 = vpop.f32.mrf.mxu0
  %v4168 = vadd.f32 0.0, %v4167
  %v4169 = vpop.f32.mrf.mxu0
  %v4170 = vadd.f32 0.0, %v4169
  %4171 = vmatprep.mubr.f32.mxu0 0.0
  %4172 = vmatmul.mubr.f32.gmra.mxu0 %v3902
  %v4173 = vpop.f32.mrf.mxu0
  %v4174 = vadd.f32 0.0, %v4173
  %v4175 = vpop.f32.mrf.mxu0
  %v4176 = vadd.f32 0.0, %v4175
  %4177 = vmatprep.mubr.f32.mxu0 0.0
  %4178 = vmatmul.mubr.f32.gmra.mxu0 %v3903
  %v4179 = vpop.f32.mrf.mxu0
  %v4180 = vadd.f32 0.0, %v4179
  %v4181 = vpop.f32.mrf.mxu0
  %v4182 = vadd.f32 0.0, %v4181
  %4183 = vmatprep.mubr.f32.mxu0 0.0
  %4184 = vmatmul.mubr.f32.gmra.mxu0 %v3904
  %v4185 = vpop.f32.mrf.mxu0
  %v4186 = vadd.f32 0.0, %v4185
  %v4187 = vpop.f32.mrf.mxu0
  %v4188 = vadd.f32 0.0, %v4187
  %4189 = vmatprep.mubr.f32.mxu0 0.0
  %4190 = vmatmul.mubr.f32.gmra.mxu0 %v3905
  %v4191 = vpop.f32.mrf.mxu0
  %v4192 = vadd.f32 0.0, %v4191
  %v4193 = vpop.f32.mrf.mxu0
  %v4194 = vadd.f32 0.0, %v4193
  %4195 = vdwg.mxu0
  %v4196 = vadd.f32 %v3684, %v4006
  %v4197 = vadd.f32 %v3686, %v4008
  %v4198 = vadd.f32 %v3690, %v4012
  %v4199 = vadd.f32 %v3692, %v4014
  %v4200 = vadd.f32 %v3696, %v4018
  %v4201 = vadd.f32 %v3698, %v4020
  %v4202 = vadd.f32 %v3702, %v4024
  %v4203 = vadd.f32 %v3704, %v4026
  %v4204 = vadd.f32 %v3708, %v4030
  %v4205 = vadd.f32 %v3710, %v4032
  %v4206 = vadd.f32 %v3714, %v4036
  %v4207 = vadd.f32 %v3716, %v4038
  %v4208 = vadd.f32 %v3720, %v4042
  %v4209 = vadd.f32 %v3722, %v4044
  %v4210 = vadd.f32 %v3726, %v4048
  %v4211 = vadd.f32 %v3728, %v4050
  %v4212 = vadd.f32 %v3732, %v4054
  %v4213 = vadd.f32 %v3734, %v4056
  %v4214 = vadd.f32 %v3738, %v4060
  %v4215 = vadd.f32 %v3740, %v4062
  %v4216 = vadd.f32 %v3744, %v4066
  %v4217 = vadd.f32 %v3746, %v4068
  %v4218 = vadd.f32 %v3750, %v4072
  %v4219 = vadd.f32 %v3752, %v4074
  %v4220 = vadd.f32 %v3756, %v4078
  %v4221 = vadd.f32 %v3758, %v4080
  %v4222 = vadd.f32 %v3762, %v4084
  %v4223 = vadd.f32 %v3764, %v4086
  %v4224 = vadd.f32 %v3768, %v4090
  %v4225 = vadd.f32 %v3770, %v4092
  %v4226 = vadd.f32 %v3774, %v4096
  %v4227 = vadd.f32 %v3776, %v4098
  %v4228 = vadd.f32 %v3780, %v4102
  %v4229 = vadd.f32 %v3782, %v4104
  %v4230 = vadd.f32 %v3786, %v4108
  %v4231 = vadd.f32 %v3788, %v4110
  %v4232 = vadd.f32 %v3792, %v4114
  %v4233 = vadd.f32 %v3794, %v4116
  %v4234 = vadd.f32 %v3798, %v4120
  %v4235 = vadd.f32 %v3800, %v4122
  %v4236 = vadd.f32 %v3804, %v4126
  %v4237 = vadd.f32 %v3806, %v4128
  %v4238 = vadd.f32 %v3810, %v4132
  %v4239 = vadd.f32 %v3812, %v4134
  %v4240 = vadd.f32 %v3816, %v4138
  %v4241 = vadd.f32 %v3818, %v4140
  %v4242 = vadd.f32 %v3822, %v4144
  %v4243 = vadd.f32 %v3824, %v4146
  %v4244 = vadd.f32 %v3828, %v4150
  %v4245 = vadd.f32 %v3830, %v4152
  %v4246 = vadd.f32 %v3834, %v4156
  %v4247 = vadd.f32 %v3836, %v4158
  %v4248 = vadd.f32 %v3840, %v4162
  %v4249 = vadd.f32 %v3842, %v4164
  %v4250 = vadd.f32 %v3846, %v4168
  %v4251 = vadd.f32 %v3848, %v4170
  %v4252 = vadd.f32 %v3852, %v4174
  %v4253 = vadd.f32 %v3854, %v4176
  %v4254 = vadd.f32 %v3858, %v4180
  %v4255 = vadd.f32 %v3860, %v4182
  %v4256 = vadd.f32 %v3864, %v4186
  %v4257 = vadd.f32 %v3866, %v4188
  %v4258 = vadd.f32 %v3870, %v4192
  %v4259 = vadd.f32 %v3872, %v4194
  %v4260 = vld [vmem:[#allocation4 + $0x6] sm:$0xff]
  %v4261 = vld [vmem:[#allocation4 + $0xe] sm:$0xff]
  %v4262 = vld [vmem:[#allocation4 + $0x16] sm:$0xff]
  %v4263 = vld [vmem:[#allocation4 + $0x1e] sm:$0xff]
  %v4264 = vld [vmem:[#allocation4 + $0x26] sm:$0xff]
  %v4265 = vld [vmem:[#allocation4 + $0x2e] sm:$0xff]
  %v4266 = vld [vmem:[#allocation4 + $0x36] sm:$0xff]
  %v4267 = vld [vmem:[#allocation4 + $0x3e] sm:$0xff]
  %v4268 = vld [vmem:[#allocation4 + $0x46] sm:$0xff]
  %v4269 = vld [vmem:[#allocation4 + $0x4e] sm:$0xff]
  %v4270 = vld [vmem:[#allocation4 + $0x56] sm:$0xff]
  %v4271 = vld [vmem:[#allocation4 + $0x5e] sm:$0xff]
  %v4272 = vld [vmem:[#allocation4 + $0x66] sm:$0xff]
  %v4273 = vld [vmem:[#allocation4 + $0x6e] sm:$0xff]
  %v4274 = vld [vmem:[#allocation4 + $0x76] sm:$0xff]
  %v4275 = vld [vmem:[#allocation4 + $0x7e] sm:$0xff]
  %v4276 = vld [vmem:[#allocation4 + $0x86] sm:$0xff]
  %v4277 = vld [vmem:[#allocation4 + $0x8e] sm:$0xff]
  %v4278 = vld [vmem:[#allocation4 + $0x96] sm:$0xff]
  %v4279 = vld [vmem:[#allocation4 + $0x9e] sm:$0xff]
  %v4280 = vld [vmem:[#allocation4 + $0xa6] sm:$0xff]
  %v4281 = vld [vmem:[#allocation4 + $0xae] sm:$0xff]
  %v4282 = vld [vmem:[#allocation4 + $0xb6] sm:$0xff]
  %v4283 = vld [vmem:[#allocation4 + $0xbe] sm:$0xff]
  %v4284 = vld [vmem:[#allocation4 + $0xc6] sm:$0xff]
  %v4285 = vld [vmem:[#allocation4 + $0xce] sm:$0xff]
  %v4286 = vld [vmem:[#allocation4 + $0xd6] sm:$0xff]
  %v4287 = vld [vmem:[#allocation4 + $0xde] sm:$0xff]
  %v4288 = vld [vmem:[#allocation4 + $0xe6] sm:$0xff]
  %v4289 = vld [vmem:[#allocation4 + $0xee] sm:$0xff]
  %v4290 = vld [vmem:[#allocation4 + $0xf6] sm:$0xff]
  %v4291 = vld [vmem:[#allocation4 + $0xfe] sm:$0xff]
  %s4292 = scalar_lea.vmem %s4, 768
  %v4293 = vld [vmem:[%s4292] sm:$0xff]
  %v4294 = vld [vmem:[%s4292 + $0x8] sm:$0xff]
  %v4295 = vld [vmem:[%s4292 + $0x10] sm:$0xff]
  %v4296 = vld [vmem:[%s4292 + $0x18] sm:$0xff]
  %v4297 = vld [vmem:[%s4292 + $0x20] sm:$0xff]
  %v4298 = vld [vmem:[%s4292 + $0x28] sm:$0xff]
  %v4299 = vld [vmem:[%s4292 + $0x30] sm:$0xff]
  %v4300 = vld [vmem:[%s4292 + $0x38] sm:$0xff]
  %v4301 = vld [vmem:[%s4292 + $0x40] sm:$0xff]
  %v4302 = vld [vmem:[%s4292 + $0x48] sm:$0xff]
  %v4303 = vld [vmem:[%s4292 + $0x50] sm:$0xff]
  %v4304 = vld [vmem:[%s4292 + $0x58] sm:$0xff]
  %v4305 = vld [vmem:[%s4292 + $0x60] sm:$0xff]
  %v4306 = vld [vmem:[%s4292 + $0x68] sm:$0xff]
  %v4307 = vld [vmem:[%s4292 + $0x70] sm:$0xff]
  %v4308 = vld [vmem:[%s4292 + $0x78] sm:$0xff]
  %v4309 = vld [vmem:[%s4292 + $0x80] sm:$0xff]
  %v4310 = vld [vmem:[%s4292 + $0x88] sm:$0xff]
  %v4311 = vld [vmem:[%s4292 + $0x90] sm:$0xff]
  %v4312 = vld [vmem:[%s4292 + $0x98] sm:$0xff]
  %v4313 = vld [vmem:[%s4292 + $0xa0] sm:$0xff]
  %v4314 = vld [vmem:[%s4292 + $0xa8] sm:$0xff]
  %v4315 = vld [vmem:[%s4292 + $0xb0] sm:$0xff]
  %v4316 = vld [vmem:[%s4292 + $0xb8] sm:$0xff]
  %v4317 = vld [vmem:[%s4292 + $0xc0] sm:$0xff]
  %v4318 = vld [vmem:[%s4292 + $0xc8] sm:$0xff]
  %v4319 = vld [vmem:[%s4292 + $0xd0] sm:$0xff]
  %v4320 = vld [vmem:[%s4292 + $0xd8] sm:$0xff]
  %v4321 = vld [vmem:[%s4292 + $0xe0] sm:$0xff]
  %v4322 = vld [vmem:[%s4292 + $0xe8] sm:$0xff]
  %v4323 = vld [vmem:[%s4292 + $0xf0] sm:$0xff]
  %v4324 = vld [vmem:[%s4292 + $0xf8] sm:$0xff]
  %4325 = vmatprep.subr.mxu0 %v4324
  %4326 = vmatpush1.msra.mxu0 %v4323
  %4327 = vmatprep.subr.mxu0 %v4322
  %4328 = vmatpush1.msra.mxu0 %v4321
  %4329 = vmatprep.subr.mxu0 %v4320
  %4330 = vmatpush1.msra.mxu0 %v4319
  %4331 = vmatprep.subr.mxu0 %v4318
  %4332 = vmatpush1.msra.mxu0 %v4317
  %4333 = vmatprep.subr.mxu0 %v4316
  %4334 = vmatpush1.msra.mxu0 %v4315
  %4335 = vmatprep.subr.mxu0 %v4314
  %4336 = vmatpush1.msra.mxu0 %v4313
  %4337 = vmatprep.subr.mxu0 %v4312
  %4338 = vmatpush1.msra.mxu0 %v4311
  %4339 = vmatprep.subr.mxu0 %v4310
  %4340 = vmatpush1.msra.mxu0 %v4309
  %4341 = vmatprep.subr.mxu0 %v4308
  %4342 = vmatpush1.msra.mxu0 %v4307
  %4343 = vmatprep.subr.mxu0 %v4306
  %4344 = vmatpush1.msra.mxu0 %v4305
  %4345 = vmatprep.subr.mxu0 %v4304
  %4346 = vmatpush1.msra.mxu0 %v4303
  %4347 = vmatprep.subr.mxu0 %v4302
  %4348 = vmatpush1.msra.mxu0 %v4301
  %4349 = vmatprep.subr.mxu0 %v4300
  %4350 = vmatpush1.msra.mxu0 %v4299
  %4351 = vmatprep.subr.mxu0 %v4298
  %4352 = vmatpush1.msra.mxu0 %v4297
  %4353 = vmatprep.subr.mxu0 %v4296
  %4354 = vmatpush1.msra.mxu0 %v4295
  %4355 = vmatprep.subr.mxu0 %v4294
  %4356 = vmatpush1.msra.mxu0 %v4293
  %4357 = vmatprep.subr.mxu0 0.0
  %4358 = vmatpush2.msra.mxu0 0.0
  %4359 = vmatprep.subr.mxu0 0.0
  %4360 = vmatpush2.msra.mxu0 0.0
  %4361 = vmatprep.subr.mxu0 0.0
  %4362 = vmatpush2.msra.mxu0 0.0
  %4363 = vmatprep.subr.mxu0 0.0
  %4364 = vmatpush2.msra.mxu0 0.0
  %4365 = vmatprep.subr.mxu0 0.0
  %4366 = vmatpush2.msra.mxu0 0.0
  %4367 = vmatprep.subr.mxu0 0.0
  %4368 = vmatpush2.msra.mxu0 0.0
  %4369 = vmatprep.subr.mxu0 0.0
  %4370 = vmatpush2.msra.mxu0 0.0
  %4371 = vmatprep.subr.mxu0 0.0
  %4372 = vmatpush2.msra.mxu0 0.0
  %4373 = vmatprep.subr.mxu0 0.0
  %4374 = vmatpush2.msra.mxu0 0.0
  %4375 = vmatprep.subr.mxu0 0.0
  %4376 = vmatpush2.msra.mxu0 0.0
  %4377 = vmatprep.subr.mxu0 0.0
  %4378 = vmatpush2.msra.mxu0 0.0
  %4379 = vmatprep.subr.mxu0 0.0
  %4380 = vmatpush2.msra.mxu0 0.0
  %4381 = vmatprep.subr.mxu0 0.0
  %4382 = vmatpush2.msra.mxu0 0.0
  %4383 = vmatprep.subr.mxu0 0.0
  %4384 = vmatpush2.msra.mxu0 0.0
  %4385 = vmatprep.subr.mxu0 0.0
  %4386 = vmatpush2.msra.mxu0 0.0
  %4387 = vmatprep.subr.mxu0 0.0
  %4388 = vmatpush2.msra.mxu0 0.0
  %4389 = vmatprep.mubr.f32.mxu0 0.0
  %4390 = vmatmul.mubr.f32.gmra.mxu0 %v4260
  %v4391 = vpop.f32.mrf.mxu0
  %v4392 = vadd.f32 0.0, %v4391
  %v4393 = vpop.f32.mrf.mxu0
  %v4394 = vadd.f32 0.0, %v4393
  %4395 = vmatprep.mubr.f32.mxu0 0.0
  %4396 = vmatmul.mubr.f32.gmra.mxu0 %v4261
  %v4397 = vpop.f32.mrf.mxu0
  %v4398 = vadd.f32 0.0, %v4397
  %v4399 = vpop.f32.mrf.mxu0
  %v4400 = vadd.f32 0.0, %v4399
  %4401 = vmatprep.mubr.f32.mxu0 0.0
  %4402 = vmatmul.mubr.f32.gmra.mxu0 %v4262
  %v4403 = vpop.f32.mrf.mxu0
  %v4404 = vadd.f32 0.0, %v4403
  %v4405 = vpop.f32.mrf.mxu0
  %v4406 = vadd.f32 0.0, %v4405
  %4407 = vmatprep.mubr.f32.mxu0 0.0
  %4408 = vmatmul.mubr.f32.gmra.mxu0 %v4263
  %v4409 = vpop.f32.mrf.mxu0
  %v4410 = vadd.f32 0.0, %v4409
  %v4411 = vpop.f32.mrf.mxu0
  %v4412 = vadd.f32 0.0, %v4411
  %4413 = vmatprep.mubr.f32.mxu0 0.0
  %4414 = vmatmul.mubr.f32.gmra.mxu0 %v4264
  %v4415 = vpop.f32.mrf.mxu0
  %v4416 = vadd.f32 0.0, %v4415
  %v4417 = vpop.f32.mrf.mxu0
  %v4418 = vadd.f32 0.0, %v4417
  %4419 = vmatprep.mubr.f32.mxu0 0.0
  %4420 = vmatmul.mubr.f32.gmra.mxu0 %v4265
  %v4421 = vpop.f32.mrf.mxu0
  %v4422 = vadd.f32 0.0, %v4421
  %v4423 = vpop.f32.mrf.mxu0
  %v4424 = vadd.f32 0.0, %v4423
  %4425 = vmatprep.mubr.f32.mxu0 0.0
  %4426 = vmatmul.mubr.f32.gmra.mxu0 %v4266
  %v4427 = vpop.f32.mrf.mxu0
  %v4428 = vadd.f32 0.0, %v4427
  %v4429 = vpop.f32.mrf.mxu0
  %v4430 = vadd.f32 0.0, %v4429
  %4431 = vmatprep.mubr.f32.mxu0 0.0
  %4432 = vmatmul.mubr.f32.gmra.mxu0 %v4267
  %v4433 = vpop.f32.mrf.mxu0
  %v4434 = vadd.f32 0.0, %v4433
  %v4435 = vpop.f32.mrf.mxu0
  %v4436 = vadd.f32 0.0, %v4435
  %4437 = vmatprep.mubr.f32.mxu0 0.0
  %4438 = vmatmul.mubr.f32.gmra.mxu0 %v4268
  %v4439 = vpop.f32.mrf.mxu0
  %v4440 = vadd.f32 0.0, %v4439
  %v4441 = vpop.f32.mrf.mxu0
  %v4442 = vadd.f32 0.0, %v4441
  %4443 = vmatprep.mubr.f32.mxu0 0.0
  %4444 = vmatmul.mubr.f32.gmra.mxu0 %v4269
  %v4445 = vpop.f32.mrf.mxu0
  %v4446 = vadd.f32 0.0, %v4445
  %v4447 = vpop.f32.mrf.mxu0
  %v4448 = vadd.f32 0.0, %v4447
  %4449 = vmatprep.mubr.f32.mxu0 0.0
  %4450 = vmatmul.mubr.f32.gmra.mxu0 %v4270
  %v4451 = vpop.f32.mrf.mxu0
  %v4452 = vadd.f32 0.0, %v4451
  %v4453 = vpop.f32.mrf.mxu0
  %v4454 = vadd.f32 0.0, %v4453
  %4455 = vmatprep.mubr.f32.mxu0 0.0
  %4456 = vmatmul.mubr.f32.gmra.mxu0 %v4271
  %v4457 = vpop.f32.mrf.mxu0
  %v4458 = vadd.f32 0.0, %v4457
  %v4459 = vpop.f32.mrf.mxu0
  %v4460 = vadd.f32 0.0, %v4459
  %4461 = vmatprep.mubr.f32.mxu0 0.0
  %4462 = vmatmul.mubr.f32.gmra.mxu0 %v4272
  %v4463 = vpop.f32.mrf.mxu0
  %v4464 = vadd.f32 0.0, %v4463
  %v4465 = vpop.f32.mrf.mxu0
  %v4466 = vadd.f32 0.0, %v4465
  %4467 = vmatprep.mubr.f32.mxu0 0.0
  %4468 = vmatmul.mubr.f32.gmra.mxu0 %v4273
  %v4469 = vpop.f32.mrf.mxu0
  %v4470 = vadd.f32 0.0, %v4469
  %v4471 = vpop.f32.mrf.mxu0
  %v4472 = vadd.f32 0.0, %v4471
  %4473 = vmatprep.mubr.f32.mxu0 0.0
  %4474 = vmatmul.mubr.f32.gmra.mxu0 %v4274
  %v4475 = vpop.f32.mrf.mxu0
  %v4476 = vadd.f32 0.0, %v4475
  %v4477 = vpop.f32.mrf.mxu0
  %v4478 = vadd.f32 0.0, %v4477
  %4479 = vmatprep.mubr.f32.mxu0 0.0
  %4480 = vmatmul.mubr.f32.gmra.mxu0 %v4275
  %v4481 = vpop.f32.mrf.mxu0
  %v4482 = vadd.f32 0.0, %v4481
  %v4483 = vpop.f32.mrf.mxu0
  %v4484 = vadd.f32 0.0, %v4483
  %4485 = vmatprep.mubr.f32.mxu0 0.0
  %4486 = vmatmul.mubr.f32.gmra.mxu0 %v4276
  %v4487 = vpop.f32.mrf.mxu0
  %v4488 = vadd.f32 0.0, %v4487
  %v4489 = vpop.f32.mrf.mxu0
  %v4490 = vadd.f32 0.0, %v4489
  %4491 = vmatprep.mubr.f32.mxu0 0.0
  %4492 = vmatmul.mubr.f32.gmra.mxu0 %v4277
  %v4493 = vpop.f32.mrf.mxu0
  %v4494 = vadd.f32 0.0, %v4493
  %v4495 = vpop.f32.mrf.mxu0
  %v4496 = vadd.f32 0.0, %v4495
  %4497 = vmatprep.mubr.f32.mxu0 0.0
  %4498 = vmatmul.mubr.f32.gmra.mxu0 %v4278
  %v4499 = vpop.f32.mrf.mxu0
  %v4500 = vadd.f32 0.0, %v4499
  %v4501 = vpop.f32.mrf.mxu0
  %v4502 = vadd.f32 0.0, %v4501
  %4503 = vmatprep.mubr.f32.mxu0 0.0
  %4504 = vmatmul.mubr.f32.gmra.mxu0 %v4279
  %v4505 = vpop.f32.mrf.mxu0
  %v4506 = vadd.f32 0.0, %v4505
  %v4507 = vpop.f32.mrf.mxu0
  %v4508 = vadd.f32 0.0, %v4507
  %4509 = vmatprep.mubr.f32.mxu0 0.0
  %4510 = vmatmul.mubr.f32.gmra.mxu0 %v4280
  %v4511 = vpop.f32.mrf.mxu0
  %v4512 = vadd.f32 0.0, %v4511
  %v4513 = vpop.f32.mrf.mxu0
  %v4514 = vadd.f32 0.0, %v4513
  %4515 = vmatprep.mubr.f32.mxu0 0.0
  %4516 = vmatmul.mubr.f32.gmra.mxu0 %v4281
  %v4517 = vpop.f32.mrf.mxu0
  %v4518 = vadd.f32 0.0, %v4517
  %v4519 = vpop.f32.mrf.mxu0
  %v4520 = vadd.f32 0.0, %v4519
  %4521 = vmatprep.mubr.f32.mxu0 0.0
  %4522 = vmatmul.mubr.f32.gmra.mxu0 %v4282
  %v4523 = vpop.f32.mrf.mxu0
  %v4524 = vadd.f32 0.0, %v4523
  %v4525 = vpop.f32.mrf.mxu0
  %v4526 = vadd.f32 0.0, %v4525
  %4527 = vmatprep.mubr.f32.mxu0 0.0
  %4528 = vmatmul.mubr.f32.gmra.mxu0 %v4283
  %v4529 = vpop.f32.mrf.mxu0
  %v4530 = vadd.f32 0.0, %v4529
  %v4531 = vpop.f32.mrf.mxu0
  %v4532 = vadd.f32 0.0, %v4531
  %4533 = vmatprep.mubr.f32.mxu0 0.0
  %4534 = vmatmul.mubr.f32.gmra.mxu0 %v4284
  %v4535 = vpop.f32.mrf.mxu0
  %v4536 = vadd.f32 0.0, %v4535
  %v4537 = vpop.f32.mrf.mxu0
  %v4538 = vadd.f32 0.0, %v4537
  %4539 = vmatprep.mubr.f32.mxu0 0.0
  %4540 = vmatmul.mubr.f32.gmra.mxu0 %v4285
  %v4541 = vpop.f32.mrf.mxu0
  %v4542 = vadd.f32 0.0, %v4541
  %v4543 = vpop.f32.mrf.mxu0
  %v4544 = vadd.f32 0.0, %v4543
  %4545 = vmatprep.mubr.f32.mxu0 0.0
  %4546 = vmatmul.mubr.f32.gmra.mxu0 %v4286
  %v4547 = vpop.f32.mrf.mxu0
  %v4548 = vadd.f32 0.0, %v4547
  %v4549 = vpop.f32.mrf.mxu0
  %v4550 = vadd.f32 0.0, %v4549
  %4551 = vmatprep.mubr.f32.mxu0 0.0
  %4552 = vmatmul.mubr.f32.gmra.mxu0 %v4287
  %v4553 = vpop.f32.mrf.mxu0
  %v4554 = vadd.f32 0.0, %v4553
  %v4555 = vpop.f32.mrf.mxu0
  %v4556 = vadd.f32 0.0, %v4555
  %4557 = vmatprep.mubr.f32.mxu0 0.0
  %4558 = vmatmul.mubr.f32.gmra.mxu0 %v4288
  %v4559 = vpop.f32.mrf.mxu0
  %v4560 = vadd.f32 0.0, %v4559
  %v4561 = vpop.f32.mrf.mxu0
  %v4562 = vadd.f32 0.0, %v4561
  %4563 = vmatprep.mubr.f32.mxu0 0.0
  %4564 = vmatmul.mubr.f32.gmra.mxu0 %v4289
  %v4565 = vpop.f32.mrf.mxu0
  %v4566 = vadd.f32 0.0, %v4565
  %v4567 = vpop.f32.mrf.mxu0
  %v4568 = vadd.f32 0.0, %v4567
  %4569 = vmatprep.mubr.f32.mxu0 0.0
  %4570 = vmatmul.mubr.f32.gmra.mxu0 %v4290
  %v4571 = vpop.f32.mrf.mxu0
  %v4572 = vadd.f32 0.0, %v4571
  %v4573 = vpop.f32.mrf.mxu0
  %v4574 = vadd.f32 0.0, %v4573
  %4575 = vmatprep.mubr.f32.mxu0 0.0
  %4576 = vmatmul.mubr.f32.gmra.mxu0 %v4291
  %v4577 = vpop.f32.mrf.mxu0
  %v4578 = vadd.f32 0.0, %v4577
  %v4579 = vpop.f32.mrf.mxu0
  %v4580 = vadd.f32 0.0, %v4579
  %4581 = vdwg.mxu0
  %v4582 = vadd.f32 %v4196, %v4392
  %v4583 = vadd.f32 %v4197, %v4394
  %v4584 = vadd.f32 %v4198, %v4398
  %v4585 = vadd.f32 %v4199, %v4400
  %v4586 = vadd.f32 %v4200, %v4404
  %v4587 = vadd.f32 %v4201, %v4406
  %v4588 = vadd.f32 %v4202, %v4410
  %v4589 = vadd.f32 %v4203, %v4412
  %v4590 = vadd.f32 %v4204, %v4416
  %v4591 = vadd.f32 %v4205, %v4418
  %v4592 = vadd.f32 %v4206, %v4422
  %v4593 = vadd.f32 %v4207, %v4424
  %v4594 = vadd.f32 %v4208, %v4428
  %v4595 = vadd.f32 %v4209, %v4430
  %v4596 = vadd.f32 %v4210, %v4434
  %v4597 = vadd.f32 %v4211, %v4436
  %v4598 = vadd.f32 %v4212, %v4440
  %v4599 = vadd.f32 %v4213, %v4442
  %v4600 = vadd.f32 %v4214, %v4446
  %v4601 = vadd.f32 %v4215, %v4448
  %v4602 = vadd.f32 %v4216, %v4452
  %v4603 = vadd.f32 %v4217, %v4454
  %v4604 = vadd.f32 %v4218, %v4458
  %v4605 = vadd.f32 %v4219, %v4460
  %v4606 = vadd.f32 %v4220, %v4464
  %v4607 = vadd.f32 %v4221, %v4466
  %v4608 = vadd.f32 %v4222, %v4470
  %v4609 = vadd.f32 %v4223, %v4472
  %v4610 = vadd.f32 %v4224, %v4476
  %v4611 = vadd.f32 %v4225, %v4478
  %v4612 = vadd.f32 %v4226, %v4482
  %v4613 = vadd.f32 %v4227, %v4484
  %v4614 = vadd.f32 %v4228, %v4488
  %v4615 = vadd.f32 %v4229, %v4490
  %v4616 = vadd.f32 %v4230, %v4494
  %v4617 = vadd.f32 %v4231, %v4496
  %v4618 = vadd.f32 %v4232, %v4500
  %v4619 = vadd.f32 %v4233, %v4502
  %v4620 = vadd.f32 %v4234, %v4506
  %v4621 = vadd.f32 %v4235, %v4508
  %v4622 = vadd.f32 %v4236, %v4512
  %v4623 = vadd.f32 %v4237, %v4514
  %v4624 = vadd.f32 %v4238, %v4518
  %v4625 = vadd.f32 %v4239, %v4520
  %v4626 = vadd.f32 %v4240, %v4524
  %v4627 = vadd.f32 %v4241, %v4526
  %v4628 = vadd.f32 %v4242, %v4530
  %v4629 = vadd.f32 %v4243, %v4532
  %v4630 = vadd.f32 %v4244, %v4536
  %v4631 = vadd.f32 %v4245, %v4538
  %v4632 = vadd.f32 %v4246, %v4542
  %v4633 = vadd.f32 %v4247, %v4544
  %v4634 = vadd.f32 %v4248, %v4548
  %v4635 = vadd.f32 %v4249, %v4550
  %v4636 = vadd.f32 %v4250, %v4554
  %v4637 = vadd.f32 %v4251, %v4556
  %v4638 = vadd.f32 %v4252, %v4560
  %v4639 = vadd.f32 %v4253, %v4562
  %v4640 = vadd.f32 %v4254, %v4566
  %v4641 = vadd.f32 %v4255, %v4568
  %v4642 = vadd.f32 %v4256, %v4572
  %v4643 = vadd.f32 %v4257, %v4574
  %v4644 = vadd.f32 %v4258, %v4578
  %v4645 = vadd.f32 %v4259, %v4580
  %v4646 = vld [vmem:[#allocation4 + $0x8] sm:$0xff]
  %v4647 = vld [vmem:[#allocation4 + $0x10] sm:$0xff]
  %v4648 = vld [vmem:[#allocation4 + $0x18] sm:$0xff]
  %v4649 = vld [vmem:[#allocation4 + $0x20] sm:$0xff]
  %v4650 = vld [vmem:[#allocation4 + $0x28] sm:$0xff]
  %v4651 = vld [vmem:[#allocation4 + $0x30] sm:$0xff]
  %v4652 = vld [vmem:[#allocation4 + $0x38] sm:$0xff]
  %v4653 = vld [vmem:[#allocation4 + $0x40] sm:$0xff]
  %v4654 = vld [vmem:[#allocation4 + $0x48] sm:$0xff]
  %v4655 = vld [vmem:[#allocation4 + $0x50] sm:$0xff]
  %v4656 = vld [vmem:[#allocation4 + $0x58] sm:$0xff]
  %v4657 = vld [vmem:[#allocation4 + $0x60] sm:$0xff]
  %v4658 = vld [vmem:[#allocation4 + $0x68] sm:$0xff]
  %v4659 = vld [vmem:[#allocation4 + $0x70] sm:$0xff]
  %v4660 = vld [vmem:[#allocation4 + $0x78] sm:$0xff]
  %v4661 = vld [vmem:[#allocation4 + $0x80] sm:$0xff]
  %v4662 = vld [vmem:[#allocation4 + $0x88] sm:$0xff]
  %v4663 = vld [vmem:[#allocation4 + $0x90] sm:$0xff]
  %v4664 = vld [vmem:[#allocation4 + $0x98] sm:$0xff]
  %v4665 = vld [vmem:[#allocation4 + $0xa0] sm:$0xff]
  %v4666 = vld [vmem:[#allocation4 + $0xa8] sm:$0xff]
  %v4667 = vld [vmem:[#allocation4 + $0xb0] sm:$0xff]
  %v4668 = vld [vmem:[#allocation4 + $0xb8] sm:$0xff]
  %v4669 = vld [vmem:[#allocation4 + $0xc0] sm:$0xff]
  %v4670 = vld [vmem:[#allocation4 + $0xc8] sm:$0xff]
  %v4671 = vld [vmem:[#allocation4 + $0xd0] sm:$0xff]
  %v4672 = vld [vmem:[#allocation4 + $0xd8] sm:$0xff]
  %v4673 = vld [vmem:[#allocation4 + $0xe0] sm:$0xff]
  %v4674 = vld [vmem:[#allocation4 + $0xe8] sm:$0xff]
  %v4675 = vld [vmem:[#allocation4 + $0xf0] sm:$0xff]
  %v4676 = vld [vmem:[#allocation4 + $0xf8] sm:$0xff]
  %v4677 = vld [vmem:[#allocation4 + $0x100] sm:$0xff]
  %s4678 = scalar_lea.vmem %s4, 1024
  %v4679 = vld [vmem:[%s4678] sm:$0xff]
  %v4680 = vld [vmem:[%s4678 + $0x8] sm:$0xff]
  %v4681 = vld [vmem:[%s4678 + $0x10] sm:$0xff]
  %v4682 = vld [vmem:[%s4678 + $0x18] sm:$0xff]
  %v4683 = vld [vmem:[%s4678 + $0x20] sm:$0xff]
  %v4684 = vld [vmem:[%s4678 + $0x28] sm:$0xff]
  %v4685 = vld [vmem:[%s4678 + $0x30] sm:$0xff]
  %v4686 = vld [vmem:[%s4678 + $0x38] sm:$0xff]
  %v4687 = vld [vmem:[%s4678 + $0x40] sm:$0xff]
  %v4688 = vld [vmem:[%s4678 + $0x48] sm:$0xff]
  %v4689 = vld [vmem:[%s4678 + $0x50] sm:$0xff]
  %v4690 = vld [vmem:[%s4678 + $0x58] sm:$0xff]
  %v4691 = vld [vmem:[%s4678 + $0x60] sm:$0xff]
  %v4692 = vld [vmem:[%s4678 + $0x68] sm:$0xff]
  %v4693 = vld [vmem:[%s4678 + $0x70] sm:$0xff]
  %v4694 = vld [vmem:[%s4678 + $0x78] sm:$0xff]
  %v4695 = vld [vmem:[%s4678 + $0x80] sm:$0xff]
  %v4696 = vld [vmem:[%s4678 + $0x88] sm:$0xff]
  %v4697 = vld [vmem:[%s4678 + $0x90] sm:$0xff]
  %v4698 = vld [vmem:[%s4678 + $0x98] sm:$0xff]
  %v4699 = vld [vmem:[%s4678 + $0xa0] sm:$0xff]
  %v4700 = vld [vmem:[%s4678 + $0xa8] sm:$0xff]
  %v4701 = vld [vmem:[%s4678 + $0xb0] sm:$0xff]
  %v4702 = vld [vmem:[%s4678 + $0xb8] sm:$0xff]
  %v4703 = vld [vmem:[%s4678 + $0xc0] sm:$0xff]
  %v4704 = vld [vmem:[%s4678 + $0xc8] sm:$0xff]
  %v4705 = vld [vmem:[%s4678 + $0xd0] sm:$0xff]
  %v4706 = vld [vmem:[%s4678 + $0xd8] sm:$0xff]
  %v4707 = vld [vmem:[%s4678 + $0xe0] sm:$0xff]
  %v4708 = vld [vmem:[%s4678 + $0xe8] sm:$0xff]
  %v4709 = vld [vmem:[%s4678 + $0xf0] sm:$0xff]
  %v4710 = vld [vmem:[%s4678 + $0xf8] sm:$0xff]
  %4711 = vmatprep.subr.mxu0 %v4710
  %4712 = vmatpush1.msra.mxu0 %v4709
  %4713 = vmatprep.subr.mxu0 %v4708
  %4714 = vmatpush1.msra.mxu0 %v4707
  %4715 = vmatprep.subr.mxu0 %v4706
  %4716 = vmatpush1.msra.mxu0 %v4705
  %4717 = vmatprep.subr.mxu0 %v4704
  %4718 = vmatpush1.msra.mxu0 %v4703
  %4719 = vmatprep.subr.mxu0 %v4702
  %4720 = vmatpush1.msra.mxu0 %v4701
  %4721 = vmatprep.subr.mxu0 %v4700
  %4722 = vmatpush1.msra.mxu0 %v4699
  %4723 = vmatprep.subr.mxu0 %v4698
  %4724 = vmatpush1.msra.mxu0 %v4697
  %4725 = vmatprep.subr.mxu0 %v4696
  %4726 = vmatpush1.msra.mxu0 %v4695
  %4727 = vmatprep.subr.mxu0 %v4694
  %4728 = vmatpush1.msra.mxu0 %v4693
  %4729 = vmatprep.subr.mxu0 %v4692
  %4730 = vmatpush1.msra.mxu0 %v4691
  %4731 = vmatprep.subr.mxu0 %v4690
  %4732 = vmatpush1.msra.mxu0 %v4689
  %4733 = vmatprep.subr.mxu0 %v4688
  %4734 = vmatpush1.msra.mxu0 %v4687
  %4735 = vmatprep.subr.mxu0 %v4686
  %4736 = vmatpush1.msra.mxu0 %v4685
  %4737 = vmatprep.subr.mxu0 %v4684
  %4738 = vmatpush1.msra.mxu0 %v4683
  %4739 = vmatprep.subr.mxu0 %v4682
  %4740 = vmatpush1.msra.mxu0 %v4681
  %4741 = vmatprep.subr.mxu0 %v4680
  %4742 = vmatpush1.msra.mxu0 %v4679
  %4743 = vmatprep.subr.mxu0 0.0
  %4744 = vmatpush2.msra.mxu0 0.0
  %4745 = vmatprep.subr.mxu0 0.0
  %4746 = vmatpush2.msra.mxu0 0.0
  %4747 = vmatprep.subr.mxu0 0.0
  %4748 = vmatpush2.msra.mxu0 0.0
  %4749 = vmatprep.subr.mxu0 0.0
  %4750 = vmatpush2.msra.mxu0 0.0
  %4751 = vmatprep.subr.mxu0 0.0
  %4752 = vmatpush2.msra.mxu0 0.0
  %4753 = vmatprep.subr.mxu0 0.0
  %4754 = vmatpush2.msra.mxu0 0.0
  %4755 = vmatprep.subr.mxu0 0.0
  %4756 = vmatpush2.msra.mxu0 0.0
  %4757 = vmatprep.subr.mxu0 0.0
  %4758 = vmatpush2.msra.mxu0 0.0
  %4759 = vmatprep.subr.mxu0 0.0
  %4760 = vmatpush2.msra.mxu0 0.0
  %4761 = vmatprep.subr.mxu0 0.0
  %4762 = vmatpush2.msra.mxu0 0.0
  %4763 = vmatprep.subr.mxu0 0.0
  %4764 = vmatpush2.msra.mxu0 0.0
  %4765 = vmatprep.subr.mxu0 0.0
  %4766 = vmatpush2.msra.mxu0 0.0
  %4767 = vmatprep.subr.mxu0 0.0
  %4768 = vmatpush2.msra.mxu0 0.0
  %4769 = vmatprep.subr.mxu0 0.0
  %4770 = vmatpush2.msra.mxu0 0.0
  %4771 = vmatprep.subr.mxu0 0.0
  %4772 = vmatpush2.msra.mxu0 0.0
  %4773 = vmatprep.subr.mxu0 0.0
  %4774 = vmatpush2.msra.mxu0 0.0
  %4775 = vmatprep.mubr.f32.mxu0 0.0
  %4776 = vmatmul.mubr.f32.gmra.mxu0 %v4646
  %v4777 = vpop.f32.mrf.mxu0
  %v4778 = vadd.f32 0.0, %v4777
  %v4779 = vpop.f32.mrf.mxu0
  %v4780 = vadd.f32 0.0, %v4779
  %4781 = vmatprep.mubr.f32.mxu0 0.0
  %4782 = vmatmul.mubr.f32.gmra.mxu0 %v4647
  %v4783 = vpop.f32.mrf.mxu0
  %v4784 = vadd.f32 0.0, %v4783
  %v4785 = vpop.f32.mrf.mxu0
  %v4786 = vadd.f32 0.0, %v4785
  %4787 = vmatprep.mubr.f32.mxu0 0.0
  %4788 = vmatmul.mubr.f32.gmra.mxu0 %v4648
  %v4789 = vpop.f32.mrf.mxu0
  %v4790 = vadd.f32 0.0, %v4789
  %v4791 = vpop.f32.mrf.mxu0
  %v4792 = vadd.f32 0.0, %v4791
  %4793 = vmatprep.mubr.f32.mxu0 0.0
  %4794 = vmatmul.mubr.f32.gmra.mxu0 %v4649
  %v4795 = vpop.f32.mrf.mxu0
  %v4796 = vadd.f32 0.0, %v4795
  %v4797 = vpop.f32.mrf.mxu0
  %v4798 = vadd.f32 0.0, %v4797
  %4799 = vmatprep.mubr.f32.mxu0 0.0
  %4800 = vmatmul.mubr.f32.gmra.mxu0 %v4650
  %v4801 = vpop.f32.mrf.mxu0
  %v4802 = vadd.f32 0.0, %v4801
  %v4803 = vpop.f32.mrf.mxu0
  %v4804 = vadd.f32 0.0, %v4803
  %4805 = vmatprep.mubr.f32.mxu0 0.0
  %4806 = vmatmul.mubr.f32.gmra.mxu0 %v4651
  %v4807 = vpop.f32.mrf.mxu0
  %v4808 = vadd.f32 0.0, %v4807
  %v4809 = vpop.f32.mrf.mxu0
  %v4810 = vadd.f32 0.0, %v4809
  %4811 = vmatprep.mubr.f32.mxu0 0.0
  %4812 = vmatmul.mubr.f32.gmra.mxu0 %v4652
  %v4813 = vpop.f32.mrf.mxu0
  %v4814 = vadd.f32 0.0, %v4813
  %v4815 = vpop.f32.mrf.mxu0
  %v4816 = vadd.f32 0.0, %v4815
  %4817 = vmatprep.mubr.f32.mxu0 0.0
  %4818 = vmatmul.mubr.f32.gmra.mxu0 %v4653
  %v4819 = vpop.f32.mrf.mxu0
  %v4820 = vadd.f32 0.0, %v4819
  %v4821 = vpop.f32.mrf.mxu0
  %v4822 = vadd.f32 0.0, %v4821
  %4823 = vmatprep.mubr.f32.mxu0 0.0
  %4824 = vmatmul.mubr.f32.gmra.mxu0 %v4654
  %v4825 = vpop.f32.mrf.mxu0
  %v4826 = vadd.f32 0.0, %v4825
  %v4827 = vpop.f32.mrf.mxu0
  %v4828 = vadd.f32 0.0, %v4827
  %4829 = vmatprep.mubr.f32.mxu0 0.0
  %4830 = vmatmul.mubr.f32.gmra.mxu0 %v4655
  %v4831 = vpop.f32.mrf.mxu0
  %v4832 = vadd.f32 0.0, %v4831
  %v4833 = vpop.f32.mrf.mxu0
  %v4834 = vadd.f32 0.0, %v4833
  %4835 = vmatprep.mubr.f32.mxu0 0.0
  %4836 = vmatmul.mubr.f32.gmra.mxu0 %v4656
  %v4837 = vpop.f32.mrf.mxu0
  %v4838 = vadd.f32 0.0, %v4837
  %v4839 = vpop.f32.mrf.mxu0
  %v4840 = vadd.f32 0.0, %v4839
  %4841 = vmatprep.mubr.f32.mxu0 0.0
  %4842 = vmatmul.mubr.f32.gmra.mxu0 %v4657
  %v4843 = vpop.f32.mrf.mxu0
  %v4844 = vadd.f32 0.0, %v4843
  %v4845 = vpop.f32.mrf.mxu0
  %v4846 = vadd.f32 0.0, %v4845
  %4847 = vmatprep.mubr.f32.mxu0 0.0
  %4848 = vmatmul.mubr.f32.gmra.mxu0 %v4658
  %v4849 = vpop.f32.mrf.mxu0
  %v4850 = vadd.f32 0.0, %v4849
  %v4851 = vpop.f32.mrf.mxu0
  %v4852 = vadd.f32 0.0, %v4851
  %4853 = vmatprep.mubr.f32.mxu0 0.0
  %4854 = vmatmul.mubr.f32.gmra.mxu0 %v4659
  %v4855 = vpop.f32.mrf.mxu0
  %v4856 = vadd.f32 0.0, %v4855
  %v4857 = vpop.f32.mrf.mxu0
  %v4858 = vadd.f32 0.0, %v4857
  %4859 = vmatprep.mubr.f32.mxu0 0.0
  %4860 = vmatmul.mubr.f32.gmra.mxu0 %v4660
  %v4861 = vpop.f32.mrf.mxu0
  %v4862 = vadd.f32 0.0, %v4861
  %v4863 = vpop.f32.mrf.mxu0
  %v4864 = vadd.f32 0.0, %v4863
  %4865 = vmatprep.mubr.f32.mxu0 0.0
  %4866 = vmatmul.mubr.f32.gmra.mxu0 %v4661
  %v4867 = vpop.f32.mrf.mxu0
  %v4868 = vadd.f32 0.0, %v4867
  %v4869 = vpop.f32.mrf.mxu0
  %v4870 = vadd.f32 0.0, %v4869
  %4871 = vmatprep.mubr.f32.mxu0 0.0
  %4872 = vmatmul.mubr.f32.gmra.mxu0 %v4662
  %v4873 = vpop.f32.mrf.mxu0
  %v4874 = vadd.f32 0.0, %v4873
  %v4875 = vpop.f32.mrf.mxu0
  %v4876 = vadd.f32 0.0, %v4875
  %4877 = vmatprep.mubr.f32.mxu0 0.0
  %4878 = vmatmul.mubr.f32.gmra.mxu0 %v4663
  %v4879 = vpop.f32.mrf.mxu0
  %v4880 = vadd.f32 0.0, %v4879
  %v4881 = vpop.f32.mrf.mxu0
  %v4882 = vadd.f32 0.0, %v4881
  %4883 = vmatprep.mubr.f32.mxu0 0.0
  %4884 = vmatmul.mubr.f32.gmra.mxu0 %v4664
  %v4885 = vpop.f32.mrf.mxu0
  %v4886 = vadd.f32 0.0, %v4885
  %v4887 = vpop.f32.mrf.mxu0
  %v4888 = vadd.f32 0.0, %v4887
  %4889 = vmatprep.mubr.f32.mxu0 0.0
  %4890 = vmatmul.mubr.f32.gmra.mxu0 %v4665
  %v4891 = vpop.f32.mrf.mxu0
  %v4892 = vadd.f32 0.0, %v4891
  %v4893 = vpop.f32.mrf.mxu0
  %v4894 = vadd.f32 0.0, %v4893
  %4895 = vmatprep.mubr.f32.mxu0 0.0
  %4896 = vmatmul.mubr.f32.gmra.mxu0 %v4666
  %v4897 = vpop.f32.mrf.mxu0
  %v4898 = vadd.f32 0.0, %v4897
  %v4899 = vpop.f32.mrf.mxu0
  %v4900 = vadd.f32 0.0, %v4899
  %4901 = vmatprep.mubr.f32.mxu0 0.0
  %4902 = vmatmul.mubr.f32.gmra.mxu0 %v4667
  %v4903 = vpop.f32.mrf.mxu0
  %v4904 = vadd.f32 0.0, %v4903
  %v4905 = vpop.f32.mrf.mxu0
  %v4906 = vadd.f32 0.0, %v4905
  %4907 = vmatprep.mubr.f32.mxu0 0.0
  %4908 = vmatmul.mubr.f32.gmra.mxu0 %v4668
  %v4909 = vpop.f32.mrf.mxu0
  %v4910 = vadd.f32 0.0, %v4909
  %v4911 = vpop.f32.mrf.mxu0
  %v4912 = vadd.f32 0.0, %v4911
  %4913 = vmatprep.mubr.f32.mxu0 0.0
  %4914 = vmatmul.mubr.f32.gmra.mxu0 %v4669
  %v4915 = vpop.f32.mrf.mxu0
  %v4916 = vadd.f32 0.0, %v4915
  %v4917 = vpop.f32.mrf.mxu0
  %v4918 = vadd.f32 0.0, %v4917
  %4919 = vmatprep.mubr.f32.mxu0 0.0
  %4920 = vmatmul.mubr.f32.gmra.mxu0 %v4670
  %v4921 = vpop.f32.mrf.mxu0
  %v4922 = vadd.f32 0.0, %v4921
  %v4923 = vpop.f32.mrf.mxu0
  %v4924 = vadd.f32 0.0, %v4923
  %4925 = vmatprep.mubr.f32.mxu0 0.0
  %4926 = vmatmul.mubr.f32.gmra.mxu0 %v4671
  %v4927 = vpop.f32.mrf.mxu0
  %v4928 = vadd.f32 0.0, %v4927
  %v4929 = vpop.f32.mrf.mxu0
  %v4930 = vadd.f32 0.0, %v4929
  %4931 = vmatprep.mubr.f32.mxu0 0.0
  %4932 = vmatmul.mubr.f32.gmra.mxu0 %v4672
  %v4933 = vpop.f32.mrf.mxu0
  %v4934 = vadd.f32 0.0, %v4933
  %v4935 = vpop.f32.mrf.mxu0
  %v4936 = vadd.f32 0.0, %v4935
  %4937 = vmatprep.mubr.f32.mxu0 0.0
  %4938 = vmatmul.mubr.f32.gmra.mxu0 %v4673
  %v4939 = vpop.f32.mrf.mxu0
  %v4940 = vadd.f32 0.0, %v4939
  %v4941 = vpop.f32.mrf.mxu0
  %v4942 = vadd.f32 0.0, %v4941
  %4943 = vmatprep.mubr.f32.mxu0 0.0
  %4944 = vmatmul.mubr.f32.gmra.mxu0 %v4674
  %v4945 = vpop.f32.mrf.mxu0
  %v4946 = vadd.f32 0.0, %v4945
  %v4947 = vpop.f32.mrf.mxu0
  %v4948 = vadd.f32 0.0, %v4947
  %4949 = vmatprep.mubr.f32.mxu0 0.0
  %4950 = vmatmul.mubr.f32.gmra.mxu0 %v4675
  %v4951 = vpop.f32.mrf.mxu0
  %v4952 = vadd.f32 0.0, %v4951
  %v4953 = vpop.f32.mrf.mxu0
  %v4954 = vadd.f32 0.0, %v4953
  %4955 = vmatprep.mubr.f32.mxu0 0.0
  %4956 = vmatmul.mubr.f32.gmra.mxu0 %v4676
  %v4957 = vpop.f32.mrf.mxu0
  %v4958 = vadd.f32 0.0, %v4957
  %v4959 = vpop.f32.mrf.mxu0
  %v4960 = vadd.f32 0.0, %v4959
  %4961 = vmatprep.mubr.f32.mxu0 0.0
  %4962 = vmatmul.mubr.f32.gmra.mxu0 %v4677
  %v4963 = vpop.f32.mrf.mxu0
  %v4964 = vadd.f32 0.0, %v4963
  %v4965 = vpop.f32.mrf.mxu0
  %v4966 = vadd.f32 0.0, %v4965
  %4967 = vdwg.mxu0
  %v4968 = vadd.f32 %v4582, %v4778
  %v4969 = vadd.f32 %v4583, %v4780
  %v4970 = vadd.f32 %v4584, %v4784
  %v4971 = vadd.f32 %v4585, %v4786
  %v4972 = vadd.f32 %v4586, %v4790
  %v4973 = vadd.f32 %v4587, %v4792
  %v4974 = vadd.f32 %v4588, %v4796
  %v4975 = vadd.f32 %v4589, %v4798
  %v4976 = vadd.f32 %v4590, %v4802
  %v4977 = vadd.f32 %v4591, %v4804
  %v4978 = vadd.f32 %v4592, %v4808
  %v4979 = vadd.f32 %v4593, %v4810
  %v4980 = vadd.f32 %v4594, %v4814
  %v4981 = vadd.f32 %v4595, %v4816
  %v4982 = vadd.f32 %v4596, %v4820
  %v4983 = vadd.f32 %v4597, %v4822
  %v4984 = vadd.f32 %v4598, %v4826
  %v4985 = vadd.f32 %v4599, %v4828
  %v4986 = vadd.f32 %v4600, %v4832
  %v4987 = vadd.f32 %v4601, %v4834
  %v4988 = vadd.f32 %v4602, %v4838
  %v4989 = vadd.f32 %v4603, %v4840
  %v4990 = vadd.f32 %v4604, %v4844
  %v4991 = vadd.f32 %v4605, %v4846
  %v4992 = vadd.f32 %v4606, %v4850
  %v4993 = vadd.f32 %v4607, %v4852
  %v4994 = vadd.f32 %v4608, %v4856
  %v4995 = vadd.f32 %v4609, %v4858
  %v4996 = vadd.f32 %v4610, %v4862
  %v4997 = vadd.f32 %v4611, %v4864
  %v4998 = vadd.f32 %v4612, %v4868
  %v4999 = vadd.f32 %v4613, %v4870
  %v5000 = vadd.f32 %v4614, %v4874
  %v5001 = vadd.f32 %v4615, %v4876
  %v5002 = vadd.f32 %v4616, %v4880
  %v5003 = vadd.f32 %v4617, %v4882
  %v5004 = vadd.f32 %v4618, %v4886
  %v5005 = vadd.f32 %v4619, %v4888
  %v5006 = vadd.f32 %v4620, %v4892
  %v5007 = vadd.f32 %v4621, %v4894
  %v5008 = vadd.f32 %v4622, %v4898
  %v5009 = vadd.f32 %v4623, %v4900
  %v5010 = vadd.f32 %v4624, %v4904
  %v5011 = vadd.f32 %v4625, %v4906
  %v5012 = vadd.f32 %v4626, %v4910
  %v5013 = vadd.f32 %v4627, %v4912
  %v5014 = vadd.f32 %v4628, %v4916
  %v5015 = vadd.f32 %v4629, %v4918
  %v5016 = vadd.f32 %v4630, %v4922
  %v5017 = vadd.f32 %v4631, %v4924
  %v5018 = vadd.f32 %v4632, %v4928
  %v5019 = vadd.f32 %v4633, %v4930
  %v5020 = vadd.f32 %v4634, %v4934
  %v5021 = vadd.f32 %v4635, %v4936
  %v5022 = vadd.f32 %v4636, %v4940
  %v5023 = vadd.f32 %v4637, %v4942
  %v5024 = vadd.f32 %v4638, %v4946
  %v5025 = vadd.f32 %v4639, %v4948
  %v5026 = vadd.f32 %v4640, %v4952
  %v5027 = vadd.f32 %v4641, %v4954
  %v5028 = vadd.f32 %v4642, %v4958
  %v5029 = vadd.f32 %v4643, %v4960
  %v5030 = vadd.f32 %v4644, %v4964
  %v5031 = vadd.f32 %v4645, %v4966
  %v5032 = vld [vmem:[%s5] sm:$0x3]
  %v5034 = vlaneseq
  %v5035 = vshrl.u32 %v5034, 7
  %v5036 = vsub.s32 0, %v5035
  %v5037 = vrot.slane %v5032, %v5036
  %v5038 = vlaneseq
  %v5039 = vshrl.u32 %v5038, 7
  %v5040 = vsub.s32 1, %v5039
  %v5041 = vrot.slane %v5032, %v5040
  %v5044 = vadd.f32 %v4968, %v5037
  %v5045 = vadd.f32 %v4969, %v5041
  %v5046 = vadd.f32 %v4970, %v5037
  %v5047 = vadd.f32 %v4971, %v5041
  %v5048 = vadd.f32 %v4972, %v5037
  %v5049 = vadd.f32 %v4973, %v5041
  %v5050 = vadd.f32 %v4974, %v5037
  %v5051 = vadd.f32 %v4975, %v5041
  %v5052 = vadd.f32 %v4976, %v5037
  %v5053 = vadd.f32 %v4977, %v5041
  %v5054 = vadd.f32 %v4978, %v5037
  %v5055 = vadd.f32 %v4979, %v5041
  %v5056 = vadd.f32 %v4980, %v5037
  %v5057 = vadd.f32 %v4981, %v5041
  %v5058 = vadd.f32 %v4982, %v5037
  %v5059 = vadd.f32 %v4983, %v5041
  %v5060 = vadd.f32 %v4984, %v5037
  %v5061 = vadd.f32 %v4985, %v5041
  %v5062 = vadd.f32 %v4986, %v5037
  %v5063 = vadd.f32 %v4987, %v5041
  %v5064 = vadd.f32 %v4988, %v5037
  %v5065 = vadd.f32 %v4989, %v5041
  %v5066 = vadd.f32 %v4990, %v5037
  %v5067 = vadd.f32 %v4991, %v5041
  %v5068 = vadd.f32 %v4992, %v5037
  %v5069 = vadd.f32 %v4993, %v5041
  %v5070 = vadd.f32 %v4994, %v5037
  %v5071 = vadd.f32 %v4995, %v5041
  %v5072 = vadd.f32 %v4996, %v5037
  %v5073 = vadd.f32 %v4997, %v5041
  %v5074 = vadd.f32 %v4998, %v5037
  %v5075 = vadd.f32 %v4999, %v5041
  %v5076 = vadd.f32 %v5000, %v5037
  %v5077 = vadd.f32 %v5001, %v5041
  %v5078 = vadd.f32 %v5002, %v5037
  %v5079 = vadd.f32 %v5003, %v5041
  %v5080 = vadd.f32 %v5004, %v5037
  %v5081 = vadd.f32 %v5005, %v5041
  %v5082 = vadd.f32 %v5006, %v5037
  %v5083 = vadd.f32 %v5007, %v5041
  %v5084 = vadd.f32 %v5008, %v5037
  %v5085 = vadd.f32 %v5009, %v5041
  %v5086 = vadd.f32 %v5010, %v5037
  %v5087 = vadd.f32 %v5011, %v5041
  %v5088 = vadd.f32 %v5012, %v5037
  %v5089 = vadd.f32 %v5013, %v5041
  %v5090 = vadd.f32 %v5014, %v5037
  %v5091 = vadd.f32 %v5015, %v5041
  %v5092 = vadd.f32 %v5016, %v5037
  %v5093 = vadd.f32 %v5017, %v5041
  %v5094 = vadd.f32 %v5018, %v5037
  %v5095 = vadd.f32 %v5019, %v5041
  %v5096 = vadd.f32 %v5020, %v5037
  %v5097 = vadd.f32 %v5021, %v5041
  %v5098 = vadd.f32 %v5022, %v5037
  %v5099 = vadd.f32 %v5023, %v5041
  %v5100 = vadd.f32 %v5024, %v5037
  %v5101 = vadd.f32 %v5025, %v5041
  %v5102 = vadd.f32 %v5026, %v5037
  %v5103 = vadd.f32 %v5027, %v5041
  %v5104 = vadd.f32 %v5028, %v5037
  %v5105 = vadd.f32 %v5029, %v5041
  %v5106 = vadd.f32 %v5030, %v5037
  %v5107 = vadd.f32 %v5031, %v5041
  %v5108 = vmax.f32 %v5044, 0.0
  %v5109 = vmax.f32 %v5045, 0.0
  %v5110 = vmax.f32 %v5046, 0.0
  %v5111 = vmax.f32 %v5047, 0.0
  %v5112 = vmax.f32 %v5048, 0.0
  %v5113 = vmax.f32 %v5049, 0.0
  %v5114 = vmax.f32 %v5050, 0.0
  %v5115 = vmax.f32 %v5051, 0.0
  %v5116 = vmax.f32 %v5052, 0.0
  %v5117 = vmax.f32 %v5053, 0.0
  %v5118 = vmax.f32 %v5054, 0.0
  %v5119 = vmax.f32 %v5055, 0.0
  %v5120 = vmax.f32 %v5056, 0.0
  %v5121 = vmax.f32 %v5057, 0.0
  %v5122 = vmax.f32 %v5058, 0.0
  %v5123 = vmax.f32 %v5059, 0.0
  %v5124 = vmax.f32 %v5060, 0.0
  %v5125 = vmax.f32 %v5061, 0.0
  %v5126 = vmax.f32 %v5062, 0.0
  %v5127 = vmax.f32 %v5063, 0.0
  %v5128 = vmax.f32 %v5064, 0.0
  %v5129 = vmax.f32 %v5065, 0.0
  %v5130 = vmax.f32 %v5066, 0.0
  %v5131 = vmax.f32 %v5067, 0.0
  %v5132 = vmax.f32 %v5068, 0.0
  %v5133 = vmax.f32 %v5069, 0.0
  %v5134 = vmax.f32 %v5070, 0.0
  %v5135 = vmax.f32 %v5071, 0.0
  %v5136 = vmax.f32 %v5072, 0.0
  %v5137 = vmax.f32 %v5073, 0.0
  %v5138 = vmax.f32 %v5074, 0.0
  %v5139 = vmax.f32 %v5075, 0.0
  %v5140 = vmax.f32 %v5076, 0.0
  %v5141 = vmax.f32 %v5077, 0.0
  %v5142 = vmax.f32 %v5078, 0.0
  %v5143 = vmax.f32 %v5079, 0.0
  %v5144 = vmax.f32 %v5080, 0.0
  %v5145 = vmax.f32 %v5081, 0.0
  %v5146 = vmax.f32 %v5082, 0.0
  %v5147 = vmax.f32 %v5083, 0.0
  %v5148 = vmax.f32 %v5084, 0.0
  %v5149 = vmax.f32 %v5085, 0.0
  %v5150 = vmax.f32 %v5086, 0.0
  %v5151 = vmax.f32 %v5087, 0.0
  %v5152 = vmax.f32 %v5088, 0.0
  %v5153 = vmax.f32 %v5089, 0.0
  %v5154 = vmax.f32 %v5090, 0.0
  %v5155 = vmax.f32 %v5091, 0.0
  %v5156 = vmax.f32 %v5092, 0.0
  %v5157 = vmax.f32 %v5093, 0.0
  %v5158 = vmax.f32 %v5094, 0.0
  %v5159 = vmax.f32 %v5095, 0.0
  %v5160 = vmax.f32 %v5096, 0.0
  %v5161 = vmax.f32 %v5097, 0.0
  %v5162 = vmax.f32 %v5098, 0.0
  %v5163 = vmax.f32 %v5099, 0.0
  %v5164 = vmax.f32 %v5100, 0.0
  %v5165 = vmax.f32 %v5101, 0.0
  %v5166 = vmax.f32 %v5102, 0.0
  %v5167 = vmax.f32 %v5103, 0.0
  %v5168 = vmax.f32 %v5104, 0.0
  %v5169 = vmax.f32 %v5105, 0.0
  %v5170 = vmax.f32 %v5106, 0.0
  %v5171 = vmax.f32 %v5107, 0.0
  %5172 = vst [vmem:[#allocation5] sm:$0xff] %v5108
  %5173 = vst [vmem:[#allocation5 + $0x8] sm:$0xff] %v5109
  %5174 = vst [vmem:[#allocation5 + $0x10] sm:$0xff] %v5110
  %5175 = vst [vmem:[#allocation5 + $0x18] sm:$0xff] %v5111
  %5176 = vst [vmem:[#allocation5 + $0x20] sm:$0xff] %v5112
  %5177 = vst [vmem:[#allocation5 + $0x28] sm:$0xff] %v5113
  %5178 = vst [vmem:[#allocation5 + $0x30] sm:$0xff] %v5114
  %5179 = vst [vmem:[#allocation5 + $0x38] sm:$0xff] %v5115
  %5180 = vst [vmem:[#allocation5 + $0x40] sm:$0xff] %v5116
  %5181 = vst [vmem:[#allocation5 + $0x48] sm:$0xff] %v5117
  %5182 = vst [vmem:[#allocation5 + $0x50] sm:$0xff] %v5118
  %5183 = vst [vmem:[#allocation5 + $0x58] sm:$0xff] %v5119
  %5184 = vst [vmem:[#allocation5 + $0x60] sm:$0xff] %v5120
  %5185 = vst [vmem:[#allocation5 + $0x68] sm:$0xff] %v5121
  %5186 = vst [vmem:[#allocation5 + $0x70] sm:$0xff] %v5122
  %5187 = vst [vmem:[#allocation5 + $0x78] sm:$0xff] %v5123
  %5188 = vst [vmem:[#allocation5 + $0x80] sm:$0xff] %v5124
  %5189 = vst [vmem:[#allocation5 + $0x88] sm:$0xff] %v5125
  %5190 = vst [vmem:[#allocation5 + $0x90] sm:$0xff] %v5126
  %5191 = vst [vmem:[#allocation5 + $0x98] sm:$0xff] %v5127
  %5192 = vst [vmem:[#allocation5 + $0xa0] sm:$0xff] %v5128
  %5193 = vst [vmem:[#allocation5 + $0xa8] sm:$0xff] %v5129
  %5194 = vst [vmem:[#allocation5 + $0xb0] sm:$0xff] %v5130
  %5195 = vst [vmem:[#allocation5 + $0xb8] sm:$0xff] %v5131
  %5196 = vst [vmem:[#allocation5 + $0xc0] sm:$0xff] %v5132
  %5197 = vst [vmem:[#allocation5 + $0xc8] sm:$0xff] %v5133
  %5198 = vst [vmem:[#allocation5 + $0xd0] sm:$0xff] %v5134
  %5199 = vst [vmem:[#allocation5 + $0xd8] sm:$0xff] %v5135
  %5200 = vst [vmem:[#allocation5 + $0xe0] sm:$0xff] %v5136
  %5201 = vst [vmem:[#allocation5 + $0xe8] sm:$0xff] %v5137
  %5202 = vst [vmem:[#allocation5 + $0xf0] sm:$0xff] %v5138
  %5203 = vst [vmem:[#allocation5 + $0xf8] sm:$0xff] %v5139
  %5204 = vst [vmem:[#allocation5 + $0x100] sm:$0xff] %v5140
  %5205 = vst [vmem:[#allocation5 + $0x108] sm:$0xff] %v5141
  %5206 = vst [vmem:[#allocation5 + $0x110] sm:$0xff] %v5142
  %5207 = vst [vmem:[#allocation5 + $0x118] sm:$0xff] %v5143
  %5208 = vst [vmem:[#allocation5 + $0x120] sm:$0xff] %v5144
  %5209 = vst [vmem:[#allocation5 + $0x128] sm:$0xff] %v5145
  %5210 = vst [vmem:[#allocation5 + $0x130] sm:$0xff] %v5146
  %5211 = vst [vmem:[#allocation5 + $0x138] sm:$0xff] %v5147
  %5212 = vst [vmem:[#allocation5 + $0x140] sm:$0xff] %v5148
  %5213 = vst [vmem:[#allocation5 + $0x148] sm:$0xff] %v5149
  %5214 = vst [vmem:[#allocation5 + $0x150] sm:$0xff] %v5150
  %5215 = vst [vmem:[#allocation5 + $0x158] sm:$0xff] %v5151
  %5216 = vst [vmem:[#allocation5 + $0x160] sm:$0xff] %v5152
  %5217 = vst [vmem:[#allocation5 + $0x168] sm:$0xff] %v5153
  %5218 = vst [vmem:[#allocation5 + $0x170] sm:$0xff] %v5154
  %5219 = vst [vmem:[#allocation5 + $0x178] sm:$0xff] %v5155
  %5220 = vst [vmem:[#allocation5 + $0x180] sm:$0xff] %v5156
  %5221 = vst [vmem:[#allocation5 + $0x188] sm:$0xff] %v5157
  %5222 = vst [vmem:[#allocation5 + $0x190] sm:$0xff] %v5158
  %5223 = vst [vmem:[#allocation5 + $0x198] sm:$0xff] %v5159
  %5224 = vst [vmem:[#allocation5 + $0x1a0] sm:$0xff] %v5160
  %5225 = vst [vmem:[#allocation5 + $0x1a8] sm:$0xff] %v5161
  %5226 = vst [vmem:[#allocation5 + $0x1b0] sm:$0xff] %v5162
  %5227 = vst [vmem:[#allocation5 + $0x1b8] sm:$0xff] %v5163
  %5228 = vst [vmem:[#allocation5 + $0x1c0] sm:$0xff] %v5164
  %5229 = vst [vmem:[#allocation5 + $0x1c8] sm:$0xff] %v5165
  %5230 = vst [vmem:[#allocation5 + $0x1d0] sm:$0xff] %v5166
  %5231 = vst [vmem:[#allocation5 + $0x1d8] sm:$0xff] %v5167
  %5232 = vst [vmem:[#allocation5 + $0x1e0] sm:$0xff] %v5168
  %5233 = vst [vmem:[#allocation5 + $0x1e8] sm:$0xff] %v5169
  %5234 = vst [vmem:[#allocation5 + $0x1f0] sm:$0xff] %v5170
  %5235 = vst [vmem:[#allocation5 + $0x1f8] sm:$0xff] %v5171
  %v5236 = vld [vmem:[#allocation5] sm:$0xff]
  %v5237 = vld [vmem:[#allocation5 + $0x10] sm:$0xff]
  %v5238 = vld [vmem:[#allocation5 + $0x20] sm:$0xff]
  %v5239 = vld [vmem:[#allocation5 + $0x30] sm:$0xff]
  %v5240 = vld [vmem:[#allocation5 + $0x40] sm:$0xff]
  %v5241 = vld [vmem:[#allocation5 + $0x50] sm:$0xff]
  %v5242 = vld [vmem:[#allocation5 + $0x60] sm:$0xff]
  %v5243 = vld [vmem:[#allocation5 + $0x70] sm:$0xff]
  %v5244 = vld [vmem:[#allocation5 + $0x80] sm:$0xff]
  %v5245 = vld [vmem:[#allocation5 + $0x90] sm:$0xff]
  %v5246 = vld [vmem:[#allocation5 + $0xa0] sm:$0xff]
  %v5247 = vld [vmem:[#allocation5 + $0xb0] sm:$0xff]
  %v5248 = vld [vmem:[#allocation5 + $0xc0] sm:$0xff]
  %v5249 = vld [vmem:[#allocation5 + $0xd0] sm:$0xff]
  %v5250 = vld [vmem:[#allocation5 + $0xe0] sm:$0xff]
  %v5251 = vld [vmem:[#allocation5 + $0xf0] sm:$0xff]
  %v5252 = vld [vmem:[#allocation5 + $0x100] sm:$0xff]
  %v5253 = vld [vmem:[#allocation5 + $0x110] sm:$0xff]
  %v5254 = vld [vmem:[#allocation5 + $0x120] sm:$0xff]
  %v5255 = vld [vmem:[#allocation5 + $0x130] sm:$0xff]
  %v5256 = vld [vmem:[#allocation5 + $0x140] sm:$0xff]
  %v5257 = vld [vmem:[#allocation5 + $0x150] sm:$0xff]
  %v5258 = vld [vmem:[#allocation5 + $0x160] sm:$0xff]
  %v5259 = vld [vmem:[#allocation5 + $0x170] sm:$0xff]
  %v5260 = vld [vmem:[#allocation5 + $0x180] sm:$0xff]
  %v5261 = vld [vmem:[#allocation5 + $0x190] sm:$0xff]
  %v5262 = vld [vmem:[#allocation5 + $0x1a0] sm:$0xff]
  %v5263 = vld [vmem:[#allocation5 + $0x1b0] sm:$0xff]
  %v5264 = vld [vmem:[#allocation5 + $0x1c0] sm:$0xff]
  %v5265 = vld [vmem:[#allocation5 + $0x1d0] sm:$0xff]
  %v5266 = vld [vmem:[#allocation5 + $0x1e0] sm:$0xff]
  %v5267 = vld [vmem:[#allocation5 + $0x1f0] sm:$0xff]
  %v5268 = vld [vmem:[#allocation5] sm:$0xfc]
  %v5269 = vld [vmem:[#allocation5 + $0x200] sm:$0x3]
  %vm5303 = vcmask 1045504
  %v5304 = vrot.slane %v5268, 2
  %v5305 = vrot.slane %v5237, 2
  %v5306 = vsel %vm5303, %v5304, %v5305
  %v5307 = vrot.slane %v5238, 2
  %v5308 = vsel %vm5303, %v5305, %v5307
  %v5309 = vrot.slane %v5239, 2
  %v5310 = vsel %vm5303, %v5307, %v5309
  %v5311 = vrot.slane %v5240, 2
  %v5312 = vsel %vm5303, %v5309, %v5311
  %v5313 = vrot.slane %v5241, 2
  %v5314 = vsel %vm5303, %v5311, %v5313
  %v5315 = vrot.slane %v5242, 2
  %v5316 = vsel %vm5303, %v5313, %v5315
  %v5317 = vrot.slane %v5243, 2
  %v5318 = vsel %vm5303, %v5315, %v5317
  %v5319 = vrot.slane %v5244, 2
  %v5320 = vsel %vm5303, %v5317, %v5319
  %v5321 = vrot.slane %v5245, 2
  %v5322 = vsel %vm5303, %v5319, %v5321
  %v5323 = vrot.slane %v5246, 2
  %v5324 = vsel %vm5303, %v5321, %v5323
  %v5325 = vrot.slane %v5247, 2
  %v5326 = vsel %vm5303, %v5323, %v5325
  %v5327 = vrot.slane %v5248, 2
  %v5328 = vsel %vm5303, %v5325, %v5327
  %v5329 = vrot.slane %v5249, 2
  %v5330 = vsel %vm5303, %v5327, %v5329
  %v5331 = vrot.slane %v5250, 2
  %v5332 = vsel %vm5303, %v5329, %v5331
  %v5333 = vrot.slane %v5251, 2
  %v5334 = vsel %vm5303, %v5331, %v5333
  %v5335 = vrot.slane %v5252, 2
  %v5336 = vsel %vm5303, %v5333, %v5335
  %v5337 = vrot.slane %v5253, 2
  %v5338 = vsel %vm5303, %v5335, %v5337
  %v5339 = vrot.slane %v5254, 2
  %v5340 = vsel %vm5303, %v5337, %v5339
  %v5341 = vrot.slane %v5255, 2
  %v5342 = vsel %vm5303, %v5339, %v5341
  %v5343 = vrot.slane %v5256, 2
  %v5344 = vsel %vm5303, %v5341, %v5343
  %v5345 = vrot.slane %v5257, 2
  %v5346 = vsel %vm5303, %v5343, %v5345
  %v5347 = vrot.slane %v5258, 2
  %v5348 = vsel %vm5303, %v5345, %v5347
  %v5349 = vrot.slane %v5259, 2
  %v5350 = vsel %vm5303, %v5347, %v5349
  %v5351 = vrot.slane %v5260, 2
  %v5352 = vsel %vm5303, %v5349, %v5351
  %v5353 = vrot.slane %v5261, 2
  %v5354 = vsel %vm5303, %v5351, %v5353
  %v5355 = vrot.slane %v5262, 2
  %v5356 = vsel %vm5303, %v5353, %v5355
  %v5357 = vrot.slane %v5263, 2
  %v5358 = vsel %vm5303, %v5355, %v5357
  %v5359 = vrot.slane %v5264, 2
  %v5360 = vsel %vm5303, %v5357, %v5359
  %v5361 = vrot.slane %v5265, 2
  %v5362 = vsel %vm5303, %v5359, %v5361
  %v5363 = vrot.slane %v5266, 2
  %v5364 = vsel %vm5303, %v5361, %v5363
  %v5365 = vrot.slane %v5267, 2
  %v5366 = vsel %vm5303, %v5363, %v5365
  %v5367 = vrot.slane %v5269, 2
  %v5368 = vsel %vm5303, %v5365, %v5367
  %v5401 = vmax.f32 %v5236, %v5306
  %v5402 = vmax.f32 %v5237, %v5308
  %v5403 = vmax.f32 %v5238, %v5310
  %v5404 = vmax.f32 %v5239, %v5312
  %v5405 = vmax.f32 %v5240, %v5314
  %v5406 = vmax.f32 %v5241, %v5316
  %v5407 = vmax.f32 %v5242, %v5318
  %v5408 = vmax.f32 %v5243, %v5320
  %v5409 = vmax.f32 %v5244, %v5322
  %v5410 = vmax.f32 %v5245, %v5324
  %v5411 = vmax.f32 %v5246, %v5326
  %v5412 = vmax.f32 %v5247, %v5328
  %v5413 = vmax.f32 %v5248, %v5330
  %v5414 = vmax.f32 %v5249, %v5332
  %v5415 = vmax.f32 %v5250, %v5334
  %v5416 = vmax.f32 %v5251, %v5336
  %v5417 = vmax.f32 %v5252, %v5338
  %v5418 = vmax.f32 %v5253, %v5340
  %v5419 = vmax.f32 %v5254, %v5342
  %v5420 = vmax.f32 %v5255, %v5344
  %v5421 = vmax.f32 %v5256, %v5346
  %v5422 = vmax.f32 %v5257, %v5348
  %v5423 = vmax.f32 %v5258, %v5350
  %v5424 = vmax.f32 %v5259, %v5352
  %v5425 = vmax.f32 %v5260, %v5354
  %v5426 = vmax.f32 %v5261, %v5356
  %v5427 = vmax.f32 %v5262, %v5358
  %v5428 = vmax.f32 %v5263, %v5360
  %v5429 = vmax.f32 %v5264, %v5362
  %v5430 = vmax.f32 %v5265, %v5364
  %v5431 = vmax.f32 %v5266, %v5366
  %v5432 = vmax.f32 %v5267, %v5368
  %v5433 = vld [vmem:[#allocation5 + $0x8] sm:$0xff]
  %v5434 = vld [vmem:[#allocation5 + $0x18] sm:$0xff]
  %v5435 = vld [vmem:[#allocation5 + $0x28] sm:$0xff]
  %v5436 = vld [vmem:[#allocation5 + $0x38] sm:$0xff]
  %v5437 = vld [vmem:[#allocation5 + $0x48] sm:$0xff]
  %v5438 = vld [vmem:[#allocation5 + $0x58] sm:$0xff]
  %v5439 = vld [vmem:[#allocation5 + $0x68] sm:$0xff]
  %v5440 = vld [vmem:[#allocation5 + $0x78] sm:$0xff]
  %v5441 = vld [vmem:[#allocation5 + $0x88] sm:$0xff]
  %v5442 = vld [vmem:[#allocation5 + $0x98] sm:$0xff]
  %v5443 = vld [vmem:[#allocation5 + $0xa8] sm:$0xff]
  %v5444 = vld [vmem:[#allocation5 + $0xb8] sm:$0xff]
  %v5445 = vld [vmem:[#allocation5 + $0xc8] sm:$0xff]
  %v5446 = vld [vmem:[#allocation5 + $0xd8] sm:$0xff]
  %v5447 = vld [vmem:[#allocation5 + $0xe8] sm:$0xff]
  %v5448 = vld [vmem:[#allocation5 + $0xf8] sm:$0xff]
  %v5449 = vld [vmem:[#allocation5 + $0x108] sm:$0xff]
  %v5450 = vld [vmem:[#allocation5 + $0x118] sm:$0xff]
  %v5451 = vld [vmem:[#allocation5 + $0x128] sm:$0xff]
  %v5452 = vld [vmem:[#allocation5 + $0x138] sm:$0xff]
  %v5453 = vld [vmem:[#allocation5 + $0x148] sm:$0xff]
  %v5454 = vld [vmem:[#allocation5 + $0x158] sm:$0xff]
  %v5455 = vld [vmem:[#allocation5 + $0x168] sm:$0xff]
  %v5456 = vld [vmem:[#allocation5 + $0x178] sm:$0xff]
  %v5457 = vld [vmem:[#allocation5 + $0x188] sm:$0xff]
  %v5458 = vld [vmem:[#allocation5 + $0x198] sm:$0xff]
  %v5459 = vld [vmem:[#allocation5 + $0x1a8] sm:$0xff]
  %v5460 = vld [vmem:[#allocation5 + $0x1b8] sm:$0xff]
  %v5461 = vld [vmem:[#allocation5 + $0x1c8] sm:$0xff]
  %v5462 = vld [vmem:[#allocation5 + $0x1d8] sm:$0xff]
  %v5463 = vld [vmem:[#allocation5 + $0x1e8] sm:$0xff]
  %v5464 = vld [vmem:[#allocation5 + $0x1f8] sm:$0xff]
  %v5465 = vld [vmem:[#allocation5 + $0x8] sm:$0xfc]
  %v5466 = vld [vmem:[#allocation5 + $0x18] sm:$0xff]
  %v5467 = vld [vmem:[#allocation5 + $0x28] sm:$0xff]
  %v5468 = vld [vmem:[#allocation5 + $0x38] sm:$0xff]
  %v5469 = vld [vmem:[#allocation5 + $0x48] sm:$0xff]
  %v5470 = vld [vmem:[#allocation5 + $0x58] sm:$0xff]
  %v5471 = vld [vmem:[#allocation5 + $0x68] sm:$0xff]
  %v5472 = vld [vmem:[#allocation5 + $0x78] sm:$0xff]
  %v5473 = vld [vmem:[#allocation5 + $0x88] sm:$0xff]
  %v5474 = vld [vmem:[#allocation5 + $0x98] sm:$0xff]
  %v5475 = vld [vmem:[#allocation5 + $0xa8] sm:$0xff]
  %v5476 = vld [vmem:[#allocation5 + $0xb8] sm:$0xff]
  %v5477 = vld [vmem:[#allocation5 + $0xc8] sm:$0xff]
  %v5478 = vld [vmem:[#allocation5 + $0xd8] sm:$0xff]
  %v5479 = vld [vmem:[#allocation5 + $0xe8] sm:$0xff]
  %v5480 = vld [vmem:[#allocation5 + $0xf8] sm:$0xff]
  %v5481 = vld [vmem:[#allocation5 + $0x108] sm:$0xff]
  %v5482 = vld [vmem:[#allocation5 + $0x118] sm:$0xff]
  %v5483 = vld [vmem:[#allocation5 + $0x128] sm:$0xff]
  %v5484 = vld [vmem:[#allocation5 + $0x138] sm:$0xff]
  %v5485 = vld [vmem:[#allocation5 + $0x148] sm:$0xff]
  %v5486 = vld [vmem:[#allocation5 + $0x158] sm:$0xff]
  %v5487 = vld [vmem:[#allocation5 + $0x168] sm:$0xff]
  %v5488 = vld [vmem:[#allocation5 + $0x178] sm:$0xff]
  %v5489 = vld [vmem:[#allocation5 + $0x188] sm:$0xff]
  %v5490 = vld [vmem:[#allocation5 + $0x198] sm:$0xff]
  %v5491 = vld [vmem:[#allocation5 + $0x1a8] sm:$0xff]
  %v5492 = vld [vmem:[#allocation5 + $0x1b8] sm:$0xff]
  %v5493 = vld [vmem:[#allocation5 + $0x1c8] sm:$0xff]
  %v5494 = vld [vmem:[#allocation5 + $0x1d8] sm:$0xff]
  %v5495 = vld [vmem:[#allocation5 + $0x1e8] sm:$0xff]
  %v5496 = vld [vmem:[#allocation5 + $0x1f8] sm:$0xff]
  %v5497 = vld [vmem:[#allocation5 + $0x208] sm:$0x3]
  %v5531 = vrot.slane %v5465, 2
  %v5532 = vrot.slane %v5466, 2
  %v5533 = vsel %vm5303, %v5531, %v5532
  %v5534 = vrot.slane %v5467, 2
  %v5535 = vsel %vm5303, %v5532, %v5534
  %v5536 = vrot.slane %v5468, 2
  %v5537 = vsel %vm5303, %v5534, %v5536
  %v5538 = vrot.slane %v5469, 2
  %v5539 = vsel %vm5303, %v5536, %v5538
  %v5540 = vrot.slane %v5470, 2
  %v5541 = vsel %vm5303, %v5538, %v5540
  %v5542 = vrot.slane %v5471, 2
  %v5543 = vsel %vm5303, %v5540, %v5542
  %v5544 = vrot.slane %v5472, 2
  %v5545 = vsel %vm5303, %v5542, %v5544
  %v5546 = vrot.slane %v5473, 2
  %v5547 = vsel %vm5303, %v5544, %v5546
  %v5548 = vrot.slane %v5474, 2
  %v5549 = vsel %vm5303, %v5546, %v5548
  %v5550 = vrot.slane %v5475, 2
  %v5551 = vsel %vm5303, %v5548, %v5550
  %v5552 = vrot.slane %v5476, 2
  %v5553 = vsel %vm5303, %v5550, %v5552
  %v5554 = vrot.slane %v5477, 2
  %v5555 = vsel %vm5303, %v5552, %v5554
  %v5556 = vrot.slane %v5478, 2
  %v5557 = vsel %vm5303, %v5554, %v5556
  %v5558 = vrot.slane %v5479, 2
  %v5559 = vsel %vm5303, %v5556, %v5558
  %v5560 = vrot.slane %v5480, 2
  %v5561 = vsel %vm5303, %v5558, %v5560
  %v5562 = vrot.slane %v5481, 2
  %v5563 = vsel %vm5303, %v5560, %v5562
  %v5564 = vrot.slane %v5482, 2
  %v5565 = vsel %vm5303, %v5562, %v5564
  %v5566 = vrot.slane %v5483, 2
  %v5567 = vsel %vm5303, %v5564, %v5566
  %v5568 = vrot.slane %v5484, 2
  %v5569 = vsel %vm5303, %v5566, %v5568
  %v5570 = vrot.slane %v5485, 2
  %v5571 = vsel %vm5303, %v5568, %v5570
  %v5572 = vrot.slane %v5486, 2
  %v5573 = vsel %vm5303, %v5570, %v5572
  %v5574 = vrot.slane %v5487, 2
  %v5575 = vsel %vm5303, %v5572, %v5574
  %v5576 = vrot.slane %v5488, 2
  %v5577 = vsel %vm5303, %v5574, %v5576
  %v5578 = vrot.slane %v5489, 2
  %v5579 = vsel %vm5303, %v5576, %v5578
  %v5580 = vrot.slane %v5490, 2
  %v5581 = vsel %vm5303, %v5578, %v5580
  %v5582 = vrot.slane %v5491, 2
  %v5583 = vsel %vm5303, %v5580, %v5582
  %v5584 = vrot.slane %v5492, 2
  %v5585 = vsel %vm5303, %v5582, %v5584
  %v5586 = vrot.slane %v5493, 2
  %v5587 = vsel %vm5303, %v5584, %v5586
  %v5588 = vrot.slane %v5494, 2
  %v5589 = vsel %vm5303, %v5586, %v5588
  %v5590 = vrot.slane %v5495, 2
  %v5591 = vsel %vm5303, %v5588, %v5590
  %v5592 = vrot.slane %v5496, 2
  %v5593 = vsel %vm5303, %v5590, %v5592
  %v5594 = vrot.slane %v5497, 2
  %v5595 = vsel %vm5303, %v5592, %v5594
  %v5628 = vmax.f32 %v5433, %v5533
  %v5629 = vmax.f32 %v5434, %v5535
  %v5630 = vmax.f32 %v5435, %v5537
  %v5631 = vmax.f32 %v5436, %v5539
  %v5632 = vmax.f32 %v5437, %v5541
  %v5633 = vmax.f32 %v5438, %v5543
  %v5634 = vmax.f32 %v5439, %v5545
  %v5635 = vmax.f32 %v5440, %v5547
  %v5636 = vmax.f32 %v5441, %v5549
  %v5637 = vmax.f32 %v5442, %v5551
  %v5638 = vmax.f32 %v5443, %v5553
  %v5639 = vmax.f32 %v5444, %v5555
  %v5640 = vmax.f32 %v5445, %v5557
  %v5641 = vmax.f32 %v5446, %v5559
  %v5642 = vmax.f32 %v5447, %v5561
  %v5643 = vmax.f32 %v5448, %v5563
  %v5644 = vmax.f32 %v5449, %v5565
  %v5645 = vmax.f32 %v5450, %v5567
  %v5646 = vmax.f32 %v5451, %v5569
  %v5647 = vmax.f32 %v5452, %v5571
  %v5648 = vmax.f32 %v5453, %v5573
  %v5649 = vmax.f32 %v5454, %v5575
  %v5650 = vmax.f32 %v5455, %v5577
  %v5651 = vmax.f32 %v5456, %v5579
  %v5652 = vmax.f32 %v5457, %v5581
  %v5653 = vmax.f32 %v5458, %v5583
  %v5654 = vmax.f32 %v5459, %v5585
  %v5655 = vmax.f32 %v5460, %v5587
  %v5656 = vmax.f32 %v5461, %v5589
  %v5657 = vmax.f32 %v5462, %v5591
  %v5658 = vmax.f32 %v5463, %v5593
  %v5659 = vmax.f32 %v5464, %v5595
  %v5660 = vmax.f32 %v5401, %v5628
  %v5661 = vmax.f32 %v5402, %v5629
  %v5662 = vmax.f32 %v5403, %v5630
  %v5663 = vmax.f32 %v5404, %v5631
  %v5664 = vmax.f32 %v5405, %v5632
  %v5665 = vmax.f32 %v5406, %v5633
  %v5666 = vmax.f32 %v5407, %v5634
  %v5667 = vmax.f32 %v5408, %v5635
  %v5668 = vmax.f32 %v5409, %v5636
  %v5669 = vmax.f32 %v5410, %v5637
  %v5670 = vmax.f32 %v5411, %v5638
  %v5671 = vmax.f32 %v5412, %v5639
  %v5672 = vmax.f32 %v5413, %v5640
  %v5673 = vmax.f32 %v5414, %v5641
  %v5674 = vmax.f32 %v5415, %v5642
  %v5675 = vmax.f32 %v5416, %v5643
  %v5676 = vmax.f32 %v5417, %v5644
  %v5677 = vmax.f32 %v5418, %v5645
  %v5678 = vmax.f32 %v5419, %v5646
  %v5679 = vmax.f32 %v5420, %v5647
  %v5680 = vmax.f32 %v5421, %v5648
  %v5681 = vmax.f32 %v5422, %v5649
  %v5682 = vmax.f32 %v5423, %v5650
  %v5683 = vmax.f32 %v5424, %v5651
  %v5684 = vmax.f32 %v5425, %v5652
  %v5685 = vmax.f32 %v5426, %v5653
  %v5686 = vmax.f32 %v5427, %v5654
  %v5687 = vmax.f32 %v5428, %v5655
  %v5688 = vmax.f32 %v5429, %v5656
  %v5689 = vmax.f32 %v5430, %v5657
  %v5690 = vmax.f32 %v5431, %v5658
  %v5691 = vmax.f32 %v5432, %v5659
  %5692 = vst [vmem:[#allocation6] sm:$0xff] %v5660
  %5693 = vst [vmem:[#allocation6 + $0x8] sm:$0xff] %v5661
  %5694 = vst [vmem:[#allocation6 + $0x10] sm:$0xff] %v5662
  %5695 = vst [vmem:[#allocation6 + $0x18] sm:$0xff] %v5663
  %5696 = vst [vmem:[#allocation6 + $0x20] sm:$0xff] %v5664
  %5697 = vst [vmem:[#allocation6 + $0x28] sm:$0xff] %v5665
  %5698 = vst [vmem:[#allocation6 + $0x30] sm:$0xff] %v5666
  %5699 = vst [vmem:[#allocation6 + $0x38] sm:$0xff] %v5667
  %5700 = vst [vmem:[#allocation6 + $0x40] sm:$0xff] %v5668
  %5701 = vst [vmem:[#allocation6 + $0x48] sm:$0xff] %v5669
  %5702 = vst [vmem:[#allocation6 + $0x50] sm:$0xff] %v5670
  %5703 = vst [vmem:[#allocation6 + $0x58] sm:$0xff] %v5671
  %5704 = vst [vmem:[#allocation6 + $0x60] sm:$0xff] %v5672
  %5705 = vst [vmem:[#allocation6 + $0x68] sm:$0xff] %v5673
  %5706 = vst [vmem:[#allocation6 + $0x70] sm:$0xff] %v5674
  %5707 = vst [vmem:[#allocation6 + $0x78] sm:$0xff] %v5675
  %5708 = vst [vmem:[#allocation6 + $0x80] sm:$0xff] %v5676
  %5709 = vst [vmem:[#allocation6 + $0x88] sm:$0xff] %v5677
  %5710 = vst [vmem:[#allocation6 + $0x90] sm:$0xff] %v5678
  %5711 = vst [vmem:[#allocation6 + $0x98] sm:$0xff] %v5679
  %5712 = vst [vmem:[#allocation6 + $0xa0] sm:$0xff] %v5680
  %5713 = vst [vmem:[#allocation6 + $0xa8] sm:$0xff] %v5681
  %5714 = vst [vmem:[#allocation6 + $0xb0] sm:$0xff] %v5682
  %5715 = vst [vmem:[#allocation6 + $0xb8] sm:$0xff] %v5683
  %5716 = vst [vmem:[#allocation6 + $0xc0] sm:$0xff] %v5684
  %5717 = vst [vmem:[#allocation6 + $0xc8] sm:$0xff] %v5685
  %5718 = vst [vmem:[#allocation6 + $0xd0] sm:$0xff] %v5686
  %5719 = vst [vmem:[#allocation6 + $0xd8] sm:$0xff] %v5687
  %5720 = vst [vmem:[#allocation6 + $0xe0] sm:$0xff] %v5688
  %5721 = vst [vmem:[#allocation6 + $0xe8] sm:$0xff] %v5689
  %5722 = vst [vmem:[#allocation6 + $0xf0] sm:$0xff] %v5690
  %5723 = vst [vmem:[#allocation6 + $0xf8] sm:$0xff] %v5691
  %v5724 = vld [vmem:[#allocation6] sm:$0xff]
  %v5725 = vld [vmem:[#allocation6 + $0x8] sm:$0xff]
  %v5726 = vld [vmem:[#allocation6 + $0x10] sm:$0xff]
  %v5727 = vld [vmem:[#allocation6 + $0x18] sm:$0xff]
  %v5728 = vld [vmem:[#allocation6 + $0x20] sm:$0xff]
  %v5729 = vld [vmem:[#allocation6 + $0x28] sm:$0xff]
  %v5730 = vld [vmem:[#allocation6 + $0x30] sm:$0xff]
  %v5731 = vld [vmem:[#allocation6 + $0x38] sm:$0xff]
  %v5732 = vld [vmem:[#allocation6 + $0x40] sm:$0xff]
  %v5733 = vld [vmem:[#allocation6 + $0x48] sm:$0xff]
  %v5734 = vld [vmem:[#allocation6 + $0x50] sm:$0xff]
  %v5735 = vld [vmem:[#allocation6 + $0x58] sm:$0xff]
  %v5736 = vld [vmem:[#allocation6 + $0x60] sm:$0xff]
  %v5737 = vld [vmem:[#allocation6 + $0x68] sm:$0xff]
  %v5738 = vld [vmem:[#allocation6 + $0x70] sm:$0xff]
  %v5739 = vld [vmem:[#allocation6 + $0x78] sm:$0xff]
  %v5740 = vld [vmem:[#allocation6 + $0x80] sm:$0xff]
  %v5741 = vld [vmem:[#allocation6 + $0x88] sm:$0xff]
  %v5742 = vld [vmem:[#allocation6 + $0x90] sm:$0xff]
  %v5743 = vld [vmem:[#allocation6 + $0x98] sm:$0xff]
  %v5744 = vld [vmem:[#allocation6 + $0xa0] sm:$0xff]
  %v5745 = vld [vmem:[#allocation6 + $0xa8] sm:$0xff]
  %v5746 = vld [vmem:[#allocation6 + $0xb0] sm:$0xff]
  %v5747 = vld [vmem:[#allocation6 + $0xb8] sm:$0xff]
  %v5748 = vld [vmem:[#allocation6 + $0xc0] sm:$0xff]
  %v5749 = vld [vmem:[#allocation6 + $0xc8] sm:$0xff]
  %v5750 = vld [vmem:[#allocation6 + $0xd0] sm:$0xff]
  %v5751 = vld [vmem:[#allocation6 + $0xd8] sm:$0xff]
  %v5752 = vld [vmem:[#allocation6 + $0xe0] sm:$0xff]
  %v5753 = vld [vmem:[#allocation6 + $0xe8] sm:$0xff]
  %v5754 = vld [vmem:[#allocation6 + $0xf0] sm:$0xff]
  %v5755 = vld [vmem:[#allocation6 + $0xf8] sm:$0xff]
  %v5756 = vld [vmem:[%s6] sm:$0xff]
  %v5757 = vld [vmem:[%s6 + $0x8] sm:$0xff]
  %v5758 = vld [vmem:[%s6 + $0x10] sm:$0xff]
  %v5759 = vld [vmem:[%s6 + $0x18] sm:$0xff]
  %v5760 = vld [vmem:[%s6 + $0x20] sm:$0xff]
  %v5761 = vld [vmem:[%s6 + $0x28] sm:$0xff]
  %v5762 = vld [vmem:[%s6 + $0x30] sm:$0xff]
  %v5763 = vld [vmem:[%s6 + $0x38] sm:$0xff]
  %v5764 = vld [vmem:[%s6 + $0x40] sm:$0xff]
  %v5765 = vld [vmem:[%s6 + $0x48] sm:$0xff]
  %v5766 = vld [vmem:[%s6 + $0x50] sm:$0xff]
  %v5767 = vld [vmem:[%s6 + $0x58] sm:$0xff]
  %v5768 = vld [vmem:[%s6 + $0x60] sm:$0xff]
  %v5769 = vld [vmem:[%s6 + $0x68] sm:$0xff]
  %v5770 = vld [vmem:[%s6 + $0x70] sm:$0xff]
  %v5771 = vld [vmem:[%s6 + $0x78] sm:$0xff]
  %v5772 = vld [vmem:[#allocation6 + $0x4] sm:$0xff]
  %v5773 = vld [vmem:[#allocation6 + $0xc] sm:$0xff]
  %v5774 = vld [vmem:[#allocation6 + $0x14] sm:$0xff]
  %v5775 = vld [vmem:[#allocation6 + $0x1c] sm:$0xff]
  %v5776 = vld [vmem:[#allocation6 + $0x24] sm:$0xff]
  %v5777 = vld [vmem:[#allocation6 + $0x2c] sm:$0xff]
  %v5778 = vld [vmem:[#allocation6 + $0x34] sm:$0xff]
  %v5779 = vld [vmem:[#allocation6 + $0x3c] sm:$0xff]
  %v5780 = vld [vmem:[#allocation6 + $0x44] sm:$0xff]
  %v5781 = vld [vmem:[#allocation6 + $0x4c] sm:$0xff]
  %v5782 = vld [vmem:[#allocation6 + $0x54] sm:$0xff]
  %v5783 = vld [vmem:[#allocation6 + $0x5c] sm:$0xff]
  %v5784 = vld [vmem:[#allocation6 + $0x64] sm:$0xff]
  %v5785 = vld [vmem:[#allocation6 + $0x6c] sm:$0xff]
  %v5786 = vld [vmem:[#allocation6 + $0x74] sm:$0xff]
  %v5787 = vld [vmem:[#allocation6 + $0x7c] sm:$0xff]
  %v5788 = vld [vmem:[#allocation6 + $0x84] sm:$0xff]
  %v5789 = vld [vmem:[#allocation6 + $0x8c] sm:$0xff]
  %v5790 = vld [vmem:[#allocation6 + $0x94] sm:$0xff]
  %v5791 = vld [vmem:[#allocation6 + $0x9c] sm:$0xff]
  %v5792 = vld [vmem:[#allocation6 + $0xa4] sm:$0xff]
  %v5793 = vld [vmem:[#allocation6 + $0xac] sm:$0xff]
  %v5794 = vld [vmem:[#allocation6 + $0xb4] sm:$0xff]
  %v5795 = vld [vmem:[#allocation6 + $0xbc] sm:$0xff]
  %v5796 = vld [vmem:[#allocation6 + $0xc4] sm:$0xff]
  %v5797 = vld [vmem:[#allocation6 + $0xcc] sm:$0xff]
  %v5798 = vld [vmem:[#allocation6 + $0xd4] sm:$0xff]
  %v5799 = vld [vmem:[#allocation6 + $0xdc] sm:$0xff]
  %v5800 = vld [vmem:[#allocation6 + $0xe4] sm:$0xff]
  %v5801 = vld [vmem:[#allocation6 + $0xec] sm:$0xff]
  %v5802 = vld [vmem:[#allocation6 + $0xf4] sm:$0xff]
  %v5803 = vld [vmem:[#allocation6 + $0xfc] sm:$0xff]
  %s5804 = scalar_lea.vmem %s6, 128
  %v5805 = vld [vmem:[%s5804] sm:$0xff]
  %v5806 = vld [vmem:[%s5804 + $0x8] sm:$0xff]
  %v5807 = vld [vmem:[%s5804 + $0x10] sm:$0xff]
  %v5808 = vld [vmem:[%s5804 + $0x18] sm:$0xff]
  %v5809 = vld [vmem:[%s5804 + $0x20] sm:$0xff]
  %v5810 = vld [vmem:[%s5804 + $0x28] sm:$0xff]
  %v5811 = vld [vmem:[%s5804 + $0x30] sm:$0xff]
  %v5812 = vld [vmem:[%s5804 + $0x38] sm:$0xff]
  %v5813 = vld [vmem:[%s5804 + $0x40] sm:$0xff]
  %v5814 = vld [vmem:[%s5804 + $0x48] sm:$0xff]
  %v5815 = vld [vmem:[%s5804 + $0x50] sm:$0xff]
  %v5816 = vld [vmem:[%s5804 + $0x58] sm:$0xff]
  %v5817 = vld [vmem:[%s5804 + $0x60] sm:$0xff]
  %v5818 = vld [vmem:[%s5804 + $0x68] sm:$0xff]
  %v5819 = vld [vmem:[%s5804 + $0x70] sm:$0xff]
  %v5820 = vld [vmem:[%s5804 + $0x78] sm:$0xff]
  %5821 = vmatprep.subr.mxu0 0.0
  %5822 = vmatpush1.msra.mxu0 %v5820
  %5823 = vmatprep.subr.mxu0 0.0
  %5824 = vmatpush1.msra.mxu0 %v5819
  %5825 = vmatprep.subr.mxu0 0.0
  %5826 = vmatpush1.msra.mxu0 %v5818
  %5827 = vmatprep.subr.mxu0 0.0
  %5828 = vmatpush1.msra.mxu0 %v5817
  %5829 = vmatprep.subr.mxu0 0.0
  %5830 = vmatpush1.msra.mxu0 %v5816
  %5831 = vmatprep.subr.mxu0 0.0
  %5832 = vmatpush1.msra.mxu0 %v5815
  %5833 = vmatprep.subr.mxu0 0.0
  %5834 = vmatpush1.msra.mxu0 %v5814
  %5835 = vmatprep.subr.mxu0 0.0
  %5836 = vmatpush1.msra.mxu0 %v5813
  %5837 = vmatprep.subr.mxu0 0.0
  %5838 = vmatpush1.msra.mxu0 %v5812
  %5839 = vmatprep.subr.mxu0 0.0
  %5840 = vmatpush1.msra.mxu0 %v5811
  %5841 = vmatprep.subr.mxu0 0.0
  %5842 = vmatpush1.msra.mxu0 %v5810
  %5843 = vmatprep.subr.mxu0 0.0
  %5844 = vmatpush1.msra.mxu0 %v5809
  %5845 = vmatprep.subr.mxu0 0.0
  %5846 = vmatpush1.msra.mxu0 %v5808
  %5847 = vmatprep.subr.mxu0 0.0
  %5848 = vmatpush1.msra.mxu0 %v5807
  %5849 = vmatprep.subr.mxu0 0.0
  %5850 = vmatpush1.msra.mxu0 %v5806
  %5851 = vmatprep.subr.mxu0 0.0
  %5852 = vmatpush1.msra.mxu0 %v5805
  %5853 = vmatprep.subr.mxu0 0.0
  %5854 = vmatpush2.msra.mxu0 0.0
  %5855 = vmatprep.subr.mxu0 0.0
  %5856 = vmatpush2.msra.mxu0 0.0
  %5857 = vmatprep.subr.mxu0 0.0
  %5858 = vmatpush2.msra.mxu0 0.0
  %5859 = vmatprep.subr.mxu0 0.0
  %5860 = vmatpush2.msra.mxu0 0.0
  %5861 = vmatprep.subr.mxu0 0.0
  %5862 = vmatpush2.msra.mxu0 0.0
  %5863 = vmatprep.subr.mxu0 0.0
  %5864 = vmatpush2.msra.mxu0 0.0
  %5865 = vmatprep.subr.mxu0 0.0
  %5866 = vmatpush2.msra.mxu0 0.0
  %5867 = vmatprep.subr.mxu0 0.0
  %5868 = vmatpush2.msra.mxu0 0.0
  %5869 = vmatprep.subr.mxu0 0.0
  %5870 = vmatpush2.msra.mxu0 0.0
  %5871 = vmatprep.subr.mxu0 0.0
  %5872 = vmatpush2.msra.mxu0 0.0
  %5873 = vmatprep.subr.mxu0 0.0
  %5874 = vmatpush2.msra.mxu0 0.0
  %5875 = vmatprep.subr.mxu0 0.0
  %5876 = vmatpush2.msra.mxu0 0.0
  %5877 = vmatprep.subr.mxu0 0.0
  %5878 = vmatpush2.msra.mxu0 0.0
  %5879 = vmatprep.subr.mxu0 0.0
  %5880 = vmatpush2.msra.mxu0 0.0
  %5881 = vmatprep.subr.mxu0 0.0
  %5882 = vmatpush2.msra.mxu0 0.0
  %5883 = vmatprep.subr.mxu0 0.0
  %5884 = vmatpush2.msra.mxu0 0.0
  %5885 = vmatprep.mubr.f32.mxu0 0.0
  %5886 = vmatmul.mubr.f32.gmra.mxu0 %v5772
  %v5887 = vpop.f32.mrf.mxu0
  %v5888 = vadd.f32 0.0, %v5887
  %v5889 = vpop.f32.mrf.mxu0
  %5890 = vmatprep.mubr.f32.mxu0 0.0
  %5891 = vmatmul.mubr.f32.gmra.mxu0 %v5773
  %v5892 = vpop.f32.mrf.mxu0
  %v5893 = vadd.f32 0.0, %v5892
  %v5894 = vpop.f32.mrf.mxu0
  %5895 = vmatprep.mubr.f32.mxu0 0.0
  %5896 = vmatmul.mubr.f32.gmra.mxu0 %v5774
  %v5897 = vpop.f32.mrf.mxu0
  %v5898 = vadd.f32 0.0, %v5897
  %v5899 = vpop.f32.mrf.mxu0
  %5900 = vmatprep.mubr.f32.mxu0 0.0
  %5901 = vmatmul.mubr.f32.gmra.mxu0 %v5775
  %v5902 = vpop.f32.mrf.mxu0
  %v5903 = vadd.f32 0.0, %v5902
  %v5904 = vpop.f32.mrf.mxu0
  %5905 = vmatprep.mubr.f32.mxu0 0.0
  %5906 = vmatmul.mubr.f32.gmra.mxu0 %v5776
  %v5907 = vpop.f32.mrf.mxu0
  %v5908 = vadd.f32 0.0, %v5907
  %v5909 = vpop.f32.mrf.mxu0
  %5910 = vmatprep.mubr.f32.mxu0 0.0
  %5911 = vmatmul.mubr.f32.gmra.mxu0 %v5777
  %v5912 = vpop.f32.mrf.mxu0
  %v5913 = vadd.f32 0.0, %v5912
  %v5914 = vpop.f32.mrf.mxu0
  %5915 = vmatprep.mubr.f32.mxu0 0.0
  %5916 = vmatmul.mubr.f32.gmra.mxu0 %v5778
  %v5917 = vpop.f32.mrf.mxu0
  %v5918 = vadd.f32 0.0, %v5917
  %v5919 = vpop.f32.mrf.mxu0
  %5920 = vmatprep.mubr.f32.mxu0 0.0
  %5921 = vmatmul.mubr.f32.gmra.mxu0 %v5779
  %v5922 = vpop.f32.mrf.mxu0
  %v5923 = vadd.f32 0.0, %v5922
  %v5924 = vpop.f32.mrf.mxu0
  %5925 = vmatprep.mubr.f32.mxu0 0.0
  %5926 = vmatmul.mubr.f32.gmra.mxu0 %v5780
  %v5927 = vpop.f32.mrf.mxu0
  %v5928 = vadd.f32 0.0, %v5927
  %v5929 = vpop.f32.mrf.mxu0
  %5930 = vmatprep.mubr.f32.mxu0 0.0
  %5931 = vmatmul.mubr.f32.gmra.mxu0 %v5781
  %v5932 = vpop.f32.mrf.mxu0
  %v5933 = vadd.f32 0.0, %v5932
  %v5934 = vpop.f32.mrf.mxu0
  %5935 = vmatprep.mubr.f32.mxu0 0.0
  %5936 = vmatmul.mubr.f32.gmra.mxu0 %v5782
  %v5937 = vpop.f32.mrf.mxu0
  %v5938 = vadd.f32 0.0, %v5937
  %v5939 = vpop.f32.mrf.mxu0
  %5940 = vmatprep.mubr.f32.mxu0 0.0
  %5941 = vmatmul.mubr.f32.gmra.mxu0 %v5783
  %v5942 = vpop.f32.mrf.mxu0
  %v5943 = vadd.f32 0.0, %v5942
  %v5944 = vpop.f32.mrf.mxu0
  %5945 = vmatprep.mubr.f32.mxu0 0.0
  %5946 = vmatmul.mubr.f32.gmra.mxu0 %v5784
  %v5947 = vpop.f32.mrf.mxu0
  %v5948 = vadd.f32 0.0, %v5947
  %v5949 = vpop.f32.mrf.mxu0
  %5950 = vmatprep.mubr.f32.mxu0 0.0
  %5951 = vmatmul.mubr.f32.gmra.mxu0 %v5785
  %v5952 = vpop.f32.mrf.mxu0
  %v5953 = vadd.f32 0.0, %v5952
  %v5954 = vpop.f32.mrf.mxu0
  %5955 = vmatprep.mubr.f32.mxu0 0.0
  %5956 = vmatmul.mubr.f32.gmra.mxu0 %v5786
  %v5957 = vpop.f32.mrf.mxu0
  %v5958 = vadd.f32 0.0, %v5957
  %v5959 = vpop.f32.mrf.mxu0
  %5960 = vmatprep.mubr.f32.mxu0 0.0
  %5961 = vmatmul.mubr.f32.gmra.mxu0 %v5787
  %v5962 = vpop.f32.mrf.mxu0
  %v5963 = vadd.f32 0.0, %v5962
  %v5964 = vpop.f32.mrf.mxu0
  %5965 = vmatprep.mubr.f32.mxu0 0.0
  %5966 = vmatmul.mubr.f32.gmra.mxu0 %v5788
  %v5967 = vpop.f32.mrf.mxu0
  %v5968 = vadd.f32 0.0, %v5967
  %v5969 = vpop.f32.mrf.mxu0
  %5970 = vmatprep.mubr.f32.mxu0 0.0
  %5971 = vmatmul.mubr.f32.gmra.mxu0 %v5789
  %v5972 = vpop.f32.mrf.mxu0
  %v5973 = vadd.f32 0.0, %v5972
  %v5974 = vpop.f32.mrf.mxu0
  %5975 = vmatprep.mubr.f32.mxu0 0.0
  %5976 = vmatmul.mubr.f32.gmra.mxu0 %v5790
  %v5977 = vpop.f32.mrf.mxu0
  %v5978 = vadd.f32 0.0, %v5977
  %v5979 = vpop.f32.mrf.mxu0
  %5980 = vmatprep.mubr.f32.mxu0 0.0
  %5981 = vmatmul.mubr.f32.gmra.mxu0 %v5791
  %v5982 = vpop.f32.mrf.mxu0
  %v5983 = vadd.f32 0.0, %v5982
  %v5984 = vpop.f32.mrf.mxu0
  %5985 = vmatprep.mubr.f32.mxu0 0.0
  %5986 = vmatmul.mubr.f32.gmra.mxu0 %v5792
  %v5987 = vpop.f32.mrf.mxu0
  %v5988 = vadd.f32 0.0, %v5987
  %v5989 = vpop.f32.mrf.mxu0
  %5990 = vmatprep.mubr.f32.mxu0 0.0
  %5991 = vmatmul.mubr.f32.gmra.mxu0 %v5793
  %v5992 = vpop.f32.mrf.mxu0
  %v5993 = vadd.f32 0.0, %v5992
  %v5994 = vpop.f32.mrf.mxu0
  %5995 = vmatprep.mubr.f32.mxu0 0.0
  %5996 = vmatmul.mubr.f32.gmra.mxu0 %v5794
  %v5997 = vpop.f32.mrf.mxu0
  %v5998 = vadd.f32 0.0, %v5997
  %v5999 = vpop.f32.mrf.mxu0
  %6000 = vmatprep.mubr.f32.mxu0 0.0
  %6001 = vmatmul.mubr.f32.gmra.mxu0 %v5795
  %v6002 = vpop.f32.mrf.mxu0
  %v6003 = vadd.f32 0.0, %v6002
  %v6004 = vpop.f32.mrf.mxu0
  %6005 = vmatprep.mubr.f32.mxu0 0.0
  %6006 = vmatmul.mubr.f32.gmra.mxu0 %v5796
  %v6007 = vpop.f32.mrf.mxu0
  %v6008 = vadd.f32 0.0, %v6007
  %v6009 = vpop.f32.mrf.mxu0
  %6010 = vmatprep.mubr.f32.mxu0 0.0
  %6011 = vmatmul.mubr.f32.gmra.mxu0 %v5797
  %v6012 = vpop.f32.mrf.mxu0
  %v6013 = vadd.f32 0.0, %v6012
  %v6014 = vpop.f32.mrf.mxu0
  %6015 = vmatprep.mubr.f32.mxu0 0.0
  %6016 = vmatmul.mubr.f32.gmra.mxu0 %v5798
  %v6017 = vpop.f32.mrf.mxu0
  %v6018 = vadd.f32 0.0, %v6017
  %v6019 = vpop.f32.mrf.mxu0
  %6020 = vmatprep.mubr.f32.mxu0 0.0
  %6021 = vmatmul.mubr.f32.gmra.mxu0 %v5799
  %v6022 = vpop.f32.mrf.mxu0
  %v6023 = vadd.f32 0.0, %v6022
  %v6024 = vpop.f32.mrf.mxu0
  %6025 = vmatprep.mubr.f32.mxu0 0.0
  %6026 = vmatmul.mubr.f32.gmra.mxu0 %v5800
  %v6027 = vpop.f32.mrf.mxu0
  %v6028 = vadd.f32 0.0, %v6027
  %v6029 = vpop.f32.mrf.mxu0
  %6030 = vmatprep.mubr.f32.mxu0 0.0
  %6031 = vmatmul.mubr.f32.gmra.mxu0 %v5801
  %v6032 = vpop.f32.mrf.mxu0
  %v6033 = vadd.f32 0.0, %v6032
  %v6034 = vpop.f32.mrf.mxu0
  %6035 = vmatprep.mubr.f32.mxu0 0.0
  %6036 = vmatmul.mubr.f32.gmra.mxu0 %v5802
  %v6037 = vpop.f32.mrf.mxu0
  %v6038 = vadd.f32 0.0, %v6037
  %v6039 = vpop.f32.mrf.mxu0
  %6040 = vmatprep.mubr.f32.mxu0 0.0
  %6041 = vmatmul.mubr.f32.gmra.mxu0 %v5803
  %v6042 = vpop.f32.mrf.mxu0
  %v6043 = vadd.f32 0.0, %v6042
  %v6044 = vpop.f32.mrf.mxu0
  %6045 = vdwg.mxu0
  %6046 = vmatprep.subr.mxu0 0.0
  %6047 = vmatpush1.msra.mxu0 %v5771
  %6048 = vmatprep.subr.mxu0 0.0
  %6049 = vmatpush1.msra.mxu0 %v5770
  %6050 = vmatprep.subr.mxu0 0.0
  %6051 = vmatpush1.msra.mxu0 %v5769
  %6052 = vmatprep.subr.mxu0 0.0
  %6053 = vmatpush1.msra.mxu0 %v5768
  %6054 = vmatprep.subr.mxu0 0.0
  %6055 = vmatpush1.msra.mxu0 %v5767
  %6056 = vmatprep.subr.mxu0 0.0
  %6057 = vmatpush1.msra.mxu0 %v5766
  %6058 = vmatprep.subr.mxu0 0.0
  %6059 = vmatpush1.msra.mxu0 %v5765
  %6060 = vmatprep.subr.mxu0 0.0
  %6061 = vmatpush1.msra.mxu0 %v5764
  %6062 = vmatprep.subr.mxu0 0.0
  %6063 = vmatpush1.msra.mxu0 %v5763
  %6064 = vmatprep.subr.mxu0 0.0
  %6065 = vmatpush1.msra.mxu0 %v5762
  %6066 = vmatprep.subr.mxu0 0.0
  %6067 = vmatpush1.msra.mxu0 %v5761
  %6068 = vmatprep.subr.mxu0 0.0
  %6069 = vmatpush1.msra.mxu0 %v5760
  %6070 = vmatprep.subr.mxu0 0.0
  %6071 = vmatpush1.msra.mxu0 %v5759
  %6072 = vmatprep.subr.mxu0 0.0
  %6073 = vmatpush1.msra.mxu0 %v5758
  %6074 = vmatprep.subr.mxu0 0.0
  %6075 = vmatpush1.msra.mxu0 %v5757
  %6076 = vmatprep.subr.mxu0 0.0
  %6077 = vmatpush1.msra.mxu0 %v5756
  %6078 = vmatprep.subr.mxu0 0.0
  %6079 = vmatpush2.msra.mxu0 0.0
  %6080 = vmatprep.subr.mxu0 0.0
  %6081 = vmatpush2.msra.mxu0 0.0
  %6082 = vmatprep.subr.mxu0 0.0
  %6083 = vmatpush2.msra.mxu0 0.0
  %6084 = vmatprep.subr.mxu0 0.0
  %6085 = vmatpush2.msra.mxu0 0.0
  %6086 = vmatprep.subr.mxu0 0.0
  %6087 = vmatpush2.msra.mxu0 0.0
  %6088 = vmatprep.subr.mxu0 0.0
  %6089 = vmatpush2.msra.mxu0 0.0
  %6090 = vmatprep.subr.mxu0 0.0
  %6091 = vmatpush2.msra.mxu0 0.0
  %6092 = vmatprep.subr.mxu0 0.0
  %6093 = vmatpush2.msra.mxu0 0.0
  %6094 = vmatprep.subr.mxu0 0.0
  %6095 = vmatpush2.msra.mxu0 0.0
  %6096 = vmatprep.subr.mxu0 0.0
  %6097 = vmatpush2.msra.mxu0 0.0
  %6098 = vmatprep.subr.mxu0 0.0
  %6099 = vmatpush2.msra.mxu0 0.0
  %6100 = vmatprep.subr.mxu0 0.0
  %6101 = vmatpush2.msra.mxu0 0.0
  %6102 = vmatprep.subr.mxu0 0.0
  %6103 = vmatpush2.msra.mxu0 0.0
  %6104 = vmatprep.subr.mxu0 0.0
  %6105 = vmatpush2.msra.mxu0 0.0
  %6106 = vmatprep.subr.mxu0 0.0
  %6107 = vmatpush2.msra.mxu0 0.0
  %6108 = vmatprep.subr.mxu0 0.0
  %6109 = vmatpush2.msra.mxu0 0.0
  %6110 = vmatprep.mubr.f32.mxu0 0.0
  %6111 = vmatmul.mubr.f32.gmra.mxu0 %v5724
  %v6112 = vpop.f32.mrf.mxu0
  %v6113 = vadd.f32 %v5888, %v6112
  %v6114 = vpop.f32.mrf.mxu0
  %6115 = vmatprep.mubr.f32.mxu0 0.0
  %6116 = vmatmul.mubr.f32.gmra.mxu0 %v5725
  %v6117 = vpop.f32.mrf.mxu0
  %v6118 = vadd.f32 %v5893, %v6117
  %v6119 = vpop.f32.mrf.mxu0
  %6120 = vmatprep.mubr.f32.mxu0 0.0
  %6121 = vmatmul.mubr.f32.gmra.mxu0 %v5726
  %v6122 = vpop.f32.mrf.mxu0
  %v6123 = vadd.f32 %v5898, %v6122
  %v6124 = vpop.f32.mrf.mxu0
  %6125 = vmatprep.mubr.f32.mxu0 0.0
  %6126 = vmatmul.mubr.f32.gmra.mxu0 %v5727
  %v6127 = vpop.f32.mrf.mxu0
  %v6128 = vadd.f32 %v5903, %v6127
  %v6129 = vpop.f32.mrf.mxu0
  %6130 = vmatprep.mubr.f32.mxu0 0.0
  %6131 = vmatmul.mubr.f32.gmra.mxu0 %v5728
  %v6132 = vpop.f32.mrf.mxu0
  %v6133 = vadd.f32 %v5908, %v6132
  %v6134 = vpop.f32.mrf.mxu0
  %6135 = vmatprep.mubr.f32.mxu0 0.0
  %6136 = vmatmul.mubr.f32.gmra.mxu0 %v5729
  %v6137 = vpop.f32.mrf.mxu0
  %v6138 = vadd.f32 %v5913, %v6137
  %v6139 = vpop.f32.mrf.mxu0
  %6140 = vmatprep.mubr.f32.mxu0 0.0
  %6141 = vmatmul.mubr.f32.gmra.mxu0 %v5730
  %v6142 = vpop.f32.mrf.mxu0
  %v6143 = vadd.f32 %v5918, %v6142
  %v6144 = vpop.f32.mrf.mxu0
  %6145 = vmatprep.mubr.f32.mxu0 0.0
  %6146 = vmatmul.mubr.f32.gmra.mxu0 %v5731
  %v6147 = vpop.f32.mrf.mxu0
  %v6148 = vadd.f32 %v5923, %v6147
  %v6149 = vpop.f32.mrf.mxu0
  %6150 = vmatprep.mubr.f32.mxu0 0.0
  %6151 = vmatmul.mubr.f32.gmra.mxu0 %v5732
  %v6152 = vpop.f32.mrf.mxu0
  %v6153 = vadd.f32 %v5928, %v6152
  %v6154 = vpop.f32.mrf.mxu0
  %6155 = vmatprep.mubr.f32.mxu0 0.0
  %6156 = vmatmul.mubr.f32.gmra.mxu0 %v5733
  %v6157 = vpop.f32.mrf.mxu0
  %v6158 = vadd.f32 %v5933, %v6157
  %v6159 = vpop.f32.mrf.mxu0
  %6160 = vmatprep.mubr.f32.mxu0 0.0
  %6161 = vmatmul.mubr.f32.gmra.mxu0 %v5734
  %v6162 = vpop.f32.mrf.mxu0
  %v6163 = vadd.f32 %v5938, %v6162
  %v6164 = vpop.f32.mrf.mxu0
  %6165 = vmatprep.mubr.f32.mxu0 0.0
  %6166 = vmatmul.mubr.f32.gmra.mxu0 %v5735
  %v6167 = vpop.f32.mrf.mxu0
  %v6168 = vadd.f32 %v5943, %v6167
  %v6169 = vpop.f32.mrf.mxu0
  %6170 = vmatprep.mubr.f32.mxu0 0.0
  %6171 = vmatmul.mubr.f32.gmra.mxu0 %v5736
  %v6172 = vpop.f32.mrf.mxu0
  %v6173 = vadd.f32 %v5948, %v6172
  %v6174 = vpop.f32.mrf.mxu0
  %6175 = vmatprep.mubr.f32.mxu0 0.0
  %6176 = vmatmul.mubr.f32.gmra.mxu0 %v5737
  %v6177 = vpop.f32.mrf.mxu0
  %v6178 = vadd.f32 %v5953, %v6177
  %v6179 = vpop.f32.mrf.mxu0
  %6180 = vmatprep.mubr.f32.mxu0 0.0
  %6181 = vmatmul.mubr.f32.gmra.mxu0 %v5738
  %v6182 = vpop.f32.mrf.mxu0
  %v6183 = vadd.f32 %v5958, %v6182
  %v6184 = vpop.f32.mrf.mxu0
  %6185 = vmatprep.mubr.f32.mxu0 0.0
  %6186 = vmatmul.mubr.f32.gmra.mxu0 %v5739
  %v6187 = vpop.f32.mrf.mxu0
  %v6188 = vadd.f32 %v5963, %v6187
  %v6189 = vpop.f32.mrf.mxu0
  %6190 = vmatprep.mubr.f32.mxu0 0.0
  %6191 = vmatmul.mubr.f32.gmra.mxu0 %v5740
  %v6192 = vpop.f32.mrf.mxu0
  %v6193 = vadd.f32 %v5968, %v6192
  %v6194 = vpop.f32.mrf.mxu0
  %6195 = vmatprep.mubr.f32.mxu0 0.0
  %6196 = vmatmul.mubr.f32.gmra.mxu0 %v5741
  %v6197 = vpop.f32.mrf.mxu0
  %v6198 = vadd.f32 %v5973, %v6197
  %v6199 = vpop.f32.mrf.mxu0
  %6200 = vmatprep.mubr.f32.mxu0 0.0
  %6201 = vmatmul.mubr.f32.gmra.mxu0 %v5742
  %v6202 = vpop.f32.mrf.mxu0
  %v6203 = vadd.f32 %v5978, %v6202
  %v6204 = vpop.f32.mrf.mxu0
  %6205 = vmatprep.mubr.f32.mxu0 0.0
  %6206 = vmatmul.mubr.f32.gmra.mxu0 %v5743
  %v6207 = vpop.f32.mrf.mxu0
  %v6208 = vadd.f32 %v5983, %v6207
  %v6209 = vpop.f32.mrf.mxu0
  %6210 = vmatprep.mubr.f32.mxu0 0.0
  %6211 = vmatmul.mubr.f32.gmra.mxu0 %v5744
  %v6212 = vpop.f32.mrf.mxu0
  %v6213 = vadd.f32 %v5988, %v6212
  %v6214 = vpop.f32.mrf.mxu0
  %6215 = vmatprep.mubr.f32.mxu0 0.0
  %6216 = vmatmul.mubr.f32.gmra.mxu0 %v5745
  %v6217 = vpop.f32.mrf.mxu0
  %v6218 = vadd.f32 %v5993, %v6217
  %v6219 = vpop.f32.mrf.mxu0
  %6220 = vmatprep.mubr.f32.mxu0 0.0
  %6221 = vmatmul.mubr.f32.gmra.mxu0 %v5746
  %v6222 = vpop.f32.mrf.mxu0
  %v6223 = vadd.f32 %v5998, %v6222
  %v6224 = vpop.f32.mrf.mxu0
  %6225 = vmatprep.mubr.f32.mxu0 0.0
  %6226 = vmatmul.mubr.f32.gmra.mxu0 %v5747
  %v6227 = vpop.f32.mrf.mxu0
  %v6228 = vadd.f32 %v6003, %v6227
  %v6229 = vpop.f32.mrf.mxu0
  %6230 = vmatprep.mubr.f32.mxu0 0.0
  %6231 = vmatmul.mubr.f32.gmra.mxu0 %v5748
  %v6232 = vpop.f32.mrf.mxu0
  %v6233 = vadd.f32 %v6008, %v6232
  %v6234 = vpop.f32.mrf.mxu0
  %6235 = vmatprep.mubr.f32.mxu0 0.0
  %6236 = vmatmul.mubr.f32.gmra.mxu0 %v5749
  %v6237 = vpop.f32.mrf.mxu0
  %v6238 = vadd.f32 %v6013, %v6237
  %v6239 = vpop.f32.mrf.mxu0
  %6240 = vmatprep.mubr.f32.mxu0 0.0
  %6241 = vmatmul.mubr.f32.gmra.mxu0 %v5750
  %v6242 = vpop.f32.mrf.mxu0
  %v6243 = vadd.f32 %v6018, %v6242
  %v6244 = vpop.f32.mrf.mxu0
  %6245 = vmatprep.mubr.f32.mxu0 0.0
  %6246 = vmatmul.mubr.f32.gmra.mxu0 %v5751
  %v6247 = vpop.f32.mrf.mxu0
  %v6248 = vadd.f32 %v6023, %v6247
  %v6249 = vpop.f32.mrf.mxu0
  %6250 = vmatprep.mubr.f32.mxu0 0.0
  %6251 = vmatmul.mubr.f32.gmra.mxu0 %v5752
  %v6252 = vpop.f32.mrf.mxu0
  %v6253 = vadd.f32 %v6028, %v6252
  %v6254 = vpop.f32.mrf.mxu0
  %6255 = vmatprep.mubr.f32.mxu0 0.0
  %6256 = vmatmul.mubr.f32.gmra.mxu0 %v5753
  %v6257 = vpop.f32.mrf.mxu0
  %v6258 = vadd.f32 %v6033, %v6257
  %v6259 = vpop.f32.mrf.mxu0
  %6260 = vmatprep.mubr.f32.mxu0 0.0
  %6261 = vmatmul.mubr.f32.gmra.mxu0 %v5754
  %v6262 = vpop.f32.mrf.mxu0
  %v6263 = vadd.f32 %v6038, %v6262
  %v6264 = vpop.f32.mrf.mxu0
  %6265 = vmatprep.mubr.f32.mxu0 0.0
  %6266 = vmatmul.mubr.f32.gmra.mxu0 %v5755
  %v6267 = vpop.f32.mrf.mxu0
  %v6268 = vadd.f32 %v6043, %v6267
  %v6269 = vpop.f32.mrf.mxu0
  %6270 = vdwg.mxu0
  %v6271 = vld [vmem:[#allocation6 + $0x8] sm:$0xff]
  %v6272 = vld [vmem:[#allocation6 + $0x10] sm:$0xff]
  %v6273 = vld [vmem:[#allocation6 + $0x18] sm:$0xff]
  %v6274 = vld [vmem:[#allocation6 + $0x20] sm:$0xff]
  %v6275 = vld [vmem:[#allocation6 + $0x28] sm:$0xff]
  %v6276 = vld [vmem:[#allocation6 + $0x30] sm:$0xff]
  %v6277 = vld [vmem:[#allocation6 + $0x38] sm:$0xff]
  %v6278 = vld [vmem:[#allocation6 + $0x40] sm:$0xff]
  %v6279 = vld [vmem:[#allocation6 + $0x48] sm:$0xff]
  %v6280 = vld [vmem:[#allocation6 + $0x50] sm:$0xff]
  %v6281 = vld [vmem:[#allocation6 + $0x58] sm:$0xff]
  %v6282 = vld [vmem:[#allocation6 + $0x60] sm:$0xff]
  %v6283 = vld [vmem:[#allocation6 + $0x68] sm:$0xff]
  %v6284 = vld [vmem:[#allocation6 + $0x70] sm:$0xff]
  %v6285 = vld [vmem:[#allocation6 + $0x78] sm:$0xff]
  %v6286 = vld [vmem:[#allocation6 + $0x80] sm:$0xff]
  %v6287 = vld [vmem:[#allocation6 + $0x88] sm:$0xff]
  %v6288 = vld [vmem:[#allocation6 + $0x90] sm:$0xff]
  %v6289 = vld [vmem:[#allocation6 + $0x98] sm:$0xff]
  %v6290 = vld [vmem:[#allocation6 + $0xa0] sm:$0xff]
  %v6291 = vld [vmem:[#allocation6 + $0xa8] sm:$0xff]
  %v6292 = vld [vmem:[#allocation6 + $0xb0] sm:$0xff]
  %v6293 = vld [vmem:[#allocation6 + $0xb8] sm:$0xff]
  %v6294 = vld [vmem:[#allocation6 + $0xc0] sm:$0xff]
  %v6295 = vld [vmem:[#allocation6 + $0xc8] sm:$0xff]
  %v6296 = vld [vmem:[#allocation6 + $0xd0] sm:$0xff]
  %v6297 = vld [vmem:[#allocation6 + $0xd8] sm:$0xff]
  %v6298 = vld [vmem:[#allocation6 + $0xe0] sm:$0xff]
  %v6299 = vld [vmem:[#allocation6 + $0xe8] sm:$0xff]
  %v6300 = vld [vmem:[#allocation6 + $0xf0] sm:$0xff]
  %v6301 = vld [vmem:[#allocation6 + $0xf8] sm:$0xff]
  %v6302 = vld [vmem:[#allocation6 + $0x100] sm:$0xff]
  %s6303 = scalar_lea.vmem %s6, 256
  %v6304 = vld [vmem:[%s6303] sm:$0xff]
  %v6305 = vld [vmem:[%s6303 + $0x8] sm:$0xff]
  %v6306 = vld [vmem:[%s6303 + $0x10] sm:$0xff]
  %v6307 = vld [vmem:[%s6303 + $0x18] sm:$0xff]
  %v6308 = vld [vmem:[%s6303 + $0x20] sm:$0xff]
  %v6309 = vld [vmem:[%s6303 + $0x28] sm:$0xff]
  %v6310 = vld [vmem:[%s6303 + $0x30] sm:$0xff]
  %v6311 = vld [vmem:[%s6303 + $0x38] sm:$0xff]
  %v6312 = vld [vmem:[%s6303 + $0x40] sm:$0xff]
  %v6313 = vld [vmem:[%s6303 + $0x48] sm:$0xff]
  %v6314 = vld [vmem:[%s6303 + $0x50] sm:$0xff]
  %v6315 = vld [vmem:[%s6303 + $0x58] sm:$0xff]
  %v6316 = vld [vmem:[%s6303 + $0x60] sm:$0xff]
  %v6317 = vld [vmem:[%s6303 + $0x68] sm:$0xff]
  %v6318 = vld [vmem:[%s6303 + $0x70] sm:$0xff]
  %v6319 = vld [vmem:[%s6303 + $0x78] sm:$0xff]
  %6320 = vmatprep.subr.mxu0 0.0
  %6321 = vmatpush1.msra.mxu0 %v6319
  %6322 = vmatprep.subr.mxu0 0.0
  %6323 = vmatpush1.msra.mxu0 %v6318
  %6324 = vmatprep.subr.mxu0 0.0
  %6325 = vmatpush1.msra.mxu0 %v6317
  %6326 = vmatprep.subr.mxu0 0.0
  %6327 = vmatpush1.msra.mxu0 %v6316
  %6328 = vmatprep.subr.mxu0 0.0
  %6329 = vmatpush1.msra.mxu0 %v6315
  %6330 = vmatprep.subr.mxu0 0.0
  %6331 = vmatpush1.msra.mxu0 %v6314
  %6332 = vmatprep.subr.mxu0 0.0
  %6333 = vmatpush1.msra.mxu0 %v6313
  %6334 = vmatprep.subr.mxu0 0.0
  %6335 = vmatpush1.msra.mxu0 %v6312
  %6336 = vmatprep.subr.mxu0 0.0
  %6337 = vmatpush1.msra.mxu0 %v6311
  %6338 = vmatprep.subr.mxu0 0.0
  %6339 = vmatpush1.msra.mxu0 %v6310
  %6340 = vmatprep.subr.mxu0 0.0
  %6341 = vmatpush1.msra.mxu0 %v6309
  %6342 = vmatprep.subr.mxu0 0.0
  %6343 = vmatpush1.msra.mxu0 %v6308
  %6344 = vmatprep.subr.mxu0 0.0
  %6345 = vmatpush1.msra.mxu0 %v6307
  %6346 = vmatprep.subr.mxu0 0.0
  %6347 = vmatpush1.msra.mxu0 %v6306
  %6348 = vmatprep.subr.mxu0 0.0
  %6349 = vmatpush1.msra.mxu0 %v6305
  %6350 = vmatprep.subr.mxu0 0.0
  %6351 = vmatpush1.msra.mxu0 %v6304
  %6352 = vmatprep.subr.mxu0 0.0
  %6353 = vmatpush2.msra.mxu0 0.0
  %6354 = vmatprep.subr.mxu0 0.0
  %6355 = vmatpush2.msra.mxu0 0.0
  %6356 = vmatprep.subr.mxu0 0.0
  %6357 = vmatpush2.msra.mxu0 0.0
  %6358 = vmatprep.subr.mxu0 0.0
  %6359 = vmatpush2.msra.mxu0 0.0
  %6360 = vmatprep.subr.mxu0 0.0
  %6361 = vmatpush2.msra.mxu0 0.0
  %6362 = vmatprep.subr.mxu0 0.0
  %6363 = vmatpush2.msra.mxu0 0.0
  %6364 = vmatprep.subr.mxu0 0.0
  %6365 = vmatpush2.msra.mxu0 0.0
  %6366 = vmatprep.subr.mxu0 0.0
  %6367 = vmatpush2.msra.mxu0 0.0
  %6368 = vmatprep.subr.mxu0 0.0
  %6369 = vmatpush2.msra.mxu0 0.0
  %6370 = vmatprep.subr.mxu0 0.0
  %6371 = vmatpush2.msra.mxu0 0.0
  %6372 = vmatprep.subr.mxu0 0.0
  %6373 = vmatpush2.msra.mxu0 0.0
  %6374 = vmatprep.subr.mxu0 0.0
  %6375 = vmatpush2.msra.mxu0 0.0
  %6376 = vmatprep.subr.mxu0 0.0
  %6377 = vmatpush2.msra.mxu0 0.0
  %6378 = vmatprep.subr.mxu0 0.0
  %6379 = vmatpush2.msra.mxu0 0.0
  %6380 = vmatprep.subr.mxu0 0.0
  %6381 = vmatpush2.msra.mxu0 0.0
  %6382 = vmatprep.subr.mxu0 0.0
  %6383 = vmatpush2.msra.mxu0 0.0
  %6384 = vmatprep.mubr.f32.mxu0 0.0
  %6385 = vmatmul.mubr.f32.gmra.mxu0 %v6271
  %v6386 = vpop.f32.mrf.mxu0
  %v6387 = vadd.f32 0.0, %v6386
  %v6388 = vpop.f32.mrf.mxu0
  %6389 = vmatprep.mubr.f32.mxu0 0.0
  %6390 = vmatmul.mubr.f32.gmra.mxu0 %v6272
  %v6391 = vpop.f32.mrf.mxu0
  %v6392 = vadd.f32 0.0, %v6391
  %v6393 = vpop.f32.mrf.mxu0
  %6394 = vmatprep.mubr.f32.mxu0 0.0
  %6395 = vmatmul.mubr.f32.gmra.mxu0 %v6273
  %v6396 = vpop.f32.mrf.mxu0
  %v6397 = vadd.f32 0.0, %v6396
  %v6398 = vpop.f32.mrf.mxu0
  %6399 = vmatprep.mubr.f32.mxu0 0.0
  %6400 = vmatmul.mubr.f32.gmra.mxu0 %v6274
  %v6401 = vpop.f32.mrf.mxu0
  %v6402 = vadd.f32 0.0, %v6401
  %v6403 = vpop.f32.mrf.mxu0
  %6404 = vmatprep.mubr.f32.mxu0 0.0
  %6405 = vmatmul.mubr.f32.gmra.mxu0 %v6275
  %v6406 = vpop.f32.mrf.mxu0
  %v6407 = vadd.f32 0.0, %v6406
  %v6408 = vpop.f32.mrf.mxu0
  %6409 = vmatprep.mubr.f32.mxu0 0.0
  %6410 = vmatmul.mubr.f32.gmra.mxu0 %v6276
  %v6411 = vpop.f32.mrf.mxu0
  %v6412 = vadd.f32 0.0, %v6411
  %v6413 = vpop.f32.mrf.mxu0
  %6414 = vmatprep.mubr.f32.mxu0 0.0
  %6415 = vmatmul.mubr.f32.gmra.mxu0 %v6277
  %v6416 = vpop.f32.mrf.mxu0
  %v6417 = vadd.f32 0.0, %v6416
  %v6418 = vpop.f32.mrf.mxu0
  %6419 = vmatprep.mubr.f32.mxu0 0.0
  %6420 = vmatmul.mubr.f32.gmra.mxu0 %v6278
  %v6421 = vpop.f32.mrf.mxu0
  %v6422 = vadd.f32 0.0, %v6421
  %v6423 = vpop.f32.mrf.mxu0
  %6424 = vmatprep.mubr.f32.mxu0 0.0
  %6425 = vmatmul.mubr.f32.gmra.mxu0 %v6279
  %v6426 = vpop.f32.mrf.mxu0
  %v6427 = vadd.f32 0.0, %v6426
  %v6428 = vpop.f32.mrf.mxu0
  %6429 = vmatprep.mubr.f32.mxu0 0.0
  %6430 = vmatmul.mubr.f32.gmra.mxu0 %v6280
  %v6431 = vpop.f32.mrf.mxu0
  %v6432 = vadd.f32 0.0, %v6431
  %v6433 = vpop.f32.mrf.mxu0
  %6434 = vmatprep.mubr.f32.mxu0 0.0
  %6435 = vmatmul.mubr.f32.gmra.mxu0 %v6281
  %v6436 = vpop.f32.mrf.mxu0
  %v6437 = vadd.f32 0.0, %v6436
  %v6438 = vpop.f32.mrf.mxu0
  %6439 = vmatprep.mubr.f32.mxu0 0.0
  %6440 = vmatmul.mubr.f32.gmra.mxu0 %v6282
  %v6441 = vpop.f32.mrf.mxu0
  %v6442 = vadd.f32 0.0, %v6441
  %v6443 = vpop.f32.mrf.mxu0
  %6444 = vmatprep.mubr.f32.mxu0 0.0
  %6445 = vmatmul.mubr.f32.gmra.mxu0 %v6283
  %v6446 = vpop.f32.mrf.mxu0
  %v6447 = vadd.f32 0.0, %v6446
  %v6448 = vpop.f32.mrf.mxu0
  %6449 = vmatprep.mubr.f32.mxu0 0.0
  %6450 = vmatmul.mubr.f32.gmra.mxu0 %v6284
  %v6451 = vpop.f32.mrf.mxu0
  %v6452 = vadd.f32 0.0, %v6451
  %v6453 = vpop.f32.mrf.mxu0
  %6454 = vmatprep.mubr.f32.mxu0 0.0
  %6455 = vmatmul.mubr.f32.gmra.mxu0 %v6285
  %v6456 = vpop.f32.mrf.mxu0
  %v6457 = vadd.f32 0.0, %v6456
  %v6458 = vpop.f32.mrf.mxu0
  %6459 = vmatprep.mubr.f32.mxu0 0.0
  %6460 = vmatmul.mubr.f32.gmra.mxu0 %v6286
  %v6461 = vpop.f32.mrf.mxu0
  %v6462 = vadd.f32 0.0, %v6461
  %v6463 = vpop.f32.mrf.mxu0
  %6464 = vmatprep.mubr.f32.mxu0 0.0
  %6465 = vmatmul.mubr.f32.gmra.mxu0 %v6287
  %v6466 = vpop.f32.mrf.mxu0
  %v6467 = vadd.f32 0.0, %v6466
  %v6468 = vpop.f32.mrf.mxu0
  %6469 = vmatprep.mubr.f32.mxu0 0.0
  %6470 = vmatmul.mubr.f32.gmra.mxu0 %v6288
  %v6471 = vpop.f32.mrf.mxu0
  %v6472 = vadd.f32 0.0, %v6471
  %v6473 = vpop.f32.mrf.mxu0
  %6474 = vmatprep.mubr.f32.mxu0 0.0
  %6475 = vmatmul.mubr.f32.gmra.mxu0 %v6289
  %v6476 = vpop.f32.mrf.mxu0
  %v6477 = vadd.f32 0.0, %v6476
  %v6478 = vpop.f32.mrf.mxu0
  %6479 = vmatprep.mubr.f32.mxu0 0.0
  %6480 = vmatmul.mubr.f32.gmra.mxu0 %v6290
  %v6481 = vpop.f32.mrf.mxu0
  %v6482 = vadd.f32 0.0, %v6481
  %v6483 = vpop.f32.mrf.mxu0
  %6484 = vmatprep.mubr.f32.mxu0 0.0
  %6485 = vmatmul.mubr.f32.gmra.mxu0 %v6291
  %v6486 = vpop.f32.mrf.mxu0
  %v6487 = vadd.f32 0.0, %v6486
  %v6488 = vpop.f32.mrf.mxu0
  %6489 = vmatprep.mubr.f32.mxu0 0.0
  %6490 = vmatmul.mubr.f32.gmra.mxu0 %v6292
  %v6491 = vpop.f32.mrf.mxu0
  %v6492 = vadd.f32 0.0, %v6491
  %v6493 = vpop.f32.mrf.mxu0
  %6494 = vmatprep.mubr.f32.mxu0 0.0
  %6495 = vmatmul.mubr.f32.gmra.mxu0 %v6293
  %v6496 = vpop.f32.mrf.mxu0
  %v6497 = vadd.f32 0.0, %v6496
  %v6498 = vpop.f32.mrf.mxu0
  %6499 = vmatprep.mubr.f32.mxu0 0.0
  %6500 = vmatmul.mubr.f32.gmra.mxu0 %v6294
  %v6501 = vpop.f32.mrf.mxu0
  %v6502 = vadd.f32 0.0, %v6501
  %v6503 = vpop.f32.mrf.mxu0
  %6504 = vmatprep.mubr.f32.mxu0 0.0
  %6505 = vmatmul.mubr.f32.gmra.mxu0 %v6295
  %v6506 = vpop.f32.mrf.mxu0
  %v6507 = vadd.f32 0.0, %v6506
  %v6508 = vpop.f32.mrf.mxu0
  %6509 = vmatprep.mubr.f32.mxu0 0.0
  %6510 = vmatmul.mubr.f32.gmra.mxu0 %v6296
  %v6511 = vpop.f32.mrf.mxu0
  %v6512 = vadd.f32 0.0, %v6511
  %v6513 = vpop.f32.mrf.mxu0
  %6514 = vmatprep.mubr.f32.mxu0 0.0
  %6515 = vmatmul.mubr.f32.gmra.mxu0 %v6297
  %v6516 = vpop.f32.mrf.mxu0
  %v6517 = vadd.f32 0.0, %v6516
  %v6518 = vpop.f32.mrf.mxu0
  %6519 = vmatprep.mubr.f32.mxu0 0.0
  %6520 = vmatmul.mubr.f32.gmra.mxu0 %v6298
  %v6521 = vpop.f32.mrf.mxu0
  %v6522 = vadd.f32 0.0, %v6521
  %v6523 = vpop.f32.mrf.mxu0
  %6524 = vmatprep.mubr.f32.mxu0 0.0
  %6525 = vmatmul.mubr.f32.gmra.mxu0 %v6299
  %v6526 = vpop.f32.mrf.mxu0
  %v6527 = vadd.f32 0.0, %v6526
  %v6528 = vpop.f32.mrf.mxu0
  %6529 = vmatprep.mubr.f32.mxu0 0.0
  %6530 = vmatmul.mubr.f32.gmra.mxu0 %v6300
  %v6531 = vpop.f32.mrf.mxu0
  %v6532 = vadd.f32 0.0, %v6531
  %v6533 = vpop.f32.mrf.mxu0
  %6534 = vmatprep.mubr.f32.mxu0 0.0
  %6535 = vmatmul.mubr.f32.gmra.mxu0 %v6301
  %v6536 = vpop.f32.mrf.mxu0
  %v6537 = vadd.f32 0.0, %v6536
  %v6538 = vpop.f32.mrf.mxu0
  %6539 = vmatprep.mubr.f32.mxu0 0.0
  %6540 = vmatmul.mubr.f32.gmra.mxu0 %v6302
  %v6541 = vpop.f32.mrf.mxu0
  %v6542 = vadd.f32 0.0, %v6541
  %v6543 = vpop.f32.mrf.mxu0
  %6544 = vdwg.mxu0
  %v6545 = vadd.f32 %v6113, %v6387
  %v6546 = vadd.f32 %v6118, %v6392
  %v6547 = vadd.f32 %v6123, %v6397
  %v6548 = vadd.f32 %v6128, %v6402
  %v6549 = vadd.f32 %v6133, %v6407
  %v6550 = vadd.f32 %v6138, %v6412
  %v6551 = vadd.f32 %v6143, %v6417
  %v6552 = vadd.f32 %v6148, %v6422
  %v6553 = vadd.f32 %v6153, %v6427
  %v6554 = vadd.f32 %v6158, %v6432
  %v6555 = vadd.f32 %v6163, %v6437
  %v6556 = vadd.f32 %v6168, %v6442
  %v6557 = vadd.f32 %v6173, %v6447
  %v6558 = vadd.f32 %v6178, %v6452
  %v6559 = vadd.f32 %v6183, %v6457
  %v6560 = vadd.f32 %v6188, %v6462
  %v6561 = vadd.f32 %v6193, %v6467
  %v6562 = vadd.f32 %v6198, %v6472
  %v6563 = vadd.f32 %v6203, %v6477
  %v6564 = vadd.f32 %v6208, %v6482
  %v6565 = vadd.f32 %v6213, %v6487
  %v6566 = vadd.f32 %v6218, %v6492
  %v6567 = vadd.f32 %v6223, %v6497
  %v6568 = vadd.f32 %v6228, %v6502
  %v6569 = vadd.f32 %v6233, %v6507
  %v6570 = vadd.f32 %v6238, %v6512
  %v6571 = vadd.f32 %v6243, %v6517
  %v6572 = vadd.f32 %v6248, %v6522
  %v6573 = vadd.f32 %v6253, %v6527
  %v6574 = vadd.f32 %v6258, %v6532
  %v6575 = vadd.f32 %v6263, %v6537
  %v6576 = vadd.f32 %v6268, %v6542
  %v6577 = vld [vmem:[#allocation6 + $0xc] sm:$0xff]
  %v6578 = vld [vmem:[#allocation6 + $0x14] sm:$0xff]
  %v6579 = vld [vmem:[#allocation6 + $0x1c] sm:$0xff]
  %v6580 = vld [vmem:[#allocation6 + $0x24] sm:$0xff]
  %v6581 = vld [vmem:[#allocation6 + $0x2c] sm:$0xff]
  %v6582 = vld [vmem:[#allocation6 + $0x34] sm:$0xff]
  %v6583 = vld [vmem:[#allocation6 + $0x3c] sm:$0xff]
  %v6584 = vld [vmem:[#allocation6 + $0x44] sm:$0xff]
  %v6585 = vld [vmem:[#allocation6 + $0x4c] sm:$0xff]
  %v6586 = vld [vmem:[#allocation6 + $0x54] sm:$0xff]
  %v6587 = vld [vmem:[#allocation6 + $0x5c] sm:$0xff]
  %v6588 = vld [vmem:[#allocation6 + $0x64] sm:$0xff]
  %v6589 = vld [vmem:[#allocation6 + $0x6c] sm:$0xff]
  %v6590 = vld [vmem:[#allocation6 + $0x74] sm:$0xff]
  %v6591 = vld [vmem:[#allocation6 + $0x7c] sm:$0xff]
  %v6592 = vld [vmem:[#allocation6 + $0x84] sm:$0xff]
  %v6593 = vld [vmem:[#allocation6 + $0x8c] sm:$0xff]
  %v6594 = vld [vmem:[#allocation6 + $0x94] sm:$0xff]
  %v6595 = vld [vmem:[#allocation6 + $0x9c] sm:$0xff]
  %v6596 = vld [vmem:[#allocation6 + $0xa4] sm:$0xff]
  %v6597 = vld [vmem:[#allocation6 + $0xac] sm:$0xff]
  %v6598 = vld [vmem:[#allocation6 + $0xb4] sm:$0xff]
  %v6599 = vld [vmem:[#allocation6 + $0xbc] sm:$0xff]
  %v6600 = vld [vmem:[#allocation6 + $0xc4] sm:$0xff]
  %v6601 = vld [vmem:[#allocation6 + $0xcc] sm:$0xff]
  %v6602 = vld [vmem:[#allocation6 + $0xd4] sm:$0xff]
  %v6603 = vld [vmem:[#allocation6 + $0xdc] sm:$0xff]
  %v6604 = vld [vmem:[#allocation6 + $0xe4] sm:$0xff]
  %v6605 = vld [vmem:[#allocation6 + $0xec] sm:$0xff]
  %v6606 = vld [vmem:[#allocation6 + $0xf4] sm:$0xff]
  %v6607 = vld [vmem:[#allocation6 + $0xfc] sm:$0xff]
  %v6608 = vld [vmem:[#allocation6 + $0x104] sm:$0xff]
  %s6609 = scalar_lea.vmem %s6, 384
  %v6610 = vld [vmem:[%s6609] sm:$0xff]
  %v6611 = vld [vmem:[%s6609 + $0x8] sm:$0xff]
  %v6612 = vld [vmem:[%s6609 + $0x10] sm:$0xff]
  %v6613 = vld [vmem:[%s6609 + $0x18] sm:$0xff]
  %v6614 = vld [vmem:[%s6609 + $0x20] sm:$0xff]
  %v6615 = vld [vmem:[%s6609 + $0x28] sm:$0xff]
  %v6616 = vld [vmem:[%s6609 + $0x30] sm:$0xff]
  %v6617 = vld [vmem:[%s6609 + $0x38] sm:$0xff]
  %v6618 = vld [vmem:[%s6609 + $0x40] sm:$0xff]
  %v6619 = vld [vmem:[%s6609 + $0x48] sm:$0xff]
  %v6620 = vld [vmem:[%s6609 + $0x50] sm:$0xff]
  %v6621 = vld [vmem:[%s6609 + $0x58] sm:$0xff]
  %v6622 = vld [vmem:[%s6609 + $0x60] sm:$0xff]
  %v6623 = vld [vmem:[%s6609 + $0x68] sm:$0xff]
  %v6624 = vld [vmem:[%s6609 + $0x70] sm:$0xff]
  %v6625 = vld [vmem:[%s6609 + $0x78] sm:$0xff]
  %6626 = vmatprep.subr.mxu0 0.0
  %6627 = vmatpush1.msra.mxu0 %v6625
  %6628 = vmatprep.subr.mxu0 0.0
  %6629 = vmatpush1.msra.mxu0 %v6624
  %6630 = vmatprep.subr.mxu0 0.0
  %6631 = vmatpush1.msra.mxu0 %v6623
  %6632 = vmatprep.subr.mxu0 0.0
  %6633 = vmatpush1.msra.mxu0 %v6622
  %6634 = vmatprep.subr.mxu0 0.0
  %6635 = vmatpush1.msra.mxu0 %v6621
  %6636 = vmatprep.subr.mxu0 0.0
  %6637 = vmatpush1.msra.mxu0 %v6620
  %6638 = vmatprep.subr.mxu0 0.0
  %6639 = vmatpush1.msra.mxu0 %v6619
  %6640 = vmatprep.subr.mxu0 0.0
  %6641 = vmatpush1.msra.mxu0 %v6618
  %6642 = vmatprep.subr.mxu0 0.0
  %6643 = vmatpush1.msra.mxu0 %v6617
  %6644 = vmatprep.subr.mxu0 0.0
  %6645 = vmatpush1.msra.mxu0 %v6616
  %6646 = vmatprep.subr.mxu0 0.0
  %6647 = vmatpush1.msra.mxu0 %v6615
  %6648 = vmatprep.subr.mxu0 0.0
  %6649 = vmatpush1.msra.mxu0 %v6614
  %6650 = vmatprep.subr.mxu0 0.0
  %6651 = vmatpush1.msra.mxu0 %v6613
  %6652 = vmatprep.subr.mxu0 0.0
  %6653 = vmatpush1.msra.mxu0 %v6612
  %6654 = vmatprep.subr.mxu0 0.0
  %6655 = vmatpush1.msra.mxu0 %v6611
  %6656 = vmatprep.subr.mxu0 0.0
  %6657 = vmatpush1.msra.mxu0 %v6610
  %6658 = vmatprep.subr.mxu0 0.0
  %6659 = vmatpush2.msra.mxu0 0.0
  %6660 = vmatprep.subr.mxu0 0.0
  %6661 = vmatpush2.msra.mxu0 0.0
  %6662 = vmatprep.subr.mxu0 0.0
  %6663 = vmatpush2.msra.mxu0 0.0
  %6664 = vmatprep.subr.mxu0 0.0
  %6665 = vmatpush2.msra.mxu0 0.0
  %6666 = vmatprep.subr.mxu0 0.0
  %6667 = vmatpush2.msra.mxu0 0.0
  %6668 = vmatprep.subr.mxu0 0.0
  %6669 = vmatpush2.msra.mxu0 0.0
  %6670 = vmatprep.subr.mxu0 0.0
  %6671 = vmatpush2.msra.mxu0 0.0
  %6672 = vmatprep.subr.mxu0 0.0
  %6673 = vmatpush2.msra.mxu0 0.0
  %6674 = vmatprep.subr.mxu0 0.0
  %6675 = vmatpush2.msra.mxu0 0.0
  %6676 = vmatprep.subr.mxu0 0.0
  %6677 = vmatpush2.msra.mxu0 0.0
  %6678 = vmatprep.subr.mxu0 0.0
  %6679 = vmatpush2.msra.mxu0 0.0
  %6680 = vmatprep.subr.mxu0 0.0
  %6681 = vmatpush2.msra.mxu0 0.0
  %6682 = vmatprep.subr.mxu0 0.0
  %6683 = vmatpush2.msra.mxu0 0.0
  %6684 = vmatprep.subr.mxu0 0.0
  %6685 = vmatpush2.msra.mxu0 0.0
  %6686 = vmatprep.subr.mxu0 0.0
  %6687 = vmatpush2.msra.mxu0 0.0
  %6688 = vmatprep.subr.mxu0 0.0
  %6689 = vmatpush2.msra.mxu0 0.0
  %6690 = vmatprep.mubr.f32.mxu0 0.0
  %6691 = vmatmul.mubr.f32.gmra.mxu0 %v6577
  %v6692 = vpop.f32.mrf.mxu0
  %v6693 = vadd.f32 0.0, %v6692
  %v6694 = vpop.f32.mrf.mxu0
  %6695 = vmatprep.mubr.f32.mxu0 0.0
  %6696 = vmatmul.mubr.f32.gmra.mxu0 %v6578
  %v6697 = vpop.f32.mrf.mxu0
  %v6698 = vadd.f32 0.0, %v6697
  %v6699 = vpop.f32.mrf.mxu0
  %6700 = vmatprep.mubr.f32.mxu0 0.0
  %6701 = vmatmul.mubr.f32.gmra.mxu0 %v6579
  %v6702 = vpop.f32.mrf.mxu0
  %v6703 = vadd.f32 0.0, %v6702
  %v6704 = vpop.f32.mrf.mxu0
  %6705 = vmatprep.mubr.f32.mxu0 0.0
  %6706 = vmatmul.mubr.f32.gmra.mxu0 %v6580
  %v6707 = vpop.f32.mrf.mxu0
  %v6708 = vadd.f32 0.0, %v6707
  %v6709 = vpop.f32.mrf.mxu0
  %6710 = vmatprep.mubr.f32.mxu0 0.0
  %6711 = vmatmul.mubr.f32.gmra.mxu0 %v6581
  %v6712 = vpop.f32.mrf.mxu0
  %v6713 = vadd.f32 0.0, %v6712
  %v6714 = vpop.f32.mrf.mxu0
  %6715 = vmatprep.mubr.f32.mxu0 0.0
  %6716 = vmatmul.mubr.f32.gmra.mxu0 %v6582
  %v6717 = vpop.f32.mrf.mxu0
  %v6718 = vadd.f32 0.0, %v6717
  %v6719 = vpop.f32.mrf.mxu0
  %6720 = vmatprep.mubr.f32.mxu0 0.0
  %6721 = vmatmul.mubr.f32.gmra.mxu0 %v6583
  %v6722 = vpop.f32.mrf.mxu0
  %v6723 = vadd.f32 0.0, %v6722
  %v6724 = vpop.f32.mrf.mxu0
  %6725 = vmatprep.mubr.f32.mxu0 0.0
  %6726 = vmatmul.mubr.f32.gmra.mxu0 %v6584
  %v6727 = vpop.f32.mrf.mxu0
  %v6728 = vadd.f32 0.0, %v6727
  %v6729 = vpop.f32.mrf.mxu0
  %6730 = vmatprep.mubr.f32.mxu0 0.0
  %6731 = vmatmul.mubr.f32.gmra.mxu0 %v6585
  %v6732 = vpop.f32.mrf.mxu0
  %v6733 = vadd.f32 0.0, %v6732
  %v6734 = vpop.f32.mrf.mxu0
  %6735 = vmatprep.mubr.f32.mxu0 0.0
  %6736 = vmatmul.mubr.f32.gmra.mxu0 %v6586
  %v6737 = vpop.f32.mrf.mxu0
  %v6738 = vadd.f32 0.0, %v6737
  %v6739 = vpop.f32.mrf.mxu0
  %6740 = vmatprep.mubr.f32.mxu0 0.0
  %6741 = vmatmul.mubr.f32.gmra.mxu0 %v6587
  %v6742 = vpop.f32.mrf.mxu0
  %v6743 = vadd.f32 0.0, %v6742
  %v6744 = vpop.f32.mrf.mxu0
  %6745 = vmatprep.mubr.f32.mxu0 0.0
  %6746 = vmatmul.mubr.f32.gmra.mxu0 %v6588
  %v6747 = vpop.f32.mrf.mxu0
  %v6748 = vadd.f32 0.0, %v6747
  %v6749 = vpop.f32.mrf.mxu0
  %6750 = vmatprep.mubr.f32.mxu0 0.0
  %6751 = vmatmul.mubr.f32.gmra.mxu0 %v6589
  %v6752 = vpop.f32.mrf.mxu0
  %v6753 = vadd.f32 0.0, %v6752
  %v6754 = vpop.f32.mrf.mxu0
  %6755 = vmatprep.mubr.f32.mxu0 0.0
  %6756 = vmatmul.mubr.f32.gmra.mxu0 %v6590
  %v6757 = vpop.f32.mrf.mxu0
  %v6758 = vadd.f32 0.0, %v6757
  %v6759 = vpop.f32.mrf.mxu0
  %6760 = vmatprep.mubr.f32.mxu0 0.0
  %6761 = vmatmul.mubr.f32.gmra.mxu0 %v6591
  %v6762 = vpop.f32.mrf.mxu0
  %v6763 = vadd.f32 0.0, %v6762
  %v6764 = vpop.f32.mrf.mxu0
  %6765 = vmatprep.mubr.f32.mxu0 0.0
  %6766 = vmatmul.mubr.f32.gmra.mxu0 %v6592
  %v6767 = vpop.f32.mrf.mxu0
  %v6768 = vadd.f32 0.0, %v6767
  %v6769 = vpop.f32.mrf.mxu0
  %6770 = vmatprep.mubr.f32.mxu0 0.0
  %6771 = vmatmul.mubr.f32.gmra.mxu0 %v6593
  %v6772 = vpop.f32.mrf.mxu0
  %v6773 = vadd.f32 0.0, %v6772
  %v6774 = vpop.f32.mrf.mxu0
  %6775 = vmatprep.mubr.f32.mxu0 0.0
  %6776 = vmatmul.mubr.f32.gmra.mxu0 %v6594
  %v6777 = vpop.f32.mrf.mxu0
  %v6778 = vadd.f32 0.0, %v6777
  %v6779 = vpop.f32.mrf.mxu0
  %6780 = vmatprep.mubr.f32.mxu0 0.0
  %6781 = vmatmul.mubr.f32.gmra.mxu0 %v6595
  %v6782 = vpop.f32.mrf.mxu0
  %v6783 = vadd.f32 0.0, %v6782
  %v6784 = vpop.f32.mrf.mxu0
  %6785 = vmatprep.mubr.f32.mxu0 0.0
  %6786 = vmatmul.mubr.f32.gmra.mxu0 %v6596
  %v6787 = vpop.f32.mrf.mxu0
  %v6788 = vadd.f32 0.0, %v6787
  %v6789 = vpop.f32.mrf.mxu0
  %6790 = vmatprep.mubr.f32.mxu0 0.0
  %6791 = vmatmul.mubr.f32.gmra.mxu0 %v6597
  %v6792 = vpop.f32.mrf.mxu0
  %v6793 = vadd.f32 0.0, %v6792
  %v6794 = vpop.f32.mrf.mxu0
  %6795 = vmatprep.mubr.f32.mxu0 0.0
  %6796 = vmatmul.mubr.f32.gmra.mxu0 %v6598
  %v6797 = vpop.f32.mrf.mxu0
  %v6798 = vadd.f32 0.0, %v6797
  %v6799 = vpop.f32.mrf.mxu0
  %6800 = vmatprep.mubr.f32.mxu0 0.0
  %6801 = vmatmul.mubr.f32.gmra.mxu0 %v6599
  %v6802 = vpop.f32.mrf.mxu0
  %v6803 = vadd.f32 0.0, %v6802
  %v6804 = vpop.f32.mrf.mxu0
  %6805 = vmatprep.mubr.f32.mxu0 0.0
  %6806 = vmatmul.mubr.f32.gmra.mxu0 %v6600
  %v6807 = vpop.f32.mrf.mxu0
  %v6808 = vadd.f32 0.0, %v6807
  %v6809 = vpop.f32.mrf.mxu0
  %6810 = vmatprep.mubr.f32.mxu0 0.0
  %6811 = vmatmul.mubr.f32.gmra.mxu0 %v6601
  %v6812 = vpop.f32.mrf.mxu0
  %v6813 = vadd.f32 0.0, %v6812
  %v6814 = vpop.f32.mrf.mxu0
  %6815 = vmatprep.mubr.f32.mxu0 0.0
  %6816 = vmatmul.mubr.f32.gmra.mxu0 %v6602
  %v6817 = vpop.f32.mrf.mxu0
  %v6818 = vadd.f32 0.0, %v6817
  %v6819 = vpop.f32.mrf.mxu0
  %6820 = vmatprep.mubr.f32.mxu0 0.0
  %6821 = vmatmul.mubr.f32.gmra.mxu0 %v6603
  %v6822 = vpop.f32.mrf.mxu0
  %v6823 = vadd.f32 0.0, %v6822
  %v6824 = vpop.f32.mrf.mxu0
  %6825 = vmatprep.mubr.f32.mxu0 0.0
  %6826 = vmatmul.mubr.f32.gmra.mxu0 %v6604
  %v6827 = vpop.f32.mrf.mxu0
  %v6828 = vadd.f32 0.0, %v6827
  %v6829 = vpop.f32.mrf.mxu0
  %6830 = vmatprep.mubr.f32.mxu0 0.0
  %6831 = vmatmul.mubr.f32.gmra.mxu0 %v6605
  %v6832 = vpop.f32.mrf.mxu0
  %v6833 = vadd.f32 0.0, %v6832
  %v6834 = vpop.f32.mrf.mxu0
  %6835 = vmatprep.mubr.f32.mxu0 0.0
  %6836 = vmatmul.mubr.f32.gmra.mxu0 %v6606
  %v6837 = vpop.f32.mrf.mxu0
  %v6838 = vadd.f32 0.0, %v6837
  %v6839 = vpop.f32.mrf.mxu0
  %6840 = vmatprep.mubr.f32.mxu0 0.0
  %6841 = vmatmul.mubr.f32.gmra.mxu0 %v6607
  %v6842 = vpop.f32.mrf.mxu0
  %v6843 = vadd.f32 0.0, %v6842
  %v6844 = vpop.f32.mrf.mxu0
  %6845 = vmatprep.mubr.f32.mxu0 0.0
  %6846 = vmatmul.mubr.f32.gmra.mxu0 %v6608
  %v6847 = vpop.f32.mrf.mxu0
  %v6848 = vadd.f32 0.0, %v6847
  %v6849 = vpop.f32.mrf.mxu0
  %6850 = vdwg.mxu0
  %v6851 = vadd.f32 %v6545, %v6693
  %v6852 = vadd.f32 %v6546, %v6698
  %v6853 = vadd.f32 %v6547, %v6703
  %v6854 = vadd.f32 %v6548, %v6708
  %v6855 = vadd.f32 %v6549, %v6713
  %v6856 = vadd.f32 %v6550, %v6718
  %v6857 = vadd.f32 %v6551, %v6723
  %v6858 = vadd.f32 %v6552, %v6728
  %v6859 = vadd.f32 %v6553, %v6733
  %v6860 = vadd.f32 %v6554, %v6738
  %v6861 = vadd.f32 %v6555, %v6743
  %v6862 = vadd.f32 %v6556, %v6748
  %v6863 = vadd.f32 %v6557, %v6753
  %v6864 = vadd.f32 %v6558, %v6758
  %v6865 = vadd.f32 %v6559, %v6763
  %v6866 = vadd.f32 %v6560, %v6768
  %v6867 = vadd.f32 %v6561, %v6773
  %v6868 = vadd.f32 %v6562, %v6778
  %v6869 = vadd.f32 %v6563, %v6783
  %v6870 = vadd.f32 %v6564, %v6788
  %v6871 = vadd.f32 %v6565, %v6793
  %v6872 = vadd.f32 %v6566, %v6798
  %v6873 = vadd.f32 %v6567, %v6803
  %v6874 = vadd.f32 %v6568, %v6808
  %v6875 = vadd.f32 %v6569, %v6813
  %v6876 = vadd.f32 %v6570, %v6818
  %v6877 = vadd.f32 %v6571, %v6823
  %v6878 = vadd.f32 %v6572, %v6828
  %v6879 = vadd.f32 %v6573, %v6833
  %v6880 = vadd.f32 %v6574, %v6838
  %v6881 = vadd.f32 %v6575, %v6843
  %v6882 = vadd.f32 %v6576, %v6848
  %v6883 = vld [vmem:[#allocation6 + $0x10] sm:$0xff]
  %v6884 = vld [vmem:[#allocation6 + $0x18] sm:$0xff]
  %v6885 = vld [vmem:[#allocation6 + $0x20] sm:$0xff]
  %v6886 = vld [vmem:[#allocation6 + $0x28] sm:$0xff]
  %v6887 = vld [vmem:[#allocation6 + $0x30] sm:$0xff]
  %v6888 = vld [vmem:[#allocation6 + $0x38] sm:$0xff]
  %v6889 = vld [vmem:[#allocation6 + $0x40] sm:$0xff]
  %v6890 = vld [vmem:[#allocation6 + $0x48] sm:$0xff]
  %v6891 = vld [vmem:[#allocation6 + $0x50] sm:$0xff]
  %v6892 = vld [vmem:[#allocation6 + $0x58] sm:$0xff]
  %v6893 = vld [vmem:[#allocation6 + $0x60] sm:$0xff]
  %v6894 = vld [vmem:[#allocation6 + $0x68] sm:$0xff]
  %v6895 = vld [vmem:[#allocation6 + $0x70] sm:$0xff]
  %v6896 = vld [vmem:[#allocation6 + $0x78] sm:$0xff]
  %v6897 = vld [vmem:[#allocation6 + $0x80] sm:$0xff]
  %v6898 = vld [vmem:[#allocation6 + $0x88] sm:$0xff]
  %v6899 = vld [vmem:[#allocation6 + $0x90] sm:$0xff]
  %v6900 = vld [vmem:[#allocation6 + $0x98] sm:$0xff]
  %v6901 = vld [vmem:[#allocation6 + $0xa0] sm:$0xff]
  %v6902 = vld [vmem:[#allocation6 + $0xa8] sm:$0xff]
  %v6903 = vld [vmem:[#allocation6 + $0xb0] sm:$0xff]
  %v6904 = vld [vmem:[#allocation6 + $0xb8] sm:$0xff]
  %v6905 = vld [vmem:[#allocation6 + $0xc0] sm:$0xff]
  %v6906 = vld [vmem:[#allocation6 + $0xc8] sm:$0xff]
  %v6907 = vld [vmem:[#allocation6 + $0xd0] sm:$0xff]
  %v6908 = vld [vmem:[#allocation6 + $0xd8] sm:$0xff]
  %v6909 = vld [vmem:[#allocation6 + $0xe0] sm:$0xff]
  %v6910 = vld [vmem:[#allocation6 + $0xe8] sm:$0xff]
  %v6911 = vld [vmem:[#allocation6 + $0xf0] sm:$0xff]
  %v6912 = vld [vmem:[#allocation6 + $0xf8] sm:$0xff]
  %v6913 = vld [vmem:[#allocation6 + $0x100] sm:$0xff]
  %v6914 = vld [vmem:[#allocation6 + $0x108] sm:$0xff]
  %s6915 = scalar_lea.vmem %s6, 512
  %v6916 = vld [vmem:[%s6915] sm:$0xff]
  %v6917 = vld [vmem:[%s6915 + $0x8] sm:$0xff]
  %v6918 = vld [vmem:[%s6915 + $0x10] sm:$0xff]
  %v6919 = vld [vmem:[%s6915 + $0x18] sm:$0xff]
  %v6920 = vld [vmem:[%s6915 + $0x20] sm:$0xff]
  %v6921 = vld [vmem:[%s6915 + $0x28] sm:$0xff]
  %v6922 = vld [vmem:[%s6915 + $0x30] sm:$0xff]
  %v6923 = vld [vmem:[%s6915 + $0x38] sm:$0xff]
  %v6924 = vld [vmem:[%s6915 + $0x40] sm:$0xff]
  %v6925 = vld [vmem:[%s6915 + $0x48] sm:$0xff]
  %v6926 = vld [vmem:[%s6915 + $0x50] sm:$0xff]
  %v6927 = vld [vmem:[%s6915 + $0x58] sm:$0xff]
  %v6928 = vld [vmem:[%s6915 + $0x60] sm:$0xff]
  %v6929 = vld [vmem:[%s6915 + $0x68] sm:$0xff]
  %v6930 = vld [vmem:[%s6915 + $0x70] sm:$0xff]
  %v6931 = vld [vmem:[%s6915 + $0x78] sm:$0xff]
  %6932 = vmatprep.subr.mxu0 0.0
  %6933 = vmatpush1.msra.mxu0 %v6931
  %6934 = vmatprep.subr.mxu0 0.0
  %6935 = vmatpush1.msra.mxu0 %v6930
  %6936 = vmatprep.subr.mxu0 0.0
  %6937 = vmatpush1.msra.mxu0 %v6929
  %6938 = vmatprep.subr.mxu0 0.0
  %6939 = vmatpush1.msra.mxu0 %v6928
  %6940 = vmatprep.subr.mxu0 0.0
  %6941 = vmatpush1.msra.mxu0 %v6927
  %6942 = vmatprep.subr.mxu0 0.0
  %6943 = vmatpush1.msra.mxu0 %v6926
  %6944 = vmatprep.subr.mxu0 0.0
  %6945 = vmatpush1.msra.mxu0 %v6925
  %6946 = vmatprep.subr.mxu0 0.0
  %6947 = vmatpush1.msra.mxu0 %v6924
  %6948 = vmatprep.subr.mxu0 0.0
  %6949 = vmatpush1.msra.mxu0 %v6923
  %6950 = vmatprep.subr.mxu0 0.0
  %6951 = vmatpush1.msra.mxu0 %v6922
  %6952 = vmatprep.subr.mxu0 0.0
  %6953 = vmatpush1.msra.mxu0 %v6921
  %6954 = vmatprep.subr.mxu0 0.0
  %6955 = vmatpush1.msra.mxu0 %v6920
  %6956 = vmatprep.subr.mxu0 0.0
  %6957 = vmatpush1.msra.mxu0 %v6919
  %6958 = vmatprep.subr.mxu0 0.0
  %6959 = vmatpush1.msra.mxu0 %v6918
  %6960 = vmatprep.subr.mxu0 0.0
  %6961 = vmatpush1.msra.mxu0 %v6917
  %6962 = vmatprep.subr.mxu0 0.0
  %6963 = vmatpush1.msra.mxu0 %v6916
  %6964 = vmatprep.subr.mxu0 0.0
  %6965 = vmatpush2.msra.mxu0 0.0
  %6966 = vmatprep.subr.mxu0 0.0
  %6967 = vmatpush2.msra.mxu0 0.0
  %6968 = vmatprep.subr.mxu0 0.0
  %6969 = vmatpush2.msra.mxu0 0.0
  %6970 = vmatprep.subr.mxu0 0.0
  %6971 = vmatpush2.msra.mxu0 0.0
  %6972 = vmatprep.subr.mxu0 0.0
  %6973 = vmatpush2.msra.mxu0 0.0
  %6974 = vmatprep.subr.mxu0 0.0
  %6975 = vmatpush2.msra.mxu0 0.0
  %6976 = vmatprep.subr.mxu0 0.0
  %6977 = vmatpush2.msra.mxu0 0.0
  %6978 = vmatprep.subr.mxu0 0.0
  %6979 = vmatpush2.msra.mxu0 0.0
  %6980 = vmatprep.subr.mxu0 0.0
  %6981 = vmatpush2.msra.mxu0 0.0
  %6982 = vmatprep.subr.mxu0 0.0
  %6983 = vmatpush2.msra.mxu0 0.0
  %6984 = vmatprep.subr.mxu0 0.0
  %6985 = vmatpush2.msra.mxu0 0.0
  %6986 = vmatprep.subr.mxu0 0.0
  %6987 = vmatpush2.msra.mxu0 0.0
  %6988 = vmatprep.subr.mxu0 0.0
  %6989 = vmatpush2.msra.mxu0 0.0
  %6990 = vmatprep.subr.mxu0 0.0
  %6991 = vmatpush2.msra.mxu0 0.0
  %6992 = vmatprep.subr.mxu0 0.0
  %6993 = vmatpush2.msra.mxu0 0.0
  %6994 = vmatprep.subr.mxu0 0.0
  %6995 = vmatpush2.msra.mxu0 0.0
  %6996 = vmatprep.mubr.f32.mxu0 0.0
  %6997 = vmatmul.mubr.f32.gmra.mxu0 %v6883
  %v6998 = vpop.f32.mrf.mxu0
  %v6999 = vadd.f32 0.0, %v6998
  %v7000 = vpop.f32.mrf.mxu0
  %7001 = vmatprep.mubr.f32.mxu0 0.0
  %7002 = vmatmul.mubr.f32.gmra.mxu0 %v6884
  %v7003 = vpop.f32.mrf.mxu0
  %v7004 = vadd.f32 0.0, %v7003
  %v7005 = vpop.f32.mrf.mxu0
  %7006 = vmatprep.mubr.f32.mxu0 0.0
  %7007 = vmatmul.mubr.f32.gmra.mxu0 %v6885
  %v7008 = vpop.f32.mrf.mxu0
  %v7009 = vadd.f32 0.0, %v7008
  %v7010 = vpop.f32.mrf.mxu0
  %7011 = vmatprep.mubr.f32.mxu0 0.0
  %7012 = vmatmul.mubr.f32.gmra.mxu0 %v6886
  %v7013 = vpop.f32.mrf.mxu0
  %v7014 = vadd.f32 0.0, %v7013
  %v7015 = vpop.f32.mrf.mxu0
  %7016 = vmatprep.mubr.f32.mxu0 0.0
  %7017 = vmatmul.mubr.f32.gmra.mxu0 %v6887
  %v7018 = vpop.f32.mrf.mxu0
  %v7019 = vadd.f32 0.0, %v7018
  %v7020 = vpop.f32.mrf.mxu0
  %7021 = vmatprep.mubr.f32.mxu0 0.0
  %7022 = vmatmul.mubr.f32.gmra.mxu0 %v6888
  %v7023 = vpop.f32.mrf.mxu0
  %v7024 = vadd.f32 0.0, %v7023
  %v7025 = vpop.f32.mrf.mxu0
  %7026 = vmatprep.mubr.f32.mxu0 0.0
  %7027 = vmatmul.mubr.f32.gmra.mxu0 %v6889
  %v7028 = vpop.f32.mrf.mxu0
  %v7029 = vadd.f32 0.0, %v7028
  %v7030 = vpop.f32.mrf.mxu0
  %7031 = vmatprep.mubr.f32.mxu0 0.0
  %7032 = vmatmul.mubr.f32.gmra.mxu0 %v6890
  %v7033 = vpop.f32.mrf.mxu0
  %v7034 = vadd.f32 0.0, %v7033
  %v7035 = vpop.f32.mrf.mxu0
  %7036 = vmatprep.mubr.f32.mxu0 0.0
  %7037 = vmatmul.mubr.f32.gmra.mxu0 %v6891
  %v7038 = vpop.f32.mrf.mxu0
  %v7039 = vadd.f32 0.0, %v7038
  %v7040 = vpop.f32.mrf.mxu0
  %7041 = vmatprep.mubr.f32.mxu0 0.0
  %7042 = vmatmul.mubr.f32.gmra.mxu0 %v6892
  %v7043 = vpop.f32.mrf.mxu0
  %v7044 = vadd.f32 0.0, %v7043
  %v7045 = vpop.f32.mrf.mxu0
  %7046 = vmatprep.mubr.f32.mxu0 0.0
  %7047 = vmatmul.mubr.f32.gmra.mxu0 %v6893
  %v7048 = vpop.f32.mrf.mxu0
  %v7049 = vadd.f32 0.0, %v7048
  %v7050 = vpop.f32.mrf.mxu0
  %7051 = vmatprep.mubr.f32.mxu0 0.0
  %7052 = vmatmul.mubr.f32.gmra.mxu0 %v6894
  %v7053 = vpop.f32.mrf.mxu0
  %v7054 = vadd.f32 0.0, %v7053
  %v7055 = vpop.f32.mrf.mxu0
  %7056 = vmatprep.mubr.f32.mxu0 0.0
  %7057 = vmatmul.mubr.f32.gmra.mxu0 %v6895
  %v7058 = vpop.f32.mrf.mxu0
  %v7059 = vadd.f32 0.0, %v7058
  %v7060 = vpop.f32.mrf.mxu0
  %7061 = vmatprep.mubr.f32.mxu0 0.0
  %7062 = vmatmul.mubr.f32.gmra.mxu0 %v6896
  %v7063 = vpop.f32.mrf.mxu0
  %v7064 = vadd.f32 0.0, %v7063
  %v7065 = vpop.f32.mrf.mxu0
  %7066 = vmatprep.mubr.f32.mxu0 0.0
  %7067 = vmatmul.mubr.f32.gmra.mxu0 %v6897
  %v7068 = vpop.f32.mrf.mxu0
  %v7069 = vadd.f32 0.0, %v7068
  %v7070 = vpop.f32.mrf.mxu0
  %7071 = vmatprep.mubr.f32.mxu0 0.0
  %7072 = vmatmul.mubr.f32.gmra.mxu0 %v6898
  %v7073 = vpop.f32.mrf.mxu0
  %v7074 = vadd.f32 0.0, %v7073
  %v7075 = vpop.f32.mrf.mxu0
  %7076 = vmatprep.mubr.f32.mxu0 0.0
  %7077 = vmatmul.mubr.f32.gmra.mxu0 %v6899
  %v7078 = vpop.f32.mrf.mxu0
  %v7079 = vadd.f32 0.0, %v7078
  %v7080 = vpop.f32.mrf.mxu0
  %7081 = vmatprep.mubr.f32.mxu0 0.0
  %7082 = vmatmul.mubr.f32.gmra.mxu0 %v6900
  %v7083 = vpop.f32.mrf.mxu0
  %v7084 = vadd.f32 0.0, %v7083
  %v7085 = vpop.f32.mrf.mxu0
  %7086 = vmatprep.mubr.f32.mxu0 0.0
  %7087 = vmatmul.mubr.f32.gmra.mxu0 %v6901
  %v7088 = vpop.f32.mrf.mxu0
  %v7089 = vadd.f32 0.0, %v7088
  %v7090 = vpop.f32.mrf.mxu0
  %7091 = vmatprep.mubr.f32.mxu0 0.0
  %7092 = vmatmul.mubr.f32.gmra.mxu0 %v6902
  %v7093 = vpop.f32.mrf.mxu0
  %v7094 = vadd.f32 0.0, %v7093
  %v7095 = vpop.f32.mrf.mxu0
  %7096 = vmatprep.mubr.f32.mxu0 0.0
  %7097 = vmatmul.mubr.f32.gmra.mxu0 %v6903
  %v7098 = vpop.f32.mrf.mxu0
  %v7099 = vadd.f32 0.0, %v7098
  %v7100 = vpop.f32.mrf.mxu0
  %7101 = vmatprep.mubr.f32.mxu0 0.0
  %7102 = vmatmul.mubr.f32.gmra.mxu0 %v6904
  %v7103 = vpop.f32.mrf.mxu0
  %v7104 = vadd.f32 0.0, %v7103
  %v7105 = vpop.f32.mrf.mxu0
  %7106 = vmatprep.mubr.f32.mxu0 0.0
  %7107 = vmatmul.mubr.f32.gmra.mxu0 %v6905
  %v7108 = vpop.f32.mrf.mxu0
  %v7109 = vadd.f32 0.0, %v7108
  %v7110 = vpop.f32.mrf.mxu0
  %7111 = vmatprep.mubr.f32.mxu0 0.0
  %7112 = vmatmul.mubr.f32.gmra.mxu0 %v6906
  %v7113 = vpop.f32.mrf.mxu0
  %v7114 = vadd.f32 0.0, %v7113
  %v7115 = vpop.f32.mrf.mxu0
  %7116 = vmatprep.mubr.f32.mxu0 0.0
  %7117 = vmatmul.mubr.f32.gmra.mxu0 %v6907
  %v7118 = vpop.f32.mrf.mxu0
  %v7119 = vadd.f32 0.0, %v7118
  %v7120 = vpop.f32.mrf.mxu0
  %7121 = vmatprep.mubr.f32.mxu0 0.0
  %7122 = vmatmul.mubr.f32.gmra.mxu0 %v6908
  %v7123 = vpop.f32.mrf.mxu0
  %v7124 = vadd.f32 0.0, %v7123
  %v7125 = vpop.f32.mrf.mxu0
  %7126 = vmatprep.mubr.f32.mxu0 0.0
  %7127 = vmatmul.mubr.f32.gmra.mxu0 %v6909
  %v7128 = vpop.f32.mrf.mxu0
  %v7129 = vadd.f32 0.0, %v7128
  %v7130 = vpop.f32.mrf.mxu0
  %7131 = vmatprep.mubr.f32.mxu0 0.0
  %7132 = vmatmul.mubr.f32.gmra.mxu0 %v6910
  %v7133 = vpop.f32.mrf.mxu0
  %v7134 = vadd.f32 0.0, %v7133
  %v7135 = vpop.f32.mrf.mxu0
  %7136 = vmatprep.mubr.f32.mxu0 0.0
  %7137 = vmatmul.mubr.f32.gmra.mxu0 %v6911
  %v7138 = vpop.f32.mrf.mxu0
  %v7139 = vadd.f32 0.0, %v7138
  %v7140 = vpop.f32.mrf.mxu0
  %7141 = vmatprep.mubr.f32.mxu0 0.0
  %7142 = vmatmul.mubr.f32.gmra.mxu0 %v6912
  %v7143 = vpop.f32.mrf.mxu0
  %v7144 = vadd.f32 0.0, %v7143
  %v7145 = vpop.f32.mrf.mxu0
  %7146 = vmatprep.mubr.f32.mxu0 0.0
  %7147 = vmatmul.mubr.f32.gmra.mxu0 %v6913
  %v7148 = vpop.f32.mrf.mxu0
  %v7149 = vadd.f32 0.0, %v7148
  %v7150 = vpop.f32.mrf.mxu0
  %7151 = vmatprep.mubr.f32.mxu0 0.0
  %7152 = vmatmul.mubr.f32.gmra.mxu0 %v6914
  %v7153 = vpop.f32.mrf.mxu0
  %v7154 = vadd.f32 0.0, %v7153
  %v7155 = vpop.f32.mrf.mxu0
  %7156 = vdwg.mxu0
  %v7157 = vadd.f32 %v6851, %v6999
  %v7158 = vadd.f32 %v6852, %v7004
  %v7159 = vadd.f32 %v6853, %v7009
  %v7160 = vadd.f32 %v6854, %v7014
  %v7161 = vadd.f32 %v6855, %v7019
  %v7162 = vadd.f32 %v6856, %v7024
  %v7163 = vadd.f32 %v6857, %v7029
  %v7164 = vadd.f32 %v6858, %v7034
  %v7165 = vadd.f32 %v6859, %v7039
  %v7166 = vadd.f32 %v6860, %v7044
  %v7167 = vadd.f32 %v6861, %v7049
  %v7168 = vadd.f32 %v6862, %v7054
  %v7169 = vadd.f32 %v6863, %v7059
  %v7170 = vadd.f32 %v6864, %v7064
  %v7171 = vadd.f32 %v6865, %v7069
  %v7172 = vadd.f32 %v6866, %v7074
  %v7173 = vadd.f32 %v6867, %v7079
  %v7174 = vadd.f32 %v6868, %v7084
  %v7175 = vadd.f32 %v6869, %v7089
  %v7176 = vadd.f32 %v6870, %v7094
  %v7177 = vadd.f32 %v6871, %v7099
  %v7178 = vadd.f32 %v6872, %v7104
  %v7179 = vadd.f32 %v6873, %v7109
  %v7180 = vadd.f32 %v6874, %v7114
  %v7181 = vadd.f32 %v6875, %v7119
  %v7182 = vadd.f32 %v6876, %v7124
  %v7183 = vadd.f32 %v6877, %v7129
  %v7184 = vadd.f32 %v6878, %v7134
  %v7185 = vadd.f32 %v6879, %v7139
  %v7186 = vadd.f32 %v6880, %v7144
  %v7187 = vadd.f32 %v6881, %v7149
  %v7188 = vadd.f32 %v6882, %v7154
  %v7189 = vld [vmem:[%s1] sm:$0xff]
  %v7190 = vld [vmem:[%s1 + $0x8] sm:$0xff]
  %v7191 = vld [vmem:[%s7] sm:$0x1]
  %v7193 = vlaneseq
  %v7194 = vshrl.u32 %v7193, 7
  %v7195 = vsub.s32 0, %v7194
  %v7196 = vrot.slane %v7191, %v7195
  %7198 = vmatprep.subr.mxu0 0.0
  %7199 = vmatpush1.msra.mxu0 %v7172
  %7200 = vmatprep.subr.mxu0 0.0
  %7201 = vmatpush1.msra.mxu0 %v7171
  %7202 = vmatprep.subr.mxu0 0.0
  %7203 = vmatpush1.msra.mxu0 %v7170
  %7204 = vmatprep.subr.mxu0 0.0
  %7205 = vmatpush1.msra.mxu0 %v7169
  %7206 = vmatprep.subr.mxu0 0.0
  %7207 = vmatpush1.msra.mxu0 %v7168
  %7208 = vmatprep.subr.mxu0 0.0
  %7209 = vmatpush1.msra.mxu0 %v7167
  %7210 = vmatprep.subr.mxu0 0.0
  %7211 = vmatpush1.msra.mxu0 %v7166
  %7212 = vmatprep.subr.mxu0 0.0
  %7213 = vmatpush1.msra.mxu0 %v7165
  %7214 = vmatprep.subr.mxu0 0.0
  %7215 = vmatpush1.msra.mxu0 %v7164
  %7216 = vmatprep.subr.mxu0 0.0
  %7217 = vmatpush1.msra.mxu0 %v7163
  %7218 = vmatprep.subr.mxu0 0.0
  %7219 = vmatpush1.msra.mxu0 %v7162
  %7220 = vmatprep.subr.mxu0 0.0
  %7221 = vmatpush1.msra.mxu0 %v7161
  %7222 = vmatprep.subr.mxu0 0.0
  %7223 = vmatpush1.msra.mxu0 %v7160
  %7224 = vmatprep.subr.mxu0 0.0
  %7225 = vmatpush1.msra.mxu0 %v7159
  %7226 = vmatprep.subr.mxu0 0.0
  %7227 = vmatpush1.msra.mxu0 %v7158
  %7228 = vmatprep.subr.mxu0 0.0
  %7229 = vmatpush1.msra.mxu0 %v7157
  %7230 = vmatprep.subr.mxu0 0.0
  %7231 = vmatpush2.msra.mxu0 %v7188
  %7232 = vmatprep.subr.mxu0 0.0
  %7233 = vmatpush2.msra.mxu0 %v7187
  %7234 = vmatprep.subr.mxu0 0.0
  %7235 = vmatpush2.msra.mxu0 %v7186
  %7236 = vmatprep.subr.mxu0 0.0
  %7237 = vmatpush2.msra.mxu0 %v7185
  %7238 = vmatprep.subr.mxu0 0.0
  %7239 = vmatpush2.msra.mxu0 %v7184
  %7240 = vmatprep.subr.mxu0 0.0
  %7241 = vmatpush2.msra.mxu0 %v7183
  %7242 = vmatprep.subr.mxu0 0.0
  %7243 = vmatpush2.msra.mxu0 %v7182
  %7244 = vmatprep.subr.mxu0 0.0
  %7245 = vmatpush2.msra.mxu0 %v7181
  %7246 = vmatprep.subr.mxu0 0.0
  %7247 = vmatpush2.msra.mxu0 %v7180
  %7248 = vmatprep.subr.mxu0 0.0
  %7249 = vmatpush2.msra.mxu0 %v7179
  %7250 = vmatprep.subr.mxu0 0.0
  %7251 = vmatpush2.msra.mxu0 %v7178
  %7252 = vmatprep.subr.mxu0 0.0
  %7253 = vmatpush2.msra.mxu0 %v7177
  %7254 = vmatprep.subr.mxu0 0.0
  %7255 = vmatpush2.msra.mxu0 %v7176
  %7256 = vmatprep.subr.mxu0 0.0
  %7257 = vmatpush2.msra.mxu0 %v7175
  %7258 = vmatprep.subr.mxu0 0.0
  %7259 = vmatpush2.msra.mxu0 %v7174
  %7260 = vmatprep.subr.mxu0 0.0
  %7261 = vmatpush2.msra.mxu0 %v7173
  %7262 = vmatprep.mubr.f32.mxu0 %v7190
  %7263 = vmatmul.mubr.f32.gmra.mxu0 %v7189
  %v7264 = vpop.f32.mrf.mxu0
  %v7265 = vadd.f32 %v7196, %v7264
  %v7266 = vpop.f32.mrf.mxu0
  %7267 = vdwg.mxu0
  %v7268 = vld [vmem:[%s8] sm:$0xff]
  %v7269 = vld [vmem:[%s8 + $0x8] sm:$0xff]
  %v7270 = vld [vmem:[%s8 + $0x10] sm:$0xff]
  %v7271 = vld [vmem:[%s8 + $0x18] sm:$0xff]
  %v7272 = vld [vmem:[%s8 + $0x20] sm:$0xff]
  %v7273 = vld [vmem:[%s8 + $0x28] sm:$0xff]
  %v7274 = vld [vmem:[%s8 + $0x30] sm:$0xff]
  %v7275 = vld [vmem:[%s8 + $0x38] sm:$0xff]
  %v7276 = vld [vmem:[%s8 + $0x40] sm:$0xff]
  %v7277 = vld [vmem:[%s8 + $0x48] sm:$0xff]
  %v7278 = vld [vmem:[%s8 + $0x50] sm:$0xff]
  %v7279 = vld [vmem:[%s8 + $0x58] sm:$0xff]
  %v7280 = vld [vmem:[%s8 + $0x60] sm:$0xff]
  %v7281 = vld [vmem:[%s8 + $0x68] sm:$0xff]
  %v7282 = vld [vmem:[%s8 + $0x70] sm:$0xff]
  %v7283 = vld [vmem:[%s9] sm:$0x1]
  %v7285 = vlaneseq
  %v7286 = vshrl.u32 %v7285, 7
  %v7287 = vsub.s32 0, %v7286
  %v7288 = vrot.slane %v7283, %v7287
  %vm7290 = vcmask 982016
  %v7292 = vsel %vm7290, %v7265, 0
  %7294 = vmatprep.subr.mxu0 0.0
  %7295 = vmatpush1.msra.mxu0 0.0
  %7296 = vmatprep.subr.mxu0 0.0
  %7297 = vmatpush1.msra.mxu0 %v7282
  %7298 = vmatprep.subr.mxu0 0.0
  %7299 = vmatpush1.msra.mxu0 %v7281
  %7300 = vmatprep.subr.mxu0 0.0
  %7301 = vmatpush1.msra.mxu0 %v7280
  %7302 = vmatprep.subr.mxu0 0.0
  %7303 = vmatpush1.msra.mxu0 %v7279
  %7304 = vmatprep.subr.mxu0 0.0
  %7305 = vmatpush1.msra.mxu0 %v7278
  %7306 = vmatprep.subr.mxu0 0.0
  %7307 = vmatpush1.msra.mxu0 %v7277
  %7308 = vmatprep.subr.mxu0 0.0
  %7309 = vmatpush1.msra.mxu0 %v7276
  %7310 = vmatprep.subr.mxu0 0.0
  %7311 = vmatpush1.msra.mxu0 %v7275
  %7312 = vmatprep.subr.mxu0 0.0
  %7313 = vmatpush1.msra.mxu0 %v7274
  %7314 = vmatprep.subr.mxu0 0.0
  %7315 = vmatpush1.msra.mxu0 %v7273
  %7316 = vmatprep.subr.mxu0 0.0
  %7317 = vmatpush1.msra.mxu0 %v7272
  %7318 = vmatprep.subr.mxu0 0.0
  %7319 = vmatpush1.msra.mxu0 %v7271
  %7320 = vmatprep.subr.mxu0 0.0
  %7321 = vmatpush1.msra.mxu0 %v7270
  %7322 = vmatprep.subr.mxu0 0.0
  %7323 = vmatpush1.msra.mxu0 %v7269
  %7324 = vmatprep.subr.mxu0 0.0
  %7325 = vmatpush1.msra.mxu0 %v7268
  %7326 = vmatprep.subr.mxu0 0.0
  %7327 = vmatpush2.msra.mxu0 0.0
  %7328 = vmatprep.subr.mxu0 0.0
  %7329 = vmatpush2.msra.mxu0 0.0
  %7330 = vmatprep.subr.mxu0 0.0
  %7331 = vmatpush2.msra.mxu0 0.0
  %7332 = vmatprep.subr.mxu0 0.0
  %7333 = vmatpush2.msra.mxu0 0.0
  %7334 = vmatprep.subr.mxu0 0.0
  %7335 = vmatpush2.msra.mxu0 0.0
  %7336 = vmatprep.subr.mxu0 0.0
  %7337 = vmatpush2.msra.mxu0 0.0
  %7338 = vmatprep.subr.mxu0 0.0
  %7339 = vmatpush2.msra.mxu0 0.0
  %7340 = vmatprep.subr.mxu0 0.0
  %7341 = vmatpush2.msra.mxu0 0.0
  %7342 = vmatprep.subr.mxu0 0.0
  %7343 = vmatpush2.msra.mxu0 0.0
  %7344 = vmatprep.subr.mxu0 0.0
  %7345 = vmatpush2.msra.mxu0 0.0
  %7346 = vmatprep.subr.mxu0 0.0
  %7347 = vmatpush2.msra.mxu0 0.0
  %7348 = vmatprep.subr.mxu0 0.0
  %7349 = vmatpush2.msra.mxu0 0.0
  %7350 = vmatprep.subr.mxu0 0.0
  %7351 = vmatpush2.msra.mxu0 0.0
  %7352 = vmatprep.subr.mxu0 0.0
  %7353 = vmatpush2.msra.mxu0 0.0
  %7354 = vmatprep.subr.mxu0 0.0
  %7355 = vmatpush2.msra.mxu0 0.0
  %7356 = vmatprep.subr.mxu0 0.0
  %7357 = vmatpush2.msra.mxu0 0.0
  %7358 = vmatprep.mubr.f32.mxu0 0.0
  %7359 = vmatmul.mubr.f32.gmra.mxu0 %v7292
  %v7360 = vpop.f32.mrf.mxu0
  %v7361 = vadd.f32 %v7288, %v7360
  %v7362 = vpop.f32.mrf.mxu0
  %7363 = vdwg.mxu0
  %v7364 = vld [vmem:[%s10] sm:$0xff]
  %v7365 = vld [vmem:[%s10 + $0x8] sm:$0xff]
  %v7366 = vld [vmem:[%s10 + $0x10] sm:$0xff]
  %v7367 = vld [vmem:[%s10 + $0x18] sm:$0xff]
  %v7368 = vld [vmem:[%s10 + $0x20] sm:$0xff]
  %v7369 = vld [vmem:[%s10 + $0x28] sm:$0xff]
  %v7370 = vld [vmem:[%s10 + $0x30] sm:$0xff]
  %v7371 = vld [vmem:[%s10 + $0x38] sm:$0xff]
  %v7372 = vld [vmem:[%s10 + $0x40] sm:$0xff]
  %v7373 = vld [vmem:[%s10 + $0x48] sm:$0xff]
  %v7374 = vld [vmem:[%s10 + $0x50] sm:$0xf]
  %v7375 = vld [vmem:[%s11] sm:$0x1]
  %v7377 = vlaneseq
  %v7378 = vshrl.u32 %v7377, 7
  %v7379 = vsub.s32 0, %v7378
  %v7380 = vrot.slane %v7375, %v7379
  %vm7382 = vcmask 687104
  %v7384 = vsel %vm7382, %v7361, 0
  %v7387 = vsel %vm524, %v7374, 0
  %7389 = vmatprep.subr.mxu0 0.0
  %7390 = vmatpush1.msra.mxu0 0.0
  %7391 = vmatprep.subr.mxu0 0.0
  %7392 = vmatpush1.msra.mxu0 0.0
  %7393 = vmatprep.subr.mxu0 0.0
  %7394 = vmatpush1.msra.mxu0 0.0
  %7395 = vmatprep.subr.mxu0 0.0
  %7396 = vmatpush1.msra.mxu0 0.0
  %7397 = vmatprep.subr.mxu0 0.0
  %7398 = vmatpush1.msra.mxu0 0.0
  %7399 = vmatprep.subr.mxu0 0.0
  %7400 = vmatpush1.msra.mxu0 %v7387
  %7401 = vmatprep.subr.mxu0 0.0
  %7402 = vmatpush1.msra.mxu0 %v7373
  %7403 = vmatprep.subr.mxu0 0.0
  %7404 = vmatpush1.msra.mxu0 %v7372
  %7405 = vmatprep.subr.mxu0 0.0
  %7406 = vmatpush1.msra.mxu0 %v7371
  %7407 = vmatprep.subr.mxu0 0.0
  %7408 = vmatpush1.msra.mxu0 %v7370
  %7409 = vmatprep.subr.mxu0 0.0
  %7410 = vmatpush1.msra.mxu0 %v7369
  %7411 = vmatprep.subr.mxu0 0.0
  %7412 = vmatpush1.msra.mxu0 %v7368
  %7413 = vmatprep.subr.mxu0 0.0
  %7414 = vmatpush1.msra.mxu0 %v7367
  %7415 = vmatprep.subr.mxu0 0.0
  %7416 = vmatpush1.msra.mxu0 %v7366
  %7417 = vmatprep.subr.mxu0 0.0
  %7418 = vmatpush1.msra.mxu0 %v7365
  %7419 = vmatprep.subr.mxu0 0.0
  %7420 = vmatpush1.msra.mxu0 %v7364
  %7421 = vmatprep.subr.mxu0 0.0
  %7422 = vmatpush2.msra.mxu0 0.0
  %7423 = vmatprep.subr.mxu0 0.0
  %7424 = vmatpush2.msra.mxu0 0.0
  %7425 = vmatprep.subr.mxu0 0.0
  %7426 = vmatpush2.msra.mxu0 0.0
  %7427 = vmatprep.subr.mxu0 0.0
  %7428 = vmatpush2.msra.mxu0 0.0
  %7429 = vmatprep.subr.mxu0 0.0
  %7430 = vmatpush2.msra.mxu0 0.0
  %7431 = vmatprep.subr.mxu0 0.0
  %7432 = vmatpush2.msra.mxu0 0.0
  %7433 = vmatprep.subr.mxu0 0.0
  %7434 = vmatpush2.msra.mxu0 0.0
  %7435 = vmatprep.subr.mxu0 0.0
  %7436 = vmatpush2.msra.mxu0 0.0
  %7437 = vmatprep.subr.mxu0 0.0
  %7438 = vmatpush2.msra.mxu0 0.0
  %7439 = vmatprep.subr.mxu0 0.0
  %7440 = vmatpush2.msra.mxu0 0.0
  %7441 = vmatprep.subr.mxu0 0.0
  %7442 = vmatpush2.msra.mxu0 0.0
  %7443 = vmatprep.subr.mxu0 0.0
  %7444 = vmatpush2.msra.mxu0 0.0
  %7445 = vmatprep.subr.mxu0 0.0
  %7446 = vmatpush2.msra.mxu0 0.0
  %7447 = vmatprep.subr.mxu0 0.0
  %7448 = vmatpush2.msra.mxu0 0.0
  %7449 = vmatprep.subr.mxu0 0.0
  %7450 = vmatpush2.msra.mxu0 0.0
  %7451 = vmatprep.subr.mxu0 0.0
  %7452 = vmatpush2.msra.mxu0 0.0
  %7453 = vmatprep.mubr.f32.mxu0 0.0
  %7454 = vmatmul.mubr.f32.gmra.mxu0 %v7384
  %v7455 = vpop.f32.mrf.mxu0
  %v7456 = vadd.f32 %v7380, %v7455
  %v7457 = vpop.f32.mrf.mxu0
  %7458 = vdwg.mxu0
  %7459 = vst [vmem:[%s12] sm:$0xff] %v7456
  // Predicated region
  $region50: #{lenet5_forward.1} parent=0 // pred_check
    _
  $region51: #{lenet5_forward.1} parent=0 // pred_check_branch
    %7461 = sbr.rel (0) target = $region53
  $region52: #{lenet5_forward.1} parent=0 // pred_region
    _
  $region53: #{lenet5_forward.1} parent=0 // pred_fallthru
    _
  // Predicated region
  $region54: #{lenet5_forward.1} parent=0 // pred_check
    _
  $region55: #{lenet5_forward.1} parent=0 // pred_check_branch
    %7463 = sbr.rel (0) target = $region57
  $region56: #{lenet5_forward.1} parent=0 // pred_region
    _
  $region57: #{lenet5_forward.1} parent=0 // pred_fallthru
    _

</llo_original>
